<compile_context>
chip_gen: v7x
topology: tpu7x:2x2x1
jax: 0.10.0
libtpu: 0.0.40
codegen_flags: <defaults>
</compile_context>

<pallas_src>
import jax
import jax.numpy as jnp
from jax.experimental import pallas as pl
from jax.experimental.pallas import tpu as pltpu

# bf16 operands / f32 accumulation (recommended for v6e/v7x MXU + halved DMA
# bytes).  Flip to jnp.float32 if bit-level parity with the PyTorch f32
# reference is required (expect ~1e-2 relative drift in bf16).
COMPUTE_DTYPE = jnp.bfloat16


# ----------------------------- Pallas kernels ------------------------------ #

def conv_pool_relu_kernel(cols_ref, w_ref, b_ref, o_ref):
    """cols_ref: (4, TM, K) im2col patches grouped by 2x2-pool quadrant.
    One merged (4*TM, K) @ (K, N) MXU matmul, then quadrant max + bias + ReLU
    on the VPU.  Padded weight columns / bias lanes are zero, so padded output
    lanes stay exactly 0 after ReLU."""
    _, tm, k = cols_ref.shape
    cols = cols_ref[...].reshape(4 * tm, k)          # layout-free merge (tm%8==0)
    acc = jnp.dot(cols, w_ref[...], preferred_element_type=jnp.float32)
    m01 = jnp.maximum(acc[0 * tm:1 * tm], acc[1 * tm:2 * tm])
    m23 = jnp.maximum(acc[2 * tm:3 * tm], acc[3 * tm:4 * tm])
    o_ref[...] = jnp.maximum(jnp.maximum(m01, m23) + b_ref[...], 0.0
                             ).astype(o_ref.dtype)


def mlp_head_kernel(x_ref, w1_ref, b1_ref, w2_ref, b2_ref, o_ref):
    """fc1 -> ReLU -> (dropout: identity in eval) -> fc2, fused."""
    h = jnp.dot(x_ref[...], w1_ref[...], preferred_element_type=jnp.float32)
    h = jnp.maximum(h + b1_ref[...], 0.0)
    o_ref[...] = (jnp.dot(h.astype(w2_ref.dtype), w2_ref[...],
                          preferred_element_type=jnp.float32)
                  + b2_ref[...]).astype(o_ref.dtype)


# ------------------------------ Pallas wrappers ----------------------------- #

def _row_tile(m, target=512):
    """Largest multiple-of-16 divisor of m that is <= target (else m).
    16 keeps bf16 sublane tiling clean; fine for f32 too."""
    if m <= target:
        return m
    for tm in range(target - target % 16, 15, -16):
        if m % tm == 0:
            return tm
    return m


def pallas_conv_pool_relu(cols4, w_pad, b_pad, out_dtype):
    """cols4: (4, M, K), w_pad: (K, N) with K,N % 128 == 0, b_pad: (1, N) f32."""
    _, m, k = cols4.shape
    n = w_pad.shape[1]
    tm = _row_tile(m)
    cost = pl.CostEstimate(
        flops=2 * 4 * m * k * n, transcendentals=0,
        bytes_accessed=(cols4.dtype.itemsize * 4 * m * k
                        + w_pad.dtype.itemsize * k * n + 4 * n
                        + jnp.dtype(out_dtype).itemsize * m * n))
    return pl.pallas_call(
        conv_pool_relu_kernel,
        out_shape=jax.ShapeDtypeStruct((m, n), out_dtype),
        grid=(m // tm,),
        in_specs=[
            pl.BlockSpec((4, tm, k), lambda i: (0, i, 0)),
            pl.BlockSpec((k, n), lambda i: (0, 0)),
            pl.BlockSpec((1, n), lambda i: (0, 0)),
        ],
        out_specs=pl.BlockSpec((tm, n), lambda i: (i, 0)),
        compiler_params=pltpu.CompilerParams(
            dimension_semantics=("parallel",)),
        cost_estimate=cost,
    )(cols4, w_pad, b_pad)


def pallas_mlp_head(x, w1, b1, w2, b2):
    m, k1 = x.shape
    n1 = w1.shape[1]
    n2 = w2.shape[1]
    tm = _row_tile(m, target=256)   # M-tiled: v7x megacore + bounded VMEM
    cost = pl.CostEstimate(
        flops=2 * m * (k1 * n1 + n1 * n2), transcendentals=0,
        bytes_accessed=(x.dtype.itemsize * m * k1 + w1.dtype.itemsize * k1 * n1
                        + w2.dtype.itemsize * n1 * n2 + 4 * (n1 + n2)
                        + 4 * m * n2))
    return pl.pallas_call(
        mlp_head_kernel,
        out_shape=jax.ShapeDtypeStruct((m, n2), jnp.float32),
        grid=(m // tm,),
        in_specs=[
            pl.BlockSpec((tm, k1), lambda i: (i, 0)),
            pl.BlockSpec((k1, n1), lambda i: (0, 0)),
            pl.BlockSpec((1, n1), lambda i: (0, 0)),
            pl.BlockSpec((n1, n2), lambda i: (0, 0)),
            pl.BlockSpec((1, n2), lambda i: (0, 0)),
        ],
        out_specs=pl.BlockSpec((tm, n2), lambda i: (i, 0)),
        compiler_params=pltpu.CompilerParams(
            dimension_semantics=("parallel",)),
        cost_estimate=cost,
    )(x, w1, b1, w2, b2)


# ------------------------------ JAX glue (layout) --------------------------- #

def im2col_pool_groups(x_nhwc, k, k_pad=None):
    """x: (B, H, W, C) -> (4, B*Hp*Wp, C*k*k [padded to k_pad]), Hp=(H-k+1)//2.
    cols4[q] holds the im2col patch of the conv-output pixel at 2x2-pool
    position q = 2*row_parity + col_parity of each pool window.  Column
    (feature) order is (c, kh, kw), matching PyTorch weight.reshape(out, -1).
    TODO(synk): this patch extraction is XLA glue (fused slices/transpose on a
    few hundred KB of bf16); a fully in-kernel gather (memory_space=pl.ANY +
    strided pl.ds loads) would avoid materializing cols4 to HBM entirely.
    """
    b, h, w, c = x_nhwc.shape
    ho, wo = h - k + 1, w - k + 1
    hp, wp = ho // 2, wo // 2
    kk = c * k * k
    cols = jnp.stack(
        [x_nhwc[:, i:i + ho, j:j + wo, :] for i in range(k) for j in range(k)],
        axis=-1)                                        # (B, Ho, Wo, C, k*k)
    cols = cols.reshape(b, ho, wo, kk)
    cols = cols.reshape(b, hp, 2, wp, 2, kk)
    cols = jnp.transpose(cols, (2, 4, 0, 1, 3, 5))      # (2, 2, B, Hp, Wp, K)
    cols = cols.reshape(4, b * hp * wp, kk)
    if k_pad is not None and k_pad > kk:
        cols = jnp.pad(cols, ((0, 0), (0, 0), (0, k_pad - kk)))
    return cols, (b, hp, wp)


# ------------------------------ Model parameters ---------------------------- #

def _pad_to(x, shape):
    out = jnp.zeros(shape, jnp.float32)
    return out.at[tuple(slice(0, s) for s in x.shape)].set(
        x.astype(jnp.float32))


def init_raw_params(key):
    """Random parameters in PyTorch layout (weight = (out, in[, kh, kw]))."""
    ks = jax.random.split(key, 10)
    n = jax.random.normal
    return {
        "conv1_w": 0.05 * n(ks[0], (20, 1, 5, 5), jnp.float32),
        "conv1_b": 0.05 * n(ks[1], (20,), jnp.float32),
        "conv2_w": 0.05 * n(ks[2], (50, 20, 5, 5), jnp.float32),
        "conv2_b": 0.05 * n(ks[3], (50,), jnp.float32),
        "fc1_w": 0.05 * n(ks[4], (500, 800), jnp.float32),
        "fc1_b": 0.05 * n(ks[5], (500,), jnp.float32),
        "fc2_w": 0.05 * n(ks[6], (10, 500), jnp.float32),
        "fc2_b": 0.05 * n(ks[7], (10,), jnp.float32),
        # DeepCORAL.fc: weight ~ N(0, 0.005) per reference __init__ (unused,
        # see TODO in deep_coral_forward).
        "fc_w": 0.005 * n(ks[8], (10, 500), jnp.float32),
        "fc_b": 0.05 * n(ks[9], (10,), jnp.float32),
    }


def prepare_params(raw, dtype=COMPUTE_DTYPE):
    """PyTorch-layout weights -> kernel-ready, lane-padded matmul operands.
    All K and N dims padded to multiples of 128 (zero rows/columns); weights
    cast to the compute dtype, biases kept f32 (added on the f32 accumulator).
    """
    p = {}
    # Conv2d(1, 20, 5): (20,1,5,5) -> (25, 20) -> zero-pad K 25->128, N 20->128.
    p["conv1_w"] = _pad_to(raw["conv1_w"].reshape(20, 25).T,
                           (128, 128)).astype(dtype)
    p["conv1_b"] = _pad_to(raw["conv1_b"].reshape(1, 20), (1, 128))
    # Conv2d(20, 50, 5): in-channels padded 20->128 so conv1's 128-lane output
    # feeds im2col with no lane slice.  Row order (c_pad, kh, kw) matches the
    # im2col feature order; rows for channels 20..127 are zero.
    w = jnp.zeros((50, 128, 5, 5), jnp.float32).at[:, :20].set(raw["conv2_w"])
    p["conv2_w"] = _pad_to(w.reshape(50, 128 * 25).T,
                           (3200, 128)).astype(dtype)       # (3200, 128)
    p["conv2_b"] = _pad_to(raw["conv2_b"].reshape(1, 50), (1, 128))
    # fc1: rows reordered from PyTorch's (c, h, w) flatten order to
    # (h, w, c_pad) over the 128-lane conv2 output so `flat` is a plain
    # reshape; rows for padded channels 50..127 are zero.  K=16*128=2048.
    w = raw["fc1_w"].reshape(500, 50, 4, 4)                  # (out, c, h, w)
    w = jnp.transpose(w, (0, 2, 3, 1))                       # (out, h, w, c)
    w = jnp.zeros((500, 4, 4, 128), jnp.float32).at[..., :50].set(w)
    p["fc1_w"] = _pad_to(w.reshape(500, 2048).T, (2048, 512)).astype(dtype)
    p["fc1_b"] = _pad_to(raw["fc1_b"].reshape(1, 500), (1, 512))
    # fc2: (10, 500) -> (500, 10) -> zero-pad K 500->512, N 10->128.
    p["fc2_w"] = _pad_to(raw["fc2_w"].T, (512, 128)).astype(dtype)
    p["fc2_b"] = _pad_to(raw["fc2_b"].reshape(1, 10), (1, 128))
    return p


# ------------------------------ Forward pass -------------------------------- #

def deep_coral_forward(source_nchw, target_nchw, p, dtype=COMPUTE_DTYPE):
    b = source_nchw.shape[0]
    # Run source and target through the shared network in ONE batched pass.
    x = jnp.concatenate([source_nchw, target_nchw], axis=0)      # (2B,1,28,28)
    x = jnp.transpose(x, (0, 2, 3, 1)).astype(dtype)             # NHWC

    # Conv2d(1,20,5) -> MaxPool2d(2) -> ReLU   (single fused kernel, K->128)
    cols4, (bb, hp, wp) = im2col_pool_groups(x, 5, k_pad=128)    # (4, 2B*144, 128)
    y = pallas_conv_pool_relu(cols4, p["conv1_w"], p["conv1_b"], dtype)
    y = y.reshape(bb, hp, wp, 128)        # no lane slice: channels 20..127 == 0

    # Conv2d(20,50,5) -> Dropout2d(eval: identity) -> MaxPool2d(2) -> ReLU
    cols4, (bb, hp, wp) = im2col_pool_groups(y, 5)               # (4, 2B*16, 3200)
    y = pallas_conv_pool_relu(cols4, p["conv2_w"], p["conv2_b"], dtype)

    # Plain flatten (fc1 rows pre-ordered/zero-padded to (h, w, c_pad)), then
    # fc1 -> ReLU -> dropout(identity) -> fc2 in one fused kernel.
    flat = y.reshape(bb, hp * wp * 128)                          # (2B, 2048)
    logits = pallas_mlp_head(flat, p["fc1_w"], p["fc1_b"],
                             p["fc2_w"], p["fc2_b"])[:, :10]     # (2B, 10)

    # TODO(synk): the reference then applies self.fc (Linear(500,10)) to these
    # 10-dim logits (a shape mismatch / runtime error in the original PyTorch)
    # and calls the nonexistent `self.Classifier` on the target path; fc
    # params are initialized but not applied, and LeNetClassifier is used for
    # both paths.
    return logits[:b], logits[b:]


# ----------------------------------- main ----------------------------------- #

if __name__ == "__main__":
    key = jax.random.PRNGKey(0)
    k_p, k_s, k_t = jax.random.split(key, 3)

    params = prepare_params(init_raw_params(k_p))

    # LeNet encoder requires 28x28 single-channel inputs (fc1 expects 50*4*4).
    source = jax.random.normal(k_s, (2, 1, 28, 28), jnp.float32)
    target = jax.random.normal(k_t, (2, 1, 28, 28), jnp.float32)

    fwd = jax.jit(lambda s, t: deep_coral_forward(s, t, params))
    src_out, tgt_out = fwd(source, target)
    jax.block_until_ready((src_out, tgt_out))

    assert src_out.shape == (2, 10) and tgt_out.shape == (2, 10)
    assert bool(jnp.all(jnp.isfinite(src_out))) and bool(jnp.all(jnp.isfinite(tgt_out)))
    print("KERNEL_OK")
</pallas_src>

<mosaic_0001>
module attributes {stable_mosaic.version = 11 : i64} {
  func.func @conv_pool_relu_kernel(%arg0: i32, %arg1: memref<4x288x128xbf16, #tpu.memory_space<vmem>>, %arg2: memref<128x128xbf16, #tpu.memory_space<vmem>>, %arg3: memref<1x128xf32, #tpu.memory_space<vmem>>, %arg4: memref<288x128xbf16, #tpu.memory_space<vmem>>) attributes {dimension_semantics = [#tpu.dimension_semantics<parallel>], iteration_bounds = array<i64: 2>, scalar_prefetch = 0 : i64, scratch_operands = 0 : i64, tpu.core_type = #tpu.core_type<tc>, window_params = [{transform_indices = @transform_0, window_bounds = array<i64: 4, 288, 128>}, {pipeline_mode = #tpu.pipeline_mode<synchronous>, transform_indices = @transform_1, window_bounds = array<i64: 128, 128>}, {pipeline_mode = #tpu.pipeline_mode<synchronous>, transform_indices = @transform_2, window_bounds = array<i64: 1, 128>}, {transform_indices = @transform_3, window_bounds = array<i64: 288, 128>}]} {
    %c0 = arith.constant 0 : index
    %c0_0 = arith.constant 0 : index
    %c0_1 = arith.constant 0 : index
    %0 = vector.load %arg1[%c0, %c0_0, %c0_1] : memref<4x288x128xbf16, #tpu.memory_space<vmem>>, vector<4x288x128xbf16>
    %1 = vector.shape_cast %0 : vector<4x288x128xbf16> to vector<1152x128xbf16>
    %c0_2 = arith.constant 0 : index
    %c0_3 = arith.constant 0 : index
    %2 = vector.load %arg2[%c0_2, %c0_3] : memref<128x128xbf16, #tpu.memory_space<vmem>>, vector<128x128xbf16>
    %cst = arith.constant dense<0.000000e+00> : vector<1152x128xf32>
    %3 = tpu.matmul %1, %2, %cst {dimension_numbers = #tpu.dot_dimension_numbers<[1], [0], [0], [1], [0, 0, 1, 1], [], []>} : vector<1152x128xbf16>, vector<128x128xbf16>, vector<1152x128xf32> -> vector<1152x128xf32>
    %4 = vector.extract_strided_slice %3 {offsets = [0, 0], sizes = [288, 128], strides = [1, 1]} : vector<1152x128xf32> to vector<288x128xf32>
    %5 = vector.extract_strided_slice %3 {offsets = [288, 0], sizes = [288, 128], strides = [1, 1]} : vector<1152x128xf32> to vector<288x128xf32>
    %6 = arith.maximumf %4, %5 : vector<288x128xf32>
    %7 = vector.extract_strided_slice %3 {offsets = [576, 0], sizes = [288, 128], strides = [1, 1]} : vector<1152x128xf32> to vector<288x128xf32>
    %8 = vector.extract_strided_slice %3 {offsets = [864, 0], sizes = [288, 128], strides = [1, 1]} : vector<1152x128xf32> to vector<288x128xf32>
    %9 = arith.maximumf %7, %8 : vector<288x128xf32>
    %10 = arith.maximumf %6, %9 : vector<288x128xf32>
    %c0_4 = arith.constant 0 : index
    %c0_5 = arith.constant 0 : index
    %11 = vector.load %arg3[%c0_4, %c0_5] : memref<1x128xf32, #tpu.memory_space<vmem>>, vector<1x128xf32>
    %12 = vector.broadcast %11 : vector<1x128xf32> to vector<288x128xf32>
    %13 = arith.addf %10, %12 : vector<288x128xf32>
    %cst_6 = arith.constant 0.000000e+00 : f32
    %14 = vector.broadcast %cst_6 : f32 to vector<288x128xf32>
    %15 = arith.maximumf %13, %14 : vector<288x128xf32>
    %16 = arith.truncf %15 : vector<288x128xf32> to vector<288x128xbf16>
    %c0_7 = arith.constant 0 : index
    %c0_8 = arith.constant 0 : index
    %17 = vector.load %arg4[%c0_7, %c0_8] : memref<288x128xbf16, #tpu.memory_space<vmem>>, vector<288x128xbf16>
    tpu.vector_store %arg4[%c0_7, %c0_8], %16 {strides = array<i32>} : memref<288x128xbf16, #tpu.memory_space<vmem>>, vector<288x128xbf16>,
    return
  }
  func.func @transform_0(%arg0: i32) -> (i32, i32, i32) {
    %c0_i32 = arith.constant 0 : i32
    %c0_i32_0 = arith.constant 0 : i32
    %c0_i32_1 = arith.constant 0 : i32
    return %c0_i32, %arg0, %c0_i32_0 : i32, i32, i32
  }
  func.func @transform_1(%arg0: i32) -> (i32, i32) {
    %c0_i32 = arith.constant 0 : i32
    %c0_i32_0 = arith.constant 0 : i32
    %c0_i32_1 = arith.constant 0 : i32
    return %c0_i32, %c0_i32_0 : i32, i32
  }
  func.func @transform_2(%arg0: i32) -> (i32, i32) {
    %c0_i32 = arith.constant 0 : i32
    %c0_i32_0 = arith.constant 0 : i32
    %c0_i32_1 = arith.constant 0 : i32
    return %c0_i32, %c0_i32_0 : i32, i32
  }
  func.func @transform_3(%arg0: i32) -> (i32, i32) {
    %c0_i32 = arith.constant 0 : i32
    %c0_i32_0 = arith.constant 0 : i32
    return %arg0, %c0_i32 : i32, i32
  }
}

module attributes {stable_mosaic.version = 11 : i64} {
  func.func @conv_pool_relu_kernel(%arg0: i32, %arg1: memref<4x64x3200xbf16, #tpu.memory_space<vmem>>, %arg2: memref<3200x128xbf16, #tpu.memory_space<vmem>>, %arg3: memref<1x128xf32, #tpu.memory_space<vmem>>, %arg4: memref<64x128xbf16, #tpu.memory_space<vmem>>) attributes {dimension_semantics = [#tpu.dimension_semantics<parallel>], iteration_bounds = array<i64: 1>, scalar_prefetch = 0 : i64, scratch_operands = 0 : i64, tpu.core_type = #tpu.core_type<tc>, window_params = [{transform_indices = @transform_0, window_bounds = array<i64: 4, 64, 3200>}, {pipeline_mode = #tpu.pipeline_mode<synchronous>, transform_indices = @transform_1, window_bounds = array<i64: 3200, 128>}, {pipeline_mode = #tpu.pipeline_mode<synchronous>, transform_indices = @transform_2, window_bounds = array<i64: 1, 128>}, {transform_indices = @transform_3, window_bounds = array<i64: 64, 128>}]} {
    %c0 = arith.constant 0 : index
    %c0_0 = arith.constant 0 : index
    %c0_1 = arith.constant 0 : index
    %0 = vector.load %arg1[%c0, %c0_0, %c0_1] : memref<4x64x3200xbf16, #tpu.memory_space<vmem>>, vector<4x64x3200xbf16>
    %1 = vector.shape_cast %0 : vector<4x64x3200xbf16> to vector<256x3200xbf16>
    %c0_2 = arith.constant 0 : index
    %c0_3 = arith.constant 0 : index
    %2 = vector.load %arg2[%c0_2, %c0_3] : memref<3200x128xbf16, #tpu.memory_space<vmem>>, vector<3200x128xbf16>
    %cst = arith.constant dense<0.000000e+00> : vector<256x128xf32>
    %3 = tpu.matmul %1, %2, %cst {dimension_numbers = #tpu.dot_dimension_numbers<[1], [0], [0], [1], [0, 0, 1, 1], [], []>} : vector<256x3200xbf16>, vector<3200x128xbf16>, vector<256x128xf32> -> vector<256x128xf32>
    %4 = vector.extract_strided_slice %3 {offsets = [0, 0], sizes = [64, 128], strides = [1, 1]} : vector<256x128xf32> to vector<64x128xf32>
    %5 = vector.extract_strided_slice %3 {offsets = [64, 0], sizes = [64, 128], strides = [1, 1]} : vector<256x128xf32> to vector<64x128xf32>
    %6 = arith.maximumf %4, %5 : vector<64x128xf32>
    %7 = vector.extract_strided_slice %3 {offsets = [128, 0], sizes = [64, 128], strides = [1, 1]} : vector<256x128xf32> to vector<64x128xf32>
    %8 = vector.extract_strided_slice %3 {offsets = [192, 0], sizes = [64, 128], strides = [1, 1]} : vector<256x128xf32> to vector<64x128xf32>
    %9 = arith.maximumf %7, %8 : vector<64x128xf32>
    %10 = arith.maximumf %6, %9 : vector<64x128xf32>
    %c0_4 = arith.constant 0 : index
    %c0_5 = arith.constant 0 : index
    %11 = vector.load %arg3[%c0_4, %c0_5] : memref<1x128xf32, #tpu.memory_space<vmem>>, vector<1x128xf32>
    %12 = vector.broadcast %11 : vector<1x128xf32> to vector<64x128xf32>
    %13 = arith.addf %10, %12 : vector<64x128xf32>
    %cst_6 = arith.constant 0.000000e+00 : f32
    %14 = vector.broadcast %cst_6 : f32 to vector<64x128xf32>
    %15 = arith.maximumf %13, %14 : vector<64x128xf32>
    %16 = arith.truncf %15 : vector<64x128xf32> to vector<64x128xbf16>
    %c0_7 = arith.constant 0 : index
    %c0_8 = arith.constant 0 : index
    %17 = vector.load %arg4[%c0_7, %c0_8] : memref<64x128xbf16, #tpu.memory_space<vmem>>, vector<64x128xbf16>
    tpu.vector_store %arg4[%c0_7, %c0_8], %16 {strides = array<i32>} : memref<64x128xbf16, #tpu.memory_space<vmem>>, vector<64x128xbf16>,
    return
  }
  func.func @transform_0(%arg0: i32) -> (i32, i32, i32) {
    %c0_i32 = arith.constant 0 : i32
    %c0_i32_0 = arith.constant 0 : i32
    %c0_i32_1 = arith.constant 0 : i32
    return %c0_i32, %arg0, %c0_i32_0 : i32, i32, i32
  }
  func.func @transform_1(%arg0: i32) -> (i32, i32) {
    %c0_i32 = arith.constant 0 : i32
    %c0_i32_0 = arith.constant 0 : i32
    %c0_i32_1 = arith.constant 0 : i32
    return %c0_i32, %c0_i32_0 : i32, i32
  }
  func.func @transform_2(%arg0: i32) -> (i32, i32) {
    %c0_i32 = arith.constant 0 : i32
    %c0_i32_0 = arith.constant 0 : i32
    %c0_i32_1 = arith.constant 0 : i32
    return %c0_i32, %c0_i32_0 : i32, i32
  }
  func.func @transform_3(%arg0: i32) -> (i32, i32) {
    %c0_i32 = arith.constant 0 : i32
    %c0_i32_0 = arith.constant 0 : i32
    return %arg0, %c0_i32 : i32, i32
  }
}

module attributes {stable_mosaic.version = 11 : i64} {
  func.func @mlp_head_kernel(%arg0: i32, %arg1: memref<4x2048xbf16, #tpu.memory_space<vmem>>, %arg2: memref<2048x512xbf16, #tpu.memory_space<vmem>>, %arg3: memref<1x512xf32, #tpu.memory_space<vmem>>, %arg4: memref<512x128xbf16, #tpu.memory_space<vmem>>, %arg5: memref<1x128xf32, #tpu.memory_space<vmem>>, %arg6: memref<4x128xf32, #tpu.memory_space<vmem>>) attributes {dimension_semantics = [#tpu.dimension_semantics<parallel>], iteration_bounds = array<i64: 1>, scalar_prefetch = 0 : i64, scratch_operands = 0 : i64, tpu.core_type = #tpu.core_type<tc>, window_params = [{transform_indices = @transform_0, window_bounds = array<i64: 4, 2048>}, {pipeline_mode = #tpu.pipeline_mode<synchronous>, transform_indices = @transform_1, window_bounds = array<i64: 2048, 512>}, {pipeline_mode = #tpu.pipeline_mode<synchronous>, transform_indices = @transform_2, window_bounds = array<i64: 1, 512>}, {pipeline_mode = #tpu.pipeline_mode<synchronous>, transform_indices = @transform_3, window_bounds = array<i64: 512, 128>}, {pipeline_mode = #tpu.pipeline_mode<synchronous>, transform_indices = @transform_4, window_bounds = array<i64: 1, 128>}, {transform_indices = @transform_5, window_bounds = array<i64: 4, 128>}]} {
    %c0 = arith.constant 0 : index
    %c0_0 = arith.constant 0 : index
    %0 = vector.load %arg1[%c0, %c0_0] : memref<4x2048xbf16, #tpu.memory_space<vmem>>, vector<4x2048xbf16>
    %c0_1 = arith.constant 0 : index
    %c0_2 = arith.constant 0 : index
    %1 = vector.load %arg2[%c0_1, %c0_2] : memref<2048x512xbf16, #tpu.memory_space<vmem>>, vector<2048x512xbf16>
    %cst = arith.constant dense<0.000000e+00> : vector<4x512xf32>
    %2 = tpu.matmul %0, %1, %cst {dimension_numbers = #tpu.dot_dimension_numbers<[1], [0], [0], [1], [0, 0, 1, 1], [], []>} : vector<4x2048xbf16>, vector<2048x512xbf16>, vector<4x512xf32> -> vector<4x512xf32>
    %c0_3 = arith.constant 0 : index
    %c0_4 = arith.constant 0 : index
    %3 = vector.load %arg3[%c0_3, %c0_4] : memref<1x512xf32, #tpu.memory_space<vmem>>, vector<1x512xf32>
    %4 = vector.broadcast %3 : vector<1x512xf32> to vector<4x512xf32>
    %5 = arith.addf %2, %4 : vector<4x512xf32>
    %cst_5 = arith.constant 0.000000e+00 : f32
    %6 = vector.broadcast %cst_5 : f32 to vector<4x512xf32>
    %7 = arith.maximumf %5, %6 : vector<4x512xf32>
    %8 = arith.truncf %7 : vector<4x512xf32> to vector<4x512xbf16>
    %c0_6 = arith.constant 0 : index
    %c0_7 = arith.constant 0 : index
    %9 = vector.load %arg4[%c0_6, %c0_7] : memref<512x128xbf16, #tpu.memory_space<vmem>>, vector<512x128xbf16>
    %cst_8 = arith.constant dense<0.000000e+00> : vector<4x128xf32>
    %10 = tpu.matmul %8, %9, %cst_8 {dimension_numbers = #tpu.dot_dimension_numbers<[1], [0], [0], [1], [0, 0, 1, 1], [], []>} : vector<4x512xbf16>, vector<512x128xbf16>, vector<4x128xf32> -> vector<4x128xf32>
    %c0_9 = arith.constant 0 : index
    %c0_10 = arith.constant 0 : index
    %11 = vector.load %arg5[%c0_9, %c0_10] : memref<1x128xf32, #tpu.memory_space<vmem>>, vector<1x128xf32>
    %12 = vector.broadcast %11 : vector<1x128xf32> to vector<4x128xf32>
    %13 = arith.addf %10, %12 : vector<4x128xf32>
    %c0_11 = arith.constant 0 : index
    %c0_12 = arith.constant 0 : index
    %14 = vector.load %arg6[%c0_11, %c0_12] : memref<4x128xf32, #tpu.memory_space<vmem>>, vector<4x128xf32>
    tpu.vector_store %arg6[%c0_11, %c0_12], %13 {strides = array<i32>} : memref<4x128xf32, #tpu.memory_space<vmem>>, vector<4x128xf32>,
    return
  }
  func.func @transform_0(%arg0: i32) -> (i32, i32) {
    %c0_i32 = arith.constant 0 : i32
    %c0_i32_0 = arith.constant 0 : i32
    return %arg0, %c0_i32 : i32, i32
  }
  func.func @transform_1(%arg0: i32) -> (i32, i32) {
    %c0_i32 = arith.constant 0 : i32
    %c0_i32_0 = arith.constant 0 : i32
    %c0_i32_1 = arith.constant 0 : i32
    return %c0_i32, %c0_i32_0 : i32, i32
  }
  func.func @transform_2(%arg0: i32) -> (i32, i32) {
    %c0_i32 = arith.constant 0 : i32
    %c0_i32_0 = arith.constant 0 : i32
    %c0_i32_1 = arith.constant 0 : i32
    return %c0_i32, %c0_i32_0 : i32, i32
  }
  func.func @transform_3(%arg0: i32) -> (i32, i32) {
    %c0_i32 = arith.constant 0 : i32
    %c0_i32_0 = arith.constant 0 : i32
    %c0_i32_1 = arith.constant 0 : i32
    return %c0_i32, %c0_i32_0 : i32, i32
  }
  func.func @transform_4(%arg0: i32) -> (i32, i32) {
    %c0_i32 = arith.constant 0 : i32
    %c0_i32_0 = arith.constant 0 : i32
    %c0_i32_1 = arith.constant 0 : i32
    return %c0_i32, %c0_i32_0 : i32, i32
  }
  func.func @transform_5(%arg0: i32) -> (i32, i32) {
    %c0_i32 = arith.constant 0 : i32
    %c0_i32_0 = arith.constant 0 : i32
    return %arg0, %c0_i32 : i32, i32
  }
}

</mosaic_0001>

<llo_original>
// kernel: _lambda_.3
$region0: #{_lambda_.3}
  #allocation0 [shape = 'u32[]', space=smem, size = 0x4, offset = 0x4, fixed_abs, tag = 'smem constant byte address 0x4 - core index']
  #allocation1 [shape = 'u32[144,128]{1,0:T(1,128)}', space=vmem, size = 0x12000, scoped, tag = 'internal scratch']
  %s0 = inlined_call_operand.vmem [shape: bf16[4,576,128], index: 0, kind: input, shape index: {}]
  %s1 = inlined_call_operand.vmem [shape: bf16[128,128], index: 1, kind: input, shape index: {}]
  %s2 = inlined_call_operand.vmem [shape: f32[1,128], index: 2, kind: input, shape index: {}]
  %s3 = inlined_call_operand.vmem [shape: bf16[576,128], index: 3, kind: output, shape index: {}]
  %s4 = sld [smem:[#allocation0]]
  $region86: #{_lambda_.3} parent=0
    _
  %s6 = ssub.s32 1, %s4
  %s7 = scalar_select 0, %s6, %s4
  $region1: #{_lambda_.3} parent=0
    #allocation2 [shape = 'u8[589824]{0}', space=vmem, size = 0x90000, scoped, tag = 'input window, operand 0']
    loop: start=0, step=1, limit=4
    $region2: #{_lambda_.3} parent=1 // loop_pre_header
      _
    $region3: #{_lambda_.3} parent=1 // loop_header
      %s9 = sphi 0, %s13
      %p10 = scmp.ge.s32.totalorder %s9, 4
      %s19 = sphi 0, %s21
      %s22 = sphi 0, %s19
      %s23 = sphi 0, %s22
      %s39 = sphi 0, %s23
      %s43 = sphi 0, %s43
      %s45 = sphi 0, %s43
      %s46 = sphi 0, %s45
      %s60 = sphi 0, %s46
      %s64 = sphi 0, %s64
      %s66 = sphi 0, %s64
      %s67 = sphi 0, %s66
      %s81 = sphi 0, %s67
      %s87 = sphi 0, %s89
      %s90 = sphi 0, %s87
      %s91 = sphi 0, %s90
      %s107 = sphi 0, %s91
    $region4: #{_lambda_.3} parent=1 // loop_header_branch
      %12 = sbr.rel (%p10) target = $region8
    $region5: #{_lambda_.3} parent=1 // loop_body
      %s14 = ssub.s32 %s9, 1
      %s15 = ssub.s32 %s9, 2
      %s16 = sadd.s32 %s9, 1
      %s17 = ssub.s32 %s9, %s16
      %p18 = scmp.eq.s32.totalorder %s17, 0
      %s20 = sadd.s32 %s19, 1
      %s21 = scalar_select %p18, %s19, %s20
      %p24 = pneg %p18
      %p25 = scmp.eq.s32.totalorder %s9, 1
      %p26 = por %p24, %p25
      %p27 = scmp.ne.s32.totalorder %s19, %s22
      %p28 = scmp.eq.s32.totalorder %s9, 0
      %p29 = por %p27, %p28
      %p30 = scmp.ne.s32.totalorder %s19, %s22
      %p31 = scmp.eq.s32.totalorder %s14, 1
      %p32 = por %p30, %p31
      %p33 = scmp.ne.s32.totalorder %s22, %s23
      %p34 = scmp.eq.s32.totalorder %s14, 0
      %p35 = por %p33, %p34
      %p36 = scmp.ne.s32.totalorder %s22, %s23
      %p37 = scmp.eq.s32.totalorder %s15, 1
      %p38 = por %p36, %p37
      %p40 = scmp.ne.s32.totalorder %s23, %s39
      %p41 = scmp.eq.s32.totalorder %s15, 0
      %p42 = por %p40, %p41
      %s44 = sadd.s32 %s43, 1
      %p47 = scmp.eq.s32.totalorder %s9, 1
      %p48 = scmp.ne.s32.totalorder %s43, %s45
      %p49 = scmp.eq.s32.totalorder %s9, 0
      %p50 = por %p48, %p49
      %p51 = scmp.ne.s32.totalorder %s43, %s45
      %p52 = scmp.eq.s32.totalorder %s14, 1
      %p53 = por %p51, %p52
      %p54 = scmp.ne.s32.totalorder %s45, %s46
      %p55 = scmp.eq.s32.totalorder %s14, 0
      %p56 = por %p54, %p55
      %p57 = scmp.ne.s32.totalorder %s45, %s46
      %p58 = scmp.eq.s32.totalorder %s15, 1
      %p59 = por %p57, %p58
      %p61 = scmp.ne.s32.totalorder %s46, %s60
      %p62 = scmp.eq.s32.totalorder %s15, 0
      %p63 = por %p61, %p62
      %s65 = sadd.s32 %s64, 1
      %p68 = scmp.eq.s32.totalorder %s9, 1
      %p69 = scmp.ne.s32.totalorder %s64, %s66
      %p70 = scmp.eq.s32.totalorder %s9, 0
      %p71 = por %p69, %p70
      %p72 = scmp.ne.s32.totalorder %s64, %s66
      %p73 = scmp.eq.s32.totalorder %s14, 1
      %p74 = por %p72, %p73
      %p75 = scmp.ne.s32.totalorder %s66, %s67
      %p76 = scmp.eq.s32.totalorder %s14, 0
      %p77 = por %p75, %p76
      %p78 = scmp.ne.s32.totalorder %s66, %s67
      %p79 = scmp.eq.s32.totalorder %s15, 1
      %p80 = por %p78, %p79
      %p82 = scmp.ne.s32.totalorder %s67, %s81
      %p83 = scmp.eq.s32.totalorder %s15, 0
      %p84 = por %p82, %p83
      %s85 = ssub.s32 %s9, %s16
      %p86 = scmp.eq.s32.totalorder %s85, 0
      %s88 = sadd.s32 %s87, 1
      %s89 = scalar_select %p86, %s87, %s88
      %p92 = pneg %p86
      %p93 = scmp.eq.s32.totalorder %s9, 1
      %p94 = por %p92, %p93
      %p95 = scmp.ne.s32.totalorder %s87, %s90
      %p96 = scmp.eq.s32.totalorder %s9, 0
      %p97 = por %p95, %p96
      %p98 = scmp.ne.s32.totalorder %s87, %s90
      %p99 = scmp.eq.s32.totalorder %s14, 1
      %p100 = por %p98, %p99
      %p101 = scmp.ne.s32.totalorder %s90, %s91
      %p102 = scmp.eq.s32.totalorder %s14, 0
      %p103 = por %p101, %p102
      %p104 = scmp.ne.s32.totalorder %s90, %s91
      %p105 = scmp.eq.s32.totalorder %s15, 1
      %p106 = por %p104, %p105
      %p108 = scmp.ne.s32.totalorder %s91, %s107
      %p109 = scmp.eq.s32.totalorder %s15, 0
      %p110 = por %p108, %p109
      %p111 = scmp.le.s32.totalorder 1, %s9
      %p112 = scmp.lt.s32.totalorder %s9, 3
      %p113 = pnand %p111, %p112
      %p114 = pneg %p113
      // Predicated region
      $region9: #{_lambda_.3} parent=5 // pred_check
        _
      $region10: #{_lambda_.3} parent=5 // pred_check_branch
        %116 = sbr.rel (%p113) target = $region12
      $region11: #{_lambda_.3} parent=5 // pred_region
        %s117 = ssub.s32 %s9, 1
        // Predicated region
        $region13: #{_lambda_.3} parent=11 // pred_check
          %p118 = pneg %p56
        $region14: #{_lambda_.3} parent=11 // pred_check_branch
          %120 = sbr.rel (%p118) target = $region16
        $region15: #{_lambda_.3} parent=11 // pred_region
          _
        $region16: #{_lambda_.3} parent=11 // pred_fallthru
          _
        // Predicated region
        $region17: #{_lambda_.3} parent=11 // pred_check
          %p121 = pneg %p77
        $region18: #{_lambda_.3} parent=11 // pred_check_branch
          %123 = sbr.rel (%p121) target = $region20
        $region19: #{_lambda_.3} parent=11 // pred_region
          _
        $region20: #{_lambda_.3} parent=11 // pred_fallthru
          _
      $region12: #{_lambda_.3} parent=5 // pred_fallthru
        _
      %p124 = scmp.lt.s32.totalorder %s9, 2
      // Predicated region
      $region21: #{_lambda_.3} parent=5 // pred_check
        %p125 = pneg %p124
      $region22: #{_lambda_.3} parent=5 // pred_check_branch
        %127 = sbr.rel (%p125) target = $region24
      $region23: #{_lambda_.3} parent=5 // pred_region
        // Predicated region
        $region25: #{_lambda_.3} parent=23 // pred_check
          %p128 = pneg %p29
        $region26: #{_lambda_.3} parent=23 // pred_check_branch
          %130 = sbr.rel (%p128) target = $region28
        $region27: #{_lambda_.3} parent=23 // pred_region
          %s131 = sand.u32 %s19, 1
          %s132 = sand.u32 %s19, 1
          %s133 = smul.addr %s132, 576
          %s134 = scalar_lea.vmem [#allocation2], %s133
          %s135 = smul.u32 36, %s9
          %s136 = smul.addr %s135, 4
          %s137 = scalar_lea.vmem %s0, %s136
          // Predicated region
          $region29: #{_lambda_.3} parent=27 // pred_check
            _
          $region30: #{_lambda_.3} parent=27 // pred_check_branch
            %139 = sbr.rel (0) target = $region32
          $region31: #{_lambda_.3} parent=27 // pred_region
            // Predicated region
            $region33: #{_lambda_.3} parent=31 // pred_check
              _
            $region34: #{_lambda_.3} parent=31 // pred_check_branch
              %141 = sbr.rel target = $region36
            $region35: #{_lambda_.3} parent=31 // pred_region
              // Predicated region
              $region48: #{_lambda_.3} parent=35 // pred_check
                _
              $region49: #{_lambda_.3} parent=35 // pred_check_branch
                %442 = sbr.rel (0) target = $region51
              $region50: #{_lambda_.3} parent=35 // pred_region
                loop: start=0, step=1, limit=1
                $region52: #{_lambda_.3} parent=50 // loop_pre_header
                  _
                $region53: #{_lambda_.3} parent=50 // loop_header
                  %s444 = sphi 0, %s448
                  %p445 = scmp.ge.s32.totalorder %s444, 1
                  %s449 = sphi %s137, %s137
                  %s450 = sphi %s134, %s134
                $region54: #{_lambda_.3} parent=50 // loop_header_branch
                  %447 = sbr.rel (%p445) target = $region58
                $region55: #{_lambda_.3} parent=50 // loop_body
                  _
                $region56: #{_lambda_.3} parent=50 // loop_footer
                  %s448 = sadd.s32 1, %s444
                $region57: #{_lambda_.3} parent=50 // loop_footer_branch
                  %443 = sbr.rel target = $region53
                $region58: #{_lambda_.3} parent=50 // loop_exit
                  _
                loop: start=0, step=1, limit=1
                $region59: #{_lambda_.3} parent=50 // loop_pre_header
                  _
                $region60: #{_lambda_.3} parent=50 // loop_header
                  %s453 = sphi 0, %s457
                  %p454 = scmp.ge.s32.totalorder %s453, 1
                  %s458 = sphi %s137, %s137
                  %s459 = sphi %s134, %s134
                $region61: #{_lambda_.3} parent=50 // loop_header_branch
                  %456 = sbr.rel (%p454) target = $region65
                $region62: #{_lambda_.3} parent=50 // loop_body
                  %v460 = vld [vmem:[%s458] sm:$0xf]
                  %461 = vst [vmem:[%s459] sm:$0xf] %v460
                  %v462 = vld [vmem:[%s458 + $0x4] sm:$0xf]
                  %463 = vst [vmem:[%s459 + $0x4] sm:$0xf] %v462
                  %v464 = vld [vmem:[%s458 + $0x8] sm:$0xf]
                  %465 = vst [vmem:[%s459 + $0x8] sm:$0xf] %v464
                  %v466 = vld [vmem:[%s458 + $0xc] sm:$0xf]
                  %467 = vst [vmem:[%s459 + $0xc] sm:$0xf] %v466
                  %v468 = vld [vmem:[%s458 + $0x10] sm:$0xf]
                  %469 = vst [vmem:[%s459 + $0x10] sm:$0xf] %v468
                  %v470 = vld [vmem:[%s458 + $0x14] sm:$0xf]
                  %471 = vst [vmem:[%s459 + $0x14] sm:$0xf] %v470
                  %v472 = vld [vmem:[%s458 + $0x18] sm:$0xf]
                  %473 = vst [vmem:[%s459 + $0x18] sm:$0xf] %v472
                  %v474 = vld [vmem:[%s458 + $0x1c] sm:$0xf]
                  %475 = vst [vmem:[%s459 + $0x1c] sm:$0xf] %v474
                  %v476 = vld [vmem:[%s458 + $0x20] sm:$0xf]
                  %477 = vst [vmem:[%s459 + $0x20] sm:$0xf] %v476
                  %v478 = vld [vmem:[%s458 + $0x24] sm:$0xf]
                  %479 = vst [vmem:[%s459 + $0x24] sm:$0xf] %v478
                  %v480 = vld [vmem:[%s458 + $0x28] sm:$0xf]
                  %481 = vst [vmem:[%s459 + $0x28] sm:$0xf] %v480
                  %v482 = vld [vmem:[%s458 + $0x2c] sm:$0xf]
                  %483 = vst [vmem:[%s459 + $0x2c] sm:$0xf] %v482
                  %v484 = vld [vmem:[%s458 + $0x30] sm:$0xf]
                  %485 = vst [vmem:[%s459 + $0x30] sm:$0xf] %v484
                  %v486 = vld [vmem:[%s458 + $0x34] sm:$0xf]
                  %487 = vst [vmem:[%s459 + $0x34] sm:$0xf] %v486
                  %v488 = vld [vmem:[%s458 + $0x38] sm:$0xf]
                  %489 = vst [vmem:[%s459 + $0x38] sm:$0xf] %v488
                  %v490 = vld [vmem:[%s458 + $0x3c] sm:$0xf]
                  %491 = vst [vmem:[%s459 + $0x3c] sm:$0xf] %v490
                  %v492 = vld [vmem:[%s458 + $0x40] sm:$0xf]
                  %493 = vst [vmem:[%s459 + $0x40] sm:$0xf] %v492
                  %v494 = vld [vmem:[%s458 + $0x44] sm:$0xf]
                  %495 = vst [vmem:[%s459 + $0x44] sm:$0xf] %v494
                  %v496 = vld [vmem:[%s458 + $0x48] sm:$0xf]
                  %497 = vst [vmem:[%s459 + $0x48] sm:$0xf] %v496
                  %v498 = vld [vmem:[%s458 + $0x4c] sm:$0xf]
                  %499 = vst [vmem:[%s459 + $0x4c] sm:$0xf] %v498
                  %v500 = vld [vmem:[%s458 + $0x50] sm:$0xf]
                  %501 = vst [vmem:[%s459 + $0x50] sm:$0xf] %v500
                  %v502 = vld [vmem:[%s458 + $0x54] sm:$0xf]
                  %503 = vst [vmem:[%s459 + $0x54] sm:$0xf] %v502
                  %v504 = vld [vmem:[%s458 + $0x58] sm:$0xf]
                  %505 = vst [vmem:[%s459 + $0x58] sm:$0xf] %v504
                  %v506 = vld [vmem:[%s458 + $0x5c] sm:$0xf]
                  %507 = vst [vmem:[%s459 + $0x5c] sm:$0xf] %v506
                  %v508 = vld [vmem:[%s458 + $0x60] sm:$0xf]
                  %509 = vst [vmem:[%s459 + $0x60] sm:$0xf] %v508
                  %v510 = vld [vmem:[%s458 + $0x64] sm:$0xf]
                  %511 = vst [vmem:[%s459 + $0x64] sm:$0xf] %v510
                  %v512 = vld [vmem:[%s458 + $0x68] sm:$0xf]
                  %513 = vst [vmem:[%s459 + $0x68] sm:$0xf] %v512
                  %v514 = vld [vmem:[%s458 + $0x6c] sm:$0xf]
                  %515 = vst [vmem:[%s459 + $0x6c] sm:$0xf] %v514
                  %v516 = vld [vmem:[%s458 + $0x70] sm:$0xf]
                  %517 = vst [vmem:[%s459 + $0x70] sm:$0xf] %v516
                  %v518 = vld [vmem:[%s458 + $0x74] sm:$0xf]
                  %519 = vst [vmem:[%s459 + $0x74] sm:$0xf] %v518
                  %v520 = vld [vmem:[%s458 + $0x78] sm:$0xf]
                  %521 = vst [vmem:[%s459 + $0x78] sm:$0xf] %v520
                  %v522 = vld [vmem:[%s458 + $0x7c] sm:$0xf]
                  %523 = vst [vmem:[%s459 + $0x7c] sm:$0xf] %v522
                  %v524 = vld [vmem:[%s458 + $0x80] sm:$0xf]
                  %525 = vst [vmem:[%s459 + $0x80] sm:$0xf] %v524
                  %v526 = vld [vmem:[%s458 + $0x84] sm:$0xf]
                  %527 = vst [vmem:[%s459 + $0x84] sm:$0xf] %v526
                  %v528 = vld [vmem:[%s458 + $0x88] sm:$0xf]
                  %529 = vst [vmem:[%s459 + $0x88] sm:$0xf] %v528
                  %v530 = vld [vmem:[%s458 + $0x8c] sm:$0xf]
                  %531 = vst [vmem:[%s459 + $0x8c] sm:$0xf] %v530
                  %v532 = vld [vmem:[%s458 + $0x120] sm:$0xf]
                  %533 = vst [vmem:[%s459 + $0x90] sm:$0xf] %v532
                  %v534 = vld [vmem:[%s458 + $0x124] sm:$0xf]
                  %535 = vst [vmem:[%s459 + $0x94] sm:$0xf] %v534
                  %v536 = vld [vmem:[%s458 + $0x128] sm:$0xf]
                  %537 = vst [vmem:[%s459 + $0x98] sm:$0xf] %v536
                  %v538 = vld [vmem:[%s458 + $0x12c] sm:$0xf]
                  %539 = vst [vmem:[%s459 + $0x9c] sm:$0xf] %v538
                  %v540 = vld [vmem:[%s458 + $0x130] sm:$0xf]
                  %541 = vst [vmem:[%s459 + $0xa0] sm:$0xf] %v540
                  %v542 = vld [vmem:[%s458 + $0x134] sm:$0xf]
                  %543 = vst [vmem:[%s459 + $0xa4] sm:$0xf] %v542
                  %v544 = vld [vmem:[%s458 + $0x138] sm:$0xf]
                  %545 = vst [vmem:[%s459 + $0xa8] sm:$0xf] %v544
                  %v546 = vld [vmem:[%s458 + $0x13c] sm:$0xf]
                  %547 = vst [vmem:[%s459 + $0xac] sm:$0xf] %v546
                  %v548 = vld [vmem:[%s458 + $0x140] sm:$0xf]
                  %549 = vst [vmem:[%s459 + $0xb0] sm:$0xf] %v548
                  %v550 = vld [vmem:[%s458 + $0x144] sm:$0xf]
                  %551 = vst [vmem:[%s459 + $0xb4] sm:$0xf] %v550
                  %v552 = vld [vmem:[%s458 + $0x148] sm:$0xf]
                  %553 = vst [vmem:[%s459 + $0xb8] sm:$0xf] %v552
                  %v554 = vld [vmem:[%s458 + $0x14c] sm:$0xf]
                  %555 = vst [vmem:[%s459 + $0xbc] sm:$0xf] %v554
                  %v556 = vld [vmem:[%s458 + $0x150] sm:$0xf]
                  %557 = vst [vmem:[%s459 + $0xc0] sm:$0xf] %v556
                  %v558 = vld [vmem:[%s458 + $0x154] sm:$0xf]
                  %559 = vst [vmem:[%s459 + $0xc4] sm:$0xf] %v558
                  %v560 = vld [vmem:[%s458 + $0x158] sm:$0xf]
                  %561 = vst [vmem:[%s459 + $0xc8] sm:$0xf] %v560
                  %v562 = vld [vmem:[%s458 + $0x15c] sm:$0xf]
                  %563 = vst [vmem:[%s459 + $0xcc] sm:$0xf] %v562
                  %v564 = vld [vmem:[%s458 + $0x160] sm:$0xf]
                  %565 = vst [vmem:[%s459 + $0xd0] sm:$0xf] %v564
                  %v566 = vld [vmem:[%s458 + $0x164] sm:$0xf]
                  %567 = vst [vmem:[%s459 + $0xd4] sm:$0xf] %v566
                  %v568 = vld [vmem:[%s458 + $0x168] sm:$0xf]
                  %569 = vst [vmem:[%s459 + $0xd8] sm:$0xf] %v568
                  %v570 = vld [vmem:[%s458 + $0x16c] sm:$0xf]
                  %571 = vst [vmem:[%s459 + $0xdc] sm:$0xf] %v570
                  %v572 = vld [vmem:[%s458 + $0x170] sm:$0xf]
                  %573 = vst [vmem:[%s459 + $0xe0] sm:$0xf] %v572
                  %v574 = vld [vmem:[%s458 + $0x174] sm:$0xf]
                  %575 = vst [vmem:[%s459 + $0xe4] sm:$0xf] %v574
                  %v576 = vld [vmem:[%s458 + $0x178] sm:$0xf]
                  %577 = vst [vmem:[%s459 + $0xe8] sm:$0xf] %v576
                  %v578 = vld [vmem:[%s458 + $0x17c] sm:$0xf]
                  %579 = vst [vmem:[%s459 + $0xec] sm:$0xf] %v578
                  %v580 = vld [vmem:[%s458 + $0x180] sm:$0xf]
                  %581 = vst [vmem:[%s459 + $0xf0] sm:$0xf] %v580
                  %v582 = vld [vmem:[%s458 + $0x184] sm:$0xf]
                  %583 = vst [vmem:[%s459 + $0xf4] sm:$0xf] %v582
                  %v584 = vld [vmem:[%s458 + $0x188] sm:$0xf]
                  %585 = vst [vmem:[%s459 + $0xf8] sm:$0xf] %v584
                  %v586 = vld [vmem:[%s458 + $0x18c] sm:$0xf]
                  %587 = vst [vmem:[%s459 + $0xfc] sm:$0xf] %v586
                  %v588 = vld [vmem:[%s458 + $0x190] sm:$0xf]
                  %589 = vst [vmem:[%s459 + $0x100] sm:$0xf] %v588
                  %v590 = vld [vmem:[%s458 + $0x194] sm:$0xf]
                  %591 = vst [vmem:[%s459 + $0x104] sm:$0xf] %v590
                  %v592 = vld [vmem:[%s458 + $0x198] sm:$0xf]
                  %593 = vst [vmem:[%s459 + $0x108] sm:$0xf] %v592
                  %v594 = vld [vmem:[%s458 + $0x19c] sm:$0xf]
                  %595 = vst [vmem:[%s459 + $0x10c] sm:$0xf] %v594
                  %v596 = vld [vmem:[%s458 + $0x1a0] sm:$0xf]
                  %597 = vst [vmem:[%s459 + $0x110] sm:$0xf] %v596
                  %v598 = vld [vmem:[%s458 + $0x1a4] sm:$0xf]
                  %599 = vst [vmem:[%s459 + $0x114] sm:$0xf] %v598
                  %v600 = vld [vmem:[%s458 + $0x1a8] sm:$0xf]
                  %601 = vst [vmem:[%s459 + $0x118] sm:$0xf] %v600
                  %v602 = vld [vmem:[%s458 + $0x1ac] sm:$0xf]
                  %603 = vst [vmem:[%s459 + $0x11c] sm:$0xf] %v602
                  %v604 = vld [vmem:[%s458 + $0x240] sm:$0xf]
                  %605 = vst [vmem:[%s459 + $0x120] sm:$0xf] %v604
                  %v606 = vld [vmem:[%s458 + $0x244] sm:$0xf]
                  %607 = vst [vmem:[%s459 + $0x124] sm:$0xf] %v606
                  %v608 = vld [vmem:[%s458 + $0x248] sm:$0xf]
                  %609 = vst [vmem:[%s459 + $0x128] sm:$0xf] %v608
                  %v610 = vld [vmem:[%s458 + $0x24c] sm:$0xf]
                  %611 = vst [vmem:[%s459 + $0x12c] sm:$0xf] %v610
                  %v612 = vld [vmem:[%s458 + $0x250] sm:$0xf]
                  %613 = vst [vmem:[%s459 + $0x130] sm:$0xf] %v612
                  %v614 = vld [vmem:[%s458 + $0x254] sm:$0xf]
                  %615 = vst [vmem:[%s459 + $0x134] sm:$0xf] %v614
                  %v616 = vld [vmem:[%s458 + $0x258] sm:$0xf]
                  %617 = vst [vmem:[%s459 + $0x138] sm:$0xf] %v616
                  %v618 = vld [vmem:[%s458 + $0x25c] sm:$0xf]
                  %619 = vst [vmem:[%s459 + $0x13c] sm:$0xf] %v618
                  %v620 = vld [vmem:[%s458 + $0x260] sm:$0xf]
                  %621 = vst [vmem:[%s459 + $0x140] sm:$0xf] %v620
                  %v622 = vld [vmem:[%s458 + $0x264] sm:$0xf]
                  %623 = vst [vmem:[%s459 + $0x144] sm:$0xf] %v622
                  %v624 = vld [vmem:[%s458 + $0x268] sm:$0xf]
                  %625 = vst [vmem:[%s459 + $0x148] sm:$0xf] %v624
                  %v626 = vld [vmem:[%s458 + $0x26c] sm:$0xf]
                  %627 = vst [vmem:[%s459 + $0x14c] sm:$0xf] %v626
                  %v628 = vld [vmem:[%s458 + $0x270] sm:$0xf]
                  %629 = vst [vmem:[%s459 + $0x150] sm:$0xf] %v628
                  %v630 = vld [vmem:[%s458 + $0x274] sm:$0xf]
                  %631 = vst [vmem:[%s459 + $0x154] sm:$0xf] %v630
                  %v632 = vld [vmem:[%s458 + $0x278] sm:$0xf]
                  %633 = vst [vmem:[%s459 + $0x158] sm:$0xf] %v632
                  %v634 = vld [vmem:[%s458 + $0x27c] sm:$0xf]
                  %635 = vst [vmem:[%s459 + $0x15c] sm:$0xf] %v634
                  %v636 = vld [vmem:[%s458 + $0x280] sm:$0xf]
                  %637 = vst [vmem:[%s459 + $0x160] sm:$0xf] %v636
                  %v638 = vld [vmem:[%s458 + $0x284] sm:$0xf]
                  %639 = vst [vmem:[%s459 + $0x164] sm:$0xf] %v638
                  %v640 = vld [vmem:[%s458 + $0x288] sm:$0xf]
                  %641 = vst [vmem:[%s459 + $0x168] sm:$0xf] %v640
                  %v642 = vld [vmem:[%s458 + $0x28c] sm:$0xf]
                  %643 = vst [vmem:[%s459 + $0x16c] sm:$0xf] %v642
                  %v644 = vld [vmem:[%s458 + $0x290] sm:$0xf]
                  %645 = vst [vmem:[%s459 + $0x170] sm:$0xf] %v644
                  %v646 = vld [vmem:[%s458 + $0x294] sm:$0xf]
                  %647 = vst [vmem:[%s459 + $0x174] sm:$0xf] %v646
                  %v648 = vld [vmem:[%s458 + $0x298] sm:$0xf]
                  %649 = vst [vmem:[%s459 + $0x178] sm:$0xf] %v648
                  %v650 = vld [vmem:[%s458 + $0x29c] sm:$0xf]
                  %651 = vst [vmem:[%s459 + $0x17c] sm:$0xf] %v650
                  %v652 = vld [vmem:[%s458 + $0x2a0] sm:$0xf]
                  %653 = vst [vmem:[%s459 + $0x180] sm:$0xf] %v652
                  %v654 = vld [vmem:[%s458 + $0x2a4] sm:$0xf]
                  %655 = vst [vmem:[%s459 + $0x184] sm:$0xf] %v654
                  %v656 = vld [vmem:[%s458 + $0x2a8] sm:$0xf]
                  %657 = vst [vmem:[%s459 + $0x188] sm:$0xf] %v656
                  %v658 = vld [vmem:[%s458 + $0x2ac] sm:$0xf]
                  %659 = vst [vmem:[%s459 + $0x18c] sm:$0xf] %v658
                  %v660 = vld [vmem:[%s458 + $0x2b0] sm:$0xf]
                  %661 = vst [vmem:[%s459 + $0x190] sm:$0xf] %v660
                  %v662 = vld [vmem:[%s458 + $0x2b4] sm:$0xf]
                  %663 = vst [vmem:[%s459 + $0x194] sm:$0xf] %v662
                  %v664 = vld [vmem:[%s458 + $0x2b8] sm:$0xf]
                  %665 = vst [vmem:[%s459 + $0x198] sm:$0xf] %v664
                  %v666 = vld [vmem:[%s458 + $0x2bc] sm:$0xf]
                  %667 = vst [vmem:[%s459 + $0x19c] sm:$0xf] %v666
                  %v668 = vld [vmem:[%s458 + $0x2c0] sm:$0xf]
                  %669 = vst [vmem:[%s459 + $0x1a0] sm:$0xf] %v668
                  %v670 = vld [vmem:[%s458 + $0x2c4] sm:$0xf]
                  %671 = vst [vmem:[%s459 + $0x1a4] sm:$0xf] %v670
                  %v672 = vld [vmem:[%s458 + $0x2c8] sm:$0xf]
                  %673 = vst [vmem:[%s459 + $0x1a8] sm:$0xf] %v672
                  %v674 = vld [vmem:[%s458 + $0x2cc] sm:$0xf]
                  %675 = vst [vmem:[%s459 + $0x1ac] sm:$0xf] %v674
                  %v676 = vld [vmem:[%s458 + $0x360] sm:$0xf]
                  %677 = vst [vmem:[%s459 + $0x1b0] sm:$0xf] %v676
                  %v678 = vld [vmem:[%s458 + $0x364] sm:$0xf]
                  %679 = vst [vmem:[%s459 + $0x1b4] sm:$0xf] %v678
                  %v680 = vld [vmem:[%s458 + $0x368] sm:$0xf]
                  %681 = vst [vmem:[%s459 + $0x1b8] sm:$0xf] %v680
                  %v682 = vld [vmem:[%s458 + $0x36c] sm:$0xf]
                  %683 = vst [vmem:[%s459 + $0x1bc] sm:$0xf] %v682
                  %v684 = vld [vmem:[%s458 + $0x370] sm:$0xf]
                  %685 = vst [vmem:[%s459 + $0x1c0] sm:$0xf] %v684
                  %v686 = vld [vmem:[%s458 + $0x374] sm:$0xf]
                  %687 = vst [vmem:[%s459 + $0x1c4] sm:$0xf] %v686
                  %v688 = vld [vmem:[%s458 + $0x378] sm:$0xf]
                  %689 = vst [vmem:[%s459 + $0x1c8] sm:$0xf] %v688
                  %v690 = vld [vmem:[%s458 + $0x37c] sm:$0xf]
                  %691 = vst [vmem:[%s459 + $0x1cc] sm:$0xf] %v690
                  %v692 = vld [vmem:[%s458 + $0x380] sm:$0xf]
                  %693 = vst [vmem:[%s459 + $0x1d0] sm:$0xf] %v692
                  %v694 = vld [vmem:[%s458 + $0x384] sm:$0xf]
                  %695 = vst [vmem:[%s459 + $0x1d4] sm:$0xf] %v694
                  %v696 = vld [vmem:[%s458 + $0x388] sm:$0xf]
                  %697 = vst [vmem:[%s459 + $0x1d8] sm:$0xf] %v696
                  %v698 = vld [vmem:[%s458 + $0x38c] sm:$0xf]
                  %699 = vst [vmem:[%s459 + $0x1dc] sm:$0xf] %v698
                  %v700 = vld [vmem:[%s458 + $0x390] sm:$0xf]
                  %701 = vst [vmem:[%s459 + $0x1e0] sm:$0xf] %v700
                  %v702 = vld [vmem:[%s458 + $0x394] sm:$0xf]
                  %703 = vst [vmem:[%s459 + $0x1e4] sm:$0xf] %v702
                  %v704 = vld [vmem:[%s458 + $0x398] sm:$0xf]
                  %705 = vst [vmem:[%s459 + $0x1e8] sm:$0xf] %v704
                  %v706 = vld [vmem:[%s458 + $0x39c] sm:$0xf]
                  %707 = vst [vmem:[%s459 + $0x1ec] sm:$0xf] %v706
                  %v708 = vld [vmem:[%s458 + $0x3a0] sm:$0xf]
                  %709 = vst [vmem:[%s459 + $0x1f0] sm:$0xf] %v708
                  %v710 = vld [vmem:[%s458 + $0x3a4] sm:$0xf]
                  %711 = vst [vmem:[%s459 + $0x1f4] sm:$0xf] %v710
                  %v712 = vld [vmem:[%s458 + $0x3a8] sm:$0xf]
                  %713 = vst [vmem:[%s459 + $0x1f8] sm:$0xf] %v712
                  %v714 = vld [vmem:[%s458 + $0x3ac] sm:$0xf]
                  %715 = vst [vmem:[%s459 + $0x1fc] sm:$0xf] %v714
                  %v716 = vld [vmem:[%s458 + $0x3b0] sm:$0xf]
                  %717 = vst [vmem:[%s459 + $0x200] sm:$0xf] %v716
                  %v718 = vld [vmem:[%s458 + $0x3b4] sm:$0xf]
                  %719 = vst [vmem:[%s459 + $0x204] sm:$0xf] %v718
                  %v720 = vld [vmem:[%s458 + $0x3b8] sm:$0xf]
                  %721 = vst [vmem:[%s459 + $0x208] sm:$0xf] %v720
                  %v722 = vld [vmem:[%s458 + $0x3bc] sm:$0xf]
                  %723 = vst [vmem:[%s459 + $0x20c] sm:$0xf] %v722
                  %v724 = vld [vmem:[%s458 + $0x3c0] sm:$0xf]
                  %725 = vst [vmem:[%s459 + $0x210] sm:$0xf] %v724
                  %v726 = vld [vmem:[%s458 + $0x3c4] sm:$0xf]
                  %727 = vst [vmem:[%s459 + $0x214] sm:$0xf] %v726
                  %v728 = vld [vmem:[%s458 + $0x3c8] sm:$0xf]
                  %729 = vst [vmem:[%s459 + $0x218] sm:$0xf] %v728
                  %v730 = vld [vmem:[%s458 + $0x3cc] sm:$0xf]
                  %731 = vst [vmem:[%s459 + $0x21c] sm:$0xf] %v730
                  %v732 = vld [vmem:[%s458 + $0x3d0] sm:$0xf]
                  %733 = vst [vmem:[%s459 + $0x220] sm:$0xf] %v732
                  %v734 = vld [vmem:[%s458 + $0x3d4] sm:$0xf]
                  %735 = vst [vmem:[%s459 + $0x224] sm:$0xf] %v734
                  %v736 = vld [vmem:[%s458 + $0x3d8] sm:$0xf]
                  %737 = vst [vmem:[%s459 + $0x228] sm:$0xf] %v736
                  %v738 = vld [vmem:[%s458 + $0x3dc] sm:$0xf]
                  %739 = vst [vmem:[%s459 + $0x22c] sm:$0xf] %v738
                  %v740 = vld [vmem:[%s458 + $0x3e0] sm:$0xf]
                  %741 = vst [vmem:[%s459 + $0x230] sm:$0xf] %v740
                  %v742 = vld [vmem:[%s458 + $0x3e4] sm:$0xf]
                  %743 = vst [vmem:[%s459 + $0x234] sm:$0xf] %v742
                  %v744 = vld [vmem:[%s458 + $0x3e8] sm:$0xf]
                  %745 = vst [vmem:[%s459 + $0x238] sm:$0xf] %v744
                  %v746 = vld [vmem:[%s458 + $0x3ec] sm:$0xf]
                  %747 = vst [vmem:[%s459 + $0x23c] sm:$0xf] %v746
                $region63: #{_lambda_.3} parent=50 // loop_footer
                  %s457 = sadd.s32 1, %s453
                $region64: #{_lambda_.3} parent=50 // loop_footer_branch
                  %452 = sbr.rel target = $region60
                $region65: #{_lambda_.3} parent=50 // loop_exit
                  _
              $region51: #{_lambda_.3} parent=35 // pred_fallthru
                _
            $region36: #{_lambda_.3} parent=31 // pred_fallthru
              _
            // Predicated region
            $region37: #{_lambda_.3} parent=31 // pred_check
              _
            $region38: #{_lambda_.3} parent=31 // pred_check_branch
              %143 = sbr.rel (0) target = $region40
            $region39: #{_lambda_.3} parent=31 // pred_region
              loop: start=0, step=1, limit=1
              $region41: #{_lambda_.3} parent=39 // loop_pre_header
                _
              $region42: #{_lambda_.3} parent=39 // loop_header
                %s146 = sphi 0, %s150
                %p147 = scmp.ge.s32.totalorder %s146, 1
                %s151 = sphi %s137, %s137
                %s152 = sphi %s134, %s134
              $region43: #{_lambda_.3} parent=39 // loop_header_branch
                %149 = sbr.rel (%p147) target = $region47
              $region44: #{_lambda_.3} parent=39 // loop_body
                %v153 = vld [vmem:[%s151] sm:$0xf]
                %154 = vst [vmem:[%s152] sm:$0xf] %v153
                %v155 = vld [vmem:[%s151 + $0x4] sm:$0xf]
                %156 = vst [vmem:[%s152 + $0x4] sm:$0xf] %v155
                %v157 = vld [vmem:[%s151 + $0x8] sm:$0xf]
                %158 = vst [vmem:[%s152 + $0x8] sm:$0xf] %v157
                %v159 = vld [vmem:[%s151 + $0xc] sm:$0xf]
                %160 = vst [vmem:[%s152 + $0xc] sm:$0xf] %v159
                %v161 = vld [vmem:[%s151 + $0x10] sm:$0xf]
                %162 = vst [vmem:[%s152 + $0x10] sm:$0xf] %v161
                %v163 = vld [vmem:[%s151 + $0x14] sm:$0xf]
                %164 = vst [vmem:[%s152 + $0x14] sm:$0xf] %v163
                %v165 = vld [vmem:[%s151 + $0x18] sm:$0xf]
                %166 = vst [vmem:[%s152 + $0x18] sm:$0xf] %v165
                %v167 = vld [vmem:[%s151 + $0x1c] sm:$0xf]
                %168 = vst [vmem:[%s152 + $0x1c] sm:$0xf] %v167
                %v169 = vld [vmem:[%s151 + $0x20] sm:$0xf]
                %170 = vst [vmem:[%s152 + $0x20] sm:$0xf] %v169
                %v171 = vld [vmem:[%s151 + $0x24] sm:$0xf]
                %172 = vst [vmem:[%s152 + $0x24] sm:$0xf] %v171
                %v173 = vld [vmem:[%s151 + $0x28] sm:$0xf]
                %174 = vst [vmem:[%s152 + $0x28] sm:$0xf] %v173
                %v175 = vld [vmem:[%s151 + $0x2c] sm:$0xf]
                %176 = vst [vmem:[%s152 + $0x2c] sm:$0xf] %v175
                %v177 = vld [vmem:[%s151 + $0x30] sm:$0xf]
                %178 = vst [vmem:[%s152 + $0x30] sm:$0xf] %v177
                %v179 = vld [vmem:[%s151 + $0x34] sm:$0xf]
                %180 = vst [vmem:[%s152 + $0x34] sm:$0xf] %v179
                %v181 = vld [vmem:[%s151 + $0x38] sm:$0xf]
                %182 = vst [vmem:[%s152 + $0x38] sm:$0xf] %v181
                %v183 = vld [vmem:[%s151 + $0x3c] sm:$0xf]
                %184 = vst [vmem:[%s152 + $0x3c] sm:$0xf] %v183
                %v185 = vld [vmem:[%s151 + $0x40] sm:$0xf]
                %186 = vst [vmem:[%s152 + $0x40] sm:$0xf] %v185
                %v187 = vld [vmem:[%s151 + $0x44] sm:$0xf]
                %188 = vst [vmem:[%s152 + $0x44] sm:$0xf] %v187
                %v189 = vld [vmem:[%s151 + $0x48] sm:$0xf]
                %190 = vst [vmem:[%s152 + $0x48] sm:$0xf] %v189
                %v191 = vld [vmem:[%s151 + $0x4c] sm:$0xf]
                %192 = vst [vmem:[%s152 + $0x4c] sm:$0xf] %v191
                %v193 = vld [vmem:[%s151 + $0x50] sm:$0xf]
                %194 = vst [vmem:[%s152 + $0x50] sm:$0xf] %v193
                %v195 = vld [vmem:[%s151 + $0x54] sm:$0xf]
                %196 = vst [vmem:[%s152 + $0x54] sm:$0xf] %v195
                %v197 = vld [vmem:[%s151 + $0x58] sm:$0xf]
                %198 = vst [vmem:[%s152 + $0x58] sm:$0xf] %v197
                %v199 = vld [vmem:[%s151 + $0x5c] sm:$0xf]
                %200 = vst [vmem:[%s152 + $0x5c] sm:$0xf] %v199
                %v201 = vld [vmem:[%s151 + $0x60] sm:$0xf]
                %202 = vst [vmem:[%s152 + $0x60] sm:$0xf] %v201
                %v203 = vld [vmem:[%s151 + $0x64] sm:$0xf]
                %204 = vst [vmem:[%s152 + $0x64] sm:$0xf] %v203
                %v205 = vld [vmem:[%s151 + $0x68] sm:$0xf]
                %206 = vst [vmem:[%s152 + $0x68] sm:$0xf] %v205
                %v207 = vld [vmem:[%s151 + $0x6c] sm:$0xf]
                %208 = vst [vmem:[%s152 + $0x6c] sm:$0xf] %v207
                %v209 = vld [vmem:[%s151 + $0x70] sm:$0xf]
                %210 = vst [vmem:[%s152 + $0x70] sm:$0xf] %v209
                %v211 = vld [vmem:[%s151 + $0x74] sm:$0xf]
                %212 = vst [vmem:[%s152 + $0x74] sm:$0xf] %v211
                %v213 = vld [vmem:[%s151 + $0x78] sm:$0xf]
                %214 = vst [vmem:[%s152 + $0x78] sm:$0xf] %v213
                %v215 = vld [vmem:[%s151 + $0x7c] sm:$0xf]
                %216 = vst [vmem:[%s152 + $0x7c] sm:$0xf] %v215
                %v217 = vld [vmem:[%s151 + $0x80] sm:$0xf]
                %218 = vst [vmem:[%s152 + $0x80] sm:$0xf] %v217
                %v219 = vld [vmem:[%s151 + $0x84] sm:$0xf]
                %220 = vst [vmem:[%s152 + $0x84] sm:$0xf] %v219
                %v221 = vld [vmem:[%s151 + $0x88] sm:$0xf]
                %222 = vst [vmem:[%s152 + $0x88] sm:$0xf] %v221
                %v223 = vld [vmem:[%s151 + $0x8c] sm:$0xf]
                %224 = vst [vmem:[%s152 + $0x8c] sm:$0xf] %v223
                %v225 = vld [vmem:[%s151 + $0x120] sm:$0xf]
                %226 = vst [vmem:[%s152 + $0x90] sm:$0xf] %v225
                %v227 = vld [vmem:[%s151 + $0x124] sm:$0xf]
                %228 = vst [vmem:[%s152 + $0x94] sm:$0xf] %v227
                %v229 = vld [vmem:[%s151 + $0x128] sm:$0xf]
                %230 = vst [vmem:[%s152 + $0x98] sm:$0xf] %v229
                %v231 = vld [vmem:[%s151 + $0x12c] sm:$0xf]
                %232 = vst [vmem:[%s152 + $0x9c] sm:$0xf] %v231
                %v233 = vld [vmem:[%s151 + $0x130] sm:$0xf]
                %234 = vst [vmem:[%s152 + $0xa0] sm:$0xf] %v233
                %v235 = vld [vmem:[%s151 + $0x134] sm:$0xf]
                %236 = vst [vmem:[%s152 + $0xa4] sm:$0xf] %v235
                %v237 = vld [vmem:[%s151 + $0x138] sm:$0xf]
                %238 = vst [vmem:[%s152 + $0xa8] sm:$0xf] %v237
                %v239 = vld [vmem:[%s151 + $0x13c] sm:$0xf]
                %240 = vst [vmem:[%s152 + $0xac] sm:$0xf] %v239
                %v241 = vld [vmem:[%s151 + $0x140] sm:$0xf]
                %242 = vst [vmem:[%s152 + $0xb0] sm:$0xf] %v241
                %v243 = vld [vmem:[%s151 + $0x144] sm:$0xf]
                %244 = vst [vmem:[%s152 + $0xb4] sm:$0xf] %v243
                %v245 = vld [vmem:[%s151 + $0x148] sm:$0xf]
                %246 = vst [vmem:[%s152 + $0xb8] sm:$0xf] %v245
                %v247 = vld [vmem:[%s151 + $0x14c] sm:$0xf]
                %248 = vst [vmem:[%s152 + $0xbc] sm:$0xf] %v247
                %v249 = vld [vmem:[%s151 + $0x150] sm:$0xf]
                %250 = vst [vmem:[%s152 + $0xc0] sm:$0xf] %v249
                %v251 = vld [vmem:[%s151 + $0x154] sm:$0xf]
                %252 = vst [vmem:[%s152 + $0xc4] sm:$0xf] %v251
                %v253 = vld [vmem:[%s151 + $0x158] sm:$0xf]
                %254 = vst [vmem:[%s152 + $0xc8] sm:$0xf] %v253
                %v255 = vld [vmem:[%s151 + $0x15c] sm:$0xf]
                %256 = vst [vmem:[%s152 + $0xcc] sm:$0xf] %v255
                %v257 = vld [vmem:[%s151 + $0x160] sm:$0xf]
                %258 = vst [vmem:[%s152 + $0xd0] sm:$0xf] %v257
                %v259 = vld [vmem:[%s151 + $0x164] sm:$0xf]
                %260 = vst [vmem:[%s152 + $0xd4] sm:$0xf] %v259
                %v261 = vld [vmem:[%s151 + $0x168] sm:$0xf]
                %262 = vst [vmem:[%s152 + $0xd8] sm:$0xf] %v261
                %v263 = vld [vmem:[%s151 + $0x16c] sm:$0xf]
                %264 = vst [vmem:[%s152 + $0xdc] sm:$0xf] %v263
                %v265 = vld [vmem:[%s151 + $0x170] sm:$0xf]
                %266 = vst [vmem:[%s152 + $0xe0] sm:$0xf] %v265
                %v267 = vld [vmem:[%s151 + $0x174] sm:$0xf]
                %268 = vst [vmem:[%s152 + $0xe4] sm:$0xf] %v267
                %v269 = vld [vmem:[%s151 + $0x178] sm:$0xf]
                %270 = vst [vmem:[%s152 + $0xe8] sm:$0xf] %v269
                %v271 = vld [vmem:[%s151 + $0x17c] sm:$0xf]
                %272 = vst [vmem:[%s152 + $0xec] sm:$0xf] %v271
                %v273 = vld [vmem:[%s151 + $0x180] sm:$0xf]
                %274 = vst [vmem:[%s152 + $0xf0] sm:$0xf] %v273
                %v275 = vld [vmem:[%s151 + $0x184] sm:$0xf]
                %276 = vst [vmem:[%s152 + $0xf4] sm:$0xf] %v275
                %v277 = vld [vmem:[%s151 + $0x188] sm:$0xf]
                %278 = vst [vmem:[%s152 + $0xf8] sm:$0xf] %v277
                %v279 = vld [vmem:[%s151 + $0x18c] sm:$0xf]
                %280 = vst [vmem:[%s152 + $0xfc] sm:$0xf] %v279
                %v281 = vld [vmem:[%s151 + $0x190] sm:$0xf]
                %282 = vst [vmem:[%s152 + $0x100] sm:$0xf] %v281
                %v283 = vld [vmem:[%s151 + $0x194] sm:$0xf]
                %284 = vst [vmem:[%s152 + $0x104] sm:$0xf] %v283
                %v285 = vld [vmem:[%s151 + $0x198] sm:$0xf]
                %286 = vst [vmem:[%s152 + $0x108] sm:$0xf] %v285
                %v287 = vld [vmem:[%s151 + $0x19c] sm:$0xf]
                %288 = vst [vmem:[%s152 + $0x10c] sm:$0xf] %v287
                %v289 = vld [vmem:[%s151 + $0x1a0] sm:$0xf]
                %290 = vst [vmem:[%s152 + $0x110] sm:$0xf] %v289
                %v291 = vld [vmem:[%s151 + $0x1a4] sm:$0xf]
                %292 = vst [vmem:[%s152 + $0x114] sm:$0xf] %v291
                %v293 = vld [vmem:[%s151 + $0x1a8] sm:$0xf]
                %294 = vst [vmem:[%s152 + $0x118] sm:$0xf] %v293
                %v295 = vld [vmem:[%s151 + $0x1ac] sm:$0xf]
                %296 = vst [vmem:[%s152 + $0x11c] sm:$0xf] %v295
                %v297 = vld [vmem:[%s151 + $0x240] sm:$0xf]
                %298 = vst [vmem:[%s152 + $0x120] sm:$0xf] %v297
                %v299 = vld [vmem:[%s151 + $0x244] sm:$0xf]
                %300 = vst [vmem:[%s152 + $0x124] sm:$0xf] %v299
                %v301 = vld [vmem:[%s151 + $0x248] sm:$0xf]
                %302 = vst [vmem:[%s152 + $0x128] sm:$0xf] %v301
                %v303 = vld [vmem:[%s151 + $0x24c] sm:$0xf]
                %304 = vst [vmem:[%s152 + $0x12c] sm:$0xf] %v303
                %v305 = vld [vmem:[%s151 + $0x250] sm:$0xf]
                %306 = vst [vmem:[%s152 + $0x130] sm:$0xf] %v305
                %v307 = vld [vmem:[%s151 + $0x254] sm:$0xf]
                %308 = vst [vmem:[%s152 + $0x134] sm:$0xf] %v307
                %v309 = vld [vmem:[%s151 + $0x258] sm:$0xf]
                %310 = vst [vmem:[%s152 + $0x138] sm:$0xf] %v309
                %v311 = vld [vmem:[%s151 + $0x25c] sm:$0xf]
                %312 = vst [vmem:[%s152 + $0x13c] sm:$0xf] %v311
                %v313 = vld [vmem:[%s151 + $0x260] sm:$0xf]
                %314 = vst [vmem:[%s152 + $0x140] sm:$0xf] %v313
                %v315 = vld [vmem:[%s151 + $0x264] sm:$0xf]
                %316 = vst [vmem:[%s152 + $0x144] sm:$0xf] %v315
                %v317 = vld [vmem:[%s151 + $0x268] sm:$0xf]
                %318 = vst [vmem:[%s152 + $0x148] sm:$0xf] %v317
                %v319 = vld [vmem:[%s151 + $0x26c] sm:$0xf]
                %320 = vst [vmem:[%s152 + $0x14c] sm:$0xf] %v319
                %v321 = vld [vmem:[%s151 + $0x270] sm:$0xf]
                %322 = vst [vmem:[%s152 + $0x150] sm:$0xf] %v321
                %v323 = vld [vmem:[%s151 + $0x274] sm:$0xf]
                %324 = vst [vmem:[%s152 + $0x154] sm:$0xf] %v323
                %v325 = vld [vmem:[%s151 + $0x278] sm:$0xf]
                %326 = vst [vmem:[%s152 + $0x158] sm:$0xf] %v325
                %v327 = vld [vmem:[%s151 + $0x27c] sm:$0xf]
                %328 = vst [vmem:[%s152 + $0x15c] sm:$0xf] %v327
                %v329 = vld [vmem:[%s151 + $0x280] sm:$0xf]
                %330 = vst [vmem:[%s152 + $0x160] sm:$0xf] %v329
                %v331 = vld [vmem:[%s151 + $0x284] sm:$0xf]
                %332 = vst [vmem:[%s152 + $0x164] sm:$0xf] %v331
                %v333 = vld [vmem:[%s151 + $0x288] sm:$0xf]
                %334 = vst [vmem:[%s152 + $0x168] sm:$0xf] %v333
                %v335 = vld [vmem:[%s151 + $0x28c] sm:$0xf]
                %336 = vst [vmem:[%s152 + $0x16c] sm:$0xf] %v335
                %v337 = vld [vmem:[%s151 + $0x290] sm:$0xf]
                %338 = vst [vmem:[%s152 + $0x170] sm:$0xf] %v337
                %v339 = vld [vmem:[%s151 + $0x294] sm:$0xf]
                %340 = vst [vmem:[%s152 + $0x174] sm:$0xf] %v339
                %v341 = vld [vmem:[%s151 + $0x298] sm:$0xf]
                %342 = vst [vmem:[%s152 + $0x178] sm:$0xf] %v341
                %v343 = vld [vmem:[%s151 + $0x29c] sm:$0xf]
                %344 = vst [vmem:[%s152 + $0x17c] sm:$0xf] %v343
                %v345 = vld [vmem:[%s151 + $0x2a0] sm:$0xf]
                %346 = vst [vmem:[%s152 + $0x180] sm:$0xf] %v345
                %v347 = vld [vmem:[%s151 + $0x2a4] sm:$0xf]
                %348 = vst [vmem:[%s152 + $0x184] sm:$0xf] %v347
                %v349 = vld [vmem:[%s151 + $0x2a8] sm:$0xf]
                %350 = vst [vmem:[%s152 + $0x188] sm:$0xf] %v349
                %v351 = vld [vmem:[%s151 + $0x2ac] sm:$0xf]
                %352 = vst [vmem:[%s152 + $0x18c] sm:$0xf] %v351
                %v353 = vld [vmem:[%s151 + $0x2b0] sm:$0xf]
                %354 = vst [vmem:[%s152 + $0x190] sm:$0xf] %v353
                %v355 = vld [vmem:[%s151 + $0x2b4] sm:$0xf]
                %356 = vst [vmem:[%s152 + $0x194] sm:$0xf] %v355
                %v357 = vld [vmem:[%s151 + $0x2b8] sm:$0xf]
                %358 = vst [vmem:[%s152 + $0x198] sm:$0xf] %v357
                %v359 = vld [vmem:[%s151 + $0x2bc] sm:$0xf]
                %360 = vst [vmem:[%s152 + $0x19c] sm:$0xf] %v359
                %v361 = vld [vmem:[%s151 + $0x2c0] sm:$0xf]
                %362 = vst [vmem:[%s152 + $0x1a0] sm:$0xf] %v361
                %v363 = vld [vmem:[%s151 + $0x2c4] sm:$0xf]
                %364 = vst [vmem:[%s152 + $0x1a4] sm:$0xf] %v363
                %v365 = vld [vmem:[%s151 + $0x2c8] sm:$0xf]
                %366 = vst [vmem:[%s152 + $0x1a8] sm:$0xf] %v365
                %v367 = vld [vmem:[%s151 + $0x2cc] sm:$0xf]
                %368 = vst [vmem:[%s152 + $0x1ac] sm:$0xf] %v367
                %v369 = vld [vmem:[%s151 + $0x360] sm:$0xf]
                %370 = vst [vmem:[%s152 + $0x1b0] sm:$0xf] %v369
                %v371 = vld [vmem:[%s151 + $0x364] sm:$0xf]
                %372 = vst [vmem:[%s152 + $0x1b4] sm:$0xf] %v371
                %v373 = vld [vmem:[%s151 + $0x368] sm:$0xf]
                %374 = vst [vmem:[%s152 + $0x1b8] sm:$0xf] %v373
                %v375 = vld [vmem:[%s151 + $0x36c] sm:$0xf]
                %376 = vst [vmem:[%s152 + $0x1bc] sm:$0xf] %v375
                %v377 = vld [vmem:[%s151 + $0x370] sm:$0xf]
                %378 = vst [vmem:[%s152 + $0x1c0] sm:$0xf] %v377
                %v379 = vld [vmem:[%s151 + $0x374] sm:$0xf]
                %380 = vst [vmem:[%s152 + $0x1c4] sm:$0xf] %v379
                %v381 = vld [vmem:[%s151 + $0x378] sm:$0xf]
                %382 = vst [vmem:[%s152 + $0x1c8] sm:$0xf] %v381
                %v383 = vld [vmem:[%s151 + $0x37c] sm:$0xf]
                %384 = vst [vmem:[%s152 + $0x1cc] sm:$0xf] %v383
                %v385 = vld [vmem:[%s151 + $0x380] sm:$0xf]
                %386 = vst [vmem:[%s152 + $0x1d0] sm:$0xf] %v385
                %v387 = vld [vmem:[%s151 + $0x384] sm:$0xf]
                %388 = vst [vmem:[%s152 + $0x1d4] sm:$0xf] %v387
                %v389 = vld [vmem:[%s151 + $0x388] sm:$0xf]
                %390 = vst [vmem:[%s152 + $0x1d8] sm:$0xf] %v389
                %v391 = vld [vmem:[%s151 + $0x38c] sm:$0xf]
                %392 = vst [vmem:[%s152 + $0x1dc] sm:$0xf] %v391
                %v393 = vld [vmem:[%s151 + $0x390] sm:$0xf]
                %394 = vst [vmem:[%s152 + $0x1e0] sm:$0xf] %v393
                %v395 = vld [vmem:[%s151 + $0x394] sm:$0xf]
                %396 = vst [vmem:[%s152 + $0x1e4] sm:$0xf] %v395
                %v397 = vld [vmem:[%s151 + $0x398] sm:$0xf]
                %398 = vst [vmem:[%s152 + $0x1e8] sm:$0xf] %v397
                %v399 = vld [vmem:[%s151 + $0x39c] sm:$0xf]
                %400 = vst [vmem:[%s152 + $0x1ec] sm:$0xf] %v399
                %v401 = vld [vmem:[%s151 + $0x3a0] sm:$0xf]
                %402 = vst [vmem:[%s152 + $0x1f0] sm:$0xf] %v401
                %v403 = vld [vmem:[%s151 + $0x3a4] sm:$0xf]
                %404 = vst [vmem:[%s152 + $0x1f4] sm:$0xf] %v403
                %v405 = vld [vmem:[%s151 + $0x3a8] sm:$0xf]
                %406 = vst [vmem:[%s152 + $0x1f8] sm:$0xf] %v405
                %v407 = vld [vmem:[%s151 + $0x3ac] sm:$0xf]
                %408 = vst [vmem:[%s152 + $0x1fc] sm:$0xf] %v407
                %v409 = vld [vmem:[%s151 + $0x3b0] sm:$0xf]
                %410 = vst [vmem:[%s152 + $0x200] sm:$0xf] %v409
                %v411 = vld [vmem:[%s151 + $0x3b4] sm:$0xf]
                %412 = vst [vmem:[%s152 + $0x204] sm:$0xf] %v411
                %v413 = vld [vmem:[%s151 + $0x3b8] sm:$0xf]
                %414 = vst [vmem:[%s152 + $0x208] sm:$0xf] %v413
                %v415 = vld [vmem:[%s151 + $0x3bc] sm:$0xf]
                %416 = vst [vmem:[%s152 + $0x20c] sm:$0xf] %v415
                %v417 = vld [vmem:[%s151 + $0x3c0] sm:$0xf]
                %418 = vst [vmem:[%s152 + $0x210] sm:$0xf] %v417
                %v419 = vld [vmem:[%s151 + $0x3c4] sm:$0xf]
                %420 = vst [vmem:[%s152 + $0x214] sm:$0xf] %v419
                %v421 = vld [vmem:[%s151 + $0x3c8] sm:$0xf]
                %422 = vst [vmem:[%s152 + $0x218] sm:$0xf] %v421
                %v423 = vld [vmem:[%s151 + $0x3cc] sm:$0xf]
                %424 = vst [vmem:[%s152 + $0x21c] sm:$0xf] %v423
                %v425 = vld [vmem:[%s151 + $0x3d0] sm:$0xf]
                %426 = vst [vmem:[%s152 + $0x220] sm:$0xf] %v425
                %v427 = vld [vmem:[%s151 + $0x3d4] sm:$0xf]
                %428 = vst [vmem:[%s152 + $0x224] sm:$0xf] %v427
                %v429 = vld [vmem:[%s151 + $0x3d8] sm:$0xf]
                %430 = vst [vmem:[%s152 + $0x228] sm:$0xf] %v429
                %v431 = vld [vmem:[%s151 + $0x3dc] sm:$0xf]
                %432 = vst [vmem:[%s152 + $0x22c] sm:$0xf] %v431
                %v433 = vld [vmem:[%s151 + $0x3e0] sm:$0xf]
                %434 = vst [vmem:[%s152 + $0x230] sm:$0xf] %v433
                %v435 = vld [vmem:[%s151 + $0x3e4] sm:$0xf]
                %436 = vst [vmem:[%s152 + $0x234] sm:$0xf] %v435
                %v437 = vld [vmem:[%s151 + $0x3e8] sm:$0xf]
                %438 = vst [vmem:[%s152 + $0x238] sm:$0xf] %v437
                %v439 = vld [vmem:[%s151 + $0x3ec] sm:$0xf]
                %440 = vst [vmem:[%s152 + $0x23c] sm:$0xf] %v439
              $region45: #{_lambda_.3} parent=39 // loop_footer
                %s150 = sadd.s32 1, %s146
              $region46: #{_lambda_.3} parent=39 // loop_footer_branch
                %145 = sbr.rel target = $region42
              $region47: #{_lambda_.3} parent=39 // loop_exit
                _
            $region40: #{_lambda_.3} parent=31 // pred_fallthru
              _
          $region32: #{_lambda_.3} parent=27 // pred_fallthru
            _
          %748 = vnop
        $region28: #{_lambda_.3} parent=23 // pred_fallthru
          _
      $region24: #{_lambda_.3} parent=5 // pred_fallthru
        _
      %p749 = scmp.le.s32.totalorder 1, %s9
      %p750 = scmp.lt.s32.totalorder %s9, 3
      %p751 = pnand %p749, %p750
      %p752 = pneg %p751
      // Predicated region
      $region66: #{_lambda_.3} parent=5 // pred_check
        _
      $region67: #{_lambda_.3} parent=5 // pred_check_branch
        %754 = sbr.rel (%p751) target = $region69
      $region68: #{_lambda_.3} parent=5 // pred_region
        %s755 = ssub.s32 %s9, 1
        %s756 = sand.u32 %s22, 1
        %s757 = sand.u32 %s22, 1
        %s758 = smul.addr %s757, 576
        %s759 = scalar_lea.vmem [#allocation2], %s758
        // Predicated region
        $region70: #{_lambda_.3} parent=68 // pred_check
          %p760 = pneg %p35
        $region71: #{_lambda_.3} parent=68 // pred_check_branch
          %762 = sbr.rel (%p760) target = $region73
        $region72: #{_lambda_.3} parent=68 // pred_region
          _
        $region73: #{_lambda_.3} parent=68 // pred_fallthru
          _
        %s763 = sand.u32 %s22, 1
        %s764 = sand.u32 %s22, 1
        %s765 = smul.addr %s764, 576
        %s766 = scalar_lea.vmem [#allocation2], %s765
        %p767 = pneg %p35
        %p768 = pneg %p32
        %p769 = pneg %p56
        %p770 = pneg %p53
        %p771 = pneg %p77
        %p772 = pneg %p74
        %p773 = pneg %p103
        %p774 = pneg %p100
        %s775 = smul.u32 36, %s14
        %p776 = scmp.lt.s32.totalorder %s775, 71
        %s777 = scalar_select %p776, %s775, 71
        %s778 = smul.addr %s777, 4
        %s779 = scalar_lea.vmem %s3, %s778
        %s780 = smul.u32 36, %s14
        %s781 = smul.u32 36, %s14
        %p782 = scmp.lt.s32.totalorder %s781, 71
        %s783 = scalar_select %p782, %s781, 71
        %s784 = smul.addr %s783, 4
        %s785 = scalar_lea.vmem %s3, %s784
        %s786 = smul.u32 36, %s14
        %v788 = vld [vmem:[%s759] sm:$0xf]
        %v789 = vld [vmem:[%s759 + $0x4] sm:$0xf]
        %v790 = vld [vmem:[%s759 + $0x8] sm:$0xf]
        %v791 = vld [vmem:[%s759 + $0xc] sm:$0xf]
        %v792 = vld [vmem:[%s759 + $0x10] sm:$0xf]
        %v793 = vld [vmem:[%s759 + $0x14] sm:$0xf]
        %v794 = vld [vmem:[%s759 + $0x18] sm:$0xf]
        %v795 = vld [vmem:[%s759 + $0x1c] sm:$0xf]
        %v796 = vld [vmem:[%s759 + $0x20] sm:$0xf]
        %v797 = vld [vmem:[%s759 + $0x24] sm:$0xf]
        %v798 = vld [vmem:[%s759 + $0x28] sm:$0xf]
        %v799 = vld [vmem:[%s759 + $0x2c] sm:$0xf]
        %v800 = vld [vmem:[%s759 + $0x30] sm:$0xf]
        %v801 = vld [vmem:[%s759 + $0x34] sm:$0xf]
        %v802 = vld [vmem:[%s759 + $0x38] sm:$0xf]
        %v803 = vld [vmem:[%s759 + $0x3c] sm:$0xf]
        %v804 = vld [vmem:[%s759 + $0x40] sm:$0xf]
        %v805 = vld [vmem:[%s759 + $0x44] sm:$0xf]
        %v806 = vld [vmem:[%s759 + $0x48] sm:$0xf]
        %v807 = vld [vmem:[%s759 + $0x4c] sm:$0xf]
        %v808 = vld [vmem:[%s759 + $0x50] sm:$0xf]
        %v809 = vld [vmem:[%s759 + $0x54] sm:$0xf]
        %v810 = vld [vmem:[%s759 + $0x58] sm:$0xf]
        %v811 = vld [vmem:[%s759 + $0x5c] sm:$0xf]
        %v812 = vld [vmem:[%s759 + $0x60] sm:$0xf]
        %v813 = vld [vmem:[%s759 + $0x64] sm:$0xf]
        %v814 = vld [vmem:[%s759 + $0x68] sm:$0xf]
        %v815 = vld [vmem:[%s759 + $0x6c] sm:$0xf]
        %v816 = vld [vmem:[%s759 + $0x70] sm:$0xf]
        %v817 = vld [vmem:[%s759 + $0x74] sm:$0xf]
        %v818 = vld [vmem:[%s759 + $0x78] sm:$0xf]
        %v819 = vld [vmem:[%s759 + $0x7c] sm:$0xf]
        %v820 = vld [vmem:[%s759 + $0x80] sm:$0xf]
        %v821 = vld [vmem:[%s759 + $0x84] sm:$0xf]
        %v822 = vld [vmem:[%s759 + $0x88] sm:$0xf]
        %v823 = vld [vmem:[%s759 + $0x8c] sm:$0xf]
        %v824 = vld [vmem:[%s759 + $0x90] sm:$0xf]
        %v825 = vld [vmem:[%s759 + $0x94] sm:$0xf]
        %v826 = vld [vmem:[%s759 + $0x98] sm:$0xf]
        %v827 = vld [vmem:[%s759 + $0x9c] sm:$0xf]
        %v828 = vld [vmem:[%s759 + $0xa0] sm:$0xf]
        %v829 = vld [vmem:[%s759 + $0xa4] sm:$0xf]
        %v830 = vld [vmem:[%s759 + $0xa8] sm:$0xf]
        %v831 = vld [vmem:[%s759 + $0xac] sm:$0xf]
        %v832 = vld [vmem:[%s759 + $0xb0] sm:$0xf]
        %v833 = vld [vmem:[%s759 + $0xb4] sm:$0xf]
        %v834 = vld [vmem:[%s759 + $0xb8] sm:$0xf]
        %v835 = vld [vmem:[%s759 + $0xbc] sm:$0xf]
        %v836 = vld [vmem:[%s759 + $0xc0] sm:$0xf]
        %v837 = vld [vmem:[%s759 + $0xc4] sm:$0xf]
        %v838 = vld [vmem:[%s759 + $0xc8] sm:$0xf]
        %v839 = vld [vmem:[%s759 + $0xcc] sm:$0xf]
        %v840 = vld [vmem:[%s759 + $0xd0] sm:$0xf]
        %v841 = vld [vmem:[%s759 + $0xd4] sm:$0xf]
        %v842 = vld [vmem:[%s759 + $0xd8] sm:$0xf]
        %v843 = vld [vmem:[%s759 + $0xdc] sm:$0xf]
        %v844 = vld [vmem:[%s759 + $0xe0] sm:$0xf]
        %v845 = vld [vmem:[%s759 + $0xe4] sm:$0xf]
        %v846 = vld [vmem:[%s759 + $0xe8] sm:$0xf]
        %v847 = vld [vmem:[%s759 + $0xec] sm:$0xf]
        %v848 = vld [vmem:[%s759 + $0xf0] sm:$0xf]
        %v849 = vld [vmem:[%s759 + $0xf4] sm:$0xf]
        %v850 = vld [vmem:[%s759 + $0xf8] sm:$0xf]
        %v851 = vld [vmem:[%s759 + $0xfc] sm:$0xf]
        %v852 = vld [vmem:[%s759 + $0x100] sm:$0xf]
        %v853 = vld [vmem:[%s759 + $0x104] sm:$0xf]
        %v854 = vld [vmem:[%s759 + $0x108] sm:$0xf]
        %v855 = vld [vmem:[%s759 + $0x10c] sm:$0xf]
        %v856 = vld [vmem:[%s759 + $0x110] sm:$0xf]
        %v857 = vld [vmem:[%s759 + $0x114] sm:$0xf]
        %v858 = vld [vmem:[%s759 + $0x118] sm:$0xf]
        %v859 = vld [vmem:[%s759 + $0x11c] sm:$0xf]
        %v860 = vld [vmem:[%s759 + $0x120] sm:$0xf]
        %v861 = vld [vmem:[%s759 + $0x124] sm:$0xf]
        %v862 = vld [vmem:[%s759 + $0x128] sm:$0xf]
        %v863 = vld [vmem:[%s759 + $0x12c] sm:$0xf]
        %v864 = vld [vmem:[%s759 + $0x130] sm:$0xf]
        %v865 = vld [vmem:[%s759 + $0x134] sm:$0xf]
        %v866 = vld [vmem:[%s759 + $0x138] sm:$0xf]
        %v867 = vld [vmem:[%s759 + $0x13c] sm:$0xf]
        %v868 = vld [vmem:[%s759 + $0x140] sm:$0xf]
        %v869 = vld [vmem:[%s759 + $0x144] sm:$0xf]
        %v870 = vld [vmem:[%s759 + $0x148] sm:$0xf]
        %v871 = vld [vmem:[%s759 + $0x14c] sm:$0xf]
        %v872 = vld [vmem:[%s759 + $0x150] sm:$0xf]
        %v873 = vld [vmem:[%s759 + $0x154] sm:$0xf]
        %v874 = vld [vmem:[%s759 + $0x158] sm:$0xf]
        %v875 = vld [vmem:[%s759 + $0x15c] sm:$0xf]
        %v876 = vld [vmem:[%s759 + $0x160] sm:$0xf]
        %v877 = vld [vmem:[%s759 + $0x164] sm:$0xf]
        %v878 = vld [vmem:[%s759 + $0x168] sm:$0xf]
        %v879 = vld [vmem:[%s759 + $0x16c] sm:$0xf]
        %v880 = vld [vmem:[%s759 + $0x170] sm:$0xf]
        %v881 = vld [vmem:[%s759 + $0x174] sm:$0xf]
        %v882 = vld [vmem:[%s759 + $0x178] sm:$0xf]
        %v883 = vld [vmem:[%s759 + $0x17c] sm:$0xf]
        %v884 = vld [vmem:[%s759 + $0x180] sm:$0xf]
        %v885 = vld [vmem:[%s759 + $0x184] sm:$0xf]
        %v886 = vld [vmem:[%s759 + $0x188] sm:$0xf]
        %v887 = vld [vmem:[%s759 + $0x18c] sm:$0xf]
        %v888 = vld [vmem:[%s759 + $0x190] sm:$0xf]
        %v889 = vld [vmem:[%s759 + $0x194] sm:$0xf]
        %v890 = vld [vmem:[%s759 + $0x198] sm:$0xf]
        %v891 = vld [vmem:[%s759 + $0x19c] sm:$0xf]
        %v892 = vld [vmem:[%s759 + $0x1a0] sm:$0xf]
        %v893 = vld [vmem:[%s759 + $0x1a4] sm:$0xf]
        %v894 = vld [vmem:[%s759 + $0x1a8] sm:$0xf]
        %v895 = vld [vmem:[%s759 + $0x1ac] sm:$0xf]
        %v896 = vld [vmem:[%s759 + $0x1b0] sm:$0xf]
        %v897 = vld [vmem:[%s759 + $0x1b4] sm:$0xf]
        %v898 = vld [vmem:[%s759 + $0x1b8] sm:$0xf]
        %v899 = vld [vmem:[%s759 + $0x1bc] sm:$0xf]
        %v900 = vld [vmem:[%s759 + $0x1c0] sm:$0xf]
        %v901 = vld [vmem:[%s759 + $0x1c4] sm:$0xf]
        %v902 = vld [vmem:[%s759 + $0x1c8] sm:$0xf]
        %v903 = vld [vmem:[%s759 + $0x1cc] sm:$0xf]
        %v904 = vld [vmem:[%s759 + $0x1d0] sm:$0xf]
        %v905 = vld [vmem:[%s759 + $0x1d4] sm:$0xf]
        %v906 = vld [vmem:[%s759 + $0x1d8] sm:$0xf]
        %v907 = vld [vmem:[%s759 + $0x1dc] sm:$0xf]
        %v908 = vld [vmem:[%s759 + $0x1e0] sm:$0xf]
        %v909 = vld [vmem:[%s759 + $0x1e4] sm:$0xf]
        %v910 = vld [vmem:[%s759 + $0x1e8] sm:$0xf]
        %v911 = vld [vmem:[%s759 + $0x1ec] sm:$0xf]
        %v912 = vld [vmem:[%s759 + $0x1f0] sm:$0xf]
        %v913 = vld [vmem:[%s759 + $0x1f4] sm:$0xf]
        %v914 = vld [vmem:[%s759 + $0x1f8] sm:$0xf]
        %v915 = vld [vmem:[%s759 + $0x1fc] sm:$0xf]
        %v916 = vld [vmem:[%s759 + $0x200] sm:$0xf]
        %v917 = vld [vmem:[%s759 + $0x204] sm:$0xf]
        %v918 = vld [vmem:[%s759 + $0x208] sm:$0xf]
        %v919 = vld [vmem:[%s759 + $0x20c] sm:$0xf]
        %v920 = vld [vmem:[%s759 + $0x210] sm:$0xf]
        %v921 = vld [vmem:[%s759 + $0x214] sm:$0xf]
        %v922 = vld [vmem:[%s759 + $0x218] sm:$0xf]
        %v923 = vld [vmem:[%s759 + $0x21c] sm:$0xf]
        %v924 = vld [vmem:[%s759 + $0x220] sm:$0xf]
        %v925 = vld [vmem:[%s759 + $0x224] sm:$0xf]
        %v926 = vld [vmem:[%s759 + $0x228] sm:$0xf]
        %v927 = vld [vmem:[%s759 + $0x22c] sm:$0xf]
        %v928 = vld [vmem:[%s759 + $0x230] sm:$0xf]
        %v929 = vld [vmem:[%s759 + $0x234] sm:$0xf]
        %v930 = vld [vmem:[%s759 + $0x238] sm:$0xf]
        %v931 = vld [vmem:[%s759 + $0x23c] sm:$0xf]
        %v932 = vld [vmem:[%s1] sm:$0xf]
        %v933 = vld [vmem:[%s1 + $0x4] sm:$0xf]
        %v934 = vld [vmem:[%s1 + $0x8] sm:$0xf]
        %v935 = vld [vmem:[%s1 + $0xc] sm:$0xf]
        %v936 = vld [vmem:[%s1 + $0x10] sm:$0xf]
        %v937 = vld [vmem:[%s1 + $0x14] sm:$0xf]
        %v938 = vld [vmem:[%s1 + $0x18] sm:$0xf]
        %v939 = vld [vmem:[%s1 + $0x1c] sm:$0xf]
        %v940 = vld [vmem:[%s1 + $0x20] sm:$0xf]
        %v941 = vld [vmem:[%s1 + $0x24] sm:$0xf]
        %v942 = vld [vmem:[%s1 + $0x28] sm:$0xf]
        %v943 = vld [vmem:[%s1 + $0x2c] sm:$0xf]
        %v944 = vld [vmem:[%s1 + $0x30] sm:$0xf]
        %v945 = vld [vmem:[%s1 + $0x34] sm:$0xf]
        %v946 = vld [vmem:[%s1 + $0x38] sm:$0xf]
        %v947 = vld [vmem:[%s1 + $0x3c] sm:$0xf]
        %v1092 = vunpack.c.l.b16 %v788
        %v1093 = vunpack.c.l.b16 %v789
        %v1094 = vunpack.c.l.b16 %v790
        %v1095 = vunpack.c.l.b16 %v791
        %v1096 = vunpack.c.l.b16 %v792
        %v1097 = vunpack.c.l.b16 %v793
        %v1098 = vunpack.c.l.b16 %v794
        %v1099 = vunpack.c.l.b16 %v795
        %v1100 = vunpack.c.l.b16 %v796
        %v1101 = vunpack.c.l.b16 %v797
        %v1102 = vunpack.c.l.b16 %v798
        %v1103 = vunpack.c.l.b16 %v799
        %v1104 = vunpack.c.l.b16 %v800
        %v1105 = vunpack.c.l.b16 %v801
        %v1106 = vunpack.c.l.b16 %v802
        %v1107 = vunpack.c.l.b16 %v803
        %v1108 = vunpack.c.l.b16 %v804
        %v1109 = vunpack.c.l.b16 %v805
        %v1110 = vunpack.c.l.b16 %v806
        %v1111 = vunpack.c.l.b16 %v807
        %v1112 = vunpack.c.l.b16 %v808
        %v1113 = vunpack.c.l.b16 %v809
        %v1114 = vunpack.c.l.b16 %v810
        %v1115 = vunpack.c.l.b16 %v811
        %v1116 = vunpack.c.l.b16 %v812
        %v1117 = vunpack.c.l.b16 %v813
        %v1118 = vunpack.c.l.b16 %v814
        %v1119 = vunpack.c.l.b16 %v815
        %v1120 = vunpack.c.l.b16 %v816
        %v1121 = vunpack.c.l.b16 %v817
        %v1122 = vunpack.c.l.b16 %v818
        %v1123 = vunpack.c.l.b16 %v819
        %v1124 = vunpack.c.l.b16 %v820
        %v1125 = vunpack.c.l.b16 %v821
        %v1126 = vunpack.c.l.b16 %v822
        %v1127 = vunpack.c.l.b16 %v823
        %v1128 = vunpack.c.l.b16 %v824
        %v1129 = vunpack.c.l.b16 %v825
        %v1130 = vunpack.c.l.b16 %v826
        %v1131 = vunpack.c.l.b16 %v827
        %v1132 = vunpack.c.l.b16 %v828
        %v1133 = vunpack.c.l.b16 %v829
        %v1134 = vunpack.c.l.b16 %v830
        %v1135 = vunpack.c.l.b16 %v831
        %v1136 = vunpack.c.l.b16 %v832
        %v1137 = vunpack.c.l.b16 %v833
        %v1138 = vunpack.c.l.b16 %v834
        %v1139 = vunpack.c.l.b16 %v835
        %v1140 = vunpack.c.l.b16 %v836
        %v1141 = vunpack.c.l.b16 %v837
        %v1142 = vunpack.c.l.b16 %v838
        %v1143 = vunpack.c.l.b16 %v839
        %v1144 = vunpack.c.l.b16 %v840
        %v1145 = vunpack.c.l.b16 %v841
        %v1146 = vunpack.c.l.b16 %v842
        %v1147 = vunpack.c.l.b16 %v843
        %v1148 = vunpack.c.l.b16 %v844
        %v1149 = vunpack.c.l.b16 %v845
        %v1150 = vunpack.c.l.b16 %v846
        %v1151 = vunpack.c.l.b16 %v847
        %v1152 = vunpack.c.l.b16 %v848
        %v1153 = vunpack.c.l.b16 %v849
        %v1154 = vunpack.c.l.b16 %v850
        %v1155 = vunpack.c.l.b16 %v851
        %v1156 = vunpack.c.l.b16 %v852
        %v1157 = vunpack.c.l.b16 %v853
        %v1158 = vunpack.c.l.b16 %v854
        %v1159 = vunpack.c.l.b16 %v855
        %v1160 = vunpack.c.l.b16 %v856
        %v1161 = vunpack.c.l.b16 %v857
        %v1162 = vunpack.c.l.b16 %v858
        %v1163 = vunpack.c.l.b16 %v859
        %v1164 = vunpack.c.l.b16 %v860
        %v1165 = vunpack.c.l.b16 %v861
        %v1166 = vunpack.c.l.b16 %v862
        %v1167 = vunpack.c.l.b16 %v863
        %v1168 = vunpack.c.l.b16 %v864
        %v1169 = vunpack.c.l.b16 %v865
        %v1170 = vunpack.c.l.b16 %v866
        %v1171 = vunpack.c.l.b16 %v867
        %v1172 = vunpack.c.l.b16 %v868
        %v1173 = vunpack.c.l.b16 %v869
        %v1174 = vunpack.c.l.b16 %v870
        %v1175 = vunpack.c.l.b16 %v871
        %v1176 = vunpack.c.l.b16 %v872
        %v1177 = vunpack.c.l.b16 %v873
        %v1178 = vunpack.c.l.b16 %v874
        %v1179 = vunpack.c.l.b16 %v875
        %v1180 = vunpack.c.l.b16 %v876
        %v1181 = vunpack.c.l.b16 %v877
        %v1182 = vunpack.c.l.b16 %v878
        %v1183 = vunpack.c.l.b16 %v879
        %v1184 = vunpack.c.l.b16 %v880
        %v1185 = vunpack.c.l.b16 %v881
        %v1186 = vunpack.c.l.b16 %v882
        %v1187 = vunpack.c.l.b16 %v883
        %v1188 = vunpack.c.l.b16 %v884
        %v1189 = vunpack.c.l.b16 %v885
        %v1190 = vunpack.c.l.b16 %v886
        %v1191 = vunpack.c.l.b16 %v887
        %v1192 = vunpack.c.l.b16 %v888
        %v1193 = vunpack.c.l.b16 %v889
        %v1194 = vunpack.c.l.b16 %v890
        %v1195 = vunpack.c.l.b16 %v891
        %v1196 = vunpack.c.l.b16 %v892
        %v1197 = vunpack.c.l.b16 %v893
        %v1198 = vunpack.c.l.b16 %v894
        %v1199 = vunpack.c.l.b16 %v895
        %v1200 = vunpack.c.l.b16 %v896
        %v1201 = vunpack.c.l.b16 %v897
        %v1202 = vunpack.c.l.b16 %v898
        %v1203 = vunpack.c.l.b16 %v899
        %v1204 = vunpack.c.l.b16 %v900
        %v1205 = vunpack.c.l.b16 %v901
        %v1206 = vunpack.c.l.b16 %v902
        %v1207 = vunpack.c.l.b16 %v903
        %v1208 = vunpack.c.l.b16 %v904
        %v1209 = vunpack.c.l.b16 %v905
        %v1210 = vunpack.c.l.b16 %v906
        %v1211 = vunpack.c.l.b16 %v907
        %v1212 = vunpack.c.l.b16 %v908
        %v1213 = vunpack.c.l.b16 %v909
        %v1214 = vunpack.c.l.b16 %v910
        %v1215 = vunpack.c.l.b16 %v911
        %v1216 = vunpack.c.l.b16 %v912
        %v1217 = vunpack.c.l.b16 %v913
        %v1218 = vunpack.c.l.b16 %v914
        %v1219 = vunpack.c.l.b16 %v915
        %v1220 = vunpack.c.l.b16 %v916
        %v1221 = vunpack.c.l.b16 %v917
        %v1222 = vunpack.c.l.b16 %v918
        %v1223 = vunpack.c.l.b16 %v919
        %v1224 = vunpack.c.l.b16 %v920
        %v1225 = vunpack.c.l.b16 %v921
        %v1226 = vunpack.c.l.b16 %v922
        %v1227 = vunpack.c.l.b16 %v923
        %v1228 = vunpack.c.l.b16 %v924
        %v1229 = vunpack.c.l.b16 %v925
        %v1230 = vunpack.c.l.b16 %v926
        %v1231 = vunpack.c.l.b16 %v927
        %v1232 = vunpack.c.l.b16 %v928
        %v1233 = vunpack.c.l.b16 %v929
        %v1234 = vunpack.c.l.b16 %v930
        %v1235 = vunpack.c.l.b16 %v931
        %v1236 = vpack.c.b16 %v1093, %v1092
        %v1237 = vpack.c.b16 %v1095, %v1094
        %v1238 = vpack.c.b16 %v1097, %v1096
        %v1239 = vpack.c.b16 %v1099, %v1098
        %v1240 = vpack.c.b16 %v1101, %v1100
        %v1241 = vpack.c.b16 %v1103, %v1102
        %v1242 = vpack.c.b16 %v1105, %v1104
        %v1243 = vpack.c.b16 %v1107, %v1106
        %v1244 = vpack.c.b16 %v1109, %v1108
        %v1245 = vpack.c.b16 %v1111, %v1110
        %v1246 = vpack.c.b16 %v1113, %v1112
        %v1247 = vpack.c.b16 %v1115, %v1114
        %v1248 = vpack.c.b16 %v1117, %v1116
        %v1249 = vpack.c.b16 %v1119, %v1118
        %v1250 = vpack.c.b16 %v1121, %v1120
        %v1251 = vpack.c.b16 %v1123, %v1122
        %v1252 = vpack.c.b16 %v1125, %v1124
        %v1253 = vpack.c.b16 %v1127, %v1126
        %v1254 = vpack.c.b16 %v1129, %v1128
        %v1255 = vpack.c.b16 %v1131, %v1130
        %v1256 = vpack.c.b16 %v1133, %v1132
        %v1257 = vpack.c.b16 %v1135, %v1134
        %v1258 = vpack.c.b16 %v1137, %v1136
        %v1259 = vpack.c.b16 %v1139, %v1138
        %v1260 = vpack.c.b16 %v1141, %v1140
        %v1261 = vpack.c.b16 %v1143, %v1142
        %v1262 = vpack.c.b16 %v1145, %v1144
        %v1263 = vpack.c.b16 %v1147, %v1146
        %v1264 = vpack.c.b16 %v1149, %v1148
        %v1265 = vpack.c.b16 %v1151, %v1150
        %v1266 = vpack.c.b16 %v1153, %v1152
        %v1267 = vpack.c.b16 %v1155, %v1154
        %v1268 = vpack.c.b16 %v1157, %v1156
        %v1269 = vpack.c.b16 %v1159, %v1158
        %v1270 = vpack.c.b16 %v1161, %v1160
        %v1271 = vpack.c.b16 %v1163, %v1162
        %v1272 = vpack.c.b16 %v1165, %v1164
        %v1273 = vpack.c.b16 %v1167, %v1166
        %v1274 = vpack.c.b16 %v1169, %v1168
        %v1275 = vpack.c.b16 %v1171, %v1170
        %v1276 = vpack.c.b16 %v1173, %v1172
        %v1277 = vpack.c.b16 %v1175, %v1174
        %v1278 = vpack.c.b16 %v1177, %v1176
        %v1279 = vpack.c.b16 %v1179, %v1178
        %v1280 = vpack.c.b16 %v1181, %v1180
        %v1281 = vpack.c.b16 %v1183, %v1182
        %v1282 = vpack.c.b16 %v1185, %v1184
        %v1283 = vpack.c.b16 %v1187, %v1186
        %v1284 = vpack.c.b16 %v1189, %v1188
        %v1285 = vpack.c.b16 %v1191, %v1190
        %v1286 = vpack.c.b16 %v1193, %v1192
        %v1287 = vpack.c.b16 %v1195, %v1194
        %v1288 = vpack.c.b16 %v1197, %v1196
        %v1289 = vpack.c.b16 %v1199, %v1198
        %v1290 = vpack.c.b16 %v1201, %v1200
        %v1291 = vpack.c.b16 %v1203, %v1202
        %v1292 = vpack.c.b16 %v1205, %v1204
        %v1293 = vpack.c.b16 %v1207, %v1206
        %v1294 = vpack.c.b16 %v1209, %v1208
        %v1295 = vpack.c.b16 %v1211, %v1210
        %v1296 = vpack.c.b16 %v1213, %v1212
        %v1297 = vpack.c.b16 %v1215, %v1214
        %v1298 = vpack.c.b16 %v1217, %v1216
        %v1299 = vpack.c.b16 %v1219, %v1218
        %v1300 = vpack.c.b16 %v1221, %v1220
        %v1301 = vpack.c.b16 %v1223, %v1222
        %v1302 = vpack.c.b16 %v1225, %v1224
        %v1303 = vpack.c.b16 %v1227, %v1226
        %v1304 = vpack.c.b16 %v1229, %v1228
        %v1305 = vpack.c.b16 %v1231, %v1230
        %v1306 = vpack.c.b16 %v1233, %v1232
        %v1307 = vpack.c.b16 %v1235, %v1234
        %v1396 = vunpack.c.l.b16 %v932
        %v1397 = vunpack.c.l.b16 %v933
        %v1398 = vunpack.c.l.b16 %v934
        %v1399 = vunpack.c.l.b16 %v935
        %v1400 = vunpack.c.l.b16 %v936
        %v1401 = vunpack.c.l.b16 %v937
        %v1402 = vunpack.c.l.b16 %v938
        %v1403 = vunpack.c.l.b16 %v939
        %v1404 = vunpack.c.l.b16 %v940
        %v1405 = vunpack.c.l.b16 %v941
        %v1406 = vunpack.c.l.b16 %v942
        %v1407 = vunpack.c.l.b16 %v943
        %v1408 = vunpack.c.l.b16 %v944
        %v1409 = vunpack.c.l.b16 %v945
        %v1410 = vunpack.c.l.b16 %v946
        %v1411 = vunpack.c.l.b16 %v947
        %v1412 = vpack.c.b16 %v1397, %v1396
        %v1413 = vpack.c.b16 %v1399, %v1398
        %v1414 = vpack.c.b16 %v1401, %v1400
        %v1415 = vpack.c.b16 %v1403, %v1402
        %v1416 = vpack.c.b16 %v1405, %v1404
        %v1417 = vpack.c.b16 %v1407, %v1406
        %v1418 = vpack.c.b16 %v1409, %v1408
        %v1419 = vpack.c.b16 %v1411, %v1410
        %1428 = vmatprep.subr.bf16.mxu0 0
        %1429 = vmatpush1.bf16.msra.mxu0 %v1412
        %1430 = vmatprep.subr.bf16.mxu0 0
        %1431 = vmatpush1.bf16.msra.mxu0 %v1413
        %1432 = vmatprep.subr.bf16.mxu0 0
        %1433 = vmatpush1.bf16.msra.mxu0 %v1414
        %1434 = vmatprep.subr.bf16.mxu0 0
        %1435 = vmatpush1.bf16.msra.mxu0 %v1415
        %1436 = vmatprep.subr.bf16.mxu0 0
        %1437 = vmatpush1.bf16.msra.mxu0 %v1416
        %1438 = vmatprep.subr.bf16.mxu0 0
        %1439 = vmatpush1.bf16.msra.mxu0 %v1417
        %1440 = vmatprep.subr.bf16.mxu0 0
        %1441 = vmatpush1.bf16.msra.mxu0 %v1418
        %1442 = vmatprep.subr.bf16.mxu0 0
        %1443 = vmatpush1.bf16.msra.mxu0 %v1419
        %1444 = vmatprep.subr.bf16.mxu0 0
        %1445 = vmatpush1.bf16.msra.mxu0 0
        %1446 = vmatprep.subr.bf16.mxu0 0
        %1447 = vmatpush1.bf16.msra.mxu0 0
        %1448 = vmatprep.subr.bf16.mxu0 0
        %1449 = vmatpush1.bf16.msra.mxu0 0
        %1450 = vmatprep.subr.bf16.mxu0 0
        %1451 = vmatpush1.bf16.msra.mxu0 0
        %1452 = vmatprep.subr.bf16.mxu0 0
        %1453 = vmatpush1.bf16.msra.mxu0 0
        %1454 = vmatprep.subr.bf16.mxu0 0
        %1455 = vmatpush1.bf16.msra.mxu0 0
        %1456 = vmatprep.subr.bf16.mxu0 0
        %1457 = vmatpush1.bf16.msra.mxu0 0
        %1458 = vmatprep.subr.bf16.mxu0 0
        %1459 = vmatpush1.bf16.msra.mxu0 0
        %1460 = vmatprep.mubr.bf16.mxu0 0
        %1461 = vmatmul.mubr.bf16.gmra.mrb[0].mxu0 %v1236
        %v1462 = vpop.f32.mrb[0].mxu0
        %v1463 = vadd.f32 0.0, %v1462
        %v1464 = vpop.f32.mrb[0].mxu0
        %v1465 = vpop.f32.mrb[0].mxu0
        %v1466 = vadd.f32 0.0, %v1465
        %v1467 = vpop.f32.mrb[0].mxu0
        %1468 = vmatprep.mubr.bf16.mxu0 0
        %1469 = vmatmul.mubr.bf16.gmra.mrb[0].mxu0 %v1237
        %v1470 = vpop.f32.mrb[0].mxu0
        %v1471 = vadd.f32 0.0, %v1470
        %v1472 = vpop.f32.mrb[0].mxu0
        %v1473 = vpop.f32.mrb[0].mxu0
        %v1474 = vadd.f32 0.0, %v1473
        %v1475 = vpop.f32.mrb[0].mxu0
        %1476 = vmatprep.mubr.bf16.mxu0 0
        %1477 = vmatmul.mubr.bf16.gmra.mrb[0].mxu0 %v1238
        %v1478 = vpop.f32.mrb[0].mxu0
        %v1479 = vadd.f32 0.0, %v1478
        %v1480 = vpop.f32.mrb[0].mxu0
        %v1481 = vpop.f32.mrb[0].mxu0
        %v1482 = vadd.f32 0.0, %v1481
        %v1483 = vpop.f32.mrb[0].mxu0
        %1484 = vmatprep.mubr.bf16.mxu0 0
        %1485 = vmatmul.mubr.bf16.gmra.mrb[0].mxu0 %v1239
        %v1486 = vpop.f32.mrb[0].mxu0
        %v1487 = vadd.f32 0.0, %v1486
        %v1488 = vpop.f32.mrb[0].mxu0
        %v1489 = vpop.f32.mrb[0].mxu0
        %v1490 = vadd.f32 0.0, %v1489
        %v1491 = vpop.f32.mrb[0].mxu0
        %1492 = vmatprep.mubr.bf16.mxu0 0
        %1493 = vmatmul.mubr.bf16.gmra.mrb[0].mxu0 %v1240
        %v1494 = vpop.f32.mrb[0].mxu0
        %v1495 = vadd.f32 0.0, %v1494
        %v1496 = vpop.f32.mrb[0].mxu0
        %v1497 = vpop.f32.mrb[0].mxu0
        %v1498 = vadd.f32 0.0, %v1497
        %v1499 = vpop.f32.mrb[0].mxu0
        %1500 = vmatprep.mubr.bf16.mxu0 0
        %1501 = vmatmul.mubr.bf16.gmra.mrb[0].mxu0 %v1241
        %v1502 = vpop.f32.mrb[0].mxu0
        %v1503 = vadd.f32 0.0, %v1502
        %v1504 = vpop.f32.mrb[0].mxu0
        %v1505 = vpop.f32.mrb[0].mxu0
        %v1506 = vadd.f32 0.0, %v1505
        %v1507 = vpop.f32.mrb[0].mxu0
        %1508 = vmatprep.mubr.bf16.mxu0 0
        %1509 = vmatmul.mubr.bf16.gmra.mrb[0].mxu0 %v1242
        %v1510 = vpop.f32.mrb[0].mxu0
        %v1511 = vadd.f32 0.0, %v1510
        %v1512 = vpop.f32.mrb[0].mxu0
        %v1513 = vpop.f32.mrb[0].mxu0
        %v1514 = vadd.f32 0.0, %v1513
        %v1515 = vpop.f32.mrb[0].mxu0
        %1516 = vmatprep.mubr.bf16.mxu0 0
        %1517 = vmatmul.mubr.bf16.gmra.mrb[0].mxu0 %v1243
        %v1518 = vpop.f32.mrb[0].mxu0
        %v1519 = vadd.f32 0.0, %v1518
        %v1520 = vpop.f32.mrb[0].mxu0
        %v1521 = vpop.f32.mrb[0].mxu0
        %v1522 = vadd.f32 0.0, %v1521
        %v1523 = vpop.f32.mrb[0].mxu0
        %1524 = vmatprep.mubr.bf16.mxu0 0
        %1525 = vmatmul.mubr.bf16.gmra.mrb[0].mxu0 %v1244
        %v1526 = vpop.f32.mrb[0].mxu0
        %v1527 = vadd.f32 0.0, %v1526
        %v1528 = vpop.f32.mrb[0].mxu0
        %v1529 = vpop.f32.mrb[0].mxu0
        %v1530 = vadd.f32 0.0, %v1529
        %v1531 = vpop.f32.mrb[0].mxu0
        %1532 = vmatprep.mubr.bf16.mxu0 0
        %1533 = vmatmul.mubr.bf16.gmra.mrb[0].mxu0 %v1245
        %v1534 = vpop.f32.mrb[0].mxu0
        %v1535 = vadd.f32 0.0, %v1534
        %v1536 = vpop.f32.mrb[0].mxu0
        %v1537 = vpop.f32.mrb[0].mxu0
        %v1538 = vadd.f32 0.0, %v1537
        %v1539 = vpop.f32.mrb[0].mxu0
        %1540 = vmatprep.mubr.bf16.mxu0 0
        %1541 = vmatmul.mubr.bf16.gmra.mrb[0].mxu0 %v1246
        %v1542 = vpop.f32.mrb[0].mxu0
        %v1543 = vadd.f32 0.0, %v1542
        %v1544 = vpop.f32.mrb[0].mxu0
        %v1545 = vpop.f32.mrb[0].mxu0
        %v1546 = vadd.f32 0.0, %v1545
        %v1547 = vpop.f32.mrb[0].mxu0
        %1548 = vmatprep.mubr.bf16.mxu0 0
        %1549 = vmatmul.mubr.bf16.gmra.mrb[0].mxu0 %v1247
        %v1550 = vpop.f32.mrb[0].mxu0
        %v1551 = vadd.f32 0.0, %v1550
        %v1552 = vpop.f32.mrb[0].mxu0
        %v1553 = vpop.f32.mrb[0].mxu0
        %v1554 = vadd.f32 0.0, %v1553
        %v1555 = vpop.f32.mrb[0].mxu0
        %1556 = vmatprep.mubr.bf16.mxu0 0
        %1557 = vmatmul.mubr.bf16.gmra.mrb[0].mxu0 %v1248
        %v1558 = vpop.f32.mrb[0].mxu0
        %v1559 = vadd.f32 0.0, %v1558
        %v1560 = vpop.f32.mrb[0].mxu0
        %v1561 = vpop.f32.mrb[0].mxu0
        %v1562 = vadd.f32 0.0, %v1561
        %v1563 = vpop.f32.mrb[0].mxu0
        %1564 = vmatprep.mubr.bf16.mxu0 0
        %1565 = vmatmul.mubr.bf16.gmra.mrb[0].mxu0 %v1249
        %v1566 = vpop.f32.mrb[0].mxu0
        %v1567 = vadd.f32 0.0, %v1566
        %v1568 = vpop.f32.mrb[0].mxu0
        %v1569 = vpop.f32.mrb[0].mxu0
        %v1570 = vadd.f32 0.0, %v1569
        %v1571 = vpop.f32.mrb[0].mxu0
        %1572 = vmatprep.mubr.bf16.mxu0 0
        %1573 = vmatmul.mubr.bf16.gmra.mrb[0].mxu0 %v1250
        %v1574 = vpop.f32.mrb[0].mxu0
        %v1575 = vadd.f32 0.0, %v1574
        %v1576 = vpop.f32.mrb[0].mxu0
        %v1577 = vpop.f32.mrb[0].mxu0
        %v1578 = vadd.f32 0.0, %v1577
        %v1579 = vpop.f32.mrb[0].mxu0
        %1580 = vmatprep.mubr.bf16.mxu0 0
        %1581 = vmatmul.mubr.bf16.gmra.mrb[0].mxu0 %v1251
        %v1582 = vpop.f32.mrb[0].mxu0
        %v1583 = vadd.f32 0.0, %v1582
        %v1584 = vpop.f32.mrb[0].mxu0
        %v1585 = vpop.f32.mrb[0].mxu0
        %v1586 = vadd.f32 0.0, %v1585
        %v1587 = vpop.f32.mrb[0].mxu0
        %1588 = vmatprep.mubr.bf16.mxu0 0
        %1589 = vmatmul.mubr.bf16.gmra.mrb[0].mxu0 %v1252
        %v1590 = vpop.f32.mrb[0].mxu0
        %v1591 = vadd.f32 0.0, %v1590
        %v1592 = vpop.f32.mrb[0].mxu0
        %v1593 = vpop.f32.mrb[0].mxu0
        %v1594 = vadd.f32 0.0, %v1593
        %v1595 = vpop.f32.mrb[0].mxu0
        %1596 = vmatprep.mubr.bf16.mxu0 0
        %1597 = vmatmul.mubr.bf16.gmra.mrb[0].mxu0 %v1253
        %v1598 = vpop.f32.mrb[0].mxu0
        %v1599 = vadd.f32 0.0, %v1598
        %v1600 = vpop.f32.mrb[0].mxu0
        %v1601 = vpop.f32.mrb[0].mxu0
        %v1602 = vadd.f32 0.0, %v1601
        %v1603 = vpop.f32.mrb[0].mxu0
        %1604 = vmatprep.mubr.bf16.mxu0 0
        %1605 = vmatmul.mubr.bf16.gmra.mrb[0].mxu0 %v1254
        %v1606 = vpop.f32.mrb[0].mxu0
        %v1607 = vadd.f32 0.0, %v1606
        %v1608 = vpop.f32.mrb[0].mxu0
        %v1609 = vpop.f32.mrb[0].mxu0
        %v1610 = vadd.f32 0.0, %v1609
        %v1611 = vpop.f32.mrb[0].mxu0
        %1612 = vmatprep.mubr.bf16.mxu0 0
        %1613 = vmatmul.mubr.bf16.gmra.mrb[0].mxu0 %v1255
        %v1614 = vpop.f32.mrb[0].mxu0
        %v1615 = vadd.f32 0.0, %v1614
        %v1616 = vpop.f32.mrb[0].mxu0
        %v1617 = vpop.f32.mrb[0].mxu0
        %v1618 = vadd.f32 0.0, %v1617
        %v1619 = vpop.f32.mrb[0].mxu0
        %1620 = vmatprep.mubr.bf16.mxu0 0
        %1621 = vmatmul.mubr.bf16.gmra.mrb[0].mxu0 %v1256
        %v1622 = vpop.f32.mrb[0].mxu0
        %v1623 = vadd.f32 0.0, %v1622
        %v1624 = vpop.f32.mrb[0].mxu0
        %v1625 = vpop.f32.mrb[0].mxu0
        %v1626 = vadd.f32 0.0, %v1625
        %v1627 = vpop.f32.mrb[0].mxu0
        %1628 = vmatprep.mubr.bf16.mxu0 0
        %1629 = vmatmul.mubr.bf16.gmra.mrb[0].mxu0 %v1257
        %v1630 = vpop.f32.mrb[0].mxu0
        %v1631 = vadd.f32 0.0, %v1630
        %v1632 = vpop.f32.mrb[0].mxu0
        %v1633 = vpop.f32.mrb[0].mxu0
        %v1634 = vadd.f32 0.0, %v1633
        %v1635 = vpop.f32.mrb[0].mxu0
        %1636 = vmatprep.mubr.bf16.mxu0 0
        %1637 = vmatmul.mubr.bf16.gmra.mrb[0].mxu0 %v1258
        %v1638 = vpop.f32.mrb[0].mxu0
        %v1639 = vadd.f32 0.0, %v1638
        %v1640 = vpop.f32.mrb[0].mxu0
        %v1641 = vpop.f32.mrb[0].mxu0
        %v1642 = vadd.f32 0.0, %v1641
        %v1643 = vpop.f32.mrb[0].mxu0
        %1644 = vmatprep.mubr.bf16.mxu0 0
        %1645 = vmatmul.mubr.bf16.gmra.mrb[0].mxu0 %v1259
        %v1646 = vpop.f32.mrb[0].mxu0
        %v1647 = vadd.f32 0.0, %v1646
        %v1648 = vpop.f32.mrb[0].mxu0
        %v1649 = vpop.f32.mrb[0].mxu0
        %v1650 = vadd.f32 0.0, %v1649
        %v1651 = vpop.f32.mrb[0].mxu0
        %1652 = vmatprep.mubr.bf16.mxu0 0
        %1653 = vmatmul.mubr.bf16.gmra.mrb[0].mxu0 %v1260
        %v1654 = vpop.f32.mrb[0].mxu0
        %v1655 = vadd.f32 0.0, %v1654
        %v1656 = vpop.f32.mrb[0].mxu0
        %v1657 = vpop.f32.mrb[0].mxu0
        %v1658 = vadd.f32 0.0, %v1657
        %v1659 = vpop.f32.mrb[0].mxu0
        %1660 = vmatprep.mubr.bf16.mxu0 0
        %1661 = vmatmul.mubr.bf16.gmra.mrb[0].mxu0 %v1261
        %v1662 = vpop.f32.mrb[0].mxu0
        %v1663 = vadd.f32 0.0, %v1662
        %v1664 = vpop.f32.mrb[0].mxu0
        %v1665 = vpop.f32.mrb[0].mxu0
        %v1666 = vadd.f32 0.0, %v1665
        %v1667 = vpop.f32.mrb[0].mxu0
        %1668 = vmatprep.mubr.bf16.mxu0 0
        %1669 = vmatmul.mubr.bf16.gmra.mrb[0].mxu0 %v1262
        %v1670 = vpop.f32.mrb[0].mxu0
        %v1671 = vadd.f32 0.0, %v1670
        %v1672 = vpop.f32.mrb[0].mxu0
        %v1673 = vpop.f32.mrb[0].mxu0
        %v1674 = vadd.f32 0.0, %v1673
        %v1675 = vpop.f32.mrb[0].mxu0
        %1676 = vmatprep.mubr.bf16.mxu0 0
        %1677 = vmatmul.mubr.bf16.gmra.mrb[0].mxu0 %v1263
        %v1678 = vpop.f32.mrb[0].mxu0
        %v1679 = vadd.f32 0.0, %v1678
        %v1680 = vpop.f32.mrb[0].mxu0
        %v1681 = vpop.f32.mrb[0].mxu0
        %v1682 = vadd.f32 0.0, %v1681
        %v1683 = vpop.f32.mrb[0].mxu0
        %1684 = vmatprep.mubr.bf16.mxu0 0
        %1685 = vmatmul.mubr.bf16.gmra.mrb[0].mxu0 %v1264
        %v1686 = vpop.f32.mrb[0].mxu0
        %v1687 = vadd.f32 0.0, %v1686
        %v1688 = vpop.f32.mrb[0].mxu0
        %v1689 = vpop.f32.mrb[0].mxu0
        %v1690 = vadd.f32 0.0, %v1689
        %v1691 = vpop.f32.mrb[0].mxu0
        %1692 = vmatprep.mubr.bf16.mxu0 0
        %1693 = vmatmul.mubr.bf16.gmra.mrb[0].mxu0 %v1265
        %v1694 = vpop.f32.mrb[0].mxu0
        %v1695 = vadd.f32 0.0, %v1694
        %v1696 = vpop.f32.mrb[0].mxu0
        %v1697 = vpop.f32.mrb[0].mxu0
        %v1698 = vadd.f32 0.0, %v1697
        %v1699 = vpop.f32.mrb[0].mxu0
        %1700 = vmatprep.mubr.bf16.mxu0 0
        %1701 = vmatmul.mubr.bf16.gmra.mrb[0].mxu0 %v1266
        %v1702 = vpop.f32.mrb[0].mxu0
        %v1703 = vadd.f32 0.0, %v1702
        %v1704 = vpop.f32.mrb[0].mxu0
        %v1705 = vpop.f32.mrb[0].mxu0
        %v1706 = vadd.f32 0.0, %v1705
        %v1707 = vpop.f32.mrb[0].mxu0
        %1708 = vmatprep.mubr.bf16.mxu0 0
        %1709 = vmatmul.mubr.bf16.gmra.mrb[0].mxu0 %v1267
        %v1710 = vpop.f32.mrb[0].mxu0
        %v1711 = vadd.f32 0.0, %v1710
        %v1712 = vpop.f32.mrb[0].mxu0
        %v1713 = vpop.f32.mrb[0].mxu0
        %v1714 = vadd.f32 0.0, %v1713
        %v1715 = vpop.f32.mrb[0].mxu0
        %1716 = vmatprep.mubr.bf16.mxu0 0
        %1717 = vmatmul.mubr.bf16.gmra.mrb[0].mxu0 %v1268
        %v1718 = vpop.f32.mrb[0].mxu0
        %v1719 = vadd.f32 0.0, %v1718
        %v1720 = vpop.f32.mrb[0].mxu0
        %v1721 = vpop.f32.mrb[0].mxu0
        %v1722 = vadd.f32 0.0, %v1721
        %v1723 = vpop.f32.mrb[0].mxu0
        %1724 = vmatprep.mubr.bf16.mxu0 0
        %1725 = vmatmul.mubr.bf16.gmra.mrb[0].mxu0 %v1269
        %v1726 = vpop.f32.mrb[0].mxu0
        %v1727 = vadd.f32 0.0, %v1726
        %v1728 = vpop.f32.mrb[0].mxu0
        %v1729 = vpop.f32.mrb[0].mxu0
        %v1730 = vadd.f32 0.0, %v1729
        %v1731 = vpop.f32.mrb[0].mxu0
        %1732 = vmatprep.mubr.bf16.mxu0 0
        %1733 = vmatmul.mubr.bf16.gmra.mrb[0].mxu0 %v1270
        %v1734 = vpop.f32.mrb[0].mxu0
        %v1735 = vadd.f32 0.0, %v1734
        %v1736 = vpop.f32.mrb[0].mxu0
        %v1737 = vpop.f32.mrb[0].mxu0
        %v1738 = vadd.f32 0.0, %v1737
        %v1739 = vpop.f32.mrb[0].mxu0
        %1740 = vmatprep.mubr.bf16.mxu0 0
        %1741 = vmatmul.mubr.bf16.gmra.mrb[0].mxu0 %v1271
        %v1742 = vpop.f32.mrb[0].mxu0
        %v1743 = vadd.f32 0.0, %v1742
        %v1744 = vpop.f32.mrb[0].mxu0
        %v1745 = vpop.f32.mrb[0].mxu0
        %v1746 = vadd.f32 0.0, %v1745
        %v1747 = vpop.f32.mrb[0].mxu0
        %1748 = vmatprep.mubr.bf16.mxu0 0
        %1749 = vmatmul.mubr.bf16.gmra.mrb[0].mxu0 %v1272
        %v1750 = vpop.f32.mrb[0].mxu0
        %v1751 = vadd.f32 0.0, %v1750
        %v1752 = vpop.f32.mrb[0].mxu0
        %v1753 = vpop.f32.mrb[0].mxu0
        %v1754 = vadd.f32 0.0, %v1753
        %v1755 = vpop.f32.mrb[0].mxu0
        %1756 = vmatprep.mubr.bf16.mxu0 0
        %1757 = vmatmul.mubr.bf16.gmra.mrb[0].mxu0 %v1273
        %v1758 = vpop.f32.mrb[0].mxu0
        %v1759 = vadd.f32 0.0, %v1758
        %v1760 = vpop.f32.mrb[0].mxu0
        %v1761 = vpop.f32.mrb[0].mxu0
        %v1762 = vadd.f32 0.0, %v1761
        %v1763 = vpop.f32.mrb[0].mxu0
        %1764 = vmatprep.mubr.bf16.mxu0 0
        %1765 = vmatmul.mubr.bf16.gmra.mrb[0].mxu0 %v1274
        %v1766 = vpop.f32.mrb[0].mxu0
        %v1767 = vadd.f32 0.0, %v1766
        %v1768 = vpop.f32.mrb[0].mxu0
        %v1769 = vpop.f32.mrb[0].mxu0
        %v1770 = vadd.f32 0.0, %v1769
        %v1771 = vpop.f32.mrb[0].mxu0
        %1772 = vmatprep.mubr.bf16.mxu0 0
        %1773 = vmatmul.mubr.bf16.gmra.mrb[0].mxu0 %v1275
        %v1774 = vpop.f32.mrb[0].mxu0
        %v1775 = vadd.f32 0.0, %v1774
        %v1776 = vpop.f32.mrb[0].mxu0
        %v1777 = vpop.f32.mrb[0].mxu0
        %v1778 = vadd.f32 0.0, %v1777
        %v1779 = vpop.f32.mrb[0].mxu0
        %1780 = vmatprep.mubr.bf16.mxu0 0
        %1781 = vmatmul.mubr.bf16.gmra.mrb[0].mxu0 %v1276
        %v1782 = vpop.f32.mrb[0].mxu0
        %v1783 = vadd.f32 0.0, %v1782
        %v1784 = vpop.f32.mrb[0].mxu0
        %v1785 = vpop.f32.mrb[0].mxu0
        %v1786 = vadd.f32 0.0, %v1785
        %v1787 = vpop.f32.mrb[0].mxu0
        %1788 = vmatprep.mubr.bf16.mxu0 0
        %1789 = vmatmul.mubr.bf16.gmra.mrb[0].mxu0 %v1277
        %v1790 = vpop.f32.mrb[0].mxu0
        %v1791 = vadd.f32 0.0, %v1790
        %v1792 = vpop.f32.mrb[0].mxu0
        %v1793 = vpop.f32.mrb[0].mxu0
        %v1794 = vadd.f32 0.0, %v1793
        %v1795 = vpop.f32.mrb[0].mxu0
        %1796 = vmatprep.mubr.bf16.mxu0 0
        %1797 = vmatmul.mubr.bf16.gmra.mrb[0].mxu0 %v1278
        %v1798 = vpop.f32.mrb[0].mxu0
        %v1799 = vadd.f32 0.0, %v1798
        %v1800 = vpop.f32.mrb[0].mxu0
        %v1801 = vpop.f32.mrb[0].mxu0
        %v1802 = vadd.f32 0.0, %v1801
        %v1803 = vpop.f32.mrb[0].mxu0
        %1804 = vmatprep.mubr.bf16.mxu0 0
        %1805 = vmatmul.mubr.bf16.gmra.mrb[0].mxu0 %v1279
        %v1806 = vpop.f32.mrb[0].mxu0
        %v1807 = vadd.f32 0.0, %v1806
        %v1808 = vpop.f32.mrb[0].mxu0
        %v1809 = vpop.f32.mrb[0].mxu0
        %v1810 = vadd.f32 0.0, %v1809
        %v1811 = vpop.f32.mrb[0].mxu0
        %1812 = vmatprep.mubr.bf16.mxu0 0
        %1813 = vmatmul.mubr.bf16.gmra.mrb[0].mxu0 %v1280
        %v1814 = vpop.f32.mrb[0].mxu0
        %v1815 = vadd.f32 0.0, %v1814
        %v1816 = vpop.f32.mrb[0].mxu0
        %v1817 = vpop.f32.mrb[0].mxu0
        %v1818 = vadd.f32 0.0, %v1817
        %v1819 = vpop.f32.mrb[0].mxu0
        %1820 = vmatprep.mubr.bf16.mxu0 0
        %1821 = vmatmul.mubr.bf16.gmra.mrb[0].mxu0 %v1281
        %v1822 = vpop.f32.mrb[0].mxu0
        %v1823 = vadd.f32 0.0, %v1822
        %v1824 = vpop.f32.mrb[0].mxu0
        %v1825 = vpop.f32.mrb[0].mxu0
        %v1826 = vadd.f32 0.0, %v1825
        %v1827 = vpop.f32.mrb[0].mxu0
        %1828 = vmatprep.mubr.bf16.mxu0 0
        %1829 = vmatmul.mubr.bf16.gmra.mrb[0].mxu0 %v1282
        %v1830 = vpop.f32.mrb[0].mxu0
        %v1831 = vadd.f32 0.0, %v1830
        %v1832 = vpop.f32.mrb[0].mxu0
        %v1833 = vpop.f32.mrb[0].mxu0
        %v1834 = vadd.f32 0.0, %v1833
        %v1835 = vpop.f32.mrb[0].mxu0
        %1836 = vmatprep.mubr.bf16.mxu0 0
        %1837 = vmatmul.mubr.bf16.gmra.mrb[0].mxu0 %v1283
        %v1838 = vpop.f32.mrb[0].mxu0
        %v1839 = vadd.f32 0.0, %v1838
        %v1840 = vpop.f32.mrb[0].mxu0
        %v1841 = vpop.f32.mrb[0].mxu0
        %v1842 = vadd.f32 0.0, %v1841
        %v1843 = vpop.f32.mrb[0].mxu0
        %1844 = vmatprep.mubr.bf16.mxu0 0
        %1845 = vmatmul.mubr.bf16.gmra.mrb[0].mxu0 %v1284
        %v1846 = vpop.f32.mrb[0].mxu0
        %v1847 = vadd.f32 0.0, %v1846
        %v1848 = vpop.f32.mrb[0].mxu0
        %v1849 = vpop.f32.mrb[0].mxu0
        %v1850 = vadd.f32 0.0, %v1849
        %v1851 = vpop.f32.mrb[0].mxu0
        %1852 = vmatprep.mubr.bf16.mxu0 0
        %1853 = vmatmul.mubr.bf16.gmra.mrb[0].mxu0 %v1285
        %v1854 = vpop.f32.mrb[0].mxu0
        %v1855 = vadd.f32 0.0, %v1854
        %v1856 = vpop.f32.mrb[0].mxu0
        %v1857 = vpop.f32.mrb[0].mxu0
        %v1858 = vadd.f32 0.0, %v1857
        %v1859 = vpop.f32.mrb[0].mxu0
        %1860 = vmatprep.mubr.bf16.mxu0 0
        %1861 = vmatmul.mubr.bf16.gmra.mrb[0].mxu0 %v1286
        %v1862 = vpop.f32.mrb[0].mxu0
        %v1863 = vadd.f32 0.0, %v1862
        %v1864 = vpop.f32.mrb[0].mxu0
        %v1865 = vpop.f32.mrb[0].mxu0
        %v1866 = vadd.f32 0.0, %v1865
        %v1867 = vpop.f32.mrb[0].mxu0
        %1868 = vmatprep.mubr.bf16.mxu0 0
        %1869 = vmatmul.mubr.bf16.gmra.mrb[0].mxu0 %v1287
        %v1870 = vpop.f32.mrb[0].mxu0
        %v1871 = vadd.f32 0.0, %v1870
        %v1872 = vpop.f32.mrb[0].mxu0
        %v1873 = vpop.f32.mrb[0].mxu0
        %v1874 = vadd.f32 0.0, %v1873
        %v1875 = vpop.f32.mrb[0].mxu0
        %1876 = vmatprep.mubr.bf16.mxu0 0
        %1877 = vmatmul.mubr.bf16.gmra.mrb[0].mxu0 %v1288
        %v1878 = vpop.f32.mrb[0].mxu0
        %v1879 = vadd.f32 0.0, %v1878
        %v1880 = vpop.f32.mrb[0].mxu0
        %v1881 = vpop.f32.mrb[0].mxu0
        %v1882 = vadd.f32 0.0, %v1881
        %v1883 = vpop.f32.mrb[0].mxu0
        %1884 = vmatprep.mubr.bf16.mxu0 0
        %1885 = vmatmul.mubr.bf16.gmra.mrb[0].mxu0 %v1289
        %v1886 = vpop.f32.mrb[0].mxu0
        %v1887 = vadd.f32 0.0, %v1886
        %v1888 = vpop.f32.mrb[0].mxu0
        %v1889 = vpop.f32.mrb[0].mxu0
        %v1890 = vadd.f32 0.0, %v1889
        %v1891 = vpop.f32.mrb[0].mxu0
        %1892 = vmatprep.mubr.bf16.mxu0 0
        %1893 = vmatmul.mubr.bf16.gmra.mrb[0].mxu0 %v1290
        %v1894 = vpop.f32.mrb[0].mxu0
        %v1895 = vadd.f32 0.0, %v1894
        %v1896 = vpop.f32.mrb[0].mxu0
        %v1897 = vpop.f32.mrb[0].mxu0
        %v1898 = vadd.f32 0.0, %v1897
        %v1899 = vpop.f32.mrb[0].mxu0
        %1900 = vmatprep.mubr.bf16.mxu0 0
        %1901 = vmatmul.mubr.bf16.gmra.mrb[0].mxu0 %v1291
        %v1902 = vpop.f32.mrb[0].mxu0
        %v1903 = vadd.f32 0.0, %v1902
        %v1904 = vpop.f32.mrb[0].mxu0
        %v1905 = vpop.f32.mrb[0].mxu0
        %v1906 = vadd.f32 0.0, %v1905
        %v1907 = vpop.f32.mrb[0].mxu0
        %1908 = vmatprep.mubr.bf16.mxu0 0
        %1909 = vmatmul.mubr.bf16.gmra.mrb[0].mxu0 %v1292
        %v1910 = vpop.f32.mrb[0].mxu0
        %v1911 = vadd.f32 0.0, %v1910
        %v1912 = vpop.f32.mrb[0].mxu0
        %v1913 = vpop.f32.mrb[0].mxu0
        %v1914 = vadd.f32 0.0, %v1913
        %v1915 = vpop.f32.mrb[0].mxu0
        %1916 = vmatprep.mubr.bf16.mxu0 0
        %1917 = vmatmul.mubr.bf16.gmra.mrb[0].mxu0 %v1293
        %v1918 = vpop.f32.mrb[0].mxu0
        %v1919 = vadd.f32 0.0, %v1918
        %v1920 = vpop.f32.mrb[0].mxu0
        %v1921 = vpop.f32.mrb[0].mxu0
        %v1922 = vadd.f32 0.0, %v1921
        %v1923 = vpop.f32.mrb[0].mxu0
        %1924 = vmatprep.mubr.bf16.mxu0 0
        %1925 = vmatmul.mubr.bf16.gmra.mrb[0].mxu0 %v1294
        %v1926 = vpop.f32.mrb[0].mxu0
        %v1927 = vadd.f32 0.0, %v1926
        %v1928 = vpop.f32.mrb[0].mxu0
        %v1929 = vpop.f32.mrb[0].mxu0
        %v1930 = vadd.f32 0.0, %v1929
        %v1931 = vpop.f32.mrb[0].mxu0
        %1932 = vmatprep.mubr.bf16.mxu0 0
        %1933 = vmatmul.mubr.bf16.gmra.mrb[0].mxu0 %v1295
        %v1934 = vpop.f32.mrb[0].mxu0
        %v1935 = vadd.f32 0.0, %v1934
        %v1936 = vpop.f32.mrb[0].mxu0
        %v1937 = vpop.f32.mrb[0].mxu0
        %v1938 = vadd.f32 0.0, %v1937
        %v1939 = vpop.f32.mrb[0].mxu0
        %1940 = vmatprep.mubr.bf16.mxu0 0
        %1941 = vmatmul.mubr.bf16.gmra.mrb[0].mxu0 %v1296
        %v1942 = vpop.f32.mrb[0].mxu0
        %v1943 = vadd.f32 0.0, %v1942
        %v1944 = vpop.f32.mrb[0].mxu0
        %v1945 = vpop.f32.mrb[0].mxu0
        %v1946 = vadd.f32 0.0, %v1945
        %v1947 = vpop.f32.mrb[0].mxu0
        %1948 = vmatprep.mubr.bf16.mxu0 0
        %1949 = vmatmul.mubr.bf16.gmra.mrb[0].mxu0 %v1297
        %v1950 = vpop.f32.mrb[0].mxu0
        %v1951 = vadd.f32 0.0, %v1950
        %v1952 = vpop.f32.mrb[0].mxu0
        %v1953 = vpop.f32.mrb[0].mxu0
        %v1954 = vadd.f32 0.0, %v1953
        %v1955 = vpop.f32.mrb[0].mxu0
        %1956 = vmatprep.mubr.bf16.mxu0 0
        %1957 = vmatmul.mubr.bf16.gmra.mrb[0].mxu0 %v1298
        %v1958 = vpop.f32.mrb[0].mxu0
        %v1959 = vadd.f32 0.0, %v1958
        %v1960 = vpop.f32.mrb[0].mxu0
        %v1961 = vpop.f32.mrb[0].mxu0
        %v1962 = vadd.f32 0.0, %v1961
        %v1963 = vpop.f32.mrb[0].mxu0
        %1964 = vmatprep.mubr.bf16.mxu0 0
        %1965 = vmatmul.mubr.bf16.gmra.mrb[0].mxu0 %v1299
        %v1966 = vpop.f32.mrb[0].mxu0
        %v1967 = vadd.f32 0.0, %v1966
        %v1968 = vpop.f32.mrb[0].mxu0
        %v1969 = vpop.f32.mrb[0].mxu0
        %v1970 = vadd.f32 0.0, %v1969
        %v1971 = vpop.f32.mrb[0].mxu0
        %1972 = vmatprep.mubr.bf16.mxu0 0
        %1973 = vmatmul.mubr.bf16.gmra.mrb[0].mxu0 %v1300
        %v1974 = vpop.f32.mrb[0].mxu0
        %v1975 = vadd.f32 0.0, %v1974
        %v1976 = vpop.f32.mrb[0].mxu0
        %v1977 = vpop.f32.mrb[0].mxu0
        %v1978 = vadd.f32 0.0, %v1977
        %v1979 = vpop.f32.mrb[0].mxu0
        %1980 = vmatprep.mubr.bf16.mxu0 0
        %1981 = vmatmul.mubr.bf16.gmra.mrb[0].mxu0 %v1301
        %v1982 = vpop.f32.mrb[0].mxu0
        %v1983 = vadd.f32 0.0, %v1982
        %v1984 = vpop.f32.mrb[0].mxu0
        %v1985 = vpop.f32.mrb[0].mxu0
        %v1986 = vadd.f32 0.0, %v1985
        %v1987 = vpop.f32.mrb[0].mxu0
        %1988 = vmatprep.mubr.bf16.mxu0 0
        %1989 = vmatmul.mubr.bf16.gmra.mrb[0].mxu0 %v1302
        %v1990 = vpop.f32.mrb[0].mxu0
        %v1991 = vadd.f32 0.0, %v1990
        %v1992 = vpop.f32.mrb[0].mxu0
        %v1993 = vpop.f32.mrb[0].mxu0
        %v1994 = vadd.f32 0.0, %v1993
        %v1995 = vpop.f32.mrb[0].mxu0
        %1996 = vmatprep.mubr.bf16.mxu0 0
        %1997 = vmatmul.mubr.bf16.gmra.mrb[0].mxu0 %v1303
        %v1998 = vpop.f32.mrb[0].mxu0
        %v1999 = vadd.f32 0.0, %v1998
        %v2000 = vpop.f32.mrb[0].mxu0
        %v2001 = vpop.f32.mrb[0].mxu0
        %v2002 = vadd.f32 0.0, %v2001
        %v2003 = vpop.f32.mrb[0].mxu0
        %2004 = vmatprep.mubr.bf16.mxu0 0
        %2005 = vmatmul.mubr.bf16.gmra.mrb[0].mxu0 %v1304
        %v2006 = vpop.f32.mrb[0].mxu0
        %v2007 = vadd.f32 0.0, %v2006
        %v2008 = vpop.f32.mrb[0].mxu0
        %v2009 = vpop.f32.mrb[0].mxu0
        %v2010 = vadd.f32 0.0, %v2009
        %v2011 = vpop.f32.mrb[0].mxu0
        %2012 = vmatprep.mubr.bf16.mxu0 0
        %2013 = vmatmul.mubr.bf16.gmra.mrb[0].mxu0 %v1305
        %v2014 = vpop.f32.mrb[0].mxu0
        %v2015 = vadd.f32 0.0, %v2014
        %v2016 = vpop.f32.mrb[0].mxu0
        %v2017 = vpop.f32.mrb[0].mxu0
        %v2018 = vadd.f32 0.0, %v2017
        %v2019 = vpop.f32.mrb[0].mxu0
        %2020 = vmatprep.mubr.bf16.mxu0 0
        %2021 = vmatmul.mubr.bf16.gmra.mrb[0].mxu0 %v1306
        %v2022 = vpop.f32.mrb[0].mxu0
        %v2023 = vadd.f32 0.0, %v2022
        %v2024 = vpop.f32.mrb[0].mxu0
        %v2025 = vpop.f32.mrb[0].mxu0
        %v2026 = vadd.f32 0.0, %v2025
        %v2027 = vpop.f32.mrb[0].mxu0
        %2028 = vmatprep.mubr.bf16.mxu0 0
        %2029 = vmatmul.mubr.bf16.gmra.mrb[0].mxu0 %v1307
        %v2030 = vpop.f32.mrb[0].mxu0
        %v2031 = vadd.f32 0.0, %v2030
        %v2032 = vpop.f32.mrb[0].mxu0
        %v2033 = vpop.f32.mrb[0].mxu0
        %v2034 = vadd.f32 0.0, %v2033
        %v2035 = vpop.f32.mrb[0].mxu0
        %2036 = vdwg.mxu0
        %v2037 = vmax.f32 %v1463, %v1607
        %v2038 = vmax.f32 %v1466, %v1610
        %v2039 = vmax.f32 %v1471, %v1615
        %v2040 = vmax.f32 %v1474, %v1618
        %v2041 = vmax.f32 %v1479, %v1623
        %v2042 = vmax.f32 %v1482, %v1626
        %v2043 = vmax.f32 %v1487, %v1631
        %v2044 = vmax.f32 %v1490, %v1634
        %v2045 = vmax.f32 %v1495, %v1639
        %v2046 = vmax.f32 %v1498, %v1642
        %v2047 = vmax.f32 %v1503, %v1647
        %v2048 = vmax.f32 %v1506, %v1650
        %v2049 = vmax.f32 %v1511, %v1655
        %v2050 = vmax.f32 %v1514, %v1658
        %v2051 = vmax.f32 %v1519, %v1663
        %v2052 = vmax.f32 %v1522, %v1666
        %v2053 = vmax.f32 %v1527, %v1671
        %v2054 = vmax.f32 %v1530, %v1674
        %v2055 = vmax.f32 %v1535, %v1679
        %v2056 = vmax.f32 %v1538, %v1682
        %v2057 = vmax.f32 %v1543, %v1687
        %v2058 = vmax.f32 %v1546, %v1690
        %v2059 = vmax.f32 %v1551, %v1695
        %v2060 = vmax.f32 %v1554, %v1698
        %v2061 = vmax.f32 %v1559, %v1703
        %v2062 = vmax.f32 %v1562, %v1706
        %v2063 = vmax.f32 %v1567, %v1711
        %v2064 = vmax.f32 %v1570, %v1714
        %v2065 = vmax.f32 %v1575, %v1719
        %v2066 = vmax.f32 %v1578, %v1722
        %v2067 = vmax.f32 %v1583, %v1727
        %v2068 = vmax.f32 %v1586, %v1730
        %v2069 = vmax.f32 %v1591, %v1735
        %v2070 = vmax.f32 %v1594, %v1738
        %v2071 = vmax.f32 %v1599, %v1743
        %v2072 = vmax.f32 %v1602, %v1746
        %v2073 = vmax.f32 %v1751, %v1895
        %v2074 = vmax.f32 %v1754, %v1898
        %v2075 = vmax.f32 %v1759, %v1903
        %v2076 = vmax.f32 %v1762, %v1906
        %v2077 = vmax.f32 %v1767, %v1911
        %v2078 = vmax.f32 %v1770, %v1914
        %v2079 = vmax.f32 %v1775, %v1919
        %v2080 = vmax.f32 %v1778, %v1922
        %v2081 = vmax.f32 %v1783, %v1927
        %v2082 = vmax.f32 %v1786, %v1930
        %v2083 = vmax.f32 %v1791, %v1935
        %v2084 = vmax.f32 %v1794, %v1938
        %v2085 = vmax.f32 %v1799, %v1943
        %v2086 = vmax.f32 %v1802, %v1946
        %v2087 = vmax.f32 %v1807, %v1951
        %v2088 = vmax.f32 %v1810, %v1954
        %v2089 = vmax.f32 %v1815, %v1959
        %v2090 = vmax.f32 %v1818, %v1962
        %v2091 = vmax.f32 %v1823, %v1967
        %v2092 = vmax.f32 %v1826, %v1970
        %v2093 = vmax.f32 %v1831, %v1975
        %v2094 = vmax.f32 %v1834, %v1978
        %v2095 = vmax.f32 %v1839, %v1983
        %v2096 = vmax.f32 %v1842, %v1986
        %v2097 = vmax.f32 %v1847, %v1991
        %v2098 = vmax.f32 %v1850, %v1994
        %v2099 = vmax.f32 %v1855, %v1999
        %v2100 = vmax.f32 %v1858, %v2002
        %v2101 = vmax.f32 %v1863, %v2007
        %v2102 = vmax.f32 %v1866, %v2010
        %v2103 = vmax.f32 %v1871, %v2015
        %v2104 = vmax.f32 %v1874, %v2018
        %v2105 = vmax.f32 %v1879, %v2023
        %v2106 = vmax.f32 %v1882, %v2026
        %v2107 = vmax.f32 %v1887, %v2031
        %v2108 = vmax.f32 %v1890, %v2034
        %v2109 = vmax.f32 %v2037, %v2073
        %v2110 = vmax.f32 %v2038, %v2074
        %v2111 = vmax.f32 %v2039, %v2075
        %v2112 = vmax.f32 %v2040, %v2076
        %v2113 = vmax.f32 %v2041, %v2077
        %v2114 = vmax.f32 %v2042, %v2078
        %v2115 = vmax.f32 %v2043, %v2079
        %v2116 = vmax.f32 %v2044, %v2080
        %v2117 = vmax.f32 %v2045, %v2081
        %v2118 = vmax.f32 %v2046, %v2082
        %v2119 = vmax.f32 %v2047, %v2083
        %v2120 = vmax.f32 %v2048, %v2084
        %v2121 = vmax.f32 %v2049, %v2085
        %v2122 = vmax.f32 %v2050, %v2086
        %v2123 = vmax.f32 %v2051, %v2087
        %v2124 = vmax.f32 %v2052, %v2088
        %v2125 = vmax.f32 %v2053, %v2089
        %v2126 = vmax.f32 %v2054, %v2090
        %v2127 = vmax.f32 %v2055, %v2091
        %v2128 = vmax.f32 %v2056, %v2092
        %v2129 = vmax.f32 %v2057, %v2093
        %v2130 = vmax.f32 %v2058, %v2094
        %v2131 = vmax.f32 %v2059, %v2095
        %v2132 = vmax.f32 %v2060, %v2096
        %v2133 = vmax.f32 %v2061, %v2097
        %v2134 = vmax.f32 %v2062, %v2098
        %v2135 = vmax.f32 %v2063, %v2099
        %v2136 = vmax.f32 %v2064, %v2100
        %v2137 = vmax.f32 %v2065, %v2101
        %v2138 = vmax.f32 %v2066, %v2102
        %v2139 = vmax.f32 %v2067, %v2103
        %v2140 = vmax.f32 %v2068, %v2104
        %v2141 = vmax.f32 %v2069, %v2105
        %v2142 = vmax.f32 %v2070, %v2106
        %v2143 = vmax.f32 %v2071, %v2107
        %v2144 = vmax.f32 %v2072, %v2108
        %v2145 = vld [vmem:[%s2] sm:$0x1]
        %v2147 = vlaneseq
        %v2148 = vshrl.u32 %v2147, 7
        %v2149 = vsub.s32 0, %v2148
        %v2150 = vrot.slane %v2145, %v2149
        %v2152 = vadd.f32 %v2109, %v2150
        %v2153 = vadd.f32 %v2110, %v2150
        %v2154 = vadd.f32 %v2111, %v2150
        %v2155 = vadd.f32 %v2112, %v2150
        %v2156 = vadd.f32 %v2113, %v2150
        %v2157 = vadd.f32 %v2114, %v2150
        %v2158 = vadd.f32 %v2115, %v2150
        %v2159 = vadd.f32 %v2116, %v2150
        %v2160 = vadd.f32 %v2117, %v2150
        %v2161 = vadd.f32 %v2118, %v2150
        %v2162 = vadd.f32 %v2119, %v2150
        %v2163 = vadd.f32 %v2120, %v2150
        %v2164 = vadd.f32 %v2121, %v2150
        %v2165 = vadd.f32 %v2122, %v2150
        %v2166 = vadd.f32 %v2123, %v2150
        %v2167 = vadd.f32 %v2124, %v2150
        %v2168 = vadd.f32 %v2125, %v2150
        %v2169 = vadd.f32 %v2126, %v2150
        %v2170 = vadd.f32 %v2127, %v2150
        %v2171 = vadd.f32 %v2128, %v2150
        %v2172 = vadd.f32 %v2129, %v2150
        %v2173 = vadd.f32 %v2130, %v2150
        %v2174 = vadd.f32 %v2131, %v2150
        %v2175 = vadd.f32 %v2132, %v2150
        %v2176 = vadd.f32 %v2133, %v2150
        %v2177 = vadd.f32 %v2134, %v2150
        %v2178 = vadd.f32 %v2135, %v2150
        %v2179 = vadd.f32 %v2136, %v2150
        %v2180 = vadd.f32 %v2137, %v2150
        %v2181 = vadd.f32 %v2138, %v2150
        %v2182 = vadd.f32 %v2139, %v2150
        %v2183 = vadd.f32 %v2140, %v2150
        %v2184 = vadd.f32 %v2141, %v2150
        %v2185 = vadd.f32 %v2142, %v2150
        %v2186 = vadd.f32 %v2143, %v2150
        %v2187 = vadd.f32 %v2144, %v2150
        %v2188 = vmax.f32 %v2152, 0.0
        %v2189 = vmax.f32 %v2153, 0.0
        %v2190 = vmax.f32 %v2154, 0.0
        %v2191 = vmax.f32 %v2155, 0.0
        %v2192 = vmax.f32 %v2156, 0.0
        %v2193 = vmax.f32 %v2157, 0.0
        %v2194 = vmax.f32 %v2158, 0.0
        %v2195 = vmax.f32 %v2159, 0.0
        %v2196 = vmax.f32 %v2160, 0.0
        %v2197 = vmax.f32 %v2161, 0.0
        %v2198 = vmax.f32 %v2162, 0.0
        %v2199 = vmax.f32 %v2163, 0.0
        %v2200 = vmax.f32 %v2164, 0.0
        %v2201 = vmax.f32 %v2165, 0.0
        %v2202 = vmax.f32 %v2166, 0.0
        %v2203 = vmax.f32 %v2167, 0.0
        %v2204 = vmax.f32 %v2168, 0.0
        %v2205 = vmax.f32 %v2169, 0.0
        %v2206 = vmax.f32 %v2170, 0.0
        %v2207 = vmax.f32 %v2171, 0.0
        %v2208 = vmax.f32 %v2172, 0.0
        %v2209 = vmax.f32 %v2173, 0.0
        %v2210 = vmax.f32 %v2174, 0.0
        %v2211 = vmax.f32 %v2175, 0.0
        %v2212 = vmax.f32 %v2176, 0.0
        %v2213 = vmax.f32 %v2177, 0.0
        %v2214 = vmax.f32 %v2178, 0.0
        %v2215 = vmax.f32 %v2179, 0.0
        %v2216 = vmax.f32 %v2180, 0.0
        %v2217 = vmax.f32 %v2181, 0.0
        %v2218 = vmax.f32 %v2182, 0.0
        %v2219 = vmax.f32 %v2183, 0.0
        %v2220 = vmax.f32 %v2184, 0.0
        %v2221 = vmax.f32 %v2185, 0.0
        %v2222 = vmax.f32 %v2186, 0.0
        %v2223 = vmax.f32 %v2187, 0.0
        %v2224 = vpack.c.bf16 %v2189, %v2188
        %v2225 = vpack.c.bf16 %v2191, %v2190
        %v2226 = vpack.c.bf16 %v2193, %v2192
        %v2227 = vpack.c.bf16 %v2195, %v2194
        %v2228 = vpack.c.bf16 %v2197, %v2196
        %v2229 = vpack.c.bf16 %v2199, %v2198
        %v2230 = vpack.c.bf16 %v2201, %v2200
        %v2231 = vpack.c.bf16 %v2203, %v2202
        %v2232 = vpack.c.bf16 %v2205, %v2204
        %v2233 = vpack.c.bf16 %v2207, %v2206
        %v2234 = vpack.c.bf16 %v2209, %v2208
        %v2235 = vpack.c.bf16 %v2211, %v2210
        %v2236 = vpack.c.bf16 %v2213, %v2212
        %v2237 = vpack.c.bf16 %v2215, %v2214
        %v2238 = vpack.c.bf16 %v2217, %v2216
        %v2239 = vpack.c.bf16 %v2219, %v2218
        %v2240 = vpack.c.bf16 %v2221, %v2220
        %v2241 = vpack.c.bf16 %v2223, %v2222
        %v2260 = vunpack.c.l.b16 %v2224
        %v2261 = vunpack.c.h.b16 %v2224
        %v2262 = vunpack.c.l.b16 %v2225
        %v2263 = vunpack.c.h.b16 %v2225
        %v2264 = vunpack.c.l.b16 %v2226
        %v2265 = vunpack.c.h.b16 %v2226
        %v2266 = vunpack.c.l.b16 %v2227
        %v2267 = vunpack.c.h.b16 %v2227
        %v2268 = vunpack.c.l.b16 %v2228
        %v2269 = vunpack.c.h.b16 %v2228
        %v2270 = vunpack.c.l.b16 %v2229
        %v2271 = vunpack.c.h.b16 %v2229
        %v2272 = vunpack.c.l.b16 %v2230
        %v2273 = vunpack.c.h.b16 %v2230
        %v2274 = vunpack.c.l.b16 %v2231
        %v2275 = vunpack.c.h.b16 %v2231
        %v2276 = vunpack.c.l.b16 %v2232
        %v2277 = vunpack.c.h.b16 %v2232
        %v2278 = vunpack.c.l.b16 %v2233
        %v2279 = vunpack.c.h.b16 %v2233
        %v2280 = vunpack.c.l.b16 %v2234
        %v2281 = vunpack.c.h.b16 %v2234
        %v2282 = vunpack.c.l.b16 %v2235
        %v2283 = vunpack.c.h.b16 %v2235
        %v2284 = vunpack.c.l.b16 %v2236
        %v2285 = vunpack.c.h.b16 %v2236
        %v2286 = vunpack.c.l.b16 %v2237
        %v2287 = vunpack.c.h.b16 %v2237
        %v2288 = vunpack.c.l.b16 %v2238
        %v2289 = vunpack.c.h.b16 %v2238
        %v2290 = vunpack.c.l.b16 %v2239
        %v2291 = vunpack.c.h.b16 %v2239
        %v2292 = vunpack.c.l.b16 %v2240
        %v2293 = vunpack.c.h.b16 %v2240
        %v2294 = vunpack.c.l.b16 %v2241
        %v2295 = vunpack.c.h.b16 %v2241
        %v2296 = vpack.c.b16 %v2260, %v2260
        %v2297 = vpack.c.b16 %v2261, %v2261
        %v2298 = vpack.c.b16 %v2262, %v2262
        %v2299 = vpack.c.b16 %v2263, %v2263
        %v2300 = vpack.c.b16 %v2264, %v2264
        %v2301 = vpack.c.b16 %v2265, %v2265
        %v2302 = vpack.c.b16 %v2266, %v2266
        %v2303 = vpack.c.b16 %v2267, %v2267
        %v2304 = vpack.c.b16 %v2268, %v2268
        %v2305 = vpack.c.b16 %v2269, %v2269
        %v2306 = vpack.c.b16 %v2270, %v2270
        %v2307 = vpack.c.b16 %v2271, %v2271
        %v2308 = vpack.c.b16 %v2272, %v2272
        %v2309 = vpack.c.b16 %v2273, %v2273
        %v2310 = vpack.c.b16 %v2274, %v2274
        %v2311 = vpack.c.b16 %v2275, %v2275
        %v2312 = vpack.c.b16 %v2276, %v2276
        %v2313 = vpack.c.b16 %v2277, %v2277
        %v2314 = vpack.c.b16 %v2278, %v2278
        %v2315 = vpack.c.b16 %v2279, %v2279
        %v2316 = vpack.c.b16 %v2280, %v2280
        %v2317 = vpack.c.b16 %v2281, %v2281
        %v2318 = vpack.c.b16 %v2282, %v2282
        %v2319 = vpack.c.b16 %v2283, %v2283
        %v2320 = vpack.c.b16 %v2284, %v2284
        %v2321 = vpack.c.b16 %v2285, %v2285
        %v2322 = vpack.c.b16 %v2286, %v2286
        %v2323 = vpack.c.b16 %v2287, %v2287
        %v2324 = vpack.c.b16 %v2288, %v2288
        %v2325 = vpack.c.b16 %v2289, %v2289
        %v2326 = vpack.c.b16 %v2290, %v2290
        %v2327 = vpack.c.b16 %v2291, %v2291
        %v2328 = vpack.c.b16 %v2292, %v2292
        %v2329 = vpack.c.b16 %v2293, %v2293
        %v2330 = vpack.c.b16 %v2294, %v2294
        %v2331 = vpack.c.b16 %v2295, %v2295
        %2368 = vst [vmem:[%s785] sm:$0xf] %v2296
        %2369 = vst [vmem:[%s785 + $0x4] sm:$0xf] %v2297
        %2370 = vst [vmem:[%s785 + $0x8] sm:$0xf] %v2298
        %2371 = vst [vmem:[%s785 + $0xc] sm:$0xf] %v2299
        %2372 = vst [vmem:[%s785 + $0x10] sm:$0xf] %v2300
        %2373 = vst [vmem:[%s785 + $0x14] sm:$0xf] %v2301
        %2374 = vst [vmem:[%s785 + $0x18] sm:$0xf] %v2302
        %2375 = vst [vmem:[%s785 + $0x1c] sm:$0xf] %v2303
        %2376 = vst [vmem:[%s785 + $0x20] sm:$0xf] %v2304
        %2377 = vst [vmem:[%s785 + $0x24] sm:$0xf] %v2305
        %2378 = vst [vmem:[%s785 + $0x28] sm:$0xf] %v2306
        %2379 = vst [vmem:[%s785 + $0x2c] sm:$0xf] %v2307
        %2380 = vst [vmem:[%s785 + $0x30] sm:$0xf] %v2308
        %2381 = vst [vmem:[%s785 + $0x34] sm:$0xf] %v2309
        %2382 = vst [vmem:[%s785 + $0x38] sm:$0xf] %v2310
        %2383 = vst [vmem:[%s785 + $0x3c] sm:$0xf] %v2311
        %2384 = vst [vmem:[%s785 + $0x40] sm:$0xf] %v2312
        %2385 = vst [vmem:[%s785 + $0x44] sm:$0xf] %v2313
        %2386 = vst [vmem:[%s785 + $0x48] sm:$0xf] %v2314
        %2387 = vst [vmem:[%s785 + $0x4c] sm:$0xf] %v2315
        %2388 = vst [vmem:[%s785 + $0x50] sm:$0xf] %v2316
        %2389 = vst [vmem:[%s785 + $0x54] sm:$0xf] %v2317
        %2390 = vst [vmem:[%s785 + $0x58] sm:$0xf] %v2318
        %2391 = vst [vmem:[%s785 + $0x5c] sm:$0xf] %v2319
        %2392 = vst [vmem:[%s785 + $0x60] sm:$0xf] %v2320
        %2393 = vst [vmem:[%s785 + $0x64] sm:$0xf] %v2321
        %2394 = vst [vmem:[%s785 + $0x68] sm:$0xf] %v2322
        %2395 = vst [vmem:[%s785 + $0x6c] sm:$0xf] %v2323
        %2396 = vst [vmem:[%s785 + $0x70] sm:$0xf] %v2324
        %2397 = vst [vmem:[%s785 + $0x74] sm:$0xf] %v2325
        %2398 = vst [vmem:[%s785 + $0x78] sm:$0xf] %v2326
        %2399 = vst [vmem:[%s785 + $0x7c] sm:$0xf] %v2327
        %2400 = vst [vmem:[%s785 + $0x80] sm:$0xf] %v2328
        %2401 = vst [vmem:[%s785 + $0x84] sm:$0xf] %v2329
        %2402 = vst [vmem:[%s785 + $0x88] sm:$0xf] %v2330
        %2403 = vst [vmem:[%s785 + $0x8c] sm:$0xf] %v2331
        %s2404 = smul.u32 36, %s14
        %p2405 = scmp.lt.s32.totalorder %s2404, 71
        %s2406 = scalar_select %p2405, %s2404, 71
        %s2407 = smul.addr %s2406, 4
        %s2408 = scalar_lea.vmem %s3, %s2407
        // Predicated region
        $region74: #{_lambda_.3} parent=68 // pred_check
          %p2409 = pneg %p100
        $region75: #{_lambda_.3} parent=68 // pred_check_branch
          %2411 = sbr.rel (%p2409) target = $region77
        $region76: #{_lambda_.3} parent=68 // pred_region
          %s2412 = smul.u32 36, %s14
        $region77: #{_lambda_.3} parent=68 // pred_fallthru
          _
      $region69: #{_lambda_.3} parent=5 // pred_fallthru
        _
      %p2413 = scmp.le.s32.totalorder 2, %s9
      // Predicated region
      $region78: #{_lambda_.3} parent=5 // pred_check
        %p2414 = pneg %p2413
      $region79: #{_lambda_.3} parent=5 // pred_check_branch
        %2416 = sbr.rel (%p2414) target = $region81
      $region80: #{_lambda_.3} parent=5 // pred_region
        %s2417 = ssub.s32 %s9, 2
        // Predicated region
        $region82: #{_lambda_.3} parent=80 // pred_check
          %p2418 = pneg %p106
        $region83: #{_lambda_.3} parent=80 // pred_check_branch
          %2420 = sbr.rel (%p2418) target = $region85
        $region84: #{_lambda_.3} parent=80 // pred_region
          %s2421 = smul.u32 36, %s15
          %p2422 = scmp.lt.s32.totalorder %s2421, 71
          %s2423 = scalar_select %p2422, %s2421, 71
          %s2424 = smul.addr %s2423, 4
          %s2425 = scalar_lea.vmem %s3, %s2424
        $region85: #{_lambda_.3} parent=80 // pred_fallthru
          _
      $region81: #{_lambda_.3} parent=5 // pred_fallthru
        _
    $region6: #{_lambda_.3} parent=1 // loop_footer
      %s13 = sadd.s32 1, %s9
    $region7: #{_lambda_.3} parent=1 // loop_footer_branch
      %8 = sbr.rel target = $region3
    $region8: #{_lambda_.3} parent=1 // loop_exit
      _

// kernel: _lambda_.4
$region0: #{_lambda_.4}
  #allocation0 [shape = 'u32[]', space=smem, size = 0x4, offset = 0x4, fixed_abs, tag = 'smem constant byte address 0x4 - core index']
  #allocation1 [shape = 'u32[144,128]{1,0:T(1,128)}', space=vmem, size = 0x12000, scoped, tag = 'internal scratch']
  %s0 = inlined_call_operand.vmem [shape: bf16[4,64,3200], index: 0, kind: input, shape index: {}]
  %s1 = inlined_call_operand.vmem [shape: bf16[3200,128], index: 1, kind: input, shape index: {}]
  %s2 = inlined_call_operand.vmem [shape: f32[1,128], index: 2, kind: input, shape index: {}]
  %s3 = inlined_call_operand.vmem [shape: bf16[64,128], index: 3, kind: output, shape index: {}]
  %s4 = sld [smem:[#allocation0]]
  $region22: #{_lambda_.4} parent=0
    _
  %s6 = ssub.s32 1, %s4
  %s7 = scalar_select 0, %s6, %s4
  // Predicated region
  $region2: #{_lambda_.4} parent=0 // pred_check
    _
  $region3: #{_lambda_.4} parent=0 // pred_check_branch
    %9 = sbr.rel (0) target = $region5
  $region4: #{_lambda_.4} parent=0 // pred_region
    _
  $region5: #{_lambda_.4} parent=0 // pred_fallthru
    _
  // Predicated region
  $region6: #{_lambda_.4} parent=0 // pred_check
    _
  $region7: #{_lambda_.4} parent=0 // pred_check_branch
    %11 = sbr.rel (0) target = $region9
  $region8: #{_lambda_.4} parent=0 // pred_region
    _
  $region9: #{_lambda_.4} parent=0 // pred_fallthru
    _
  // Predicated region
  $region10: #{_lambda_.4} parent=0 // pred_check
    _
  $region11: #{_lambda_.4} parent=0 // pred_check_branch
    %13 = sbr.rel (0) target = $region13
  $region12: #{_lambda_.4} parent=0 // pred_region
    _
  $region13: #{_lambda_.4} parent=0 // pred_fallthru
    _
  %v15 = vld [vmem:[%s0] sm:$0xff]
  %v16 = vld [vmem:[%s0 + $0x8] sm:$0xff]
  %v17 = vld [vmem:[%s0 + $0x10] sm:$0xff]
  %v18 = vld [vmem:[%s0 + $0x18] sm:$0xff]
  %v19 = vld [vmem:[%s0 + $0x20] sm:$0xff]
  %v20 = vld [vmem:[%s0 + $0x28] sm:$0xff]
  %v21 = vld [vmem:[%s0 + $0x30] sm:$0xff]
  %v22 = vld [vmem:[%s0 + $0x38] sm:$0xff]
  %v23 = vld [vmem:[%s0 + $0x40] sm:$0xff]
  %v24 = vld [vmem:[%s0 + $0x48] sm:$0xff]
  %v25 = vld [vmem:[%s0 + $0x50] sm:$0xff]
  %v26 = vld [vmem:[%s0 + $0x58] sm:$0xff]
  %v27 = vld [vmem:[%s0 + $0x60] sm:$0xf]
  %v28 = vld [vmem:[%s0 + $0x64] sm:$0xff]
  %v29 = vld [vmem:[%s0 + $0x6c] sm:$0xff]
  %v30 = vld [vmem:[%s0 + $0x74] sm:$0xff]
  %v31 = vld [vmem:[%s0 + $0x7c] sm:$0xff]
  %v32 = vld [vmem:[%s0 + $0x84] sm:$0xff]
  %v33 = vld [vmem:[%s0 + $0x8c] sm:$0xff]
  %v34 = vld [vmem:[%s0 + $0x94] sm:$0xff]
  %v35 = vld [vmem:[%s0 + $0x9c] sm:$0xff]
  %v36 = vld [vmem:[%s0 + $0xa4] sm:$0xff]
  %v37 = vld [vmem:[%s0 + $0xac] sm:$0xff]
  %v38 = vld [vmem:[%s0 + $0xb4] sm:$0xff]
  %v39 = vld [vmem:[%s0 + $0xbc] sm:$0xff]
  %v40 = vld [vmem:[%s0 + $0xc4] sm:$0xf]
  %v41 = vld [vmem:[%s0 + $0xc8] sm:$0xff]
  %v42 = vld [vmem:[%s0 + $0xd0] sm:$0xff]
  %v43 = vld [vmem:[%s0 + $0xd8] sm:$0xff]
  %v44 = vld [vmem:[%s0 + $0xe0] sm:$0xff]
  %v45 = vld [vmem:[%s0 + $0xe8] sm:$0xff]
  %v46 = vld [vmem:[%s0 + $0xf0] sm:$0xff]
  %v47 = vld [vmem:[%s0 + $0xf8] sm:$0xff]
  %v48 = vld [vmem:[%s0 + $0x100] sm:$0xff]
  %v49 = vld [vmem:[%s0 + $0x108] sm:$0xff]
  %v50 = vld [vmem:[%s0 + $0x110] sm:$0xff]
  %v51 = vld [vmem:[%s0 + $0x118] sm:$0xff]
  %v52 = vld [vmem:[%s0 + $0x120] sm:$0xff]
  %v53 = vld [vmem:[%s0 + $0x128] sm:$0xf]
  %v54 = vld [vmem:[%s0 + $0x12c] sm:$0xff]
  %v55 = vld [vmem:[%s0 + $0x134] sm:$0xff]
  %v56 = vld [vmem:[%s0 + $0x13c] sm:$0xff]
  %v57 = vld [vmem:[%s0 + $0x144] sm:$0xff]
  %v58 = vld [vmem:[%s0 + $0x14c] sm:$0xff]
  %v59 = vld [vmem:[%s0 + $0x154] sm:$0xff]
  %v60 = vld [vmem:[%s0 + $0x15c] sm:$0xff]
  %v61 = vld [vmem:[%s0 + $0x164] sm:$0xff]
  %v62 = vld [vmem:[%s0 + $0x16c] sm:$0xff]
  %v63 = vld [vmem:[%s0 + $0x174] sm:$0xff]
  %v64 = vld [vmem:[%s0 + $0x17c] sm:$0xff]
  %v65 = vld [vmem:[%s0 + $0x184] sm:$0xff]
  %v66 = vld [vmem:[%s0 + $0x18c] sm:$0xf]
  %v67 = vld [vmem:[%s0 + $0x190] sm:$0xff]
  %v68 = vld [vmem:[%s0 + $0x198] sm:$0xff]
  %v69 = vld [vmem:[%s0 + $0x1a0] sm:$0xff]
  %v70 = vld [vmem:[%s0 + $0x1a8] sm:$0xff]
  %v71 = vld [vmem:[%s0 + $0x1b0] sm:$0xff]
  %v72 = vld [vmem:[%s0 + $0x1b8] sm:$0xff]
  %v73 = vld [vmem:[%s0 + $0x1c0] sm:$0xff]
  %v74 = vld [vmem:[%s0 + $0x1c8] sm:$0xff]
  %v75 = vld [vmem:[%s0 + $0x1d0] sm:$0xff]
  %v76 = vld [vmem:[%s0 + $0x1d8] sm:$0xff]
  %v77 = vld [vmem:[%s0 + $0x1e0] sm:$0xff]
  %v78 = vld [vmem:[%s0 + $0x1e8] sm:$0xff]
  %v79 = vld [vmem:[%s0 + $0x1f0] sm:$0xf]
  %v80 = vld [vmem:[%s0 + $0x1f4] sm:$0xff]
  %v81 = vld [vmem:[%s0 + $0x1fc] sm:$0xff]
  %v82 = vld [vmem:[%s0 + $0x204] sm:$0xff]
  %v83 = vld [vmem:[%s0 + $0x20c] sm:$0xff]
  %v84 = vld [vmem:[%s0 + $0x214] sm:$0xff]
  %v85 = vld [vmem:[%s0 + $0x21c] sm:$0xff]
  %v86 = vld [vmem:[%s0 + $0x224] sm:$0xff]
  %v87 = vld [vmem:[%s0 + $0x22c] sm:$0xff]
  %v88 = vld [vmem:[%s0 + $0x234] sm:$0xff]
  %v89 = vld [vmem:[%s0 + $0x23c] sm:$0xff]
  %v90 = vld [vmem:[%s0 + $0x244] sm:$0xff]
  %v91 = vld [vmem:[%s0 + $0x24c] sm:$0xff]
  %v92 = vld [vmem:[%s0 + $0x254] sm:$0xf]
  %v93 = vld [vmem:[%s0 + $0x258] sm:$0xff]
  %v94 = vld [vmem:[%s0 + $0x260] sm:$0xff]
  %v95 = vld [vmem:[%s0 + $0x268] sm:$0xff]
  %v96 = vld [vmem:[%s0 + $0x270] sm:$0xff]
  %v97 = vld [vmem:[%s0 + $0x278] sm:$0xff]
  %v98 = vld [vmem:[%s0 + $0x280] sm:$0xff]
  %v99 = vld [vmem:[%s0 + $0x288] sm:$0xff]
  %v100 = vld [vmem:[%s0 + $0x290] sm:$0xff]
  %v101 = vld [vmem:[%s0 + $0x298] sm:$0xff]
  %v102 = vld [vmem:[%s0 + $0x2a0] sm:$0xff]
  %v103 = vld [vmem:[%s0 + $0x2a8] sm:$0xff]
  %v104 = vld [vmem:[%s0 + $0x2b0] sm:$0xff]
  %v105 = vld [vmem:[%s0 + $0x2b8] sm:$0xf]
  %v106 = vld [vmem:[%s0 + $0x2bc] sm:$0xff]
  %v107 = vld [vmem:[%s0 + $0x2c4] sm:$0xff]
  %v108 = vld [vmem:[%s0 + $0x2cc] sm:$0xff]
  %v109 = vld [vmem:[%s0 + $0x2d4] sm:$0xff]
  %v110 = vld [vmem:[%s0 + $0x2dc] sm:$0xff]
  %v111 = vld [vmem:[%s0 + $0x2e4] sm:$0xff]
  %v112 = vld [vmem:[%s0 + $0x2ec] sm:$0xff]
  %v113 = vld [vmem:[%s0 + $0x2f4] sm:$0xff]
  %v114 = vld [vmem:[%s0 + $0x2fc] sm:$0xff]
  %v115 = vld [vmem:[%s0 + $0x304] sm:$0xff]
  %v116 = vld [vmem:[%s0 + $0x30c] sm:$0xff]
  %v117 = vld [vmem:[%s0 + $0x314] sm:$0xff]
  %v118 = vld [vmem:[%s0 + $0x31c] sm:$0xf]
  %v119 = vld [vmem:[%s0 + $0x320] sm:$0xff]
  %v120 = vld [vmem:[%s0 + $0x328] sm:$0xff]
  %v121 = vld [vmem:[%s0 + $0x330] sm:$0xff]
  %v122 = vld [vmem:[%s0 + $0x338] sm:$0xff]
  %v123 = vld [vmem:[%s0 + $0x340] sm:$0xff]
  %v124 = vld [vmem:[%s0 + $0x348] sm:$0xff]
  %v125 = vld [vmem:[%s0 + $0x350] sm:$0xff]
  %v126 = vld [vmem:[%s0 + $0x358] sm:$0xff]
  %v127 = vld [vmem:[%s0 + $0x360] sm:$0xff]
  %v128 = vld [vmem:[%s0 + $0x368] sm:$0xff]
  %v129 = vld [vmem:[%s0 + $0x370] sm:$0xff]
  %v130 = vld [vmem:[%s0 + $0x378] sm:$0xff]
  %v131 = vld [vmem:[%s0 + $0x380] sm:$0xf]
  %v132 = vld [vmem:[%s0 + $0x384] sm:$0xff]
  %v133 = vld [vmem:[%s0 + $0x38c] sm:$0xff]
  %v134 = vld [vmem:[%s0 + $0x394] sm:$0xff]
  %v135 = vld [vmem:[%s0 + $0x39c] sm:$0xff]
  %v136 = vld [vmem:[%s0 + $0x3a4] sm:$0xff]
  %v137 = vld [vmem:[%s0 + $0x3ac] sm:$0xff]
  %v138 = vld [vmem:[%s0 + $0x3b4] sm:$0xff]
  %v139 = vld [vmem:[%s0 + $0x3bc] sm:$0xff]
  %v140 = vld [vmem:[%s0 + $0x3c4] sm:$0xff]
  %v141 = vld [vmem:[%s0 + $0x3cc] sm:$0xff]
  %v142 = vld [vmem:[%s0 + $0x3d4] sm:$0xff]
  %v143 = vld [vmem:[%s0 + $0x3dc] sm:$0xff]
  %v144 = vld [vmem:[%s0 + $0x3e4] sm:$0xf]
  %v145 = vld [vmem:[%s0 + $0x3e8] sm:$0xff]
  %v146 = vld [vmem:[%s0 + $0x3f0] sm:$0xff]
  %v147 = vld [vmem:[%s0 + $0x3f8] sm:$0xff]
  %v148 = vld [vmem:[%s0 + $0x400] sm:$0xff]
  %v149 = vld [vmem:[%s0 + $0x408] sm:$0xff]
  %v150 = vld [vmem:[%s0 + $0x410] sm:$0xff]
  %v151 = vld [vmem:[%s0 + $0x418] sm:$0xff]
  %v152 = vld [vmem:[%s0 + $0x420] sm:$0xff]
  %v153 = vld [vmem:[%s0 + $0x428] sm:$0xff]
  %v154 = vld [vmem:[%s0 + $0x430] sm:$0xff]
  %v155 = vld [vmem:[%s0 + $0x438] sm:$0xff]
  %v156 = vld [vmem:[%s0 + $0x440] sm:$0xff]
  %v157 = vld [vmem:[%s0 + $0x448] sm:$0xf]
  %v158 = vld [vmem:[%s0 + $0x44c] sm:$0xff]
  %v159 = vld [vmem:[%s0 + $0x454] sm:$0xff]
  %v160 = vld [vmem:[%s0 + $0x45c] sm:$0xff]
  %v161 = vld [vmem:[%s0 + $0x464] sm:$0xff]
  %v162 = vld [vmem:[%s0 + $0x46c] sm:$0xff]
  %v163 = vld [vmem:[%s0 + $0x474] sm:$0xff]
  %v164 = vld [vmem:[%s0 + $0x47c] sm:$0xff]
  %v165 = vld [vmem:[%s0 + $0x484] sm:$0xff]
  %v166 = vld [vmem:[%s0 + $0x48c] sm:$0xff]
  %v167 = vld [vmem:[%s0 + $0x494] sm:$0xff]
  %v168 = vld [vmem:[%s0 + $0x49c] sm:$0xff]
  %v169 = vld [vmem:[%s0 + $0x4a4] sm:$0xff]
  %v170 = vld [vmem:[%s0 + $0x4ac] sm:$0xf]
  %v171 = vld [vmem:[%s0 + $0x4b0] sm:$0xff]
  %v172 = vld [vmem:[%s0 + $0x4b8] sm:$0xff]
  %v173 = vld [vmem:[%s0 + $0x4c0] sm:$0xff]
  %v174 = vld [vmem:[%s0 + $0x4c8] sm:$0xff]
  %v175 = vld [vmem:[%s0 + $0x4d0] sm:$0xff]
  %v176 = vld [vmem:[%s0 + $0x4d8] sm:$0xff]
  %v177 = vld [vmem:[%s0 + $0x4e0] sm:$0xff]
  %v178 = vld [vmem:[%s0 + $0x4e8] sm:$0xff]
  %v179 = vld [vmem:[%s0 + $0x4f0] sm:$0xff]
  %v180 = vld [vmem:[%s0 + $0x4f8] sm:$0xff]
  %v181 = vld [vmem:[%s0 + $0x500] sm:$0xff]
  %v182 = vld [vmem:[%s0 + $0x508] sm:$0xff]
  %v183 = vld [vmem:[%s0 + $0x510] sm:$0xf]
  %v184 = vld [vmem:[%s0 + $0x514] sm:$0xff]
  %v185 = vld [vmem:[%s0 + $0x51c] sm:$0xff]
  %v186 = vld [vmem:[%s0 + $0x524] sm:$0xff]
  %v187 = vld [vmem:[%s0 + $0x52c] sm:$0xff]
  %v188 = vld [vmem:[%s0 + $0x534] sm:$0xff]
  %v189 = vld [vmem:[%s0 + $0x53c] sm:$0xff]
  %v190 = vld [vmem:[%s0 + $0x544] sm:$0xff]
  %v191 = vld [vmem:[%s0 + $0x54c] sm:$0xff]
  %v192 = vld [vmem:[%s0 + $0x554] sm:$0xff]
  %v193 = vld [vmem:[%s0 + $0x55c] sm:$0xff]
  %v194 = vld [vmem:[%s0 + $0x564] sm:$0xff]
  %v195 = vld [vmem:[%s0 + $0x56c] sm:$0xff]
  %v196 = vld [vmem:[%s0 + $0x574] sm:$0xf]
  %v197 = vld [vmem:[%s0 + $0x578] sm:$0xff]
  %v198 = vld [vmem:[%s0 + $0x580] sm:$0xff]
  %v199 = vld [vmem:[%s0 + $0x588] sm:$0xff]
  %v200 = vld [vmem:[%s0 + $0x590] sm:$0xff]
  %v201 = vld [vmem:[%s0 + $0x598] sm:$0xff]
  %v202 = vld [vmem:[%s0 + $0x5a0] sm:$0xff]
  %v203 = vld [vmem:[%s0 + $0x5a8] sm:$0xff]
  %v204 = vld [vmem:[%s0 + $0x5b0] sm:$0xff]
  %v205 = vld [vmem:[%s0 + $0x5b8] sm:$0xff]
  %v206 = vld [vmem:[%s0 + $0x5c0] sm:$0xff]
  %v207 = vld [vmem:[%s0 + $0x5c8] sm:$0xff]
  %v208 = vld [vmem:[%s0 + $0x5d0] sm:$0xff]
  %v209 = vld [vmem:[%s0 + $0x5d8] sm:$0xf]
  %v210 = vld [vmem:[%s0 + $0x5dc] sm:$0xff]
  %v211 = vld [vmem:[%s0 + $0x5e4] sm:$0xff]
  %v212 = vld [vmem:[%s0 + $0x5ec] sm:$0xff]
  %v213 = vld [vmem:[%s0 + $0x5f4] sm:$0xff]
  %v214 = vld [vmem:[%s0 + $0x5fc] sm:$0xff]
  %v215 = vld [vmem:[%s0 + $0x604] sm:$0xff]
  %v216 = vld [vmem:[%s0 + $0x60c] sm:$0xff]
  %v217 = vld [vmem:[%s0 + $0x614] sm:$0xff]
  %v218 = vld [vmem:[%s0 + $0x61c] sm:$0xff]
  %v219 = vld [vmem:[%s0 + $0x624] sm:$0xff]
  %v220 = vld [vmem:[%s0 + $0x62c] sm:$0xff]
  %v221 = vld [vmem:[%s0 + $0x634] sm:$0xff]
  %v222 = vld [vmem:[%s0 + $0x63c] sm:$0xf]
  %v223 = vld [vmem:[%s0 + $0x640] sm:$0xff]
  %v224 = vld [vmem:[%s0 + $0x648] sm:$0xff]
  %v225 = vld [vmem:[%s0 + $0x650] sm:$0xff]
  %v226 = vld [vmem:[%s0 + $0x658] sm:$0xff]
  %v227 = vld [vmem:[%s0 + $0x660] sm:$0xff]
  %v228 = vld [vmem:[%s0 + $0x668] sm:$0xff]
  %v229 = vld [vmem:[%s0 + $0x670] sm:$0xff]
  %v230 = vld [vmem:[%s0 + $0x678] sm:$0xff]
  %v231 = vld [vmem:[%s0 + $0x680] sm:$0xff]
  %v232 = vld [vmem:[%s0 + $0x688] sm:$0xff]
  %v233 = vld [vmem:[%s0 + $0x690] sm:$0xff]
  %v234 = vld [vmem:[%s0 + $0x698] sm:$0xff]
  %v235 = vld [vmem:[%s0 + $0x6a0] sm:$0xf]
  %v236 = vld [vmem:[%s0 + $0x6a4] sm:$0xff]
  %v237 = vld [vmem:[%s0 + $0x6ac] sm:$0xff]
  %v238 = vld [vmem:[%s0 + $0x6b4] sm:$0xff]
  %v239 = vld [vmem:[%s0 + $0x6bc] sm:$0xff]
  %v240 = vld [vmem:[%s0 + $0x6c4] sm:$0xff]
  %v241 = vld [vmem:[%s0 + $0x6cc] sm:$0xff]
  %v242 = vld [vmem:[%s0 + $0x6d4] sm:$0xff]
  %v243 = vld [vmem:[%s0 + $0x6dc] sm:$0xff]
  %v244 = vld [vmem:[%s0 + $0x6e4] sm:$0xff]
  %v245 = vld [vmem:[%s0 + $0x6ec] sm:$0xff]
  %v246 = vld [vmem:[%s0 + $0x6f4] sm:$0xff]
  %v247 = vld [vmem:[%s0 + $0x6fc] sm:$0xff]
  %v248 = vld [vmem:[%s0 + $0x704] sm:$0xf]
  %v249 = vld [vmem:[%s0 + $0x708] sm:$0xff]
  %v250 = vld [vmem:[%s0 + $0x710] sm:$0xff]
  %v251 = vld [vmem:[%s0 + $0x718] sm:$0xff]
  %v252 = vld [vmem:[%s0 + $0x720] sm:$0xff]
  %v253 = vld [vmem:[%s0 + $0x728] sm:$0xff]
  %v254 = vld [vmem:[%s0 + $0x730] sm:$0xff]
  %v255 = vld [vmem:[%s0 + $0x738] sm:$0xff]
  %v256 = vld [vmem:[%s0 + $0x740] sm:$0xff]
  %v257 = vld [vmem:[%s0 + $0x748] sm:$0xff]
  %v258 = vld [vmem:[%s0 + $0x750] sm:$0xff]
  %v259 = vld [vmem:[%s0 + $0x758] sm:$0xff]
  %v260 = vld [vmem:[%s0 + $0x760] sm:$0xff]
  %v261 = vld [vmem:[%s0 + $0x768] sm:$0xf]
  %v262 = vld [vmem:[%s0 + $0x76c] sm:$0xff]
  %v263 = vld [vmem:[%s0 + $0x774] sm:$0xff]
  %v264 = vld [vmem:[%s0 + $0x77c] sm:$0xff]
  %v265 = vld [vmem:[%s0 + $0x784] sm:$0xff]
  %v266 = vld [vmem:[%s0 + $0x78c] sm:$0xff]
  %v267 = vld [vmem:[%s0 + $0x794] sm:$0xff]
  %v268 = vld [vmem:[%s0 + $0x79c] sm:$0xff]
  %v269 = vld [vmem:[%s0 + $0x7a4] sm:$0xff]
  %v270 = vld [vmem:[%s0 + $0x7ac] sm:$0xff]
  %v271 = vld [vmem:[%s0 + $0x7b4] sm:$0xff]
  %v272 = vld [vmem:[%s0 + $0x7bc] sm:$0xff]
  %v273 = vld [vmem:[%s0 + $0x7c4] sm:$0xff]
  %v274 = vld [vmem:[%s0 + $0x7cc] sm:$0xf]
  %v275 = vld [vmem:[%s0 + $0x7d0] sm:$0xff]
  %v276 = vld [vmem:[%s0 + $0x7d8] sm:$0xff]
  %v277 = vld [vmem:[%s0 + $0x7e0] sm:$0xff]
  %v278 = vld [vmem:[%s0 + $0x7e8] sm:$0xff]
  %v279 = vld [vmem:[%s0 + $0x7f0] sm:$0xff]
  %v280 = vld [vmem:[%s0 + $0x7f8] sm:$0xff]
  %v281 = vld [vmem:[%s0 + $0x800] sm:$0xff]
  %v282 = vld [vmem:[%s0 + $0x808] sm:$0xff]
  %v283 = vld [vmem:[%s0 + $0x810] sm:$0xff]
  %v284 = vld [vmem:[%s0 + $0x818] sm:$0xff]
  %v285 = vld [vmem:[%s0 + $0x820] sm:$0xff]
  %v286 = vld [vmem:[%s0 + $0x828] sm:$0xff]
  %v287 = vld [vmem:[%s0 + $0x830] sm:$0xf]
  %v288 = vld [vmem:[%s0 + $0x834] sm:$0xff]
  %v289 = vld [vmem:[%s0 + $0x83c] sm:$0xff]
  %v290 = vld [vmem:[%s0 + $0x844] sm:$0xff]
  %v291 = vld [vmem:[%s0 + $0x84c] sm:$0xff]
  %v292 = vld [vmem:[%s0 + $0x854] sm:$0xff]
  %v293 = vld [vmem:[%s0 + $0x85c] sm:$0xff]
  %v294 = vld [vmem:[%s0 + $0x864] sm:$0xff]
  %v295 = vld [vmem:[%s0 + $0x86c] sm:$0xff]
  %v296 = vld [vmem:[%s0 + $0x874] sm:$0xff]
  %v297 = vld [vmem:[%s0 + $0x87c] sm:$0xff]
  %v298 = vld [vmem:[%s0 + $0x884] sm:$0xff]
  %v299 = vld [vmem:[%s0 + $0x88c] sm:$0xff]
  %v300 = vld [vmem:[%s0 + $0x894] sm:$0xf]
  %v301 = vld [vmem:[%s0 + $0x898] sm:$0xff]
  %v302 = vld [vmem:[%s0 + $0x8a0] sm:$0xff]
  %v303 = vld [vmem:[%s0 + $0x8a8] sm:$0xff]
  %v304 = vld [vmem:[%s0 + $0x8b0] sm:$0xff]
  %v305 = vld [vmem:[%s0 + $0x8b8] sm:$0xff]
  %v306 = vld [vmem:[%s0 + $0x8c0] sm:$0xff]
  %v307 = vld [vmem:[%s0 + $0x8c8] sm:$0xff]
  %v308 = vld [vmem:[%s0 + $0x8d0] sm:$0xff]
  %v309 = vld [vmem:[%s0 + $0x8d8] sm:$0xff]
  %v310 = vld [vmem:[%s0 + $0x8e0] sm:$0xff]
  %v311 = vld [vmem:[%s0 + $0x8e8] sm:$0xff]
  %v312 = vld [vmem:[%s0 + $0x8f0] sm:$0xff]
  %v313 = vld [vmem:[%s0 + $0x8f8] sm:$0xf]
  %v314 = vld [vmem:[%s0 + $0x8fc] sm:$0xff]
  %v315 = vld [vmem:[%s0 + $0x904] sm:$0xff]
  %v316 = vld [vmem:[%s0 + $0x90c] sm:$0xff]
  %v317 = vld [vmem:[%s0 + $0x914] sm:$0xff]
  %v318 = vld [vmem:[%s0 + $0x91c] sm:$0xff]
  %v319 = vld [vmem:[%s0 + $0x924] sm:$0xff]
  %v320 = vld [vmem:[%s0 + $0x92c] sm:$0xff]
  %v321 = vld [vmem:[%s0 + $0x934] sm:$0xff]
  %v322 = vld [vmem:[%s0 + $0x93c] sm:$0xff]
  %v323 = vld [vmem:[%s0 + $0x944] sm:$0xff]
  %v324 = vld [vmem:[%s0 + $0x94c] sm:$0xff]
  %v325 = vld [vmem:[%s0 + $0x954] sm:$0xff]
  %v326 = vld [vmem:[%s0 + $0x95c] sm:$0xf]
  %v327 = vld [vmem:[%s0 + $0x960] sm:$0xff]
  %v328 = vld [vmem:[%s0 + $0x968] sm:$0xff]
  %v329 = vld [vmem:[%s0 + $0x970] sm:$0xff]
  %v330 = vld [vmem:[%s0 + $0x978] sm:$0xff]
  %v331 = vld [vmem:[%s0 + $0x980] sm:$0xff]
  %v332 = vld [vmem:[%s0 + $0x988] sm:$0xff]
  %v333 = vld [vmem:[%s0 + $0x990] sm:$0xff]
  %v334 = vld [vmem:[%s0 + $0x998] sm:$0xff]
  %v335 = vld [vmem:[%s0 + $0x9a0] sm:$0xff]
  %v336 = vld [vmem:[%s0 + $0x9a8] sm:$0xff]
  %v337 = vld [vmem:[%s0 + $0x9b0] sm:$0xff]
  %v338 = vld [vmem:[%s0 + $0x9b8] sm:$0xff]
  %v339 = vld [vmem:[%s0 + $0x9c0] sm:$0xf]
  %v340 = vld [vmem:[%s0 + $0x9c4] sm:$0xff]
  %v341 = vld [vmem:[%s0 + $0x9cc] sm:$0xff]
  %v342 = vld [vmem:[%s0 + $0x9d4] sm:$0xff]
  %v343 = vld [vmem:[%s0 + $0x9dc] sm:$0xff]
  %v344 = vld [vmem:[%s0 + $0x9e4] sm:$0xff]
  %v345 = vld [vmem:[%s0 + $0x9ec] sm:$0xff]
  %v346 = vld [vmem:[%s0 + $0x9f4] sm:$0xff]
  %v347 = vld [vmem:[%s0 + $0x9fc] sm:$0xff]
  %v348 = vld [vmem:[%s0 + $0xa04] sm:$0xff]
  %v349 = vld [vmem:[%s0 + $0xa0c] sm:$0xff]
  %v350 = vld [vmem:[%s0 + $0xa14] sm:$0xff]
  %v351 = vld [vmem:[%s0 + $0xa1c] sm:$0xff]
  %v352 = vld [vmem:[%s0 + $0xa24] sm:$0xf]
  %v353 = vld [vmem:[%s0 + $0xa28] sm:$0xff]
  %v354 = vld [vmem:[%s0 + $0xa30] sm:$0xff]
  %v355 = vld [vmem:[%s0 + $0xa38] sm:$0xff]
  %v356 = vld [vmem:[%s0 + $0xa40] sm:$0xff]
  %v357 = vld [vmem:[%s0 + $0xa48] sm:$0xff]
  %v358 = vld [vmem:[%s0 + $0xa50] sm:$0xff]
  %v359 = vld [vmem:[%s0 + $0xa58] sm:$0xff]
  %v360 = vld [vmem:[%s0 + $0xa60] sm:$0xff]
  %v361 = vld [vmem:[%s0 + $0xa68] sm:$0xff]
  %v362 = vld [vmem:[%s0 + $0xa70] sm:$0xff]
  %v363 = vld [vmem:[%s0 + $0xa78] sm:$0xff]
  %v364 = vld [vmem:[%s0 + $0xa80] sm:$0xff]
  %v365 = vld [vmem:[%s0 + $0xa88] sm:$0xf]
  %v366 = vld [vmem:[%s0 + $0xa8c] sm:$0xff]
  %v367 = vld [vmem:[%s0 + $0xa94] sm:$0xff]
  %v368 = vld [vmem:[%s0 + $0xa9c] sm:$0xff]
  %v369 = vld [vmem:[%s0 + $0xaa4] sm:$0xff]
  %v370 = vld [vmem:[%s0 + $0xaac] sm:$0xff]
  %v371 = vld [vmem:[%s0 + $0xab4] sm:$0xff]
  %v372 = vld [vmem:[%s0 + $0xabc] sm:$0xff]
  %v373 = vld [vmem:[%s0 + $0xac4] sm:$0xff]
  %v374 = vld [vmem:[%s0 + $0xacc] sm:$0xff]
  %v375 = vld [vmem:[%s0 + $0xad4] sm:$0xff]
  %v376 = vld [vmem:[%s0 + $0xadc] sm:$0xff]
  %v377 = vld [vmem:[%s0 + $0xae4] sm:$0xff]
  %v378 = vld [vmem:[%s0 + $0xaec] sm:$0xf]
  %v379 = vld [vmem:[%s0 + $0xaf0] sm:$0xff]
  %v380 = vld [vmem:[%s0 + $0xaf8] sm:$0xff]
  %v381 = vld [vmem:[%s0 + $0xb00] sm:$0xff]
  %v382 = vld [vmem:[%s0 + $0xb08] sm:$0xff]
  %v383 = vld [vmem:[%s0 + $0xb10] sm:$0xff]
  %v384 = vld [vmem:[%s0 + $0xb18] sm:$0xff]
  %v385 = vld [vmem:[%s0 + $0xb20] sm:$0xff]
  %v386 = vld [vmem:[%s0 + $0xb28] sm:$0xff]
  %v387 = vld [vmem:[%s0 + $0xb30] sm:$0xff]
  %v388 = vld [vmem:[%s0 + $0xb38] sm:$0xff]
  %v389 = vld [vmem:[%s0 + $0xb40] sm:$0xff]
  %v390 = vld [vmem:[%s0 + $0xb48] sm:$0xff]
  %v391 = vld [vmem:[%s0 + $0xb50] sm:$0xf]
  %v392 = vld [vmem:[%s0 + $0xb54] sm:$0xff]
  %v393 = vld [vmem:[%s0 + $0xb5c] sm:$0xff]
  %v394 = vld [vmem:[%s0 + $0xb64] sm:$0xff]
  %v395 = vld [vmem:[%s0 + $0xb6c] sm:$0xff]
  %v396 = vld [vmem:[%s0 + $0xb74] sm:$0xff]
  %v397 = vld [vmem:[%s0 + $0xb7c] sm:$0xff]
  %v398 = vld [vmem:[%s0 + $0xb84] sm:$0xff]
  %v399 = vld [vmem:[%s0 + $0xb8c] sm:$0xff]
  %v400 = vld [vmem:[%s0 + $0xb94] sm:$0xff]
  %v401 = vld [vmem:[%s0 + $0xb9c] sm:$0xff]
  %v402 = vld [vmem:[%s0 + $0xba4] sm:$0xff]
  %v403 = vld [vmem:[%s0 + $0xbac] sm:$0xff]
  %v404 = vld [vmem:[%s0 + $0xbb4] sm:$0xf]
  %v405 = vld [vmem:[%s0 + $0xbb8] sm:$0xff]
  %v406 = vld [vmem:[%s0 + $0xbc0] sm:$0xff]
  %v407 = vld [vmem:[%s0 + $0xbc8] sm:$0xff]
  %v408 = vld [vmem:[%s0 + $0xbd0] sm:$0xff]
  %v409 = vld [vmem:[%s0 + $0xbd8] sm:$0xff]
  %v410 = vld [vmem:[%s0 + $0xbe0] sm:$0xff]
  %v411 = vld [vmem:[%s0 + $0xbe8] sm:$0xff]
  %v412 = vld [vmem:[%s0 + $0xbf0] sm:$0xff]
  %v413 = vld [vmem:[%s0 + $0xbf8] sm:$0xff]
  %v414 = vld [vmem:[%s0 + $0xc00] sm:$0xff]
  %v415 = vld [vmem:[%s0 + $0xc08] sm:$0xff]
  %v416 = vld [vmem:[%s0 + $0xc10] sm:$0xff]
  %v417 = vld [vmem:[%s0 + $0xc18] sm:$0xf]
  %v418 = vld [vmem:[%s0 + $0xc1c] sm:$0xff]
  %v419 = vld [vmem:[%s0 + $0xc24] sm:$0xff]
  %v420 = vld [vmem:[%s0 + $0xc2c] sm:$0xff]
  %v421 = vld [vmem:[%s0 + $0xc34] sm:$0xff]
  %v422 = vld [vmem:[%s0 + $0xc3c] sm:$0xff]
  %v423 = vld [vmem:[%s0 + $0xc44] sm:$0xff]
  %v424 = vld [vmem:[%s0 + $0xc4c] sm:$0xff]
  %v425 = vld [vmem:[%s0 + $0xc54] sm:$0xff]
  %v426 = vld [vmem:[%s0 + $0xc5c] sm:$0xff]
  %v427 = vld [vmem:[%s0 + $0xc64] sm:$0xff]
  %v428 = vld [vmem:[%s0 + $0xc6c] sm:$0xff]
  %v429 = vld [vmem:[%s0 + $0xc74] sm:$0xff]
  %v430 = vld [vmem:[%s0 + $0xc7c] sm:$0xf]
  %v431 = vld [vmem:[%s1] sm:$0xf]
  %v432 = vld [vmem:[%s1 + $0x4] sm:$0xf]
  %v433 = vld [vmem:[%s1 + $0x8] sm:$0xf]
  %v434 = vld [vmem:[%s1 + $0xc] sm:$0xf]
  %v435 = vld [vmem:[%s1 + $0x10] sm:$0xf]
  %v436 = vld [vmem:[%s1 + $0x14] sm:$0xf]
  %v437 = vld [vmem:[%s1 + $0x18] sm:$0xf]
  %v438 = vld [vmem:[%s1 + $0x1c] sm:$0xf]
  %v439 = vld [vmem:[%s1 + $0x20] sm:$0xf]
  %v440 = vld [vmem:[%s1 + $0x24] sm:$0xf]
  %v441 = vld [vmem:[%s1 + $0x28] sm:$0xf]
  %v442 = vld [vmem:[%s1 + $0x2c] sm:$0xf]
  %v443 = vld [vmem:[%s1 + $0x30] sm:$0xf]
  %v444 = vld [vmem:[%s1 + $0x34] sm:$0xf]
  %v445 = vld [vmem:[%s1 + $0x38] sm:$0xf]
  %v446 = vld [vmem:[%s1 + $0x3c] sm:$0xf]
  %v447 = vld [vmem:[%s1 + $0x40] sm:$0xf]
  %v448 = vld [vmem:[%s1 + $0x44] sm:$0xf]
  %v449 = vld [vmem:[%s1 + $0x48] sm:$0xf]
  %v450 = vld [vmem:[%s1 + $0x4c] sm:$0xf]
  %v451 = vld [vmem:[%s1 + $0x50] sm:$0xf]
  %v452 = vld [vmem:[%s1 + $0x54] sm:$0xf]
  %v453 = vld [vmem:[%s1 + $0x58] sm:$0xf]
  %v454 = vld [vmem:[%s1 + $0x5c] sm:$0xf]
  %v455 = vld [vmem:[%s1 + $0x60] sm:$0xf]
  %v456 = vld [vmem:[%s1 + $0x64] sm:$0xf]
  %v457 = vld [vmem:[%s1 + $0x68] sm:$0xf]
  %v458 = vld [vmem:[%s1 + $0x6c] sm:$0xf]
  %v459 = vld [vmem:[%s1 + $0x70] sm:$0xf]
  %v460 = vld [vmem:[%s1 + $0x74] sm:$0xf]
  %v461 = vld [vmem:[%s1 + $0x78] sm:$0xf]
  %v462 = vld [vmem:[%s1 + $0x7c] sm:$0xf]
  %v463 = vld [vmem:[%s1 + $0x80] sm:$0xf]
  %v464 = vld [vmem:[%s1 + $0x84] sm:$0xf]
  %v465 = vld [vmem:[%s1 + $0x88] sm:$0xf]
  %v466 = vld [vmem:[%s1 + $0x8c] sm:$0xf]
  %v467 = vld [vmem:[%s1 + $0x90] sm:$0xf]
  %v468 = vld [vmem:[%s1 + $0x94] sm:$0xf]
  %v469 = vld [vmem:[%s1 + $0x98] sm:$0xf]
  %v470 = vld [vmem:[%s1 + $0x9c] sm:$0xf]
  %v471 = vld [vmem:[%s1 + $0xa0] sm:$0xf]
  %v472 = vld [vmem:[%s1 + $0xa4] sm:$0xf]
  %v473 = vld [vmem:[%s1 + $0xa8] sm:$0xf]
  %v474 = vld [vmem:[%s1 + $0xac] sm:$0xf]
  %v475 = vld [vmem:[%s1 + $0xb0] sm:$0xf]
  %v476 = vld [vmem:[%s1 + $0xb4] sm:$0xf]
  %v477 = vld [vmem:[%s1 + $0xb8] sm:$0xf]
  %v478 = vld [vmem:[%s1 + $0xbc] sm:$0xf]
  %v479 = vld [vmem:[%s1 + $0xc0] sm:$0xf]
  %v480 = vld [vmem:[%s1 + $0xc4] sm:$0xf]
  %v481 = vld [vmem:[%s1 + $0xc8] sm:$0xf]
  %v482 = vld [vmem:[%s1 + $0xcc] sm:$0xf]
  %v483 = vld [vmem:[%s1 + $0xd0] sm:$0xf]
  %v484 = vld [vmem:[%s1 + $0xd4] sm:$0xf]
  %v485 = vld [vmem:[%s1 + $0xd8] sm:$0xf]
  %v486 = vld [vmem:[%s1 + $0xdc] sm:$0xf]
  %v487 = vld [vmem:[%s1 + $0xe0] sm:$0xf]
  %v488 = vld [vmem:[%s1 + $0xe4] sm:$0xf]
  %v489 = vld [vmem:[%s1 + $0xe8] sm:$0xf]
  %v490 = vld [vmem:[%s1 + $0xec] sm:$0xf]
  %v491 = vld [vmem:[%s1 + $0xf0] sm:$0xf]
  %v492 = vld [vmem:[%s1 + $0xf4] sm:$0xf]
  %v493 = vld [vmem:[%s1 + $0xf8] sm:$0xf]
  %v494 = vld [vmem:[%s1 + $0xfc] sm:$0xf]
  %v495 = vld [vmem:[%s1 + $0x100] sm:$0xf]
  %v496 = vld [vmem:[%s1 + $0x104] sm:$0xf]
  %v497 = vld [vmem:[%s1 + $0x108] sm:$0xf]
  %v498 = vld [vmem:[%s1 + $0x10c] sm:$0xf]
  %v499 = vld [vmem:[%s1 + $0x110] sm:$0xf]
  %v500 = vld [vmem:[%s1 + $0x114] sm:$0xf]
  %v501 = vld [vmem:[%s1 + $0x118] sm:$0xf]
  %v502 = vld [vmem:[%s1 + $0x11c] sm:$0xf]
  %v503 = vld [vmem:[%s1 + $0x120] sm:$0xf]
  %v504 = vld [vmem:[%s1 + $0x124] sm:$0xf]
  %v505 = vld [vmem:[%s1 + $0x128] sm:$0xf]
  %v506 = vld [vmem:[%s1 + $0x12c] sm:$0xf]
  %v507 = vld [vmem:[%s1 + $0x130] sm:$0xf]
  %v508 = vld [vmem:[%s1 + $0x134] sm:$0xf]
  %v509 = vld [vmem:[%s1 + $0x138] sm:$0xf]
  %v510 = vld [vmem:[%s1 + $0x13c] sm:$0xf]
  %v511 = vld [vmem:[%s1 + $0x140] sm:$0xf]
  %v512 = vld [vmem:[%s1 + $0x144] sm:$0xf]
  %v513 = vld [vmem:[%s1 + $0x148] sm:$0xf]
  %v514 = vld [vmem:[%s1 + $0x14c] sm:$0xf]
  %v515 = vld [vmem:[%s1 + $0x150] sm:$0xf]
  %v516 = vld [vmem:[%s1 + $0x154] sm:$0xf]
  %v517 = vld [vmem:[%s1 + $0x158] sm:$0xf]
  %v518 = vld [vmem:[%s1 + $0x15c] sm:$0xf]
  %v519 = vld [vmem:[%s1 + $0x160] sm:$0xf]
  %v520 = vld [vmem:[%s1 + $0x164] sm:$0xf]
  %v521 = vld [vmem:[%s1 + $0x168] sm:$0xf]
  %v522 = vld [vmem:[%s1 + $0x16c] sm:$0xf]
  %v523 = vld [vmem:[%s1 + $0x170] sm:$0xf]
  %v524 = vld [vmem:[%s1 + $0x174] sm:$0xf]
  %v525 = vld [vmem:[%s1 + $0x178] sm:$0xf]
  %v526 = vld [vmem:[%s1 + $0x17c] sm:$0xf]
  %v527 = vld [vmem:[%s1 + $0x180] sm:$0xf]
  %v528 = vld [vmem:[%s1 + $0x184] sm:$0xf]
  %v529 = vld [vmem:[%s1 + $0x188] sm:$0xf]
  %v530 = vld [vmem:[%s1 + $0x18c] sm:$0xf]
  %v531 = vld [vmem:[%s1 + $0x190] sm:$0xf]
  %v532 = vld [vmem:[%s1 + $0x194] sm:$0xf]
  %v533 = vld [vmem:[%s1 + $0x198] sm:$0xf]
  %v534 = vld [vmem:[%s1 + $0x19c] sm:$0xf]
  %v535 = vld [vmem:[%s1 + $0x1a0] sm:$0xf]
  %v536 = vld [vmem:[%s1 + $0x1a4] sm:$0xf]
  %v537 = vld [vmem:[%s1 + $0x1a8] sm:$0xf]
  %v538 = vld [vmem:[%s1 + $0x1ac] sm:$0xf]
  %v539 = vld [vmem:[%s1 + $0x1b0] sm:$0xf]
  %v540 = vld [vmem:[%s1 + $0x1b4] sm:$0xf]
  %v541 = vld [vmem:[%s1 + $0x1b8] sm:$0xf]
  %v542 = vld [vmem:[%s1 + $0x1bc] sm:$0xf]
  %v543 = vld [vmem:[%s1 + $0x1c0] sm:$0xf]
  %v544 = vld [vmem:[%s1 + $0x1c4] sm:$0xf]
  %v545 = vld [vmem:[%s1 + $0x1c8] sm:$0xf]
  %v546 = vld [vmem:[%s1 + $0x1cc] sm:$0xf]
  %v547 = vld [vmem:[%s1 + $0x1d0] sm:$0xf]
  %v548 = vld [vmem:[%s1 + $0x1d4] sm:$0xf]
  %v549 = vld [vmem:[%s1 + $0x1d8] sm:$0xf]
  %v550 = vld [vmem:[%s1 + $0x1dc] sm:$0xf]
  %v551 = vld [vmem:[%s1 + $0x1e0] sm:$0xf]
  %v552 = vld [vmem:[%s1 + $0x1e4] sm:$0xf]
  %v553 = vld [vmem:[%s1 + $0x1e8] sm:$0xf]
  %v554 = vld [vmem:[%s1 + $0x1ec] sm:$0xf]
  %v555 = vld [vmem:[%s1 + $0x1f0] sm:$0xf]
  %v556 = vld [vmem:[%s1 + $0x1f4] sm:$0xf]
  %v557 = vld [vmem:[%s1 + $0x1f8] sm:$0xf]
  %v558 = vld [vmem:[%s1 + $0x1fc] sm:$0xf]
  %v559 = vld [vmem:[%s1 + $0x200] sm:$0xf]
  %v560 = vld [vmem:[%s1 + $0x204] sm:$0xf]
  %v561 = vld [vmem:[%s1 + $0x208] sm:$0xf]
  %v562 = vld [vmem:[%s1 + $0x20c] sm:$0xf]
  %v563 = vld [vmem:[%s1 + $0x210] sm:$0xf]
  %v564 = vld [vmem:[%s1 + $0x214] sm:$0xf]
  %v565 = vld [vmem:[%s1 + $0x218] sm:$0xf]
  %v566 = vld [vmem:[%s1 + $0x21c] sm:$0xf]
  %v567 = vld [vmem:[%s1 + $0x220] sm:$0xf]
  %v568 = vld [vmem:[%s1 + $0x224] sm:$0xf]
  %v569 = vld [vmem:[%s1 + $0x228] sm:$0xf]
  %v570 = vld [vmem:[%s1 + $0x22c] sm:$0xf]
  %v571 = vld [vmem:[%s1 + $0x230] sm:$0xf]
  %v572 = vld [vmem:[%s1 + $0x234] sm:$0xf]
  %v573 = vld [vmem:[%s1 + $0x238] sm:$0xf]
  %v574 = vld [vmem:[%s1 + $0x23c] sm:$0xf]
  %v575 = vld [vmem:[%s1 + $0x240] sm:$0xf]
  %v576 = vld [vmem:[%s1 + $0x244] sm:$0xf]
  %v577 = vld [vmem:[%s1 + $0x248] sm:$0xf]
  %v578 = vld [vmem:[%s1 + $0x24c] sm:$0xf]
  %v579 = vld [vmem:[%s1 + $0x250] sm:$0xf]
  %v580 = vld [vmem:[%s1 + $0x254] sm:$0xf]
  %v581 = vld [vmem:[%s1 + $0x258] sm:$0xf]
  %v582 = vld [vmem:[%s1 + $0x25c] sm:$0xf]
  %v583 = vld [vmem:[%s1 + $0x260] sm:$0xf]
  %v584 = vld [vmem:[%s1 + $0x264] sm:$0xf]
  %v585 = vld [vmem:[%s1 + $0x268] sm:$0xf]
  %v586 = vld [vmem:[%s1 + $0x26c] sm:$0xf]
  %v587 = vld [vmem:[%s1 + $0x270] sm:$0xf]
  %v588 = vld [vmem:[%s1 + $0x274] sm:$0xf]
  %v589 = vld [vmem:[%s1 + $0x278] sm:$0xf]
  %v590 = vld [vmem:[%s1 + $0x27c] sm:$0xf]
  %v591 = vld [vmem:[%s1 + $0x280] sm:$0xf]
  %v592 = vld [vmem:[%s1 + $0x284] sm:$0xf]
  %v593 = vld [vmem:[%s1 + $0x288] sm:$0xf]
  %v594 = vld [vmem:[%s1 + $0x28c] sm:$0xf]
  %v595 = vld [vmem:[%s1 + $0x290] sm:$0xf]
  %v596 = vld [vmem:[%s1 + $0x294] sm:$0xf]
  %v597 = vld [vmem:[%s1 + $0x298] sm:$0xf]
  %v598 = vld [vmem:[%s1 + $0x29c] sm:$0xf]
  %v599 = vld [vmem:[%s1 + $0x2a0] sm:$0xf]
  %v600 = vld [vmem:[%s1 + $0x2a4] sm:$0xf]
  %v601 = vld [vmem:[%s1 + $0x2a8] sm:$0xf]
  %v602 = vld [vmem:[%s1 + $0x2ac] sm:$0xf]
  %v603 = vld [vmem:[%s1 + $0x2b0] sm:$0xf]
  %v604 = vld [vmem:[%s1 + $0x2b4] sm:$0xf]
  %v605 = vld [vmem:[%s1 + $0x2b8] sm:$0xf]
  %v606 = vld [vmem:[%s1 + $0x2bc] sm:$0xf]
  %v607 = vld [vmem:[%s1 + $0x2c0] sm:$0xf]
  %v608 = vld [vmem:[%s1 + $0x2c4] sm:$0xf]
  %v609 = vld [vmem:[%s1 + $0x2c8] sm:$0xf]
  %v610 = vld [vmem:[%s1 + $0x2cc] sm:$0xf]
  %v611 = vld [vmem:[%s1 + $0x2d0] sm:$0xf]
  %v612 = vld [vmem:[%s1 + $0x2d4] sm:$0xf]
  %v613 = vld [vmem:[%s1 + $0x2d8] sm:$0xf]
  %v614 = vld [vmem:[%s1 + $0x2dc] sm:$0xf]
  %v615 = vld [vmem:[%s1 + $0x2e0] sm:$0xf]
  %v616 = vld [vmem:[%s1 + $0x2e4] sm:$0xf]
  %v617 = vld [vmem:[%s1 + $0x2e8] sm:$0xf]
  %v618 = vld [vmem:[%s1 + $0x2ec] sm:$0xf]
  %v619 = vld [vmem:[%s1 + $0x2f0] sm:$0xf]
  %v620 = vld [vmem:[%s1 + $0x2f4] sm:$0xf]
  %v621 = vld [vmem:[%s1 + $0x2f8] sm:$0xf]
  %v622 = vld [vmem:[%s1 + $0x2fc] sm:$0xf]
  %v623 = vld [vmem:[%s1 + $0x300] sm:$0xf]
  %v624 = vld [vmem:[%s1 + $0x304] sm:$0xf]
  %v625 = vld [vmem:[%s1 + $0x308] sm:$0xf]
  %v626 = vld [vmem:[%s1 + $0x30c] sm:$0xf]
  %v627 = vld [vmem:[%s1 + $0x310] sm:$0xf]
  %v628 = vld [vmem:[%s1 + $0x314] sm:$0xf]
  %v629 = vld [vmem:[%s1 + $0x318] sm:$0xf]
  %v630 = vld [vmem:[%s1 + $0x31c] sm:$0xf]
  %v631 = vld [vmem:[%s1 + $0x320] sm:$0xf]
  %v632 = vld [vmem:[%s1 + $0x324] sm:$0xf]
  %v633 = vld [vmem:[%s1 + $0x328] sm:$0xf]
  %v634 = vld [vmem:[%s1 + $0x32c] sm:$0xf]
  %v635 = vld [vmem:[%s1 + $0x330] sm:$0xf]
  %v636 = vld [vmem:[%s1 + $0x334] sm:$0xf]
  %v637 = vld [vmem:[%s1 + $0x338] sm:$0xf]
  %v638 = vld [vmem:[%s1 + $0x33c] sm:$0xf]
  %v639 = vld [vmem:[%s1 + $0x340] sm:$0xf]
  %v640 = vld [vmem:[%s1 + $0x344] sm:$0xf]
  %v641 = vld [vmem:[%s1 + $0x348] sm:$0xf]
  %v642 = vld [vmem:[%s1 + $0x34c] sm:$0xf]
  %v643 = vld [vmem:[%s1 + $0x350] sm:$0xf]
  %v644 = vld [vmem:[%s1 + $0x354] sm:$0xf]
  %v645 = vld [vmem:[%s1 + $0x358] sm:$0xf]
  %v646 = vld [vmem:[%s1 + $0x35c] sm:$0xf]
  %v647 = vld [vmem:[%s1 + $0x360] sm:$0xf]
  %v648 = vld [vmem:[%s1 + $0x364] sm:$0xf]
  %v649 = vld [vmem:[%s1 + $0x368] sm:$0xf]
  %v650 = vld [vmem:[%s1 + $0x36c] sm:$0xf]
  %v651 = vld [vmem:[%s1 + $0x370] sm:$0xf]
  %v652 = vld [vmem:[%s1 + $0x374] sm:$0xf]
  %v653 = vld [vmem:[%s1 + $0x378] sm:$0xf]
  %v654 = vld [vmem:[%s1 + $0x37c] sm:$0xf]
  %v655 = vld [vmem:[%s1 + $0x380] sm:$0xf]
  %v656 = vld [vmem:[%s1 + $0x384] sm:$0xf]
  %v657 = vld [vmem:[%s1 + $0x388] sm:$0xf]
  %v658 = vld [vmem:[%s1 + $0x38c] sm:$0xf]
  %v659 = vld [vmem:[%s1 + $0x390] sm:$0xf]
  %v660 = vld [vmem:[%s1 + $0x394] sm:$0xf]
  %v661 = vld [vmem:[%s1 + $0x398] sm:$0xf]
  %v662 = vld [vmem:[%s1 + $0x39c] sm:$0xf]
  %v663 = vld [vmem:[%s1 + $0x3a0] sm:$0xf]
  %v664 = vld [vmem:[%s1 + $0x3a4] sm:$0xf]
  %v665 = vld [vmem:[%s1 + $0x3a8] sm:$0xf]
  %v666 = vld [vmem:[%s1 + $0x3ac] sm:$0xf]
  %v667 = vld [vmem:[%s1 + $0x3b0] sm:$0xf]
  %v668 = vld [vmem:[%s1 + $0x3b4] sm:$0xf]
  %v669 = vld [vmem:[%s1 + $0x3b8] sm:$0xf]
  %v670 = vld [vmem:[%s1 + $0x3bc] sm:$0xf]
  %v671 = vld [vmem:[%s1 + $0x3c0] sm:$0xf]
  %v672 = vld [vmem:[%s1 + $0x3c4] sm:$0xf]
  %v673 = vld [vmem:[%s1 + $0x3c8] sm:$0xf]
  %v674 = vld [vmem:[%s1 + $0x3cc] sm:$0xf]
  %v675 = vld [vmem:[%s1 + $0x3d0] sm:$0xf]
  %v676 = vld [vmem:[%s1 + $0x3d4] sm:$0xf]
  %v677 = vld [vmem:[%s1 + $0x3d8] sm:$0xf]
  %v678 = vld [vmem:[%s1 + $0x3dc] sm:$0xf]
  %v679 = vld [vmem:[%s1 + $0x3e0] sm:$0xf]
  %v680 = vld [vmem:[%s1 + $0x3e4] sm:$0xf]
  %v681 = vld [vmem:[%s1 + $0x3e8] sm:$0xf]
  %v682 = vld [vmem:[%s1 + $0x3ec] sm:$0xf]
  %v683 = vld [vmem:[%s1 + $0x3f0] sm:$0xf]
  %v684 = vld [vmem:[%s1 + $0x3f4] sm:$0xf]
  %v685 = vld [vmem:[%s1 + $0x3f8] sm:$0xf]
  %v686 = vld [vmem:[%s1 + $0x3fc] sm:$0xf]
  %v687 = vld [vmem:[%s1 + $0x400] sm:$0xf]
  %v688 = vld [vmem:[%s1 + $0x404] sm:$0xf]
  %v689 = vld [vmem:[%s1 + $0x408] sm:$0xf]
  %v690 = vld [vmem:[%s1 + $0x40c] sm:$0xf]
  %v691 = vld [vmem:[%s1 + $0x410] sm:$0xf]
  %v692 = vld [vmem:[%s1 + $0x414] sm:$0xf]
  %v693 = vld [vmem:[%s1 + $0x418] sm:$0xf]
  %v694 = vld [vmem:[%s1 + $0x41c] sm:$0xf]
  %v695 = vld [vmem:[%s1 + $0x420] sm:$0xf]
  %v696 = vld [vmem:[%s1 + $0x424] sm:$0xf]
  %v697 = vld [vmem:[%s1 + $0x428] sm:$0xf]
  %v698 = vld [vmem:[%s1 + $0x42c] sm:$0xf]
  %v699 = vld [vmem:[%s1 + $0x430] sm:$0xf]
  %v700 = vld [vmem:[%s1 + $0x434] sm:$0xf]
  %v701 = vld [vmem:[%s1 + $0x438] sm:$0xf]
  %v702 = vld [vmem:[%s1 + $0x43c] sm:$0xf]
  %v703 = vld [vmem:[%s1 + $0x440] sm:$0xf]
  %v704 = vld [vmem:[%s1 + $0x444] sm:$0xf]
  %v705 = vld [vmem:[%s1 + $0x448] sm:$0xf]
  %v706 = vld [vmem:[%s1 + $0x44c] sm:$0xf]
  %v707 = vld [vmem:[%s1 + $0x450] sm:$0xf]
  %v708 = vld [vmem:[%s1 + $0x454] sm:$0xf]
  %v709 = vld [vmem:[%s1 + $0x458] sm:$0xf]
  %v710 = vld [vmem:[%s1 + $0x45c] sm:$0xf]
  %v711 = vld [vmem:[%s1 + $0x460] sm:$0xf]
  %v712 = vld [vmem:[%s1 + $0x464] sm:$0xf]
  %v713 = vld [vmem:[%s1 + $0x468] sm:$0xf]
  %v714 = vld [vmem:[%s1 + $0x46c] sm:$0xf]
  %v715 = vld [vmem:[%s1 + $0x470] sm:$0xf]
  %v716 = vld [vmem:[%s1 + $0x474] sm:$0xf]
  %v717 = vld [vmem:[%s1 + $0x478] sm:$0xf]
  %v718 = vld [vmem:[%s1 + $0x47c] sm:$0xf]
  %v719 = vld [vmem:[%s1 + $0x480] sm:$0xf]
  %v720 = vld [vmem:[%s1 + $0x484] sm:$0xf]
  %v721 = vld [vmem:[%s1 + $0x488] sm:$0xf]
  %v722 = vld [vmem:[%s1 + $0x48c] sm:$0xf]
  %v723 = vld [vmem:[%s1 + $0x490] sm:$0xf]
  %v724 = vld [vmem:[%s1 + $0x494] sm:$0xf]
  %v725 = vld [vmem:[%s1 + $0x498] sm:$0xf]
  %v726 = vld [vmem:[%s1 + $0x49c] sm:$0xf]
  %v727 = vld [vmem:[%s1 + $0x4a0] sm:$0xf]
  %v728 = vld [vmem:[%s1 + $0x4a4] sm:$0xf]
  %v729 = vld [vmem:[%s1 + $0x4a8] sm:$0xf]
  %v730 = vld [vmem:[%s1 + $0x4ac] sm:$0xf]
  %v731 = vld [vmem:[%s1 + $0x4b0] sm:$0xf]
  %v732 = vld [vmem:[%s1 + $0x4b4] sm:$0xf]
  %v733 = vld [vmem:[%s1 + $0x4b8] sm:$0xf]
  %v734 = vld [vmem:[%s1 + $0x4bc] sm:$0xf]
  %v735 = vld [vmem:[%s1 + $0x4c0] sm:$0xf]
  %v736 = vld [vmem:[%s1 + $0x4c4] sm:$0xf]
  %v737 = vld [vmem:[%s1 + $0x4c8] sm:$0xf]
  %v738 = vld [vmem:[%s1 + $0x4cc] sm:$0xf]
  %v739 = vld [vmem:[%s1 + $0x4d0] sm:$0xf]
  %v740 = vld [vmem:[%s1 + $0x4d4] sm:$0xf]
  %v741 = vld [vmem:[%s1 + $0x4d8] sm:$0xf]
  %v742 = vld [vmem:[%s1 + $0x4dc] sm:$0xf]
  %v743 = vld [vmem:[%s1 + $0x4e0] sm:$0xf]
  %v744 = vld [vmem:[%s1 + $0x4e4] sm:$0xf]
  %v745 = vld [vmem:[%s1 + $0x4e8] sm:$0xf]
  %v746 = vld [vmem:[%s1 + $0x4ec] sm:$0xf]
  %v747 = vld [vmem:[%s1 + $0x4f0] sm:$0xf]
  %v748 = vld [vmem:[%s1 + $0x4f4] sm:$0xf]
  %v749 = vld [vmem:[%s1 + $0x4f8] sm:$0xf]
  %v750 = vld [vmem:[%s1 + $0x4fc] sm:$0xf]
  %v751 = vld [vmem:[%s1 + $0x500] sm:$0xf]
  %v752 = vld [vmem:[%s1 + $0x504] sm:$0xf]
  %v753 = vld [vmem:[%s1 + $0x508] sm:$0xf]
  %v754 = vld [vmem:[%s1 + $0x50c] sm:$0xf]
  %v755 = vld [vmem:[%s1 + $0x510] sm:$0xf]
  %v756 = vld [vmem:[%s1 + $0x514] sm:$0xf]
  %v757 = vld [vmem:[%s1 + $0x518] sm:$0xf]
  %v758 = vld [vmem:[%s1 + $0x51c] sm:$0xf]
  %v759 = vld [vmem:[%s1 + $0x520] sm:$0xf]
  %v760 = vld [vmem:[%s1 + $0x524] sm:$0xf]
  %v761 = vld [vmem:[%s1 + $0x528] sm:$0xf]
  %v762 = vld [vmem:[%s1 + $0x52c] sm:$0xf]
  %v763 = vld [vmem:[%s1 + $0x530] sm:$0xf]
  %v764 = vld [vmem:[%s1 + $0x534] sm:$0xf]
  %v765 = vld [vmem:[%s1 + $0x538] sm:$0xf]
  %v766 = vld [vmem:[%s1 + $0x53c] sm:$0xf]
  %v767 = vld [vmem:[%s1 + $0x540] sm:$0xf]
  %v768 = vld [vmem:[%s1 + $0x544] sm:$0xf]
  %v769 = vld [vmem:[%s1 + $0x548] sm:$0xf]
  %v770 = vld [vmem:[%s1 + $0x54c] sm:$0xf]
  %v771 = vld [vmem:[%s1 + $0x550] sm:$0xf]
  %v772 = vld [vmem:[%s1 + $0x554] sm:$0xf]
  %v773 = vld [vmem:[%s1 + $0x558] sm:$0xf]
  %v774 = vld [vmem:[%s1 + $0x55c] sm:$0xf]
  %v775 = vld [vmem:[%s1 + $0x560] sm:$0xf]
  %v776 = vld [vmem:[%s1 + $0x564] sm:$0xf]
  %v777 = vld [vmem:[%s1 + $0x568] sm:$0xf]
  %v778 = vld [vmem:[%s1 + $0x56c] sm:$0xf]
  %v779 = vld [vmem:[%s1 + $0x570] sm:$0xf]
  %v780 = vld [vmem:[%s1 + $0x574] sm:$0xf]
  %v781 = vld [vmem:[%s1 + $0x578] sm:$0xf]
  %v782 = vld [vmem:[%s1 + $0x57c] sm:$0xf]
  %v783 = vld [vmem:[%s1 + $0x580] sm:$0xf]
  %v784 = vld [vmem:[%s1 + $0x584] sm:$0xf]
  %v785 = vld [vmem:[%s1 + $0x588] sm:$0xf]
  %v786 = vld [vmem:[%s1 + $0x58c] sm:$0xf]
  %v787 = vld [vmem:[%s1 + $0x590] sm:$0xf]
  %v788 = vld [vmem:[%s1 + $0x594] sm:$0xf]
  %v789 = vld [vmem:[%s1 + $0x598] sm:$0xf]
  %v790 = vld [vmem:[%s1 + $0x59c] sm:$0xf]
  %v791 = vld [vmem:[%s1 + $0x5a0] sm:$0xf]
  %v792 = vld [vmem:[%s1 + $0x5a4] sm:$0xf]
  %v793 = vld [vmem:[%s1 + $0x5a8] sm:$0xf]
  %v794 = vld [vmem:[%s1 + $0x5ac] sm:$0xf]
  %v795 = vld [vmem:[%s1 + $0x5b0] sm:$0xf]
  %v796 = vld [vmem:[%s1 + $0x5b4] sm:$0xf]
  %v797 = vld [vmem:[%s1 + $0x5b8] sm:$0xf]
  %v798 = vld [vmem:[%s1 + $0x5bc] sm:$0xf]
  %v799 = vld [vmem:[%s1 + $0x5c0] sm:$0xf]
  %v800 = vld [vmem:[%s1 + $0x5c4] sm:$0xf]
  %v801 = vld [vmem:[%s1 + $0x5c8] sm:$0xf]
  %v802 = vld [vmem:[%s1 + $0x5cc] sm:$0xf]
  %v803 = vld [vmem:[%s1 + $0x5d0] sm:$0xf]
  %v804 = vld [vmem:[%s1 + $0x5d4] sm:$0xf]
  %v805 = vld [vmem:[%s1 + $0x5d8] sm:$0xf]
  %v806 = vld [vmem:[%s1 + $0x5dc] sm:$0xf]
  %v807 = vld [vmem:[%s1 + $0x5e0] sm:$0xf]
  %v808 = vld [vmem:[%s1 + $0x5e4] sm:$0xf]
  %v809 = vld [vmem:[%s1 + $0x5e8] sm:$0xf]
  %v810 = vld [vmem:[%s1 + $0x5ec] sm:$0xf]
  %v811 = vld [vmem:[%s1 + $0x5f0] sm:$0xf]
  %v812 = vld [vmem:[%s1 + $0x5f4] sm:$0xf]
  %v813 = vld [vmem:[%s1 + $0x5f8] sm:$0xf]
  %v814 = vld [vmem:[%s1 + $0x5fc] sm:$0xf]
  %v815 = vld [vmem:[%s1 + $0x600] sm:$0xf]
  %v816 = vld [vmem:[%s1 + $0x604] sm:$0xf]
  %v817 = vld [vmem:[%s1 + $0x608] sm:$0xf]
  %v818 = vld [vmem:[%s1 + $0x60c] sm:$0xf]
  %v819 = vld [vmem:[%s1 + $0x610] sm:$0xf]
  %v820 = vld [vmem:[%s1 + $0x614] sm:$0xf]
  %v821 = vld [vmem:[%s1 + $0x618] sm:$0xf]
  %v822 = vld [vmem:[%s1 + $0x61c] sm:$0xf]
  %v823 = vld [vmem:[%s1 + $0x620] sm:$0xf]
  %v824 = vld [vmem:[%s1 + $0x624] sm:$0xf]
  %v825 = vld [vmem:[%s1 + $0x628] sm:$0xf]
  %v826 = vld [vmem:[%s1 + $0x62c] sm:$0xf]
  %v827 = vld [vmem:[%s1 + $0x630] sm:$0xf]
  %v828 = vld [vmem:[%s1 + $0x634] sm:$0xf]
  %v829 = vld [vmem:[%s1 + $0x638] sm:$0xf]
  %v830 = vld [vmem:[%s1 + $0x63c] sm:$0xf]
  %v1247 = vunpack.c.l.b16 %v15
  %v1248 = vunpack.c.h.b16 %v15
  %v1249 = vunpack.c.l.b16 %v16
  %v1250 = vunpack.c.h.b16 %v16
  %v1251 = vunpack.c.l.b16 %v17
  %v1252 = vunpack.c.h.b16 %v17
  %v1253 = vunpack.c.l.b16 %v18
  %v1254 = vunpack.c.h.b16 %v18
  %v1255 = vunpack.c.l.b16 %v19
  %v1256 = vunpack.c.h.b16 %v19
  %v1257 = vunpack.c.l.b16 %v20
  %v1258 = vunpack.c.h.b16 %v20
  %v1259 = vunpack.c.l.b16 %v21
  %v1260 = vunpack.c.h.b16 %v21
  %v1261 = vunpack.c.l.b16 %v22
  %v1262 = vunpack.c.h.b16 %v22
  %v1263 = vunpack.c.l.b16 %v23
  %v1264 = vunpack.c.h.b16 %v23
  %v1265 = vunpack.c.l.b16 %v24
  %v1266 = vunpack.c.h.b16 %v24
  %v1267 = vunpack.c.l.b16 %v25
  %v1268 = vunpack.c.h.b16 %v25
  %v1269 = vunpack.c.l.b16 %v26
  %v1270 = vunpack.c.h.b16 %v26
  %v1271 = vunpack.c.l.b16 %v27
  %v1272 = vunpack.c.l.b16 %v28
  %v1273 = vunpack.c.h.b16 %v28
  %v1274 = vunpack.c.l.b16 %v29
  %v1275 = vunpack.c.h.b16 %v29
  %v1276 = vunpack.c.l.b16 %v30
  %v1277 = vunpack.c.h.b16 %v30
  %v1278 = vunpack.c.l.b16 %v31
  %v1279 = vunpack.c.h.b16 %v31
  %v1280 = vunpack.c.l.b16 %v32
  %v1281 = vunpack.c.h.b16 %v32
  %v1282 = vunpack.c.l.b16 %v33
  %v1283 = vunpack.c.h.b16 %v33
  %v1284 = vunpack.c.l.b16 %v34
  %v1285 = vunpack.c.h.b16 %v34
  %v1286 = vunpack.c.l.b16 %v35
  %v1287 = vunpack.c.h.b16 %v35
  %v1288 = vunpack.c.l.b16 %v36
  %v1289 = vunpack.c.h.b16 %v36
  %v1290 = vunpack.c.l.b16 %v37
  %v1291 = vunpack.c.h.b16 %v37
  %v1292 = vunpack.c.l.b16 %v38
  %v1293 = vunpack.c.h.b16 %v38
  %v1294 = vunpack.c.l.b16 %v39
  %v1295 = vunpack.c.h.b16 %v39
  %v1296 = vunpack.c.l.b16 %v40
  %v1297 = vunpack.c.l.b16 %v41
  %v1298 = vunpack.c.h.b16 %v41
  %v1299 = vunpack.c.l.b16 %v42
  %v1300 = vunpack.c.h.b16 %v42
  %v1301 = vunpack.c.l.b16 %v43
  %v1302 = vunpack.c.h.b16 %v43
  %v1303 = vunpack.c.l.b16 %v44
  %v1304 = vunpack.c.h.b16 %v44
  %v1305 = vunpack.c.l.b16 %v45
  %v1306 = vunpack.c.h.b16 %v45
  %v1307 = vunpack.c.l.b16 %v46
  %v1308 = vunpack.c.h.b16 %v46
  %v1309 = vunpack.c.l.b16 %v47
  %v1310 = vunpack.c.h.b16 %v47
  %v1311 = vunpack.c.l.b16 %v48
  %v1312 = vunpack.c.h.b16 %v48
  %v1313 = vunpack.c.l.b16 %v49
  %v1314 = vunpack.c.h.b16 %v49
  %v1315 = vunpack.c.l.b16 %v50
  %v1316 = vunpack.c.h.b16 %v50
  %v1317 = vunpack.c.l.b16 %v51
  %v1318 = vunpack.c.h.b16 %v51
  %v1319 = vunpack.c.l.b16 %v52
  %v1320 = vunpack.c.h.b16 %v52
  %v1321 = vunpack.c.l.b16 %v53
  %v1322 = vunpack.c.l.b16 %v54
  %v1323 = vunpack.c.h.b16 %v54
  %v1324 = vunpack.c.l.b16 %v55
  %v1325 = vunpack.c.h.b16 %v55
  %v1326 = vunpack.c.l.b16 %v56
  %v1327 = vunpack.c.h.b16 %v56
  %v1328 = vunpack.c.l.b16 %v57
  %v1329 = vunpack.c.h.b16 %v57
  %v1330 = vunpack.c.l.b16 %v58
  %v1331 = vunpack.c.h.b16 %v58
  %v1332 = vunpack.c.l.b16 %v59
  %v1333 = vunpack.c.h.b16 %v59
  %v1334 = vunpack.c.l.b16 %v60
  %v1335 = vunpack.c.h.b16 %v60
  %v1336 = vunpack.c.l.b16 %v61
  %v1337 = vunpack.c.h.b16 %v61
  %v1338 = vunpack.c.l.b16 %v62
  %v1339 = vunpack.c.h.b16 %v62
  %v1340 = vunpack.c.l.b16 %v63
  %v1341 = vunpack.c.h.b16 %v63
  %v1342 = vunpack.c.l.b16 %v64
  %v1343 = vunpack.c.h.b16 %v64
  %v1344 = vunpack.c.l.b16 %v65
  %v1345 = vunpack.c.h.b16 %v65
  %v1346 = vunpack.c.l.b16 %v66
  %v1347 = vunpack.c.l.b16 %v67
  %v1348 = vunpack.c.h.b16 %v67
  %v1349 = vunpack.c.l.b16 %v68
  %v1350 = vunpack.c.h.b16 %v68
  %v1351 = vunpack.c.l.b16 %v69
  %v1352 = vunpack.c.h.b16 %v69
  %v1353 = vunpack.c.l.b16 %v70
  %v1354 = vunpack.c.h.b16 %v70
  %v1355 = vunpack.c.l.b16 %v71
  %v1356 = vunpack.c.h.b16 %v71
  %v1357 = vunpack.c.l.b16 %v72
  %v1358 = vunpack.c.h.b16 %v72
  %v1359 = vunpack.c.l.b16 %v73
  %v1360 = vunpack.c.h.b16 %v73
  %v1361 = vunpack.c.l.b16 %v74
  %v1362 = vunpack.c.h.b16 %v74
  %v1363 = vunpack.c.l.b16 %v75
  %v1364 = vunpack.c.h.b16 %v75
  %v1365 = vunpack.c.l.b16 %v76
  %v1366 = vunpack.c.h.b16 %v76
  %v1367 = vunpack.c.l.b16 %v77
  %v1368 = vunpack.c.h.b16 %v77
  %v1369 = vunpack.c.l.b16 %v78
  %v1370 = vunpack.c.h.b16 %v78
  %v1371 = vunpack.c.l.b16 %v79
  %v1372 = vunpack.c.l.b16 %v80
  %v1373 = vunpack.c.h.b16 %v80
  %v1374 = vunpack.c.l.b16 %v81
  %v1375 = vunpack.c.h.b16 %v81
  %v1376 = vunpack.c.l.b16 %v82
  %v1377 = vunpack.c.h.b16 %v82
  %v1378 = vunpack.c.l.b16 %v83
  %v1379 = vunpack.c.h.b16 %v83
  %v1380 = vunpack.c.l.b16 %v84
  %v1381 = vunpack.c.h.b16 %v84
  %v1382 = vunpack.c.l.b16 %v85
  %v1383 = vunpack.c.h.b16 %v85
  %v1384 = vunpack.c.l.b16 %v86
  %v1385 = vunpack.c.h.b16 %v86
  %v1386 = vunpack.c.l.b16 %v87
  %v1387 = vunpack.c.h.b16 %v87
  %v1388 = vunpack.c.l.b16 %v88
  %v1389 = vunpack.c.h.b16 %v88
  %v1390 = vunpack.c.l.b16 %v89
  %v1391 = vunpack.c.h.b16 %v89
  %v1392 = vunpack.c.l.b16 %v90
  %v1393 = vunpack.c.h.b16 %v90
  %v1394 = vunpack.c.l.b16 %v91
  %v1395 = vunpack.c.h.b16 %v91
  %v1396 = vunpack.c.l.b16 %v92
  %v1397 = vunpack.c.l.b16 %v93
  %v1398 = vunpack.c.h.b16 %v93
  %v1399 = vunpack.c.l.b16 %v94
  %v1400 = vunpack.c.h.b16 %v94
  %v1401 = vunpack.c.l.b16 %v95
  %v1402 = vunpack.c.h.b16 %v95
  %v1403 = vunpack.c.l.b16 %v96
  %v1404 = vunpack.c.h.b16 %v96
  %v1405 = vunpack.c.l.b16 %v97
  %v1406 = vunpack.c.h.b16 %v97
  %v1407 = vunpack.c.l.b16 %v98
  %v1408 = vunpack.c.h.b16 %v98
  %v1409 = vunpack.c.l.b16 %v99
  %v1410 = vunpack.c.h.b16 %v99
  %v1411 = vunpack.c.l.b16 %v100
  %v1412 = vunpack.c.h.b16 %v100
  %v1413 = vunpack.c.l.b16 %v101
  %v1414 = vunpack.c.h.b16 %v101
  %v1415 = vunpack.c.l.b16 %v102
  %v1416 = vunpack.c.h.b16 %v102
  %v1417 = vunpack.c.l.b16 %v103
  %v1418 = vunpack.c.h.b16 %v103
  %v1419 = vunpack.c.l.b16 %v104
  %v1420 = vunpack.c.h.b16 %v104
  %v1421 = vunpack.c.l.b16 %v105
  %v1422 = vunpack.c.l.b16 %v106
  %v1423 = vunpack.c.h.b16 %v106
  %v1424 = vunpack.c.l.b16 %v107
  %v1425 = vunpack.c.h.b16 %v107
  %v1426 = vunpack.c.l.b16 %v108
  %v1427 = vunpack.c.h.b16 %v108
  %v1428 = vunpack.c.l.b16 %v109
  %v1429 = vunpack.c.h.b16 %v109
  %v1430 = vunpack.c.l.b16 %v110
  %v1431 = vunpack.c.h.b16 %v110
  %v1432 = vunpack.c.l.b16 %v111
  %v1433 = vunpack.c.h.b16 %v111
  %v1434 = vunpack.c.l.b16 %v112
  %v1435 = vunpack.c.h.b16 %v112
  %v1436 = vunpack.c.l.b16 %v113
  %v1437 = vunpack.c.h.b16 %v113
  %v1438 = vunpack.c.l.b16 %v114
  %v1439 = vunpack.c.h.b16 %v114
  %v1440 = vunpack.c.l.b16 %v115
  %v1441 = vunpack.c.h.b16 %v115
  %v1442 = vunpack.c.l.b16 %v116
  %v1443 = vunpack.c.h.b16 %v116
  %v1444 = vunpack.c.l.b16 %v117
  %v1445 = vunpack.c.h.b16 %v117
  %v1446 = vunpack.c.l.b16 %v118
  %v1447 = vunpack.c.l.b16 %v119
  %v1448 = vunpack.c.h.b16 %v119
  %v1449 = vunpack.c.l.b16 %v120
  %v1450 = vunpack.c.h.b16 %v120
  %v1451 = vunpack.c.l.b16 %v121
  %v1452 = vunpack.c.h.b16 %v121
  %v1453 = vunpack.c.l.b16 %v122
  %v1454 = vunpack.c.h.b16 %v122
  %v1455 = vunpack.c.l.b16 %v123
  %v1456 = vunpack.c.h.b16 %v123
  %v1457 = vunpack.c.l.b16 %v124
  %v1458 = vunpack.c.h.b16 %v124
  %v1459 = vunpack.c.l.b16 %v125
  %v1460 = vunpack.c.h.b16 %v125
  %v1461 = vunpack.c.l.b16 %v126
  %v1462 = vunpack.c.h.b16 %v126
  %v1463 = vunpack.c.l.b16 %v127
  %v1464 = vunpack.c.h.b16 %v127
  %v1465 = vunpack.c.l.b16 %v128
  %v1466 = vunpack.c.h.b16 %v128
  %v1467 = vunpack.c.l.b16 %v129
  %v1468 = vunpack.c.h.b16 %v129
  %v1469 = vunpack.c.l.b16 %v130
  %v1470 = vunpack.c.h.b16 %v130
  %v1471 = vunpack.c.l.b16 %v131
  %v1472 = vunpack.c.l.b16 %v132
  %v1473 = vunpack.c.h.b16 %v132
  %v1474 = vunpack.c.l.b16 %v133
  %v1475 = vunpack.c.h.b16 %v133
  %v1476 = vunpack.c.l.b16 %v134
  %v1477 = vunpack.c.h.b16 %v134
  %v1478 = vunpack.c.l.b16 %v135
  %v1479 = vunpack.c.h.b16 %v135
  %v1480 = vunpack.c.l.b16 %v136
  %v1481 = vunpack.c.h.b16 %v136
  %v1482 = vunpack.c.l.b16 %v137
  %v1483 = vunpack.c.h.b16 %v137
  %v1484 = vunpack.c.l.b16 %v138
  %v1485 = vunpack.c.h.b16 %v138
  %v1486 = vunpack.c.l.b16 %v139
  %v1487 = vunpack.c.h.b16 %v139
  %v1488 = vunpack.c.l.b16 %v140
  %v1489 = vunpack.c.h.b16 %v140
  %v1490 = vunpack.c.l.b16 %v141
  %v1491 = vunpack.c.h.b16 %v141
  %v1492 = vunpack.c.l.b16 %v142
  %v1493 = vunpack.c.h.b16 %v142
  %v1494 = vunpack.c.l.b16 %v143
  %v1495 = vunpack.c.h.b16 %v143
  %v1496 = vunpack.c.l.b16 %v144
  %v1497 = vunpack.c.l.b16 %v145
  %v1498 = vunpack.c.h.b16 %v145
  %v1499 = vunpack.c.l.b16 %v146
  %v1500 = vunpack.c.h.b16 %v146
  %v1501 = vunpack.c.l.b16 %v147
  %v1502 = vunpack.c.h.b16 %v147
  %v1503 = vunpack.c.l.b16 %v148
  %v1504 = vunpack.c.h.b16 %v148
  %v1505 = vunpack.c.l.b16 %v149
  %v1506 = vunpack.c.h.b16 %v149
  %v1507 = vunpack.c.l.b16 %v150
  %v1508 = vunpack.c.h.b16 %v150
  %v1509 = vunpack.c.l.b16 %v151
  %v1510 = vunpack.c.h.b16 %v151
  %v1511 = vunpack.c.l.b16 %v152
  %v1512 = vunpack.c.h.b16 %v152
  %v1513 = vunpack.c.l.b16 %v153
  %v1514 = vunpack.c.h.b16 %v153
  %v1515 = vunpack.c.l.b16 %v154
  %v1516 = vunpack.c.h.b16 %v154
  %v1517 = vunpack.c.l.b16 %v155
  %v1518 = vunpack.c.h.b16 %v155
  %v1519 = vunpack.c.l.b16 %v156
  %v1520 = vunpack.c.h.b16 %v156
  %v1521 = vunpack.c.l.b16 %v157
  %v1522 = vunpack.c.l.b16 %v158
  %v1523 = vunpack.c.h.b16 %v158
  %v1524 = vunpack.c.l.b16 %v159
  %v1525 = vunpack.c.h.b16 %v159
  %v1526 = vunpack.c.l.b16 %v160
  %v1527 = vunpack.c.h.b16 %v160
  %v1528 = vunpack.c.l.b16 %v161
  %v1529 = vunpack.c.h.b16 %v161
  %v1530 = vunpack.c.l.b16 %v162
  %v1531 = vunpack.c.h.b16 %v162
  %v1532 = vunpack.c.l.b16 %v163
  %v1533 = vunpack.c.h.b16 %v163
  %v1534 = vunpack.c.l.b16 %v164
  %v1535 = vunpack.c.h.b16 %v164
  %v1536 = vunpack.c.l.b16 %v165
  %v1537 = vunpack.c.h.b16 %v165
  %v1538 = vunpack.c.l.b16 %v166
  %v1539 = vunpack.c.h.b16 %v166
  %v1540 = vunpack.c.l.b16 %v167
  %v1541 = vunpack.c.h.b16 %v167
  %v1542 = vunpack.c.l.b16 %v168
  %v1543 = vunpack.c.h.b16 %v168
  %v1544 = vunpack.c.l.b16 %v169
  %v1545 = vunpack.c.h.b16 %v169
  %v1546 = vunpack.c.l.b16 %v170
  %v1547 = vunpack.c.l.b16 %v171
  %v1548 = vunpack.c.h.b16 %v171
  %v1549 = vunpack.c.l.b16 %v172
  %v1550 = vunpack.c.h.b16 %v172
  %v1551 = vunpack.c.l.b16 %v173
  %v1552 = vunpack.c.h.b16 %v173
  %v1553 = vunpack.c.l.b16 %v174
  %v1554 = vunpack.c.h.b16 %v174
  %v1555 = vunpack.c.l.b16 %v175
  %v1556 = vunpack.c.h.b16 %v175
  %v1557 = vunpack.c.l.b16 %v176
  %v1558 = vunpack.c.h.b16 %v176
  %v1559 = vunpack.c.l.b16 %v177
  %v1560 = vunpack.c.h.b16 %v177
  %v1561 = vunpack.c.l.b16 %v178
  %v1562 = vunpack.c.h.b16 %v178
  %v1563 = vunpack.c.l.b16 %v179
  %v1564 = vunpack.c.h.b16 %v179
  %v1565 = vunpack.c.l.b16 %v180
  %v1566 = vunpack.c.h.b16 %v180
  %v1567 = vunpack.c.l.b16 %v181
  %v1568 = vunpack.c.h.b16 %v181
  %v1569 = vunpack.c.l.b16 %v182
  %v1570 = vunpack.c.h.b16 %v182
  %v1571 = vunpack.c.l.b16 %v183
  %v1572 = vunpack.c.l.b16 %v184
  %v1573 = vunpack.c.h.b16 %v184
  %v1574 = vunpack.c.l.b16 %v185
  %v1575 = vunpack.c.h.b16 %v185
  %v1576 = vunpack.c.l.b16 %v186
  %v1577 = vunpack.c.h.b16 %v186
  %v1578 = vunpack.c.l.b16 %v187
  %v1579 = vunpack.c.h.b16 %v187
  %v1580 = vunpack.c.l.b16 %v188
  %v1581 = vunpack.c.h.b16 %v188
  %v1582 = vunpack.c.l.b16 %v189
  %v1583 = vunpack.c.h.b16 %v189
  %v1584 = vunpack.c.l.b16 %v190
  %v1585 = vunpack.c.h.b16 %v190
  %v1586 = vunpack.c.l.b16 %v191
  %v1587 = vunpack.c.h.b16 %v191
  %v1588 = vunpack.c.l.b16 %v192
  %v1589 = vunpack.c.h.b16 %v192
  %v1590 = vunpack.c.l.b16 %v193
  %v1591 = vunpack.c.h.b16 %v193
  %v1592 = vunpack.c.l.b16 %v194
  %v1593 = vunpack.c.h.b16 %v194
  %v1594 = vunpack.c.l.b16 %v195
  %v1595 = vunpack.c.h.b16 %v195
  %v1596 = vunpack.c.l.b16 %v196
  %v1597 = vunpack.c.l.b16 %v197
  %v1598 = vunpack.c.h.b16 %v197
  %v1599 = vunpack.c.l.b16 %v198
  %v1600 = vunpack.c.h.b16 %v198
  %v1601 = vunpack.c.l.b16 %v199
  %v1602 = vunpack.c.h.b16 %v199
  %v1603 = vunpack.c.l.b16 %v200
  %v1604 = vunpack.c.h.b16 %v200
  %v1605 = vunpack.c.l.b16 %v201
  %v1606 = vunpack.c.h.b16 %v201
  %v1607 = vunpack.c.l.b16 %v202
  %v1608 = vunpack.c.h.b16 %v202
  %v1609 = vunpack.c.l.b16 %v203
  %v1610 = vunpack.c.h.b16 %v203
  %v1611 = vunpack.c.l.b16 %v204
  %v1612 = vunpack.c.h.b16 %v204
  %v1613 = vunpack.c.l.b16 %v205
  %v1614 = vunpack.c.h.b16 %v205
  %v1615 = vunpack.c.l.b16 %v206
  %v1616 = vunpack.c.h.b16 %v206
  %v1617 = vunpack.c.l.b16 %v207
  %v1618 = vunpack.c.h.b16 %v207
  %v1619 = vunpack.c.l.b16 %v208
  %v1620 = vunpack.c.h.b16 %v208
  %v1621 = vunpack.c.l.b16 %v209
  %v1622 = vunpack.c.l.b16 %v210
  %v1623 = vunpack.c.h.b16 %v210
  %v1624 = vunpack.c.l.b16 %v211
  %v1625 = vunpack.c.h.b16 %v211
  %v1626 = vunpack.c.l.b16 %v212
  %v1627 = vunpack.c.h.b16 %v212
  %v1628 = vunpack.c.l.b16 %v213
  %v1629 = vunpack.c.h.b16 %v213
  %v1630 = vunpack.c.l.b16 %v214
  %v1631 = vunpack.c.h.b16 %v214
  %v1632 = vunpack.c.l.b16 %v215
  %v1633 = vunpack.c.h.b16 %v215
  %v1634 = vunpack.c.l.b16 %v216
  %v1635 = vunpack.c.h.b16 %v216
  %v1636 = vunpack.c.l.b16 %v217
  %v1637 = vunpack.c.h.b16 %v217
  %v1638 = vunpack.c.l.b16 %v218
  %v1639 = vunpack.c.h.b16 %v218
  %v1640 = vunpack.c.l.b16 %v219
  %v1641 = vunpack.c.h.b16 %v219
  %v1642 = vunpack.c.l.b16 %v220
  %v1643 = vunpack.c.h.b16 %v220
  %v1644 = vunpack.c.l.b16 %v221
  %v1645 = vunpack.c.h.b16 %v221
  %v1646 = vunpack.c.l.b16 %v222
  %v1647 = vunpack.c.l.b16 %v223
  %v1648 = vunpack.c.h.b16 %v223
  %v1649 = vunpack.c.l.b16 %v224
  %v1650 = vunpack.c.h.b16 %v224
  %v1651 = vunpack.c.l.b16 %v225
  %v1652 = vunpack.c.h.b16 %v225
  %v1653 = vunpack.c.l.b16 %v226
  %v1654 = vunpack.c.h.b16 %v226
  %v1655 = vunpack.c.l.b16 %v227
  %v1656 = vunpack.c.h.b16 %v227
  %v1657 = vunpack.c.l.b16 %v228
  %v1658 = vunpack.c.h.b16 %v228
  %v1659 = vunpack.c.l.b16 %v229
  %v1660 = vunpack.c.h.b16 %v229
  %v1661 = vunpack.c.l.b16 %v230
  %v1662 = vunpack.c.h.b16 %v230
  %v1663 = vunpack.c.l.b16 %v231
  %v1664 = vunpack.c.h.b16 %v231
  %v1665 = vunpack.c.l.b16 %v232
  %v1666 = vunpack.c.h.b16 %v232
  %v1667 = vunpack.c.l.b16 %v233
  %v1668 = vunpack.c.h.b16 %v233
  %v1669 = vunpack.c.l.b16 %v234
  %v1670 = vunpack.c.h.b16 %v234
  %v1671 = vunpack.c.l.b16 %v235
  %v1672 = vunpack.c.l.b16 %v236
  %v1673 = vunpack.c.h.b16 %v236
  %v1674 = vunpack.c.l.b16 %v237
  %v1675 = vunpack.c.h.b16 %v237
  %v1676 = vunpack.c.l.b16 %v238
  %v1677 = vunpack.c.h.b16 %v238
  %v1678 = vunpack.c.l.b16 %v239
  %v1679 = vunpack.c.h.b16 %v239
  %v1680 = vunpack.c.l.b16 %v240
  %v1681 = vunpack.c.h.b16 %v240
  %v1682 = vunpack.c.l.b16 %v241
  %v1683 = vunpack.c.h.b16 %v241
  %v1684 = vunpack.c.l.b16 %v242
  %v1685 = vunpack.c.h.b16 %v242
  %v1686 = vunpack.c.l.b16 %v243
  %v1687 = vunpack.c.h.b16 %v243
  %v1688 = vunpack.c.l.b16 %v244
  %v1689 = vunpack.c.h.b16 %v244
  %v1690 = vunpack.c.l.b16 %v245
  %v1691 = vunpack.c.h.b16 %v245
  %v1692 = vunpack.c.l.b16 %v246
  %v1693 = vunpack.c.h.b16 %v246
  %v1694 = vunpack.c.l.b16 %v247
  %v1695 = vunpack.c.h.b16 %v247
  %v1696 = vunpack.c.l.b16 %v248
  %v1697 = vunpack.c.l.b16 %v249
  %v1698 = vunpack.c.h.b16 %v249
  %v1699 = vunpack.c.l.b16 %v250
  %v1700 = vunpack.c.h.b16 %v250
  %v1701 = vunpack.c.l.b16 %v251
  %v1702 = vunpack.c.h.b16 %v251
  %v1703 = vunpack.c.l.b16 %v252
  %v1704 = vunpack.c.h.b16 %v252
  %v1705 = vunpack.c.l.b16 %v253
  %v1706 = vunpack.c.h.b16 %v253
  %v1707 = vunpack.c.l.b16 %v254
  %v1708 = vunpack.c.h.b16 %v254
  %v1709 = vunpack.c.l.b16 %v255
  %v1710 = vunpack.c.h.b16 %v255
  %v1711 = vunpack.c.l.b16 %v256
  %v1712 = vunpack.c.h.b16 %v256
  %v1713 = vunpack.c.l.b16 %v257
  %v1714 = vunpack.c.h.b16 %v257
  %v1715 = vunpack.c.l.b16 %v258
  %v1716 = vunpack.c.h.b16 %v258
  %v1717 = vunpack.c.l.b16 %v259
  %v1718 = vunpack.c.h.b16 %v259
  %v1719 = vunpack.c.l.b16 %v260
  %v1720 = vunpack.c.h.b16 %v260
  %v1721 = vunpack.c.l.b16 %v261
  %v1722 = vunpack.c.l.b16 %v262
  %v1723 = vunpack.c.h.b16 %v262
  %v1724 = vunpack.c.l.b16 %v263
  %v1725 = vunpack.c.h.b16 %v263
  %v1726 = vunpack.c.l.b16 %v264
  %v1727 = vunpack.c.h.b16 %v264
  %v1728 = vunpack.c.l.b16 %v265
  %v1729 = vunpack.c.h.b16 %v265
  %v1730 = vunpack.c.l.b16 %v266
  %v1731 = vunpack.c.h.b16 %v266
  %v1732 = vunpack.c.l.b16 %v267
  %v1733 = vunpack.c.h.b16 %v267
  %v1734 = vunpack.c.l.b16 %v268
  %v1735 = vunpack.c.h.b16 %v268
  %v1736 = vunpack.c.l.b16 %v269
  %v1737 = vunpack.c.h.b16 %v269
  %v1738 = vunpack.c.l.b16 %v270
  %v1739 = vunpack.c.h.b16 %v270
  %v1740 = vunpack.c.l.b16 %v271
  %v1741 = vunpack.c.h.b16 %v271
  %v1742 = vunpack.c.l.b16 %v272
  %v1743 = vunpack.c.h.b16 %v272
  %v1744 = vunpack.c.l.b16 %v273
  %v1745 = vunpack.c.h.b16 %v273
  %v1746 = vunpack.c.l.b16 %v274
  %v1747 = vunpack.c.l.b16 %v275
  %v1748 = vunpack.c.h.b16 %v275
  %v1749 = vunpack.c.l.b16 %v276
  %v1750 = vunpack.c.h.b16 %v276
  %v1751 = vunpack.c.l.b16 %v277
  %v1752 = vunpack.c.h.b16 %v277
  %v1753 = vunpack.c.l.b16 %v278
  %v1754 = vunpack.c.h.b16 %v278
  %v1755 = vunpack.c.l.b16 %v279
  %v1756 = vunpack.c.h.b16 %v279
  %v1757 = vunpack.c.l.b16 %v280
  %v1758 = vunpack.c.h.b16 %v280
  %v1759 = vunpack.c.l.b16 %v281
  %v1760 = vunpack.c.h.b16 %v281
  %v1761 = vunpack.c.l.b16 %v282
  %v1762 = vunpack.c.h.b16 %v282
  %v1763 = vunpack.c.l.b16 %v283
  %v1764 = vunpack.c.h.b16 %v283
  %v1765 = vunpack.c.l.b16 %v284
  %v1766 = vunpack.c.h.b16 %v284
  %v1767 = vunpack.c.l.b16 %v285
  %v1768 = vunpack.c.h.b16 %v285
  %v1769 = vunpack.c.l.b16 %v286
  %v1770 = vunpack.c.h.b16 %v286
  %v1771 = vunpack.c.l.b16 %v287
  %v1772 = vunpack.c.l.b16 %v288
  %v1773 = vunpack.c.h.b16 %v288
  %v1774 = vunpack.c.l.b16 %v289
  %v1775 = vunpack.c.h.b16 %v289
  %v1776 = vunpack.c.l.b16 %v290
  %v1777 = vunpack.c.h.b16 %v290
  %v1778 = vunpack.c.l.b16 %v291
  %v1779 = vunpack.c.h.b16 %v291
  %v1780 = vunpack.c.l.b16 %v292
  %v1781 = vunpack.c.h.b16 %v292
  %v1782 = vunpack.c.l.b16 %v293
  %v1783 = vunpack.c.h.b16 %v293
  %v1784 = vunpack.c.l.b16 %v294
  %v1785 = vunpack.c.h.b16 %v294
  %v1786 = vunpack.c.l.b16 %v295
  %v1787 = vunpack.c.h.b16 %v295
  %v1788 = vunpack.c.l.b16 %v296
  %v1789 = vunpack.c.h.b16 %v296
  %v1790 = vunpack.c.l.b16 %v297
  %v1791 = vunpack.c.h.b16 %v297
  %v1792 = vunpack.c.l.b16 %v298
  %v1793 = vunpack.c.h.b16 %v298
  %v1794 = vunpack.c.l.b16 %v299
  %v1795 = vunpack.c.h.b16 %v299
  %v1796 = vunpack.c.l.b16 %v300
  %v1797 = vunpack.c.l.b16 %v301
  %v1798 = vunpack.c.h.b16 %v301
  %v1799 = vunpack.c.l.b16 %v302
  %v1800 = vunpack.c.h.b16 %v302
  %v1801 = vunpack.c.l.b16 %v303
  %v1802 = vunpack.c.h.b16 %v303
  %v1803 = vunpack.c.l.b16 %v304
  %v1804 = vunpack.c.h.b16 %v304
  %v1805 = vunpack.c.l.b16 %v305
  %v1806 = vunpack.c.h.b16 %v305
  %v1807 = vunpack.c.l.b16 %v306
  %v1808 = vunpack.c.h.b16 %v306
  %v1809 = vunpack.c.l.b16 %v307
  %v1810 = vunpack.c.h.b16 %v307
  %v1811 = vunpack.c.l.b16 %v308
  %v1812 = vunpack.c.h.b16 %v308
  %v1813 = vunpack.c.l.b16 %v309
  %v1814 = vunpack.c.h.b16 %v309
  %v1815 = vunpack.c.l.b16 %v310
  %v1816 = vunpack.c.h.b16 %v310
  %v1817 = vunpack.c.l.b16 %v311
  %v1818 = vunpack.c.h.b16 %v311
  %v1819 = vunpack.c.l.b16 %v312
  %v1820 = vunpack.c.h.b16 %v312
  %v1821 = vunpack.c.l.b16 %v313
  %v1822 = vunpack.c.l.b16 %v314
  %v1823 = vunpack.c.h.b16 %v314
  %v1824 = vunpack.c.l.b16 %v315
  %v1825 = vunpack.c.h.b16 %v315
  %v1826 = vunpack.c.l.b16 %v316
  %v1827 = vunpack.c.h.b16 %v316
  %v1828 = vunpack.c.l.b16 %v317
  %v1829 = vunpack.c.h.b16 %v317
  %v1830 = vunpack.c.l.b16 %v318
  %v1831 = vunpack.c.h.b16 %v318
  %v1832 = vunpack.c.l.b16 %v319
  %v1833 = vunpack.c.h.b16 %v319
  %v1834 = vunpack.c.l.b16 %v320
  %v1835 = vunpack.c.h.b16 %v320
  %v1836 = vunpack.c.l.b16 %v321
  %v1837 = vunpack.c.h.b16 %v321
  %v1838 = vunpack.c.l.b16 %v322
  %v1839 = vunpack.c.h.b16 %v322
  %v1840 = vunpack.c.l.b16 %v323
  %v1841 = vunpack.c.h.b16 %v323
  %v1842 = vunpack.c.l.b16 %v324
  %v1843 = vunpack.c.h.b16 %v324
  %v1844 = vunpack.c.l.b16 %v325
  %v1845 = vunpack.c.h.b16 %v325
  %v1846 = vunpack.c.l.b16 %v326
  %v1847 = vunpack.c.l.b16 %v327
  %v1848 = vunpack.c.h.b16 %v327
  %v1849 = vunpack.c.l.b16 %v328
  %v1850 = vunpack.c.h.b16 %v328
  %v1851 = vunpack.c.l.b16 %v329
  %v1852 = vunpack.c.h.b16 %v329
  %v1853 = vunpack.c.l.b16 %v330
  %v1854 = vunpack.c.h.b16 %v330
  %v1855 = vunpack.c.l.b16 %v331
  %v1856 = vunpack.c.h.b16 %v331
  %v1857 = vunpack.c.l.b16 %v332
  %v1858 = vunpack.c.h.b16 %v332
  %v1859 = vunpack.c.l.b16 %v333
  %v1860 = vunpack.c.h.b16 %v333
  %v1861 = vunpack.c.l.b16 %v334
  %v1862 = vunpack.c.h.b16 %v334
  %v1863 = vunpack.c.l.b16 %v335
  %v1864 = vunpack.c.h.b16 %v335
  %v1865 = vunpack.c.l.b16 %v336
  %v1866 = vunpack.c.h.b16 %v336
  %v1867 = vunpack.c.l.b16 %v337
  %v1868 = vunpack.c.h.b16 %v337
  %v1869 = vunpack.c.l.b16 %v338
  %v1870 = vunpack.c.h.b16 %v338
  %v1871 = vunpack.c.l.b16 %v339
  %v1872 = vunpack.c.l.b16 %v340
  %v1873 = vunpack.c.h.b16 %v340
  %v1874 = vunpack.c.l.b16 %v341
  %v1875 = vunpack.c.h.b16 %v341
  %v1876 = vunpack.c.l.b16 %v342
  %v1877 = vunpack.c.h.b16 %v342
  %v1878 = vunpack.c.l.b16 %v343
  %v1879 = vunpack.c.h.b16 %v343
  %v1880 = vunpack.c.l.b16 %v344
  %v1881 = vunpack.c.h.b16 %v344
  %v1882 = vunpack.c.l.b16 %v345
  %v1883 = vunpack.c.h.b16 %v345
  %v1884 = vunpack.c.l.b16 %v346
  %v1885 = vunpack.c.h.b16 %v346
  %v1886 = vunpack.c.l.b16 %v347
  %v1887 = vunpack.c.h.b16 %v347
  %v1888 = vunpack.c.l.b16 %v348
  %v1889 = vunpack.c.h.b16 %v348
  %v1890 = vunpack.c.l.b16 %v349
  %v1891 = vunpack.c.h.b16 %v349
  %v1892 = vunpack.c.l.b16 %v350
  %v1893 = vunpack.c.h.b16 %v350
  %v1894 = vunpack.c.l.b16 %v351
  %v1895 = vunpack.c.h.b16 %v351
  %v1896 = vunpack.c.l.b16 %v352
  %v1897 = vunpack.c.l.b16 %v353
  %v1898 = vunpack.c.h.b16 %v353
  %v1899 = vunpack.c.l.b16 %v354
  %v1900 = vunpack.c.h.b16 %v354
  %v1901 = vunpack.c.l.b16 %v355
  %v1902 = vunpack.c.h.b16 %v355
  %v1903 = vunpack.c.l.b16 %v356
  %v1904 = vunpack.c.h.b16 %v356
  %v1905 = vunpack.c.l.b16 %v357
  %v1906 = vunpack.c.h.b16 %v357
  %v1907 = vunpack.c.l.b16 %v358
  %v1908 = vunpack.c.h.b16 %v358
  %v1909 = vunpack.c.l.b16 %v359
  %v1910 = vunpack.c.h.b16 %v359
  %v1911 = vunpack.c.l.b16 %v360
  %v1912 = vunpack.c.h.b16 %v360
  %v1913 = vunpack.c.l.b16 %v361
  %v1914 = vunpack.c.h.b16 %v361
  %v1915 = vunpack.c.l.b16 %v362
  %v1916 = vunpack.c.h.b16 %v362
  %v1917 = vunpack.c.l.b16 %v363
  %v1918 = vunpack.c.h.b16 %v363
  %v1919 = vunpack.c.l.b16 %v364
  %v1920 = vunpack.c.h.b16 %v364
  %v1921 = vunpack.c.l.b16 %v365
  %v1922 = vunpack.c.l.b16 %v366
  %v1923 = vunpack.c.h.b16 %v366
  %v1924 = vunpack.c.l.b16 %v367
  %v1925 = vunpack.c.h.b16 %v367
  %v1926 = vunpack.c.l.b16 %v368
  %v1927 = vunpack.c.h.b16 %v368
  %v1928 = vunpack.c.l.b16 %v369
  %v1929 = vunpack.c.h.b16 %v369
  %v1930 = vunpack.c.l.b16 %v370
  %v1931 = vunpack.c.h.b16 %v370
  %v1932 = vunpack.c.l.b16 %v371
  %v1933 = vunpack.c.h.b16 %v371
  %v1934 = vunpack.c.l.b16 %v372
  %v1935 = vunpack.c.h.b16 %v372
  %v1936 = vunpack.c.l.b16 %v373
  %v1937 = vunpack.c.h.b16 %v373
  %v1938 = vunpack.c.l.b16 %v374
  %v1939 = vunpack.c.h.b16 %v374
  %v1940 = vunpack.c.l.b16 %v375
  %v1941 = vunpack.c.h.b16 %v375
  %v1942 = vunpack.c.l.b16 %v376
  %v1943 = vunpack.c.h.b16 %v376
  %v1944 = vunpack.c.l.b16 %v377
  %v1945 = vunpack.c.h.b16 %v377
  %v1946 = vunpack.c.l.b16 %v378
  %v1947 = vunpack.c.l.b16 %v379
  %v1948 = vunpack.c.h.b16 %v379
  %v1949 = vunpack.c.l.b16 %v380
  %v1950 = vunpack.c.h.b16 %v380
  %v1951 = vunpack.c.l.b16 %v381
  %v1952 = vunpack.c.h.b16 %v381
  %v1953 = vunpack.c.l.b16 %v382
  %v1954 = vunpack.c.h.b16 %v382
  %v1955 = vunpack.c.l.b16 %v383
  %v1956 = vunpack.c.h.b16 %v383
  %v1957 = vunpack.c.l.b16 %v384
  %v1958 = vunpack.c.h.b16 %v384
  %v1959 = vunpack.c.l.b16 %v385
  %v1960 = vunpack.c.h.b16 %v385
  %v1961 = vunpack.c.l.b16 %v386
  %v1962 = vunpack.c.h.b16 %v386
  %v1963 = vunpack.c.l.b16 %v387
  %v1964 = vunpack.c.h.b16 %v387
  %v1965 = vunpack.c.l.b16 %v388
  %v1966 = vunpack.c.h.b16 %v388
  %v1967 = vunpack.c.l.b16 %v389
  %v1968 = vunpack.c.h.b16 %v389
  %v1969 = vunpack.c.l.b16 %v390
  %v1970 = vunpack.c.h.b16 %v390
  %v1971 = vunpack.c.l.b16 %v391
  %v1972 = vunpack.c.l.b16 %v392
  %v1973 = vunpack.c.h.b16 %v392
  %v1974 = vunpack.c.l.b16 %v393
  %v1975 = vunpack.c.h.b16 %v393
  %v1976 = vunpack.c.l.b16 %v394
  %v1977 = vunpack.c.h.b16 %v394
  %v1978 = vunpack.c.l.b16 %v395
  %v1979 = vunpack.c.h.b16 %v395
  %v1980 = vunpack.c.l.b16 %v396
  %v1981 = vunpack.c.h.b16 %v396
  %v1982 = vunpack.c.l.b16 %v397
  %v1983 = vunpack.c.h.b16 %v397
  %v1984 = vunpack.c.l.b16 %v398
  %v1985 = vunpack.c.h.b16 %v398
  %v1986 = vunpack.c.l.b16 %v399
  %v1987 = vunpack.c.h.b16 %v399
  %v1988 = vunpack.c.l.b16 %v400
  %v1989 = vunpack.c.h.b16 %v400
  %v1990 = vunpack.c.l.b16 %v401
  %v1991 = vunpack.c.h.b16 %v401
  %v1992 = vunpack.c.l.b16 %v402
  %v1993 = vunpack.c.h.b16 %v402
  %v1994 = vunpack.c.l.b16 %v403
  %v1995 = vunpack.c.h.b16 %v403
  %v1996 = vunpack.c.l.b16 %v404
  %v1997 = vunpack.c.l.b16 %v405
  %v1998 = vunpack.c.h.b16 %v405
  %v1999 = vunpack.c.l.b16 %v406
  %v2000 = vunpack.c.h.b16 %v406
  %v2001 = vunpack.c.l.b16 %v407
  %v2002 = vunpack.c.h.b16 %v407
  %v2003 = vunpack.c.l.b16 %v408
  %v2004 = vunpack.c.h.b16 %v408
  %v2005 = vunpack.c.l.b16 %v409
  %v2006 = vunpack.c.h.b16 %v409
  %v2007 = vunpack.c.l.b16 %v410
  %v2008 = vunpack.c.h.b16 %v410
  %v2009 = vunpack.c.l.b16 %v411
  %v2010 = vunpack.c.h.b16 %v411
  %v2011 = vunpack.c.l.b16 %v412
  %v2012 = vunpack.c.h.b16 %v412
  %v2013 = vunpack.c.l.b16 %v413
  %v2014 = vunpack.c.h.b16 %v413
  %v2015 = vunpack.c.l.b16 %v414
  %v2016 = vunpack.c.h.b16 %v414
  %v2017 = vunpack.c.l.b16 %v415
  %v2018 = vunpack.c.h.b16 %v415
  %v2019 = vunpack.c.l.b16 %v416
  %v2020 = vunpack.c.h.b16 %v416
  %v2021 = vunpack.c.l.b16 %v417
  %v2022 = vunpack.c.l.b16 %v418
  %v2023 = vunpack.c.h.b16 %v418
  %v2024 = vunpack.c.l.b16 %v419
  %v2025 = vunpack.c.h.b16 %v419
  %v2026 = vunpack.c.l.b16 %v420
  %v2027 = vunpack.c.h.b16 %v420
  %v2028 = vunpack.c.l.b16 %v421
  %v2029 = vunpack.c.h.b16 %v421
  %v2030 = vunpack.c.l.b16 %v422
  %v2031 = vunpack.c.h.b16 %v422
  %v2032 = vunpack.c.l.b16 %v423
  %v2033 = vunpack.c.h.b16 %v423
  %v2034 = vunpack.c.l.b16 %v424
  %v2035 = vunpack.c.h.b16 %v424
  %v2036 = vunpack.c.l.b16 %v425
  %v2037 = vunpack.c.h.b16 %v425
  %v2038 = vunpack.c.l.b16 %v426
  %v2039 = vunpack.c.h.b16 %v426
  %v2040 = vunpack.c.l.b16 %v427
  %v2041 = vunpack.c.h.b16 %v427
  %v2042 = vunpack.c.l.b16 %v428
  %v2043 = vunpack.c.h.b16 %v428
  %v2044 = vunpack.c.l.b16 %v429
  %v2045 = vunpack.c.h.b16 %v429
  %v2046 = vunpack.c.l.b16 %v430
  %v2047 = vpack.c.b16 %v1272, %v1247
  %v2048 = vpack.c.b16 %v1273, %v1248
  %v2049 = vpack.c.b16 %v1274, %v1249
  %v2050 = vpack.c.b16 %v1275, %v1250
  %v2051 = vpack.c.b16 %v1276, %v1251
  %v2052 = vpack.c.b16 %v1277, %v1252
  %v2053 = vpack.c.b16 %v1278, %v1253
  %v2054 = vpack.c.b16 %v1279, %v1254
  %v2055 = vpack.c.b16 %v1280, %v1255
  %v2056 = vpack.c.b16 %v1281, %v1256
  %v2057 = vpack.c.b16 %v1282, %v1257
  %v2058 = vpack.c.b16 %v1283, %v1258
  %v2059 = vpack.c.b16 %v1284, %v1259
  %v2060 = vpack.c.b16 %v1285, %v1260
  %v2061 = vpack.c.b16 %v1286, %v1261
  %v2062 = vpack.c.b16 %v1287, %v1262
  %v2063 = vpack.c.b16 %v1288, %v1263
  %v2064 = vpack.c.b16 %v1289, %v1264
  %v2065 = vpack.c.b16 %v1290, %v1265
  %v2066 = vpack.c.b16 %v1291, %v1266
  %v2067 = vpack.c.b16 %v1292, %v1267
  %v2068 = vpack.c.b16 %v1293, %v1268
  %v2069 = vpack.c.b16 %v1294, %v1269
  %v2070 = vpack.c.b16 %v1295, %v1270
  %v2071 = vpack.c.b16 %v1296, %v1271
  %v2072 = vpack.c.b16 %v1322, %v1297
  %v2073 = vpack.c.b16 %v1323, %v1298
  %v2074 = vpack.c.b16 %v1324, %v1299
  %v2075 = vpack.c.b16 %v1325, %v1300
  %v2076 = vpack.c.b16 %v1326, %v1301
  %v2077 = vpack.c.b16 %v1327, %v1302
  %v2078 = vpack.c.b16 %v1328, %v1303
  %v2079 = vpack.c.b16 %v1329, %v1304
  %v2080 = vpack.c.b16 %v1330, %v1305
  %v2081 = vpack.c.b16 %v1331, %v1306
  %v2082 = vpack.c.b16 %v1332, %v1307
  %v2083 = vpack.c.b16 %v1333, %v1308
  %v2084 = vpack.c.b16 %v1334, %v1309
  %v2085 = vpack.c.b16 %v1335, %v1310
  %v2086 = vpack.c.b16 %v1336, %v1311
  %v2087 = vpack.c.b16 %v1337, %v1312
  %v2088 = vpack.c.b16 %v1338, %v1313
  %v2089 = vpack.c.b16 %v1339, %v1314
  %v2090 = vpack.c.b16 %v1340, %v1315
  %v2091 = vpack.c.b16 %v1341, %v1316
  %v2092 = vpack.c.b16 %v1342, %v1317
  %v2093 = vpack.c.b16 %v1343, %v1318
  %v2094 = vpack.c.b16 %v1344, %v1319
  %v2095 = vpack.c.b16 %v1345, %v1320
  %v2096 = vpack.c.b16 %v1346, %v1321
  %v2097 = vpack.c.b16 %v1372, %v1347
  %v2098 = vpack.c.b16 %v1373, %v1348
  %v2099 = vpack.c.b16 %v1374, %v1349
  %v2100 = vpack.c.b16 %v1375, %v1350
  %v2101 = vpack.c.b16 %v1376, %v1351
  %v2102 = vpack.c.b16 %v1377, %v1352
  %v2103 = vpack.c.b16 %v1378, %v1353
  %v2104 = vpack.c.b16 %v1379, %v1354
  %v2105 = vpack.c.b16 %v1380, %v1355
  %v2106 = vpack.c.b16 %v1381, %v1356
  %v2107 = vpack.c.b16 %v1382, %v1357
  %v2108 = vpack.c.b16 %v1383, %v1358
  %v2109 = vpack.c.b16 %v1384, %v1359
  %v2110 = vpack.c.b16 %v1385, %v1360
  %v2111 = vpack.c.b16 %v1386, %v1361
  %v2112 = vpack.c.b16 %v1387, %v1362
  %v2113 = vpack.c.b16 %v1388, %v1363
  %v2114 = vpack.c.b16 %v1389, %v1364
  %v2115 = vpack.c.b16 %v1390, %v1365
  %v2116 = vpack.c.b16 %v1391, %v1366
  %v2117 = vpack.c.b16 %v1392, %v1367
  %v2118 = vpack.c.b16 %v1393, %v1368
  %v2119 = vpack.c.b16 %v1394, %v1369
  %v2120 = vpack.c.b16 %v1395, %v1370
  %v2121 = vpack.c.b16 %v1396, %v1371
  %v2122 = vpack.c.b16 %v1422, %v1397
  %v2123 = vpack.c.b16 %v1423, %v1398
  %v2124 = vpack.c.b16 %v1424, %v1399
  %v2125 = vpack.c.b16 %v1425, %v1400
  %v2126 = vpack.c.b16 %v1426, %v1401
  %v2127 = vpack.c.b16 %v1427, %v1402
  %v2128 = vpack.c.b16 %v1428, %v1403
  %v2129 = vpack.c.b16 %v1429, %v1404
  %v2130 = vpack.c.b16 %v1430, %v1405
  %v2131 = vpack.c.b16 %v1431, %v1406
  %v2132 = vpack.c.b16 %v1432, %v1407
  %v2133 = vpack.c.b16 %v1433, %v1408
  %v2134 = vpack.c.b16 %v1434, %v1409
  %v2135 = vpack.c.b16 %v1435, %v1410
  %v2136 = vpack.c.b16 %v1436, %v1411
  %v2137 = vpack.c.b16 %v1437, %v1412
  %v2138 = vpack.c.b16 %v1438, %v1413
  %v2139 = vpack.c.b16 %v1439, %v1414
  %v2140 = vpack.c.b16 %v1440, %v1415
  %v2141 = vpack.c.b16 %v1441, %v1416
  %v2142 = vpack.c.b16 %v1442, %v1417
  %v2143 = vpack.c.b16 %v1443, %v1418
  %v2144 = vpack.c.b16 %v1444, %v1419
  %v2145 = vpack.c.b16 %v1445, %v1420
  %v2146 = vpack.c.b16 %v1446, %v1421
  %v2147 = vpack.c.b16 %v1472, %v1447
  %v2148 = vpack.c.b16 %v1473, %v1448
  %v2149 = vpack.c.b16 %v1474, %v1449
  %v2150 = vpack.c.b16 %v1475, %v1450
  %v2151 = vpack.c.b16 %v1476, %v1451
  %v2152 = vpack.c.b16 %v1477, %v1452
  %v2153 = vpack.c.b16 %v1478, %v1453
  %v2154 = vpack.c.b16 %v1479, %v1454
  %v2155 = vpack.c.b16 %v1480, %v1455
  %v2156 = vpack.c.b16 %v1481, %v1456
  %v2157 = vpack.c.b16 %v1482, %v1457
  %v2158 = vpack.c.b16 %v1483, %v1458
  %v2159 = vpack.c.b16 %v1484, %v1459
  %v2160 = vpack.c.b16 %v1485, %v1460
  %v2161 = vpack.c.b16 %v1486, %v1461
  %v2162 = vpack.c.b16 %v1487, %v1462
  %v2163 = vpack.c.b16 %v1488, %v1463
  %v2164 = vpack.c.b16 %v1489, %v1464
  %v2165 = vpack.c.b16 %v1490, %v1465
  %v2166 = vpack.c.b16 %v1491, %v1466
  %v2167 = vpack.c.b16 %v1492, %v1467
  %v2168 = vpack.c.b16 %v1493, %v1468
  %v2169 = vpack.c.b16 %v1494, %v1469
  %v2170 = vpack.c.b16 %v1495, %v1470
  %v2171 = vpack.c.b16 %v1496, %v1471
  %v2172 = vpack.c.b16 %v1522, %v1497
  %v2173 = vpack.c.b16 %v1523, %v1498
  %v2174 = vpack.c.b16 %v1524, %v1499
  %v2175 = vpack.c.b16 %v1525, %v1500
  %v2176 = vpack.c.b16 %v1526, %v1501
  %v2177 = vpack.c.b16 %v1527, %v1502
  %v2178 = vpack.c.b16 %v1528, %v1503
  %v2179 = vpack.c.b16 %v1529, %v1504
  %v2180 = vpack.c.b16 %v1530, %v1505
  %v2181 = vpack.c.b16 %v1531, %v1506
  %v2182 = vpack.c.b16 %v1532, %v1507
  %v2183 = vpack.c.b16 %v1533, %v1508
  %v2184 = vpack.c.b16 %v1534, %v1509
  %v2185 = vpack.c.b16 %v1535, %v1510
  %v2186 = vpack.c.b16 %v1536, %v1511
  %v2187 = vpack.c.b16 %v1537, %v1512
  %v2188 = vpack.c.b16 %v1538, %v1513
  %v2189 = vpack.c.b16 %v1539, %v1514
  %v2190 = vpack.c.b16 %v1540, %v1515
  %v2191 = vpack.c.b16 %v1541, %v1516
  %v2192 = vpack.c.b16 %v1542, %v1517
  %v2193 = vpack.c.b16 %v1543, %v1518
  %v2194 = vpack.c.b16 %v1544, %v1519
  %v2195 = vpack.c.b16 %v1545, %v1520
  %v2196 = vpack.c.b16 %v1546, %v1521
  %v2197 = vpack.c.b16 %v1572, %v1547
  %v2198 = vpack.c.b16 %v1573, %v1548
  %v2199 = vpack.c.b16 %v1574, %v1549
  %v2200 = vpack.c.b16 %v1575, %v1550
  %v2201 = vpack.c.b16 %v1576, %v1551
  %v2202 = vpack.c.b16 %v1577, %v1552
  %v2203 = vpack.c.b16 %v1578, %v1553
  %v2204 = vpack.c.b16 %v1579, %v1554
  %v2205 = vpack.c.b16 %v1580, %v1555
  %v2206 = vpack.c.b16 %v1581, %v1556
  %v2207 = vpack.c.b16 %v1582, %v1557
  %v2208 = vpack.c.b16 %v1583, %v1558
  %v2209 = vpack.c.b16 %v1584, %v1559
  %v2210 = vpack.c.b16 %v1585, %v1560
  %v2211 = vpack.c.b16 %v1586, %v1561
  %v2212 = vpack.c.b16 %v1587, %v1562
  %v2213 = vpack.c.b16 %v1588, %v1563
  %v2214 = vpack.c.b16 %v1589, %v1564
  %v2215 = vpack.c.b16 %v1590, %v1565
  %v2216 = vpack.c.b16 %v1591, %v1566
  %v2217 = vpack.c.b16 %v1592, %v1567
  %v2218 = vpack.c.b16 %v1593, %v1568
  %v2219 = vpack.c.b16 %v1594, %v1569
  %v2220 = vpack.c.b16 %v1595, %v1570
  %v2221 = vpack.c.b16 %v1596, %v1571
  %v2222 = vpack.c.b16 %v1622, %v1597
  %v2223 = vpack.c.b16 %v1623, %v1598
  %v2224 = vpack.c.b16 %v1624, %v1599
  %v2225 = vpack.c.b16 %v1625, %v1600
  %v2226 = vpack.c.b16 %v1626, %v1601
  %v2227 = vpack.c.b16 %v1627, %v1602
  %v2228 = vpack.c.b16 %v1628, %v1603
  %v2229 = vpack.c.b16 %v1629, %v1604
  %v2230 = vpack.c.b16 %v1630, %v1605
  %v2231 = vpack.c.b16 %v1631, %v1606
  %v2232 = vpack.c.b16 %v1632, %v1607
  %v2233 = vpack.c.b16 %v1633, %v1608
  %v2234 = vpack.c.b16 %v1634, %v1609
  %v2235 = vpack.c.b16 %v1635, %v1610
  %v2236 = vpack.c.b16 %v1636, %v1611
  %v2237 = vpack.c.b16 %v1637, %v1612
  %v2238 = vpack.c.b16 %v1638, %v1613
  %v2239 = vpack.c.b16 %v1639, %v1614
  %v2240 = vpack.c.b16 %v1640, %v1615
  %v2241 = vpack.c.b16 %v1641, %v1616
  %v2242 = vpack.c.b16 %v1642, %v1617
  %v2243 = vpack.c.b16 %v1643, %v1618
  %v2244 = vpack.c.b16 %v1644, %v1619
  %v2245 = vpack.c.b16 %v1645, %v1620
  %v2246 = vpack.c.b16 %v1646, %v1621
  %v2247 = vpack.c.b16 %v1672, %v1647
  %v2248 = vpack.c.b16 %v1673, %v1648
  %v2249 = vpack.c.b16 %v1674, %v1649
  %v2250 = vpack.c.b16 %v1675, %v1650
  %v2251 = vpack.c.b16 %v1676, %v1651
  %v2252 = vpack.c.b16 %v1677, %v1652
  %v2253 = vpack.c.b16 %v1678, %v1653
  %v2254 = vpack.c.b16 %v1679, %v1654
  %v2255 = vpack.c.b16 %v1680, %v1655
  %v2256 = vpack.c.b16 %v1681, %v1656
  %v2257 = vpack.c.b16 %v1682, %v1657
  %v2258 = vpack.c.b16 %v1683, %v1658
  %v2259 = vpack.c.b16 %v1684, %v1659
  %v2260 = vpack.c.b16 %v1685, %v1660
  %v2261 = vpack.c.b16 %v1686, %v1661
  %v2262 = vpack.c.b16 %v1687, %v1662
  %v2263 = vpack.c.b16 %v1688, %v1663
  %v2264 = vpack.c.b16 %v1689, %v1664
  %v2265 = vpack.c.b16 %v1690, %v1665
  %v2266 = vpack.c.b16 %v1691, %v1666
  %v2267 = vpack.c.b16 %v1692, %v1667
  %v2268 = vpack.c.b16 %v1693, %v1668
  %v2269 = vpack.c.b16 %v1694, %v1669
  %v2270 = vpack.c.b16 %v1695, %v1670
  %v2271 = vpack.c.b16 %v1696, %v1671
  %v2272 = vpack.c.b16 %v1722, %v1697
  %v2273 = vpack.c.b16 %v1723, %v1698
  %v2274 = vpack.c.b16 %v1724, %v1699
  %v2275 = vpack.c.b16 %v1725, %v1700
  %v2276 = vpack.c.b16 %v1726, %v1701
  %v2277 = vpack.c.b16 %v1727, %v1702
  %v2278 = vpack.c.b16 %v1728, %v1703
  %v2279 = vpack.c.b16 %v1729, %v1704
  %v2280 = vpack.c.b16 %v1730, %v1705
  %v2281 = vpack.c.b16 %v1731, %v1706
  %v2282 = vpack.c.b16 %v1732, %v1707
  %v2283 = vpack.c.b16 %v1733, %v1708
  %v2284 = vpack.c.b16 %v1734, %v1709
  %v2285 = vpack.c.b16 %v1735, %v1710
  %v2286 = vpack.c.b16 %v1736, %v1711
  %v2287 = vpack.c.b16 %v1737, %v1712
  %v2288 = vpack.c.b16 %v1738, %v1713
  %v2289 = vpack.c.b16 %v1739, %v1714
  %v2290 = vpack.c.b16 %v1740, %v1715
  %v2291 = vpack.c.b16 %v1741, %v1716
  %v2292 = vpack.c.b16 %v1742, %v1717
  %v2293 = vpack.c.b16 %v1743, %v1718
  %v2294 = vpack.c.b16 %v1744, %v1719
  %v2295 = vpack.c.b16 %v1745, %v1720
  %v2296 = vpack.c.b16 %v1746, %v1721
  %v2297 = vpack.c.b16 %v1772, %v1747
  %v2298 = vpack.c.b16 %v1773, %v1748
  %v2299 = vpack.c.b16 %v1774, %v1749
  %v2300 = vpack.c.b16 %v1775, %v1750
  %v2301 = vpack.c.b16 %v1776, %v1751
  %v2302 = vpack.c.b16 %v1777, %v1752
  %v2303 = vpack.c.b16 %v1778, %v1753
  %v2304 = vpack.c.b16 %v1779, %v1754
  %v2305 = vpack.c.b16 %v1780, %v1755
  %v2306 = vpack.c.b16 %v1781, %v1756
  %v2307 = vpack.c.b16 %v1782, %v1757
  %v2308 = vpack.c.b16 %v1783, %v1758
  %v2309 = vpack.c.b16 %v1784, %v1759
  %v2310 = vpack.c.b16 %v1785, %v1760
  %v2311 = vpack.c.b16 %v1786, %v1761
  %v2312 = vpack.c.b16 %v1787, %v1762
  %v2313 = vpack.c.b16 %v1788, %v1763
  %v2314 = vpack.c.b16 %v1789, %v1764
  %v2315 = vpack.c.b16 %v1790, %v1765
  %v2316 = vpack.c.b16 %v1791, %v1766
  %v2317 = vpack.c.b16 %v1792, %v1767
  %v2318 = vpack.c.b16 %v1793, %v1768
  %v2319 = vpack.c.b16 %v1794, %v1769
  %v2320 = vpack.c.b16 %v1795, %v1770
  %v2321 = vpack.c.b16 %v1796, %v1771
  %v2322 = vpack.c.b16 %v1822, %v1797
  %v2323 = vpack.c.b16 %v1823, %v1798
  %v2324 = vpack.c.b16 %v1824, %v1799
  %v2325 = vpack.c.b16 %v1825, %v1800
  %v2326 = vpack.c.b16 %v1826, %v1801
  %v2327 = vpack.c.b16 %v1827, %v1802
  %v2328 = vpack.c.b16 %v1828, %v1803
  %v2329 = vpack.c.b16 %v1829, %v1804
  %v2330 = vpack.c.b16 %v1830, %v1805
  %v2331 = vpack.c.b16 %v1831, %v1806
  %v2332 = vpack.c.b16 %v1832, %v1807
  %v2333 = vpack.c.b16 %v1833, %v1808
  %v2334 = vpack.c.b16 %v1834, %v1809
  %v2335 = vpack.c.b16 %v1835, %v1810
  %v2336 = vpack.c.b16 %v1836, %v1811
  %v2337 = vpack.c.b16 %v1837, %v1812
  %v2338 = vpack.c.b16 %v1838, %v1813
  %v2339 = vpack.c.b16 %v1839, %v1814
  %v2340 = vpack.c.b16 %v1840, %v1815
  %v2341 = vpack.c.b16 %v1841, %v1816
  %v2342 = vpack.c.b16 %v1842, %v1817
  %v2343 = vpack.c.b16 %v1843, %v1818
  %v2344 = vpack.c.b16 %v1844, %v1819
  %v2345 = vpack.c.b16 %v1845, %v1820
  %v2346 = vpack.c.b16 %v1846, %v1821
  %v2347 = vpack.c.b16 %v1872, %v1847
  %v2348 = vpack.c.b16 %v1873, %v1848
  %v2349 = vpack.c.b16 %v1874, %v1849
  %v2350 = vpack.c.b16 %v1875, %v1850
  %v2351 = vpack.c.b16 %v1876, %v1851
  %v2352 = vpack.c.b16 %v1877, %v1852
  %v2353 = vpack.c.b16 %v1878, %v1853
  %v2354 = vpack.c.b16 %v1879, %v1854
  %v2355 = vpack.c.b16 %v1880, %v1855
  %v2356 = vpack.c.b16 %v1881, %v1856
  %v2357 = vpack.c.b16 %v1882, %v1857
  %v2358 = vpack.c.b16 %v1883, %v1858
  %v2359 = vpack.c.b16 %v1884, %v1859
  %v2360 = vpack.c.b16 %v1885, %v1860
  %v2361 = vpack.c.b16 %v1886, %v1861
  %v2362 = vpack.c.b16 %v1887, %v1862
  %v2363 = vpack.c.b16 %v1888, %v1863
  %v2364 = vpack.c.b16 %v1889, %v1864
  %v2365 = vpack.c.b16 %v1890, %v1865
  %v2366 = vpack.c.b16 %v1891, %v1866
  %v2367 = vpack.c.b16 %v1892, %v1867
  %v2368 = vpack.c.b16 %v1893, %v1868
  %v2369 = vpack.c.b16 %v1894, %v1869
  %v2370 = vpack.c.b16 %v1895, %v1870
  %v2371 = vpack.c.b16 %v1896, %v1871
  %v2372 = vpack.c.b16 %v1922, %v1897
  %v2373 = vpack.c.b16 %v1923, %v1898
  %v2374 = vpack.c.b16 %v1924, %v1899
  %v2375 = vpack.c.b16 %v1925, %v1900
  %v2376 = vpack.c.b16 %v1926, %v1901
  %v2377 = vpack.c.b16 %v1927, %v1902
  %v2378 = vpack.c.b16 %v1928, %v1903
  %v2379 = vpack.c.b16 %v1929, %v1904
  %v2380 = vpack.c.b16 %v1930, %v1905
  %v2381 = vpack.c.b16 %v1931, %v1906
  %v2382 = vpack.c.b16 %v1932, %v1907
  %v2383 = vpack.c.b16 %v1933, %v1908
  %v2384 = vpack.c.b16 %v1934, %v1909
  %v2385 = vpack.c.b16 %v1935, %v1910
  %v2386 = vpack.c.b16 %v1936, %v1911
  %v2387 = vpack.c.b16 %v1937, %v1912
  %v2388 = vpack.c.b16 %v1938, %v1913
  %v2389 = vpack.c.b16 %v1939, %v1914
  %v2390 = vpack.c.b16 %v1940, %v1915
  %v2391 = vpack.c.b16 %v1941, %v1916
  %v2392 = vpack.c.b16 %v1942, %v1917
  %v2393 = vpack.c.b16 %v1943, %v1918
  %v2394 = vpack.c.b16 %v1944, %v1919
  %v2395 = vpack.c.b16 %v1945, %v1920
  %v2396 = vpack.c.b16 %v1946, %v1921
  %v2397 = vpack.c.b16 %v1972, %v1947
  %v2398 = vpack.c.b16 %v1973, %v1948
  %v2399 = vpack.c.b16 %v1974, %v1949
  %v2400 = vpack.c.b16 %v1975, %v1950
  %v2401 = vpack.c.b16 %v1976, %v1951
  %v2402 = vpack.c.b16 %v1977, %v1952
  %v2403 = vpack.c.b16 %v1978, %v1953
  %v2404 = vpack.c.b16 %v1979, %v1954
  %v2405 = vpack.c.b16 %v1980, %v1955
  %v2406 = vpack.c.b16 %v1981, %v1956
  %v2407 = vpack.c.b16 %v1982, %v1957
  %v2408 = vpack.c.b16 %v1983, %v1958
  %v2409 = vpack.c.b16 %v1984, %v1959
  %v2410 = vpack.c.b16 %v1985, %v1960
  %v2411 = vpack.c.b16 %v1986, %v1961
  %v2412 = vpack.c.b16 %v1987, %v1962
  %v2413 = vpack.c.b16 %v1988, %v1963
  %v2414 = vpack.c.b16 %v1989, %v1964
  %v2415 = vpack.c.b16 %v1990, %v1965
  %v2416 = vpack.c.b16 %v1991, %v1966
  %v2417 = vpack.c.b16 %v1992, %v1967
  %v2418 = vpack.c.b16 %v1993, %v1968
  %v2419 = vpack.c.b16 %v1994, %v1969
  %v2420 = vpack.c.b16 %v1995, %v1970
  %v2421 = vpack.c.b16 %v1996, %v1971
  %v2422 = vpack.c.b16 %v2022, %v1997
  %v2423 = vpack.c.b16 %v2023, %v1998
  %v2424 = vpack.c.b16 %v2024, %v1999
  %v2425 = vpack.c.b16 %v2025, %v2000
  %v2426 = vpack.c.b16 %v2026, %v2001
  %v2427 = vpack.c.b16 %v2027, %v2002
  %v2428 = vpack.c.b16 %v2028, %v2003
  %v2429 = vpack.c.b16 %v2029, %v2004
  %v2430 = vpack.c.b16 %v2030, %v2005
  %v2431 = vpack.c.b16 %v2031, %v2006
  %v2432 = vpack.c.b16 %v2032, %v2007
  %v2433 = vpack.c.b16 %v2033, %v2008
  %v2434 = vpack.c.b16 %v2034, %v2009
  %v2435 = vpack.c.b16 %v2035, %v2010
  %v2436 = vpack.c.b16 %v2036, %v2011
  %v2437 = vpack.c.b16 %v2037, %v2012
  %v2438 = vpack.c.b16 %v2038, %v2013
  %v2439 = vpack.c.b16 %v2039, %v2014
  %v2440 = vpack.c.b16 %v2040, %v2015
  %v2441 = vpack.c.b16 %v2041, %v2016
  %v2442 = vpack.c.b16 %v2042, %v2017
  %v2443 = vpack.c.b16 %v2043, %v2018
  %v2444 = vpack.c.b16 %v2044, %v2019
  %v2445 = vpack.c.b16 %v2045, %v2020
  %v2446 = vpack.c.b16 %v2046, %v2021
  %v3247 = vunpack.c.l.b16 %v431
  %v3248 = vunpack.c.l.b16 %v432
  %v3249 = vunpack.c.l.b16 %v433
  %v3250 = vunpack.c.l.b16 %v434
  %v3251 = vunpack.c.l.b16 %v435
  %v3252 = vunpack.c.l.b16 %v436
  %v3253 = vunpack.c.l.b16 %v437
  %v3254 = vunpack.c.l.b16 %v438
  %v3255 = vunpack.c.l.b16 %v439
  %v3256 = vunpack.c.l.b16 %v440
  %v3257 = vunpack.c.l.b16 %v441
  %v3258 = vunpack.c.l.b16 %v442
  %v3259 = vunpack.c.l.b16 %v443
  %v3260 = vunpack.c.l.b16 %v444
  %v3261 = vunpack.c.l.b16 %v445
  %v3262 = vunpack.c.l.b16 %v446
  %v3263 = vunpack.c.l.b16 %v447
  %v3264 = vunpack.c.l.b16 %v448
  %v3265 = vunpack.c.l.b16 %v449
  %v3266 = vunpack.c.l.b16 %v450
  %v3267 = vunpack.c.l.b16 %v451
  %v3268 = vunpack.c.l.b16 %v452
  %v3269 = vunpack.c.l.b16 %v453
  %v3270 = vunpack.c.l.b16 %v454
  %v3271 = vunpack.c.l.b16 %v455
  %v3272 = vunpack.c.l.b16 %v456
  %v3273 = vunpack.c.l.b16 %v457
  %v3274 = vunpack.c.l.b16 %v458
  %v3275 = vunpack.c.l.b16 %v459
  %v3276 = vunpack.c.l.b16 %v460
  %v3277 = vunpack.c.l.b16 %v461
  %v3278 = vunpack.c.l.b16 %v462
  %v3279 = vunpack.c.l.b16 %v463
  %v3280 = vunpack.c.l.b16 %v464
  %v3281 = vunpack.c.l.b16 %v465
  %v3282 = vunpack.c.l.b16 %v466
  %v3283 = vunpack.c.l.b16 %v467
  %v3284 = vunpack.c.l.b16 %v468
  %v3285 = vunpack.c.l.b16 %v469
  %v3286 = vunpack.c.l.b16 %v470
  %v3287 = vunpack.c.l.b16 %v471
  %v3288 = vunpack.c.l.b16 %v472
  %v3289 = vunpack.c.l.b16 %v473
  %v3290 = vunpack.c.l.b16 %v474
  %v3291 = vunpack.c.l.b16 %v475
  %v3292 = vunpack.c.l.b16 %v476
  %v3293 = vunpack.c.l.b16 %v477
  %v3294 = vunpack.c.l.b16 %v478
  %v3295 = vunpack.c.l.b16 %v479
  %v3296 = vunpack.c.l.b16 %v480
  %v3297 = vunpack.c.l.b16 %v481
  %v3298 = vunpack.c.l.b16 %v482
  %v3299 = vunpack.c.l.b16 %v483
  %v3300 = vunpack.c.l.b16 %v484
  %v3301 = vunpack.c.l.b16 %v485
  %v3302 = vunpack.c.l.b16 %v486
  %v3303 = vunpack.c.l.b16 %v487
  %v3304 = vunpack.c.l.b16 %v488
  %v3305 = vunpack.c.l.b16 %v489
  %v3306 = vunpack.c.l.b16 %v490
  %v3307 = vunpack.c.l.b16 %v491
  %v3308 = vunpack.c.l.b16 %v492
  %v3309 = vunpack.c.l.b16 %v493
  %v3310 = vunpack.c.l.b16 %v494
  %v3311 = vunpack.c.l.b16 %v495
  %v3312 = vunpack.c.l.b16 %v496
  %v3313 = vunpack.c.l.b16 %v497
  %v3314 = vunpack.c.l.b16 %v498
  %v3315 = vunpack.c.l.b16 %v499
  %v3316 = vunpack.c.l.b16 %v500
  %v3317 = vunpack.c.l.b16 %v501
  %v3318 = vunpack.c.l.b16 %v502
  %v3319 = vunpack.c.l.b16 %v503
  %v3320 = vunpack.c.l.b16 %v504
  %v3321 = vunpack.c.l.b16 %v505
  %v3322 = vunpack.c.l.b16 %v506
  %v3323 = vunpack.c.l.b16 %v507
  %v3324 = vunpack.c.l.b16 %v508
  %v3325 = vunpack.c.l.b16 %v509
  %v3326 = vunpack.c.l.b16 %v510
  %v3327 = vunpack.c.l.b16 %v511
  %v3328 = vunpack.c.l.b16 %v512
  %v3329 = vunpack.c.l.b16 %v513
  %v3330 = vunpack.c.l.b16 %v514
  %v3331 = vunpack.c.l.b16 %v515
  %v3332 = vunpack.c.l.b16 %v516
  %v3333 = vunpack.c.l.b16 %v517
  %v3334 = vunpack.c.l.b16 %v518
  %v3335 = vunpack.c.l.b16 %v519
  %v3336 = vunpack.c.l.b16 %v520
  %v3337 = vunpack.c.l.b16 %v521
  %v3338 = vunpack.c.l.b16 %v522
  %v3339 = vunpack.c.l.b16 %v523
  %v3340 = vunpack.c.l.b16 %v524
  %v3341 = vunpack.c.l.b16 %v525
  %v3342 = vunpack.c.l.b16 %v526
  %v3343 = vunpack.c.l.b16 %v527
  %v3344 = vunpack.c.l.b16 %v528
  %v3345 = vunpack.c.l.b16 %v529
  %v3346 = vunpack.c.l.b16 %v530
  %v3347 = vunpack.c.l.b16 %v531
  %v3348 = vunpack.c.l.b16 %v532
  %v3349 = vunpack.c.l.b16 %v533
  %v3350 = vunpack.c.l.b16 %v534
  %v3351 = vunpack.c.l.b16 %v535
  %v3352 = vunpack.c.l.b16 %v536
  %v3353 = vunpack.c.l.b16 %v537
  %v3354 = vunpack.c.l.b16 %v538
  %v3355 = vunpack.c.l.b16 %v539
  %v3356 = vunpack.c.l.b16 %v540
  %v3357 = vunpack.c.l.b16 %v541
  %v3358 = vunpack.c.l.b16 %v542
  %v3359 = vunpack.c.l.b16 %v543
  %v3360 = vunpack.c.l.b16 %v544
  %v3361 = vunpack.c.l.b16 %v545
  %v3362 = vunpack.c.l.b16 %v546
  %v3363 = vunpack.c.l.b16 %v547
  %v3364 = vunpack.c.l.b16 %v548
  %v3365 = vunpack.c.l.b16 %v549
  %v3366 = vunpack.c.l.b16 %v550
  %v3367 = vunpack.c.l.b16 %v551
  %v3368 = vunpack.c.l.b16 %v552
  %v3369 = vunpack.c.l.b16 %v553
  %v3370 = vunpack.c.l.b16 %v554
  %v3371 = vunpack.c.l.b16 %v555
  %v3372 = vunpack.c.l.b16 %v556
  %v3373 = vunpack.c.l.b16 %v557
  %v3374 = vunpack.c.l.b16 %v558
  %v3375 = vunpack.c.l.b16 %v559
  %v3376 = vunpack.c.l.b16 %v560
  %v3377 = vunpack.c.l.b16 %v561
  %v3378 = vunpack.c.l.b16 %v562
  %v3379 = vunpack.c.l.b16 %v563
  %v3380 = vunpack.c.l.b16 %v564
  %v3381 = vunpack.c.l.b16 %v565
  %v3382 = vunpack.c.l.b16 %v566
  %v3383 = vunpack.c.l.b16 %v567
  %v3384 = vunpack.c.l.b16 %v568
  %v3385 = vunpack.c.l.b16 %v569
  %v3386 = vunpack.c.l.b16 %v570
  %v3387 = vunpack.c.l.b16 %v571
  %v3388 = vunpack.c.l.b16 %v572
  %v3389 = vunpack.c.l.b16 %v573
  %v3390 = vunpack.c.l.b16 %v574
  %v3391 = vunpack.c.l.b16 %v575
  %v3392 = vunpack.c.l.b16 %v576
  %v3393 = vunpack.c.l.b16 %v577
  %v3394 = vunpack.c.l.b16 %v578
  %v3395 = vunpack.c.l.b16 %v579
  %v3396 = vunpack.c.l.b16 %v580
  %v3397 = vunpack.c.l.b16 %v581
  %v3398 = vunpack.c.l.b16 %v582
  %v3399 = vunpack.c.l.b16 %v583
  %v3400 = vunpack.c.l.b16 %v584
  %v3401 = vunpack.c.l.b16 %v585
  %v3402 = vunpack.c.l.b16 %v586
  %v3403 = vunpack.c.l.b16 %v587
  %v3404 = vunpack.c.l.b16 %v588
  %v3405 = vunpack.c.l.b16 %v589
  %v3406 = vunpack.c.l.b16 %v590
  %v3407 = vunpack.c.l.b16 %v591
  %v3408 = vunpack.c.l.b16 %v592
  %v3409 = vunpack.c.l.b16 %v593
  %v3410 = vunpack.c.l.b16 %v594
  %v3411 = vunpack.c.l.b16 %v595
  %v3412 = vunpack.c.l.b16 %v596
  %v3413 = vunpack.c.l.b16 %v597
  %v3414 = vunpack.c.l.b16 %v598
  %v3415 = vunpack.c.l.b16 %v599
  %v3416 = vunpack.c.l.b16 %v600
  %v3417 = vunpack.c.l.b16 %v601
  %v3418 = vunpack.c.l.b16 %v602
  %v3419 = vunpack.c.l.b16 %v603
  %v3420 = vunpack.c.l.b16 %v604
  %v3421 = vunpack.c.l.b16 %v605
  %v3422 = vunpack.c.l.b16 %v606
  %v3423 = vunpack.c.l.b16 %v607
  %v3424 = vunpack.c.l.b16 %v608
  %v3425 = vunpack.c.l.b16 %v609
  %v3426 = vunpack.c.l.b16 %v610
  %v3427 = vunpack.c.l.b16 %v611
  %v3428 = vunpack.c.l.b16 %v612
  %v3429 = vunpack.c.l.b16 %v613
  %v3430 = vunpack.c.l.b16 %v614
  %v3431 = vunpack.c.l.b16 %v615
  %v3432 = vunpack.c.l.b16 %v616
  %v3433 = vunpack.c.l.b16 %v617
  %v3434 = vunpack.c.l.b16 %v618
  %v3435 = vunpack.c.l.b16 %v619
  %v3436 = vunpack.c.l.b16 %v620
  %v3437 = vunpack.c.l.b16 %v621
  %v3438 = vunpack.c.l.b16 %v622
  %v3439 = vunpack.c.l.b16 %v623
  %v3440 = vunpack.c.l.b16 %v624
  %v3441 = vunpack.c.l.b16 %v625
  %v3442 = vunpack.c.l.b16 %v626
  %v3443 = vunpack.c.l.b16 %v627
  %v3444 = vunpack.c.l.b16 %v628
  %v3445 = vunpack.c.l.b16 %v629
  %v3446 = vunpack.c.l.b16 %v630
  %v3447 = vunpack.c.l.b16 %v631
  %v3448 = vunpack.c.l.b16 %v632
  %v3449 = vunpack.c.l.b16 %v633
  %v3450 = vunpack.c.l.b16 %v634
  %v3451 = vunpack.c.l.b16 %v635
  %v3452 = vunpack.c.l.b16 %v636
  %v3453 = vunpack.c.l.b16 %v637
  %v3454 = vunpack.c.l.b16 %v638
  %v3455 = vunpack.c.l.b16 %v639
  %v3456 = vunpack.c.l.b16 %v640
  %v3457 = vunpack.c.l.b16 %v641
  %v3458 = vunpack.c.l.b16 %v642
  %v3459 = vunpack.c.l.b16 %v643
  %v3460 = vunpack.c.l.b16 %v644
  %v3461 = vunpack.c.l.b16 %v645
  %v3462 = vunpack.c.l.b16 %v646
  %v3463 = vunpack.c.l.b16 %v647
  %v3464 = vunpack.c.l.b16 %v648
  %v3465 = vunpack.c.l.b16 %v649
  %v3466 = vunpack.c.l.b16 %v650
  %v3467 = vunpack.c.l.b16 %v651
  %v3468 = vunpack.c.l.b16 %v652
  %v3469 = vunpack.c.l.b16 %v653
  %v3470 = vunpack.c.l.b16 %v654
  %v3471 = vunpack.c.l.b16 %v655
  %v3472 = vunpack.c.l.b16 %v656
  %v3473 = vunpack.c.l.b16 %v657
  %v3474 = vunpack.c.l.b16 %v658
  %v3475 = vunpack.c.l.b16 %v659
  %v3476 = vunpack.c.l.b16 %v660
  %v3477 = vunpack.c.l.b16 %v661
  %v3478 = vunpack.c.l.b16 %v662
  %v3479 = vunpack.c.l.b16 %v663
  %v3480 = vunpack.c.l.b16 %v664
  %v3481 = vunpack.c.l.b16 %v665
  %v3482 = vunpack.c.l.b16 %v666
  %v3483 = vunpack.c.l.b16 %v667
  %v3484 = vunpack.c.l.b16 %v668
  %v3485 = vunpack.c.l.b16 %v669
  %v3486 = vunpack.c.l.b16 %v670
  %v3487 = vunpack.c.l.b16 %v671
  %v3488 = vunpack.c.l.b16 %v672
  %v3489 = vunpack.c.l.b16 %v673
  %v3490 = vunpack.c.l.b16 %v674
  %v3491 = vunpack.c.l.b16 %v675
  %v3492 = vunpack.c.l.b16 %v676
  %v3493 = vunpack.c.l.b16 %v677
  %v3494 = vunpack.c.l.b16 %v678
  %v3495 = vunpack.c.l.b16 %v679
  %v3496 = vunpack.c.l.b16 %v680
  %v3497 = vunpack.c.l.b16 %v681
  %v3498 = vunpack.c.l.b16 %v682
  %v3499 = vunpack.c.l.b16 %v683
  %v3500 = vunpack.c.l.b16 %v684
  %v3501 = vunpack.c.l.b16 %v685
  %v3502 = vunpack.c.l.b16 %v686
  %v3503 = vunpack.c.l.b16 %v687
  %v3504 = vunpack.c.l.b16 %v688
  %v3505 = vunpack.c.l.b16 %v689
  %v3506 = vunpack.c.l.b16 %v690
  %v3507 = vunpack.c.l.b16 %v691
  %v3508 = vunpack.c.l.b16 %v692
  %v3509 = vunpack.c.l.b16 %v693
  %v3510 = vunpack.c.l.b16 %v694
  %v3511 = vunpack.c.l.b16 %v695
  %v3512 = vunpack.c.l.b16 %v696
  %v3513 = vunpack.c.l.b16 %v697
  %v3514 = vunpack.c.l.b16 %v698
  %v3515 = vunpack.c.l.b16 %v699
  %v3516 = vunpack.c.l.b16 %v700
  %v3517 = vunpack.c.l.b16 %v701
  %v3518 = vunpack.c.l.b16 %v702
  %v3519 = vunpack.c.l.b16 %v703
  %v3520 = vunpack.c.l.b16 %v704
  %v3521 = vunpack.c.l.b16 %v705
  %v3522 = vunpack.c.l.b16 %v706
  %v3523 = vunpack.c.l.b16 %v707
  %v3524 = vunpack.c.l.b16 %v708
  %v3525 = vunpack.c.l.b16 %v709
  %v3526 = vunpack.c.l.b16 %v710
  %v3527 = vunpack.c.l.b16 %v711
  %v3528 = vunpack.c.l.b16 %v712
  %v3529 = vunpack.c.l.b16 %v713
  %v3530 = vunpack.c.l.b16 %v714
  %v3531 = vunpack.c.l.b16 %v715
  %v3532 = vunpack.c.l.b16 %v716
  %v3533 = vunpack.c.l.b16 %v717
  %v3534 = vunpack.c.l.b16 %v718
  %v3535 = vunpack.c.l.b16 %v719
  %v3536 = vunpack.c.l.b16 %v720
  %v3537 = vunpack.c.l.b16 %v721
  %v3538 = vunpack.c.l.b16 %v722
  %v3539 = vunpack.c.l.b16 %v723
  %v3540 = vunpack.c.l.b16 %v724
  %v3541 = vunpack.c.l.b16 %v725
  %v3542 = vunpack.c.l.b16 %v726
  %v3543 = vunpack.c.l.b16 %v727
  %v3544 = vunpack.c.l.b16 %v728
  %v3545 = vunpack.c.l.b16 %v729
  %v3546 = vunpack.c.l.b16 %v730
  %v3547 = vunpack.c.l.b16 %v731
  %v3548 = vunpack.c.l.b16 %v732
  %v3549 = vunpack.c.l.b16 %v733
  %v3550 = vunpack.c.l.b16 %v734
  %v3551 = vunpack.c.l.b16 %v735
  %v3552 = vunpack.c.l.b16 %v736
  %v3553 = vunpack.c.l.b16 %v737
  %v3554 = vunpack.c.l.b16 %v738
  %v3555 = vunpack.c.l.b16 %v739
  %v3556 = vunpack.c.l.b16 %v740
  %v3557 = vunpack.c.l.b16 %v741
  %v3558 = vunpack.c.l.b16 %v742
  %v3559 = vunpack.c.l.b16 %v743
  %v3560 = vunpack.c.l.b16 %v744
  %v3561 = vunpack.c.l.b16 %v745
  %v3562 = vunpack.c.l.b16 %v746
  %v3563 = vunpack.c.l.b16 %v747
  %v3564 = vunpack.c.l.b16 %v748
  %v3565 = vunpack.c.l.b16 %v749
  %v3566 = vunpack.c.l.b16 %v750
  %v3567 = vunpack.c.l.b16 %v751
  %v3568 = vunpack.c.l.b16 %v752
  %v3569 = vunpack.c.l.b16 %v753
  %v3570 = vunpack.c.l.b16 %v754
  %v3571 = vunpack.c.l.b16 %v755
  %v3572 = vunpack.c.l.b16 %v756
  %v3573 = vunpack.c.l.b16 %v757
  %v3574 = vunpack.c.l.b16 %v758
  %v3575 = vunpack.c.l.b16 %v759
  %v3576 = vunpack.c.l.b16 %v760
  %v3577 = vunpack.c.l.b16 %v761
  %v3578 = vunpack.c.l.b16 %v762
  %v3579 = vunpack.c.l.b16 %v763
  %v3580 = vunpack.c.l.b16 %v764
  %v3581 = vunpack.c.l.b16 %v765
  %v3582 = vunpack.c.l.b16 %v766
  %v3583 = vunpack.c.l.b16 %v767
  %v3584 = vunpack.c.l.b16 %v768
  %v3585 = vunpack.c.l.b16 %v769
  %v3586 = vunpack.c.l.b16 %v770
  %v3587 = vunpack.c.l.b16 %v771
  %v3588 = vunpack.c.l.b16 %v772
  %v3589 = vunpack.c.l.b16 %v773
  %v3590 = vunpack.c.l.b16 %v774
  %v3591 = vunpack.c.l.b16 %v775
  %v3592 = vunpack.c.l.b16 %v776
  %v3593 = vunpack.c.l.b16 %v777
  %v3594 = vunpack.c.l.b16 %v778
  %v3595 = vunpack.c.l.b16 %v779
  %v3596 = vunpack.c.l.b16 %v780
  %v3597 = vunpack.c.l.b16 %v781
  %v3598 = vunpack.c.l.b16 %v782
  %v3599 = vunpack.c.l.b16 %v783
  %v3600 = vunpack.c.l.b16 %v784
  %v3601 = vunpack.c.l.b16 %v785
  %v3602 = vunpack.c.l.b16 %v786
  %v3603 = vunpack.c.l.b16 %v787
  %v3604 = vunpack.c.l.b16 %v788
  %v3605 = vunpack.c.l.b16 %v789
  %v3606 = vunpack.c.l.b16 %v790
  %v3607 = vunpack.c.l.b16 %v791
  %v3608 = vunpack.c.l.b16 %v792
  %v3609 = vunpack.c.l.b16 %v793
  %v3610 = vunpack.c.l.b16 %v794
  %v3611 = vunpack.c.l.b16 %v795
  %v3612 = vunpack.c.l.b16 %v796
  %v3613 = vunpack.c.l.b16 %v797
  %v3614 = vunpack.c.l.b16 %v798
  %v3615 = vunpack.c.l.b16 %v799
  %v3616 = vunpack.c.l.b16 %v800
  %v3617 = vunpack.c.l.b16 %v801
  %v3618 = vunpack.c.l.b16 %v802
  %v3619 = vunpack.c.l.b16 %v803
  %v3620 = vunpack.c.l.b16 %v804
  %v3621 = vunpack.c.l.b16 %v805
  %v3622 = vunpack.c.l.b16 %v806
  %v3623 = vunpack.c.l.b16 %v807
  %v3624 = vunpack.c.l.b16 %v808
  %v3625 = vunpack.c.l.b16 %v809
  %v3626 = vunpack.c.l.b16 %v810
  %v3627 = vunpack.c.l.b16 %v811
  %v3628 = vunpack.c.l.b16 %v812
  %v3629 = vunpack.c.l.b16 %v813
  %v3630 = vunpack.c.l.b16 %v814
  %v3631 = vunpack.c.l.b16 %v815
  %v3632 = vunpack.c.l.b16 %v816
  %v3633 = vunpack.c.l.b16 %v817
  %v3634 = vunpack.c.l.b16 %v818
  %v3635 = vunpack.c.l.b16 %v819
  %v3636 = vunpack.c.l.b16 %v820
  %v3637 = vunpack.c.l.b16 %v821
  %v3638 = vunpack.c.l.b16 %v822
  %v3639 = vunpack.c.l.b16 %v823
  %v3640 = vunpack.c.l.b16 %v824
  %v3641 = vunpack.c.l.b16 %v825
  %v3642 = vunpack.c.l.b16 %v826
  %v3643 = vunpack.c.l.b16 %v827
  %v3644 = vunpack.c.l.b16 %v828
  %v3645 = vunpack.c.l.b16 %v829
  %v3646 = vunpack.c.l.b16 %v830
  %v3647 = vpack.c.b16 %v3248, %v3247
  %v3648 = vpack.c.b16 %v3250, %v3249
  %v3649 = vpack.c.b16 %v3252, %v3251
  %v3650 = vpack.c.b16 %v3254, %v3253
  %v3651 = vpack.c.b16 %v3256, %v3255
  %v3652 = vpack.c.b16 %v3258, %v3257
  %v3653 = vpack.c.b16 %v3260, %v3259
  %v3654 = vpack.c.b16 %v3262, %v3261
  %v3655 = vpack.c.b16 %v3264, %v3263
  %v3656 = vpack.c.b16 %v3266, %v3265
  %v3657 = vpack.c.b16 %v3268, %v3267
  %v3658 = vpack.c.b16 %v3270, %v3269
  %v3659 = vpack.c.b16 %v3272, %v3271
  %v3660 = vpack.c.b16 %v3274, %v3273
  %v3661 = vpack.c.b16 %v3276, %v3275
  %v3662 = vpack.c.b16 %v3278, %v3277
  %v3663 = vpack.c.b16 %v3280, %v3279
  %v3664 = vpack.c.b16 %v3282, %v3281
  %v3665 = vpack.c.b16 %v3284, %v3283
  %v3666 = vpack.c.b16 %v3286, %v3285
  %v3667 = vpack.c.b16 %v3288, %v3287
  %v3668 = vpack.c.b16 %v3290, %v3289
  %v3669 = vpack.c.b16 %v3292, %v3291
  %v3670 = vpack.c.b16 %v3294, %v3293
  %v3671 = vpack.c.b16 %v3296, %v3295
  %v3672 = vpack.c.b16 %v3298, %v3297
  %v3673 = vpack.c.b16 %v3300, %v3299
  %v3674 = vpack.c.b16 %v3302, %v3301
  %v3675 = vpack.c.b16 %v3304, %v3303
  %v3676 = vpack.c.b16 %v3306, %v3305
  %v3677 = vpack.c.b16 %v3308, %v3307
  %v3678 = vpack.c.b16 %v3310, %v3309
  %v3679 = vpack.c.b16 %v3312, %v3311
  %v3680 = vpack.c.b16 %v3314, %v3313
  %v3681 = vpack.c.b16 %v3316, %v3315
  %v3682 = vpack.c.b16 %v3318, %v3317
  %v3683 = vpack.c.b16 %v3320, %v3319
  %v3684 = vpack.c.b16 %v3322, %v3321
  %v3685 = vpack.c.b16 %v3324, %v3323
  %v3686 = vpack.c.b16 %v3326, %v3325
  %v3687 = vpack.c.b16 %v3328, %v3327
  %v3688 = vpack.c.b16 %v3330, %v3329
  %v3689 = vpack.c.b16 %v3332, %v3331
  %v3690 = vpack.c.b16 %v3334, %v3333
  %v3691 = vpack.c.b16 %v3336, %v3335
  %v3692 = vpack.c.b16 %v3338, %v3337
  %v3693 = vpack.c.b16 %v3340, %v3339
  %v3694 = vpack.c.b16 %v3342, %v3341
  %v3695 = vpack.c.b16 %v3344, %v3343
  %v3696 = vpack.c.b16 %v3346, %v3345
  %v3697 = vpack.c.b16 %v3348, %v3347
  %v3698 = vpack.c.b16 %v3350, %v3349
  %v3699 = vpack.c.b16 %v3352, %v3351
  %v3700 = vpack.c.b16 %v3354, %v3353
  %v3701 = vpack.c.b16 %v3356, %v3355
  %v3702 = vpack.c.b16 %v3358, %v3357
  %v3703 = vpack.c.b16 %v3360, %v3359
  %v3704 = vpack.c.b16 %v3362, %v3361
  %v3705 = vpack.c.b16 %v3364, %v3363
  %v3706 = vpack.c.b16 %v3366, %v3365
  %v3707 = vpack.c.b16 %v3368, %v3367
  %v3708 = vpack.c.b16 %v3370, %v3369
  %v3709 = vpack.c.b16 %v3372, %v3371
  %v3710 = vpack.c.b16 %v3374, %v3373
  %v3711 = vpack.c.b16 %v3376, %v3375
  %v3712 = vpack.c.b16 %v3378, %v3377
  %v3713 = vpack.c.b16 %v3380, %v3379
  %v3714 = vpack.c.b16 %v3382, %v3381
  %v3715 = vpack.c.b16 %v3384, %v3383
  %v3716 = vpack.c.b16 %v3386, %v3385
  %v3717 = vpack.c.b16 %v3388, %v3387
  %v3718 = vpack.c.b16 %v3390, %v3389
  %v3719 = vpack.c.b16 %v3392, %v3391
  %v3720 = vpack.c.b16 %v3394, %v3393
  %v3721 = vpack.c.b16 %v3396, %v3395
  %v3722 = vpack.c.b16 %v3398, %v3397
  %v3723 = vpack.c.b16 %v3400, %v3399
  %v3724 = vpack.c.b16 %v3402, %v3401
  %v3725 = vpack.c.b16 %v3404, %v3403
  %v3726 = vpack.c.b16 %v3406, %v3405
  %v3727 = vpack.c.b16 %v3408, %v3407
  %v3728 = vpack.c.b16 %v3410, %v3409
  %v3729 = vpack.c.b16 %v3412, %v3411
  %v3730 = vpack.c.b16 %v3414, %v3413
  %v3731 = vpack.c.b16 %v3416, %v3415
  %v3732 = vpack.c.b16 %v3418, %v3417
  %v3733 = vpack.c.b16 %v3420, %v3419
  %v3734 = vpack.c.b16 %v3422, %v3421
  %v3735 = vpack.c.b16 %v3424, %v3423
  %v3736 = vpack.c.b16 %v3426, %v3425
  %v3737 = vpack.c.b16 %v3428, %v3427
  %v3738 = vpack.c.b16 %v3430, %v3429
  %v3739 = vpack.c.b16 %v3432, %v3431
  %v3740 = vpack.c.b16 %v3434, %v3433
  %v3741 = vpack.c.b16 %v3436, %v3435
  %v3742 = vpack.c.b16 %v3438, %v3437
  %v3743 = vpack.c.b16 %v3440, %v3439
  %v3744 = vpack.c.b16 %v3442, %v3441
  %v3745 = vpack.c.b16 %v3444, %v3443
  %v3746 = vpack.c.b16 %v3446, %v3445
  %v3747 = vpack.c.b16 %v3448, %v3447
  %v3748 = vpack.c.b16 %v3450, %v3449
  %v3749 = vpack.c.b16 %v3452, %v3451
  %v3750 = vpack.c.b16 %v3454, %v3453
  %v3751 = vpack.c.b16 %v3456, %v3455
  %v3752 = vpack.c.b16 %v3458, %v3457
  %v3753 = vpack.c.b16 %v3460, %v3459
  %v3754 = vpack.c.b16 %v3462, %v3461
  %v3755 = vpack.c.b16 %v3464, %v3463
  %v3756 = vpack.c.b16 %v3466, %v3465
  %v3757 = vpack.c.b16 %v3468, %v3467
  %v3758 = vpack.c.b16 %v3470, %v3469
  %v3759 = vpack.c.b16 %v3472, %v3471
  %v3760 = vpack.c.b16 %v3474, %v3473
  %v3761 = vpack.c.b16 %v3476, %v3475
  %v3762 = vpack.c.b16 %v3478, %v3477
  %v3763 = vpack.c.b16 %v3480, %v3479
  %v3764 = vpack.c.b16 %v3482, %v3481
  %v3765 = vpack.c.b16 %v3484, %v3483
  %v3766 = vpack.c.b16 %v3486, %v3485
  %v3767 = vpack.c.b16 %v3488, %v3487
  %v3768 = vpack.c.b16 %v3490, %v3489
  %v3769 = vpack.c.b16 %v3492, %v3491
  %v3770 = vpack.c.b16 %v3494, %v3493
  %v3771 = vpack.c.b16 %v3496, %v3495
  %v3772 = vpack.c.b16 %v3498, %v3497
  %v3773 = vpack.c.b16 %v3500, %v3499
  %v3774 = vpack.c.b16 %v3502, %v3501
  %v3775 = vpack.c.b16 %v3504, %v3503
  %v3776 = vpack.c.b16 %v3506, %v3505
  %v3777 = vpack.c.b16 %v3508, %v3507
  %v3778 = vpack.c.b16 %v3510, %v3509
  %v3779 = vpack.c.b16 %v3512, %v3511
  %v3780 = vpack.c.b16 %v3514, %v3513
  %v3781 = vpack.c.b16 %v3516, %v3515
  %v3782 = vpack.c.b16 %v3518, %v3517
  %v3783 = vpack.c.b16 %v3520, %v3519
  %v3784 = vpack.c.b16 %v3522, %v3521
  %v3785 = vpack.c.b16 %v3524, %v3523
  %v3786 = vpack.c.b16 %v3526, %v3525
  %v3787 = vpack.c.b16 %v3528, %v3527
  %v3788 = vpack.c.b16 %v3530, %v3529
  %v3789 = vpack.c.b16 %v3532, %v3531
  %v3790 = vpack.c.b16 %v3534, %v3533
  %v3791 = vpack.c.b16 %v3536, %v3535
  %v3792 = vpack.c.b16 %v3538, %v3537
  %v3793 = vpack.c.b16 %v3540, %v3539
  %v3794 = vpack.c.b16 %v3542, %v3541
  %v3795 = vpack.c.b16 %v3544, %v3543
  %v3796 = vpack.c.b16 %v3546, %v3545
  %v3797 = vpack.c.b16 %v3548, %v3547
  %v3798 = vpack.c.b16 %v3550, %v3549
  %v3799 = vpack.c.b16 %v3552, %v3551
  %v3800 = vpack.c.b16 %v3554, %v3553
  %v3801 = vpack.c.b16 %v3556, %v3555
  %v3802 = vpack.c.b16 %v3558, %v3557
  %v3803 = vpack.c.b16 %v3560, %v3559
  %v3804 = vpack.c.b16 %v3562, %v3561
  %v3805 = vpack.c.b16 %v3564, %v3563
  %v3806 = vpack.c.b16 %v3566, %v3565
  %v3807 = vpack.c.b16 %v3568, %v3567
  %v3808 = vpack.c.b16 %v3570, %v3569
  %v3809 = vpack.c.b16 %v3572, %v3571
  %v3810 = vpack.c.b16 %v3574, %v3573
  %v3811 = vpack.c.b16 %v3576, %v3575
  %v3812 = vpack.c.b16 %v3578, %v3577
  %v3813 = vpack.c.b16 %v3580, %v3579
  %v3814 = vpack.c.b16 %v3582, %v3581
  %v3815 = vpack.c.b16 %v3584, %v3583
  %v3816 = vpack.c.b16 %v3586, %v3585
  %v3817 = vpack.c.b16 %v3588, %v3587
  %v3818 = vpack.c.b16 %v3590, %v3589
  %v3819 = vpack.c.b16 %v3592, %v3591
  %v3820 = vpack.c.b16 %v3594, %v3593
  %v3821 = vpack.c.b16 %v3596, %v3595
  %v3822 = vpack.c.b16 %v3598, %v3597
  %v3823 = vpack.c.b16 %v3600, %v3599
  %v3824 = vpack.c.b16 %v3602, %v3601
  %v3825 = vpack.c.b16 %v3604, %v3603
  %v3826 = vpack.c.b16 %v3606, %v3605
  %v3827 = vpack.c.b16 %v3608, %v3607
  %v3828 = vpack.c.b16 %v3610, %v3609
  %v3829 = vpack.c.b16 %v3612, %v3611
  %v3830 = vpack.c.b16 %v3614, %v3613
  %v3831 = vpack.c.b16 %v3616, %v3615
  %v3832 = vpack.c.b16 %v3618, %v3617
  %v3833 = vpack.c.b16 %v3620, %v3619
  %v3834 = vpack.c.b16 %v3622, %v3621
  %v3835 = vpack.c.b16 %v3624, %v3623
  %v3836 = vpack.c.b16 %v3626, %v3625
  %v3837 = vpack.c.b16 %v3628, %v3627
  %v3838 = vpack.c.b16 %v3630, %v3629
  %v3839 = vpack.c.b16 %v3632, %v3631
  %v3840 = vpack.c.b16 %v3634, %v3633
  %v3841 = vpack.c.b16 %v3636, %v3635
  %v3842 = vpack.c.b16 %v3638, %v3637
  %v3843 = vpack.c.b16 %v3640, %v3639
  %v3844 = vpack.c.b16 %v3642, %v3641
  %v3845 = vpack.c.b16 %v3644, %v3643
  %v3846 = vpack.c.b16 %v3646, %v3645
  %4047 = vmatprep.subr.bf16.mxu0 0
  %4048 = vmatpush1.bf16.msra.mxu0 %v3647
  %4049 = vmatprep.subr.bf16.mxu0 0
  %4050 = vmatpush1.bf16.msra.mxu0 %v3648
  %4051 = vmatprep.subr.bf16.mxu0 0
  %4052 = vmatpush1.bf16.msra.mxu0 %v3649
  %4053 = vmatprep.subr.bf16.mxu0 0
  %4054 = vmatpush1.bf16.msra.mxu0 %v3650
  %4055 = vmatprep.subr.bf16.mxu0 0
  %4056 = vmatpush1.bf16.msra.mxu0 %v3651
  %4057 = vmatprep.subr.bf16.mxu0 0
  %4058 = vmatpush1.bf16.msra.mxu0 %v3652
  %4059 = vmatprep.subr.bf16.mxu0 0
  %4060 = vmatpush1.bf16.msra.mxu0 %v3653
  %4061 = vmatprep.subr.bf16.mxu0 0
  %4062 = vmatpush1.bf16.msra.mxu0 %v3654
  %4063 = vmatprep.subr.bf16.mxu0 0
  %4064 = vmatpush1.bf16.msra.mxu0 %v3655
  %4065 = vmatprep.subr.bf16.mxu0 0
  %4066 = vmatpush1.bf16.msra.mxu0 %v3656
  %4067 = vmatprep.subr.bf16.mxu0 0
  %4068 = vmatpush1.bf16.msra.mxu0 %v3657
  %4069 = vmatprep.subr.bf16.mxu0 0
  %4070 = vmatpush1.bf16.msra.mxu0 %v3658
  %4071 = vmatprep.subr.bf16.mxu0 0
  %4072 = vmatpush1.bf16.msra.mxu0 %v3659
  %4073 = vmatprep.subr.bf16.mxu0 0
  %4074 = vmatpush1.bf16.msra.mxu0 %v3660
  %4075 = vmatprep.subr.bf16.mxu0 0
  %4076 = vmatpush1.bf16.msra.mxu0 %v3661
  %4077 = vmatprep.subr.bf16.mxu0 0
  %4078 = vmatpush1.bf16.msra.mxu0 %v3662
  %4079 = vmatprep.mubr.bf16.mxu0 %v2048
  %4080 = vmatmul.mubr.bf16.gmra.mrb[0].mxu0 %v2047
  %v4081 = vpop.f32.mrb[0].mxu0
  %v4082 = vadd.f32 0.0, %v4081
  %v4083 = vpop.f32.mrb[0].mxu0
  %v4084 = vpop.f32.mrb[0].mxu0
  %v4085 = vadd.f32 0.0, %v4084
  %v4086 = vpop.f32.mrb[0].mxu0
  %4087 = vmatprep.mubr.bf16.mxu0 %v2073
  %4088 = vmatmul.mubr.bf16.gmra.mrb[0].mxu0 %v2072
  %v4089 = vpop.f32.mrb[0].mxu0
  %v4090 = vadd.f32 0.0, %v4089
  %v4091 = vpop.f32.mrb[0].mxu0
  %v4092 = vpop.f32.mrb[0].mxu0
  %v4093 = vadd.f32 0.0, %v4092
  %v4094 = vpop.f32.mrb[0].mxu0
  %4095 = vmatprep.mubr.bf16.mxu0 %v2098
  %4096 = vmatmul.mubr.bf16.gmra.mrb[0].mxu0 %v2097
  %v4097 = vpop.f32.mrb[0].mxu0
  %v4098 = vadd.f32 0.0, %v4097
  %v4099 = vpop.f32.mrb[0].mxu0
  %v4100 = vpop.f32.mrb[0].mxu0
  %v4101 = vadd.f32 0.0, %v4100
  %v4102 = vpop.f32.mrb[0].mxu0
  %4103 = vmatprep.mubr.bf16.mxu0 %v2123
  %4104 = vmatmul.mubr.bf16.gmra.mrb[0].mxu0 %v2122
  %v4105 = vpop.f32.mrb[0].mxu0
  %v4106 = vadd.f32 0.0, %v4105
  %v4107 = vpop.f32.mrb[0].mxu0
  %v4108 = vpop.f32.mrb[0].mxu0
  %v4109 = vadd.f32 0.0, %v4108
  %v4110 = vpop.f32.mrb[0].mxu0
  %4111 = vmatprep.mubr.bf16.mxu0 %v2148
  %4112 = vmatmul.mubr.bf16.gmra.mrb[0].mxu0 %v2147
  %v4113 = vpop.f32.mrb[0].mxu0
  %v4114 = vadd.f32 0.0, %v4113
  %v4115 = vpop.f32.mrb[0].mxu0
  %v4116 = vpop.f32.mrb[0].mxu0
  %v4117 = vadd.f32 0.0, %v4116
  %v4118 = vpop.f32.mrb[0].mxu0
  %4119 = vmatprep.mubr.bf16.mxu0 %v2173
  %4120 = vmatmul.mubr.bf16.gmra.mrb[0].mxu0 %v2172
  %v4121 = vpop.f32.mrb[0].mxu0
  %v4122 = vadd.f32 0.0, %v4121
  %v4123 = vpop.f32.mrb[0].mxu0
  %v4124 = vpop.f32.mrb[0].mxu0
  %v4125 = vadd.f32 0.0, %v4124
  %v4126 = vpop.f32.mrb[0].mxu0
  %4127 = vmatprep.mubr.bf16.mxu0 %v2198
  %4128 = vmatmul.mubr.bf16.gmra.mrb[0].mxu0 %v2197
  %v4129 = vpop.f32.mrb[0].mxu0
  %v4130 = vadd.f32 0.0, %v4129
  %v4131 = vpop.f32.mrb[0].mxu0
  %v4132 = vpop.f32.mrb[0].mxu0
  %v4133 = vadd.f32 0.0, %v4132
  %v4134 = vpop.f32.mrb[0].mxu0
  %4135 = vmatprep.mubr.bf16.mxu0 %v2223
  %4136 = vmatmul.mubr.bf16.gmra.mrb[0].mxu0 %v2222
  %v4137 = vpop.f32.mrb[0].mxu0
  %v4138 = vadd.f32 0.0, %v4137
  %v4139 = vpop.f32.mrb[0].mxu0
  %v4140 = vpop.f32.mrb[0].mxu0
  %v4141 = vadd.f32 0.0, %v4140
  %v4142 = vpop.f32.mrb[0].mxu0
  %4143 = vmatprep.mubr.bf16.mxu0 %v2248
  %4144 = vmatmul.mubr.bf16.gmra.mrb[0].mxu0 %v2247
  %v4145 = vpop.f32.mrb[0].mxu0
  %v4146 = vadd.f32 0.0, %v4145
  %v4147 = vpop.f32.mrb[0].mxu0
  %v4148 = vpop.f32.mrb[0].mxu0
  %v4149 = vadd.f32 0.0, %v4148
  %v4150 = vpop.f32.mrb[0].mxu0
  %4151 = vmatprep.mubr.bf16.mxu0 %v2273
  %4152 = vmatmul.mubr.bf16.gmra.mrb[0].mxu0 %v2272
  %v4153 = vpop.f32.mrb[0].mxu0
  %v4154 = vadd.f32 0.0, %v4153
  %v4155 = vpop.f32.mrb[0].mxu0
  %v4156 = vpop.f32.mrb[0].mxu0
  %v4157 = vadd.f32 0.0, %v4156
  %v4158 = vpop.f32.mrb[0].mxu0
  %4159 = vmatprep.mubr.bf16.mxu0 %v2298
  %4160 = vmatmul.mubr.bf16.gmra.mrb[0].mxu0 %v2297
  %v4161 = vpop.f32.mrb[0].mxu0
  %v4162 = vadd.f32 0.0, %v4161
  %v4163 = vpop.f32.mrb[0].mxu0
  %v4164 = vpop.f32.mrb[0].mxu0
  %v4165 = vadd.f32 0.0, %v4164
  %v4166 = vpop.f32.mrb[0].mxu0
  %4167 = vmatprep.mubr.bf16.mxu0 %v2323
  %4168 = vmatmul.mubr.bf16.gmra.mrb[0].mxu0 %v2322
  %v4169 = vpop.f32.mrb[0].mxu0
  %v4170 = vadd.f32 0.0, %v4169
  %v4171 = vpop.f32.mrb[0].mxu0
  %v4172 = vpop.f32.mrb[0].mxu0
  %v4173 = vadd.f32 0.0, %v4172
  %v4174 = vpop.f32.mrb[0].mxu0
  %4175 = vmatprep.mubr.bf16.mxu0 %v2348
  %4176 = vmatmul.mubr.bf16.gmra.mrb[0].mxu0 %v2347
  %v4177 = vpop.f32.mrb[0].mxu0
  %v4178 = vadd.f32 0.0, %v4177
  %v4179 = vpop.f32.mrb[0].mxu0
  %v4180 = vpop.f32.mrb[0].mxu0
  %v4181 = vadd.f32 0.0, %v4180
  %v4182 = vpop.f32.mrb[0].mxu0
  %4183 = vmatprep.mubr.bf16.mxu0 %v2373
  %4184 = vmatmul.mubr.bf16.gmra.mrb[0].mxu0 %v2372
  %v4185 = vpop.f32.mrb[0].mxu0
  %v4186 = vadd.f32 0.0, %v4185
  %v4187 = vpop.f32.mrb[0].mxu0
  %v4188 = vpop.f32.mrb[0].mxu0
  %v4189 = vadd.f32 0.0, %v4188
  %v4190 = vpop.f32.mrb[0].mxu0
  %4191 = vmatprep.mubr.bf16.mxu0 %v2398
  %4192 = vmatmul.mubr.bf16.gmra.mrb[0].mxu0 %v2397
  %v4193 = vpop.f32.mrb[0].mxu0
  %v4194 = vadd.f32 0.0, %v4193
  %v4195 = vpop.f32.mrb[0].mxu0
  %v4196 = vpop.f32.mrb[0].mxu0
  %v4197 = vadd.f32 0.0, %v4196
  %v4198 = vpop.f32.mrb[0].mxu0
  %4199 = vmatprep.mubr.bf16.mxu0 %v2423
  %4200 = vmatmul.mubr.bf16.gmra.mrb[0].mxu0 %v2422
  %v4201 = vpop.f32.mrb[0].mxu0
  %v4202 = vadd.f32 0.0, %v4201
  %v4203 = vpop.f32.mrb[0].mxu0
  %v4204 = vpop.f32.mrb[0].mxu0
  %v4205 = vadd.f32 0.0, %v4204
  %v4206 = vpop.f32.mrb[0].mxu0
  %4207 = vdwg.mxu0
  %4208 = vmatprep.subr.bf16.mxu0 0
  %4209 = vmatpush1.bf16.msra.mxu0 %v3663
  %4210 = vmatprep.subr.bf16.mxu0 0
  %4211 = vmatpush1.bf16.msra.mxu0 %v3664
  %4212 = vmatprep.subr.bf16.mxu0 0
  %4213 = vmatpush1.bf16.msra.mxu0 %v3665
  %4214 = vmatprep.subr.bf16.mxu0 0
  %4215 = vmatpush1.bf16.msra.mxu0 %v3666
  %4216 = vmatprep.subr.bf16.mxu0 0
  %4217 = vmatpush1.bf16.msra.mxu0 %v3667
  %4218 = vmatprep.subr.bf16.mxu0 0
  %4219 = vmatpush1.bf16.msra.mxu0 %v3668
  %4220 = vmatprep.subr.bf16.mxu0 0
  %4221 = vmatpush1.bf16.msra.mxu0 %v3669
  %4222 = vmatprep.subr.bf16.mxu0 0
  %4223 = vmatpush1.bf16.msra.mxu0 %v3670
  %4224 = vmatprep.subr.bf16.mxu0 0
  %4225 = vmatpush1.bf16.msra.mxu0 %v3671
  %4226 = vmatprep.subr.bf16.mxu0 0
  %4227 = vmatpush1.bf16.msra.mxu0 %v3672
  %4228 = vmatprep.subr.bf16.mxu0 0
  %4229 = vmatpush1.bf16.msra.mxu0 %v3673
  %4230 = vmatprep.subr.bf16.mxu0 0
  %4231 = vmatpush1.bf16.msra.mxu0 %v3674
  %4232 = vmatprep.subr.bf16.mxu0 0
  %4233 = vmatpush1.bf16.msra.mxu0 %v3675
  %4234 = vmatprep.subr.bf16.mxu0 0
  %4235 = vmatpush1.bf16.msra.mxu0 %v3676
  %4236 = vmatprep.subr.bf16.mxu0 0
  %4237 = vmatpush1.bf16.msra.mxu0 %v3677
  %4238 = vmatprep.subr.bf16.mxu0 0
  %4239 = vmatpush1.bf16.msra.mxu0 %v3678
  %4240 = vmatprep.mubr.bf16.mxu0 %v2050
  %4241 = vmatmul.mubr.bf16.gmra.mrb[0].mxu0 %v2049
  %v4242 = vpop.f32.mrb[0].mxu0
  %v4243 = vadd.f32 %v4082, %v4242
  %v4244 = vpop.f32.mrb[0].mxu0
  %v4245 = vpop.f32.mrb[0].mxu0
  %v4246 = vadd.f32 %v4085, %v4245
  %v4247 = vpop.f32.mrb[0].mxu0
  %4248 = vmatprep.mubr.bf16.mxu0 %v2075
  %4249 = vmatmul.mubr.bf16.gmra.mrb[0].mxu0 %v2074
  %v4250 = vpop.f32.mrb[0].mxu0
  %v4251 = vadd.f32 %v4090, %v4250
  %v4252 = vpop.f32.mrb[0].mxu0
  %v4253 = vpop.f32.mrb[0].mxu0
  %v4254 = vadd.f32 %v4093, %v4253
  %v4255 = vpop.f32.mrb[0].mxu0
  %4256 = vmatprep.mubr.bf16.mxu0 %v2100
  %4257 = vmatmul.mubr.bf16.gmra.mrb[0].mxu0 %v2099
  %v4258 = vpop.f32.mrb[0].mxu0
  %v4259 = vadd.f32 %v4098, %v4258
  %v4260 = vpop.f32.mrb[0].mxu0
  %v4261 = vpop.f32.mrb[0].mxu0
  %v4262 = vadd.f32 %v4101, %v4261
  %v4263 = vpop.f32.mrb[0].mxu0
  %4264 = vmatprep.mubr.bf16.mxu0 %v2125
  %4265 = vmatmul.mubr.bf16.gmra.mrb[0].mxu0 %v2124
  %v4266 = vpop.f32.mrb[0].mxu0
  %v4267 = vadd.f32 %v4106, %v4266
  %v4268 = vpop.f32.mrb[0].mxu0
  %v4269 = vpop.f32.mrb[0].mxu0
  %v4270 = vadd.f32 %v4109, %v4269
  %v4271 = vpop.f32.mrb[0].mxu0
  %4272 = vmatprep.mubr.bf16.mxu0 %v2150
  %4273 = vmatmul.mubr.bf16.gmra.mrb[0].mxu0 %v2149
  %v4274 = vpop.f32.mrb[0].mxu0
  %v4275 = vadd.f32 %v4114, %v4274
  %v4276 = vpop.f32.mrb[0].mxu0
  %v4277 = vpop.f32.mrb[0].mxu0
  %v4278 = vadd.f32 %v4117, %v4277
  %v4279 = vpop.f32.mrb[0].mxu0
  %4280 = vmatprep.mubr.bf16.mxu0 %v2175
  %4281 = vmatmul.mubr.bf16.gmra.mrb[0].mxu0 %v2174
  %v4282 = vpop.f32.mrb[0].mxu0
  %v4283 = vadd.f32 %v4122, %v4282
  %v4284 = vpop.f32.mrb[0].mxu0
  %v4285 = vpop.f32.mrb[0].mxu0
  %v4286 = vadd.f32 %v4125, %v4285
  %v4287 = vpop.f32.mrb[0].mxu0
  %4288 = vmatprep.mubr.bf16.mxu0 %v2200
  %4289 = vmatmul.mubr.bf16.gmra.mrb[0].mxu0 %v2199
  %v4290 = vpop.f32.mrb[0].mxu0
  %v4291 = vadd.f32 %v4130, %v4290
  %v4292 = vpop.f32.mrb[0].mxu0
  %v4293 = vpop.f32.mrb[0].mxu0
  %v4294 = vadd.f32 %v4133, %v4293
  %v4295 = vpop.f32.mrb[0].mxu0
  %4296 = vmatprep.mubr.bf16.mxu0 %v2225
  %4297 = vmatmul.mubr.bf16.gmra.mrb[0].mxu0 %v2224
  %v4298 = vpop.f32.mrb[0].mxu0
  %v4299 = vadd.f32 %v4138, %v4298
  %v4300 = vpop.f32.mrb[0].mxu0
  %v4301 = vpop.f32.mrb[0].mxu0
  %v4302 = vadd.f32 %v4141, %v4301
  %v4303 = vpop.f32.mrb[0].mxu0
  %4304 = vmatprep.mubr.bf16.mxu0 %v2250
  %4305 = vmatmul.mubr.bf16.gmra.mrb[0].mxu0 %v2249
  %v4306 = vpop.f32.mrb[0].mxu0
  %v4307 = vadd.f32 %v4146, %v4306
  %v4308 = vpop.f32.mrb[0].mxu0
  %v4309 = vpop.f32.mrb[0].mxu0
  %v4310 = vadd.f32 %v4149, %v4309
  %v4311 = vpop.f32.mrb[0].mxu0
  %4312 = vmatprep.mubr.bf16.mxu0 %v2275
  %4313 = vmatmul.mubr.bf16.gmra.mrb[0].mxu0 %v2274
  %v4314 = vpop.f32.mrb[0].mxu0
  %v4315 = vadd.f32 %v4154, %v4314
  %v4316 = vpop.f32.mrb[0].mxu0
  %v4317 = vpop.f32.mrb[0].mxu0
  %v4318 = vadd.f32 %v4157, %v4317
  %v4319 = vpop.f32.mrb[0].mxu0
  %4320 = vmatprep.mubr.bf16.mxu0 %v2300
  %4321 = vmatmul.mubr.bf16.gmra.mrb[0].mxu0 %v2299
  %v4322 = vpop.f32.mrb[0].mxu0
  %v4323 = vadd.f32 %v4162, %v4322
  %v4324 = vpop.f32.mrb[0].mxu0
  %v4325 = vpop.f32.mrb[0].mxu0
  %v4326 = vadd.f32 %v4165, %v4325
  %v4327 = vpop.f32.mrb[0].mxu0
  %4328 = vmatprep.mubr.bf16.mxu0 %v2325
  %4329 = vmatmul.mubr.bf16.gmra.mrb[0].mxu0 %v2324
  %v4330 = vpop.f32.mrb[0].mxu0
  %v4331 = vadd.f32 %v4170, %v4330
  %v4332 = vpop.f32.mrb[0].mxu0
  %v4333 = vpop.f32.mrb[0].mxu0
  %v4334 = vadd.f32 %v4173, %v4333
  %v4335 = vpop.f32.mrb[0].mxu0
  %4336 = vmatprep.mubr.bf16.mxu0 %v2350
  %4337 = vmatmul.mubr.bf16.gmra.mrb[0].mxu0 %v2349
  %v4338 = vpop.f32.mrb[0].mxu0
  %v4339 = vadd.f32 %v4178, %v4338
  %v4340 = vpop.f32.mrb[0].mxu0
  %v4341 = vpop.f32.mrb[0].mxu0
  %v4342 = vadd.f32 %v4181, %v4341
  %v4343 = vpop.f32.mrb[0].mxu0
  %4344 = vmatprep.mubr.bf16.mxu0 %v2375
  %4345 = vmatmul.mubr.bf16.gmra.mrb[0].mxu0 %v2374
  %v4346 = vpop.f32.mrb[0].mxu0
  %v4347 = vadd.f32 %v4186, %v4346
  %v4348 = vpop.f32.mrb[0].mxu0
  %v4349 = vpop.f32.mrb[0].mxu0
  %v4350 = vadd.f32 %v4189, %v4349
  %v4351 = vpop.f32.mrb[0].mxu0
  %4352 = vmatprep.mubr.bf16.mxu0 %v2400
  %4353 = vmatmul.mubr.bf16.gmra.mrb[0].mxu0 %v2399
  %v4354 = vpop.f32.mrb[0].mxu0
  %v4355 = vadd.f32 %v4194, %v4354
  %v4356 = vpop.f32.mrb[0].mxu0
  %v4357 = vpop.f32.mrb[0].mxu0
  %v4358 = vadd.f32 %v4197, %v4357
  %v4359 = vpop.f32.mrb[0].mxu0
  %4360 = vmatprep.mubr.bf16.mxu0 %v2425
  %4361 = vmatmul.mubr.bf16.gmra.mrb[0].mxu0 %v2424
  %v4362 = vpop.f32.mrb[0].mxu0
  %v4363 = vadd.f32 %v4202, %v4362
  %v4364 = vpop.f32.mrb[0].mxu0
  %v4365 = vpop.f32.mrb[0].mxu0
  %v4366 = vadd.f32 %v4205, %v4365
  %v4367 = vpop.f32.mrb[0].mxu0
  %4368 = vdwg.mxu0
  %4369 = vmatprep.subr.bf16.mxu0 0
  %4370 = vmatpush1.bf16.msra.mxu0 %v3679
  %4371 = vmatprep.subr.bf16.mxu0 0
  %4372 = vmatpush1.bf16.msra.mxu0 %v3680
  %4373 = vmatprep.subr.bf16.mxu0 0
  %4374 = vmatpush1.bf16.msra.mxu0 %v3681
  %4375 = vmatprep.subr.bf16.mxu0 0
  %4376 = vmatpush1.bf16.msra.mxu0 %v3682
  %4377 = vmatprep.subr.bf16.mxu0 0
  %4378 = vmatpush1.bf16.msra.mxu0 %v3683
  %4379 = vmatprep.subr.bf16.mxu0 0
  %4380 = vmatpush1.bf16.msra.mxu0 %v3684
  %4381 = vmatprep.subr.bf16.mxu0 0
  %4382 = vmatpush1.bf16.msra.mxu0 %v3685
  %4383 = vmatprep.subr.bf16.mxu0 0
  %4384 = vmatpush1.bf16.msra.mxu0 %v3686
  %4385 = vmatprep.subr.bf16.mxu0 0
  %4386 = vmatpush1.bf16.msra.mxu0 %v3687
  %4387 = vmatprep.subr.bf16.mxu0 0
  %4388 = vmatpush1.bf16.msra.mxu0 %v3688
  %4389 = vmatprep.subr.bf16.mxu0 0
  %4390 = vmatpush1.bf16.msra.mxu0 %v3689
  %4391 = vmatprep.subr.bf16.mxu0 0
  %4392 = vmatpush1.bf16.msra.mxu0 %v3690
  %4393 = vmatprep.subr.bf16.mxu0 0
  %4394 = vmatpush1.bf16.msra.mxu0 %v3691
  %4395 = vmatprep.subr.bf16.mxu0 0
  %4396 = vmatpush1.bf16.msra.mxu0 %v3692
  %4397 = vmatprep.subr.bf16.mxu0 0
  %4398 = vmatpush1.bf16.msra.mxu0 %v3693
  %4399 = vmatprep.subr.bf16.mxu0 0
  %4400 = vmatpush1.bf16.msra.mxu0 %v3694
  %4401 = vmatprep.mubr.bf16.mxu0 %v2052
  %4402 = vmatmul.mubr.bf16.gmra.mrb[0].mxu0 %v2051
  %v4403 = vpop.f32.mrb[0].mxu0
  %v4404 = vadd.f32 %v4243, %v4403
  %v4405 = vpop.f32.mrb[0].mxu0
  %v4406 = vpop.f32.mrb[0].mxu0
  %v4407 = vadd.f32 %v4246, %v4406
  %v4408 = vpop.f32.mrb[0].mxu0
  %4409 = vmatprep.mubr.bf16.mxu0 %v2077
  %4410 = vmatmul.mubr.bf16.gmra.mrb[0].mxu0 %v2076
  %v4411 = vpop.f32.mrb[0].mxu0
  %v4412 = vadd.f32 %v4251, %v4411
  %v4413 = vpop.f32.mrb[0].mxu0
  %v4414 = vpop.f32.mrb[0].mxu0
  %v4415 = vadd.f32 %v4254, %v4414
  %v4416 = vpop.f32.mrb[0].mxu0
  %4417 = vmatprep.mubr.bf16.mxu0 %v2102
  %4418 = vmatmul.mubr.bf16.gmra.mrb[0].mxu0 %v2101
  %v4419 = vpop.f32.mrb[0].mxu0
  %v4420 = vadd.f32 %v4259, %v4419
  %v4421 = vpop.f32.mrb[0].mxu0
  %v4422 = vpop.f32.mrb[0].mxu0
  %v4423 = vadd.f32 %v4262, %v4422
  %v4424 = vpop.f32.mrb[0].mxu0
  %4425 = vmatprep.mubr.bf16.mxu0 %v2127
  %4426 = vmatmul.mubr.bf16.gmra.mrb[0].mxu0 %v2126
  %v4427 = vpop.f32.mrb[0].mxu0
  %v4428 = vadd.f32 %v4267, %v4427
  %v4429 = vpop.f32.mrb[0].mxu0
  %v4430 = vpop.f32.mrb[0].mxu0
  %v4431 = vadd.f32 %v4270, %v4430
  %v4432 = vpop.f32.mrb[0].mxu0
  %4433 = vmatprep.mubr.bf16.mxu0 %v2152
  %4434 = vmatmul.mubr.bf16.gmra.mrb[0].mxu0 %v2151
  %v4435 = vpop.f32.mrb[0].mxu0
  %v4436 = vadd.f32 %v4275, %v4435
  %v4437 = vpop.f32.mrb[0].mxu0
  %v4438 = vpop.f32.mrb[0].mxu0
  %v4439 = vadd.f32 %v4278, %v4438
  %v4440 = vpop.f32.mrb[0].mxu0
  %4441 = vmatprep.mubr.bf16.mxu0 %v2177
  %4442 = vmatmul.mubr.bf16.gmra.mrb[0].mxu0 %v2176
  %v4443 = vpop.f32.mrb[0].mxu0
  %v4444 = vadd.f32 %v4283, %v4443
  %v4445 = vpop.f32.mrb[0].mxu0
  %v4446 = vpop.f32.mrb[0].mxu0
  %v4447 = vadd.f32 %v4286, %v4446
  %v4448 = vpop.f32.mrb[0].mxu0
  %4449 = vmatprep.mubr.bf16.mxu0 %v2202
  %4450 = vmatmul.mubr.bf16.gmra.mrb[0].mxu0 %v2201
  %v4451 = vpop.f32.mrb[0].mxu0
  %v4452 = vadd.f32 %v4291, %v4451
  %v4453 = vpop.f32.mrb[0].mxu0
  %v4454 = vpop.f32.mrb[0].mxu0
  %v4455 = vadd.f32 %v4294, %v4454
  %v4456 = vpop.f32.mrb[0].mxu0
  %4457 = vmatprep.mubr.bf16.mxu0 %v2227
  %4458 = vmatmul.mubr.bf16.gmra.mrb[0].mxu0 %v2226
  %v4459 = vpop.f32.mrb[0].mxu0
  %v4460 = vadd.f32 %v4299, %v4459
  %v4461 = vpop.f32.mrb[0].mxu0
  %v4462 = vpop.f32.mrb[0].mxu0
  %v4463 = vadd.f32 %v4302, %v4462
  %v4464 = vpop.f32.mrb[0].mxu0
  %4465 = vmatprep.mubr.bf16.mxu0 %v2252
  %4466 = vmatmul.mubr.bf16.gmra.mrb[0].mxu0 %v2251
  %v4467 = vpop.f32.mrb[0].mxu0
  %v4468 = vadd.f32 %v4307, %v4467
  %v4469 = vpop.f32.mrb[0].mxu0
  %v4470 = vpop.f32.mrb[0].mxu0
  %v4471 = vadd.f32 %v4310, %v4470
  %v4472 = vpop.f32.mrb[0].mxu0
  %4473 = vmatprep.mubr.bf16.mxu0 %v2277
  %4474 = vmatmul.mubr.bf16.gmra.mrb[0].mxu0 %v2276
  %v4475 = vpop.f32.mrb[0].mxu0
  %v4476 = vadd.f32 %v4315, %v4475
  %v4477 = vpop.f32.mrb[0].mxu0
  %v4478 = vpop.f32.mrb[0].mxu0
  %v4479 = vadd.f32 %v4318, %v4478
  %v4480 = vpop.f32.mrb[0].mxu0
  %4481 = vmatprep.mubr.bf16.mxu0 %v2302
  %4482 = vmatmul.mubr.bf16.gmra.mrb[0].mxu0 %v2301
  %v4483 = vpop.f32.mrb[0].mxu0
  %v4484 = vadd.f32 %v4323, %v4483
  %v4485 = vpop.f32.mrb[0].mxu0
  %v4486 = vpop.f32.mrb[0].mxu0
  %v4487 = vadd.f32 %v4326, %v4486
  %v4488 = vpop.f32.mrb[0].mxu0
  %4489 = vmatprep.mubr.bf16.mxu0 %v2327
  %4490 = vmatmul.mubr.bf16.gmra.mrb[0].mxu0 %v2326
  %v4491 = vpop.f32.mrb[0].mxu0
  %v4492 = vadd.f32 %v4331, %v4491
  %v4493 = vpop.f32.mrb[0].mxu0
  %v4494 = vpop.f32.mrb[0].mxu0
  %v4495 = vadd.f32 %v4334, %v4494
  %v4496 = vpop.f32.mrb[0].mxu0
  %4497 = vmatprep.mubr.bf16.mxu0 %v2352
  %4498 = vmatmul.mubr.bf16.gmra.mrb[0].mxu0 %v2351
  %v4499 = vpop.f32.mrb[0].mxu0
  %v4500 = vadd.f32 %v4339, %v4499
  %v4501 = vpop.f32.mrb[0].mxu0
  %v4502 = vpop.f32.mrb[0].mxu0
  %v4503 = vadd.f32 %v4342, %v4502
  %v4504 = vpop.f32.mrb[0].mxu0
  %4505 = vmatprep.mubr.bf16.mxu0 %v2377
  %4506 = vmatmul.mubr.bf16.gmra.mrb[0].mxu0 %v2376
  %v4507 = vpop.f32.mrb[0].mxu0
  %v4508 = vadd.f32 %v4347, %v4507
  %v4509 = vpop.f32.mrb[0].mxu0
  %v4510 = vpop.f32.mrb[0].mxu0
  %v4511 = vadd.f32 %v4350, %v4510
  %v4512 = vpop.f32.mrb[0].mxu0
  %4513 = vmatprep.mubr.bf16.mxu0 %v2402
  %4514 = vmatmul.mubr.bf16.gmra.mrb[0].mxu0 %v2401
  %v4515 = vpop.f32.mrb[0].mxu0
  %v4516 = vadd.f32 %v4355, %v4515
  %v4517 = vpop.f32.mrb[0].mxu0
  %v4518 = vpop.f32.mrb[0].mxu0
  %v4519 = vadd.f32 %v4358, %v4518
  %v4520 = vpop.f32.mrb[0].mxu0
  %4521 = vmatprep.mubr.bf16.mxu0 %v2427
  %4522 = vmatmul.mubr.bf16.gmra.mrb[0].mxu0 %v2426
  %v4523 = vpop.f32.mrb[0].mxu0
  %v4524 = vadd.f32 %v4363, %v4523
  %v4525 = vpop.f32.mrb[0].mxu0
  %v4526 = vpop.f32.mrb[0].mxu0
  %v4527 = vadd.f32 %v4366, %v4526
  %v4528 = vpop.f32.mrb[0].mxu0
  %4529 = vdwg.mxu0
  %4530 = vmatprep.subr.bf16.mxu0 0
  %4531 = vmatpush1.bf16.msra.mxu0 %v3695
  %4532 = vmatprep.subr.bf16.mxu0 0
  %4533 = vmatpush1.bf16.msra.mxu0 %v3696
  %4534 = vmatprep.subr.bf16.mxu0 0
  %4535 = vmatpush1.bf16.msra.mxu0 %v3697
  %4536 = vmatprep.subr.bf16.mxu0 0
  %4537 = vmatpush1.bf16.msra.mxu0 %v3698
  %4538 = vmatprep.subr.bf16.mxu0 0
  %4539 = vmatpush1.bf16.msra.mxu0 %v3699
  %4540 = vmatprep.subr.bf16.mxu0 0
  %4541 = vmatpush1.bf16.msra.mxu0 %v3700
  %4542 = vmatprep.subr.bf16.mxu0 0
  %4543 = vmatpush1.bf16.msra.mxu0 %v3701
  %4544 = vmatprep.subr.bf16.mxu0 0
  %4545 = vmatpush1.bf16.msra.mxu0 %v3702
  %4546 = vmatprep.subr.bf16.mxu0 0
  %4547 = vmatpush1.bf16.msra.mxu0 %v3703
  %4548 = vmatprep.subr.bf16.mxu0 0
  %4549 = vmatpush1.bf16.msra.mxu0 %v3704
  %4550 = vmatprep.subr.bf16.mxu0 0
  %4551 = vmatpush1.bf16.msra.mxu0 %v3705
  %4552 = vmatprep.subr.bf16.mxu0 0
  %4553 = vmatpush1.bf16.msra.mxu0 %v3706
  %4554 = vmatprep.subr.bf16.mxu0 0
  %4555 = vmatpush1.bf16.msra.mxu0 %v3707
  %4556 = vmatprep.subr.bf16.mxu0 0
  %4557 = vmatpush1.bf16.msra.mxu0 %v3708
  %4558 = vmatprep.subr.bf16.mxu0 0
  %4559 = vmatpush1.bf16.msra.mxu0 %v3709
  %4560 = vmatprep.subr.bf16.mxu0 0
  %4561 = vmatpush1.bf16.msra.mxu0 %v3710
  %4562 = vmatprep.mubr.bf16.mxu0 %v2054
  %4563 = vmatmul.mubr.bf16.gmra.mrb[0].mxu0 %v2053
  %v4564 = vpop.f32.mrb[0].mxu0
  %v4565 = vadd.f32 %v4404, %v4564
  %v4566 = vpop.f32.mrb[0].mxu0
  %v4567 = vpop.f32.mrb[0].mxu0
  %v4568 = vadd.f32 %v4407, %v4567
  %v4569 = vpop.f32.mrb[0].mxu0
  %4570 = vmatprep.mubr.bf16.mxu0 %v2079
  %4571 = vmatmul.mubr.bf16.gmra.mrb[0].mxu0 %v2078
  %v4572 = vpop.f32.mrb[0].mxu0
  %v4573 = vadd.f32 %v4412, %v4572
  %v4574 = vpop.f32.mrb[0].mxu0
  %v4575 = vpop.f32.mrb[0].mxu0
  %v4576 = vadd.f32 %v4415, %v4575
  %v4577 = vpop.f32.mrb[0].mxu0
  %4578 = vmatprep.mubr.bf16.mxu0 %v2104
  %4579 = vmatmul.mubr.bf16.gmra.mrb[0].mxu0 %v2103
  %v4580 = vpop.f32.mrb[0].mxu0
  %v4581 = vadd.f32 %v4420, %v4580
  %v4582 = vpop.f32.mrb[0].mxu0
  %v4583 = vpop.f32.mrb[0].mxu0
  %v4584 = vadd.f32 %v4423, %v4583
  %v4585 = vpop.f32.mrb[0].mxu0
  %4586 = vmatprep.mubr.bf16.mxu0 %v2129
  %4587 = vmatmul.mubr.bf16.gmra.mrb[0].mxu0 %v2128
  %v4588 = vpop.f32.mrb[0].mxu0
  %v4589 = vadd.f32 %v4428, %v4588
  %v4590 = vpop.f32.mrb[0].mxu0
  %v4591 = vpop.f32.mrb[0].mxu0
  %v4592 = vadd.f32 %v4431, %v4591
  %v4593 = vpop.f32.mrb[0].mxu0
  %4594 = vmatprep.mubr.bf16.mxu0 %v2154
  %4595 = vmatmul.mubr.bf16.gmra.mrb[0].mxu0 %v2153
  %v4596 = vpop.f32.mrb[0].mxu0
  %v4597 = vadd.f32 %v4436, %v4596
  %v4598 = vpop.f32.mrb[0].mxu0
  %v4599 = vpop.f32.mrb[0].mxu0
  %v4600 = vadd.f32 %v4439, %v4599
  %v4601 = vpop.f32.mrb[0].mxu0
  %4602 = vmatprep.mubr.bf16.mxu0 %v2179
  %4603 = vmatmul.mubr.bf16.gmra.mrb[0].mxu0 %v2178
  %v4604 = vpop.f32.mrb[0].mxu0
  %v4605 = vadd.f32 %v4444, %v4604
  %v4606 = vpop.f32.mrb[0].mxu0
  %v4607 = vpop.f32.mrb[0].mxu0
  %v4608 = vadd.f32 %v4447, %v4607
  %v4609 = vpop.f32.mrb[0].mxu0
  %4610 = vmatprep.mubr.bf16.mxu0 %v2204
  %4611 = vmatmul.mubr.bf16.gmra.mrb[0].mxu0 %v2203
  %v4612 = vpop.f32.mrb[0].mxu0
  %v4613 = vadd.f32 %v4452, %v4612
  %v4614 = vpop.f32.mrb[0].mxu0
  %v4615 = vpop.f32.mrb[0].mxu0
  %v4616 = vadd.f32 %v4455, %v4615
  %v4617 = vpop.f32.mrb[0].mxu0
  %4618 = vmatprep.mubr.bf16.mxu0 %v2229
  %4619 = vmatmul.mubr.bf16.gmra.mrb[0].mxu0 %v2228
  %v4620 = vpop.f32.mrb[0].mxu0
  %v4621 = vadd.f32 %v4460, %v4620
  %v4622 = vpop.f32.mrb[0].mxu0
  %v4623 = vpop.f32.mrb[0].mxu0
  %v4624 = vadd.f32 %v4463, %v4623
  %v4625 = vpop.f32.mrb[0].mxu0
  %4626 = vmatprep.mubr.bf16.mxu0 %v2254
  %4627 = vmatmul.mubr.bf16.gmra.mrb[0].mxu0 %v2253
  %v4628 = vpop.f32.mrb[0].mxu0
  %v4629 = vadd.f32 %v4468, %v4628
  %v4630 = vpop.f32.mrb[0].mxu0
  %v4631 = vpop.f32.mrb[0].mxu0
  %v4632 = vadd.f32 %v4471, %v4631
  %v4633 = vpop.f32.mrb[0].mxu0
  %4634 = vmatprep.mubr.bf16.mxu0 %v2279
  %4635 = vmatmul.mubr.bf16.gmra.mrb[0].mxu0 %v2278
  %v4636 = vpop.f32.mrb[0].mxu0
  %v4637 = vadd.f32 %v4476, %v4636
  %v4638 = vpop.f32.mrb[0].mxu0
  %v4639 = vpop.f32.mrb[0].mxu0
  %v4640 = vadd.f32 %v4479, %v4639
  %v4641 = vpop.f32.mrb[0].mxu0
  %4642 = vmatprep.mubr.bf16.mxu0 %v2304
  %4643 = vmatmul.mubr.bf16.gmra.mrb[0].mxu0 %v2303
  %v4644 = vpop.f32.mrb[0].mxu0
  %v4645 = vadd.f32 %v4484, %v4644
  %v4646 = vpop.f32.mrb[0].mxu0
  %v4647 = vpop.f32.mrb[0].mxu0
  %v4648 = vadd.f32 %v4487, %v4647
  %v4649 = vpop.f32.mrb[0].mxu0
  %4650 = vmatprep.mubr.bf16.mxu0 %v2329
  %4651 = vmatmul.mubr.bf16.gmra.mrb[0].mxu0 %v2328
  %v4652 = vpop.f32.mrb[0].mxu0
  %v4653 = vadd.f32 %v4492, %v4652
  %v4654 = vpop.f32.mrb[0].mxu0
  %v4655 = vpop.f32.mrb[0].mxu0
  %v4656 = vadd.f32 %v4495, %v4655
  %v4657 = vpop.f32.mrb[0].mxu0
  %4658 = vmatprep.mubr.bf16.mxu0 %v2354
  %4659 = vmatmul.mubr.bf16.gmra.mrb[0].mxu0 %v2353
  %v4660 = vpop.f32.mrb[0].mxu0
  %v4661 = vadd.f32 %v4500, %v4660
  %v4662 = vpop.f32.mrb[0].mxu0
  %v4663 = vpop.f32.mrb[0].mxu0
  %v4664 = vadd.f32 %v4503, %v4663
  %v4665 = vpop.f32.mrb[0].mxu0
  %4666 = vmatprep.mubr.bf16.mxu0 %v2379
  %4667 = vmatmul.mubr.bf16.gmra.mrb[0].mxu0 %v2378
  %v4668 = vpop.f32.mrb[0].mxu0
  %v4669 = vadd.f32 %v4508, %v4668
  %v4670 = vpop.f32.mrb[0].mxu0
  %v4671 = vpop.f32.mrb[0].mxu0
  %v4672 = vadd.f32 %v4511, %v4671
  %v4673 = vpop.f32.mrb[0].mxu0
  %4674 = vmatprep.mubr.bf16.mxu0 %v2404
  %4675 = vmatmul.mubr.bf16.gmra.mrb[0].mxu0 %v2403
  %v4676 = vpop.f32.mrb[0].mxu0
  %v4677 = vadd.f32 %v4516, %v4676
  %v4678 = vpop.f32.mrb[0].mxu0
  %v4679 = vpop.f32.mrb[0].mxu0
  %v4680 = vadd.f32 %v4519, %v4679
  %v4681 = vpop.f32.mrb[0].mxu0
  %4682 = vmatprep.mubr.bf16.mxu0 %v2429
  %4683 = vmatmul.mubr.bf16.gmra.mrb[0].mxu0 %v2428
  %v4684 = vpop.f32.mrb[0].mxu0
  %v4685 = vadd.f32 %v4524, %v4684
  %v4686 = vpop.f32.mrb[0].mxu0
  %v4687 = vpop.f32.mrb[0].mxu0
  %v4688 = vadd.f32 %v4527, %v4687
  %v4689 = vpop.f32.mrb[0].mxu0
  %4690 = vdwg.mxu0
  %4691 = vmatprep.subr.bf16.mxu0 0
  %4692 = vmatpush1.bf16.msra.mxu0 %v3711
  %4693 = vmatprep.subr.bf16.mxu0 0
  %4694 = vmatpush1.bf16.msra.mxu0 %v3712
  %4695 = vmatprep.subr.bf16.mxu0 0
  %4696 = vmatpush1.bf16.msra.mxu0 %v3713
  %4697 = vmatprep.subr.bf16.mxu0 0
  %4698 = vmatpush1.bf16.msra.mxu0 %v3714
  %4699 = vmatprep.subr.bf16.mxu0 0
  %4700 = vmatpush1.bf16.msra.mxu0 %v3715
  %4701 = vmatprep.subr.bf16.mxu0 0
  %4702 = vmatpush1.bf16.msra.mxu0 %v3716
  %4703 = vmatprep.subr.bf16.mxu0 0
  %4704 = vmatpush1.bf16.msra.mxu0 %v3717
  %4705 = vmatprep.subr.bf16.mxu0 0
  %4706 = vmatpush1.bf16.msra.mxu0 %v3718
  %4707 = vmatprep.subr.bf16.mxu0 0
  %4708 = vmatpush1.bf16.msra.mxu0 %v3719
  %4709 = vmatprep.subr.bf16.mxu0 0
  %4710 = vmatpush1.bf16.msra.mxu0 %v3720
  %4711 = vmatprep.subr.bf16.mxu0 0
  %4712 = vmatpush1.bf16.msra.mxu0 %v3721
  %4713 = vmatprep.subr.bf16.mxu0 0
  %4714 = vmatpush1.bf16.msra.mxu0 %v3722
  %4715 = vmatprep.subr.bf16.mxu0 0
  %4716 = vmatpush1.bf16.msra.mxu0 %v3723
  %4717 = vmatprep.subr.bf16.mxu0 0
  %4718 = vmatpush1.bf16.msra.mxu0 %v3724
  %4719 = vmatprep.subr.bf16.mxu0 0
  %4720 = vmatpush1.bf16.msra.mxu0 %v3725
  %4721 = vmatprep.subr.bf16.mxu0 0
  %4722 = vmatpush1.bf16.msra.mxu0 %v3726
  %4723 = vmatprep.mubr.bf16.mxu0 %v2056
  %4724 = vmatmul.mubr.bf16.gmra.mrb[0].mxu0 %v2055
  %v4725 = vpop.f32.mrb[0].mxu0
  %v4726 = vadd.f32 %v4565, %v4725
  %v4727 = vpop.f32.mrb[0].mxu0
  %v4728 = vpop.f32.mrb[0].mxu0
  %v4729 = vadd.f32 %v4568, %v4728
  %v4730 = vpop.f32.mrb[0].mxu0
  %4731 = vmatprep.mubr.bf16.mxu0 %v2081
  %4732 = vmatmul.mubr.bf16.gmra.mrb[0].mxu0 %v2080
  %v4733 = vpop.f32.mrb[0].mxu0
  %v4734 = vadd.f32 %v4573, %v4733
  %v4735 = vpop.f32.mrb[0].mxu0
  %v4736 = vpop.f32.mrb[0].mxu0
  %v4737 = vadd.f32 %v4576, %v4736
  %v4738 = vpop.f32.mrb[0].mxu0
  %4739 = vmatprep.mubr.bf16.mxu0 %v2106
  %4740 = vmatmul.mubr.bf16.gmra.mrb[0].mxu0 %v2105
  %v4741 = vpop.f32.mrb[0].mxu0
  %v4742 = vadd.f32 %v4581, %v4741
  %v4743 = vpop.f32.mrb[0].mxu0
  %v4744 = vpop.f32.mrb[0].mxu0
  %v4745 = vadd.f32 %v4584, %v4744
  %v4746 = vpop.f32.mrb[0].mxu0
  %4747 = vmatprep.mubr.bf16.mxu0 %v2131
  %4748 = vmatmul.mubr.bf16.gmra.mrb[0].mxu0 %v2130
  %v4749 = vpop.f32.mrb[0].mxu0
  %v4750 = vadd.f32 %v4589, %v4749
  %v4751 = vpop.f32.mrb[0].mxu0
  %v4752 = vpop.f32.mrb[0].mxu0
  %v4753 = vadd.f32 %v4592, %v4752
  %v4754 = vpop.f32.mrb[0].mxu0
  %4755 = vmatprep.mubr.bf16.mxu0 %v2156
  %4756 = vmatmul.mubr.bf16.gmra.mrb[0].mxu0 %v2155
  %v4757 = vpop.f32.mrb[0].mxu0
  %v4758 = vadd.f32 %v4597, %v4757
  %v4759 = vpop.f32.mrb[0].mxu0
  %v4760 = vpop.f32.mrb[0].mxu0
  %v4761 = vadd.f32 %v4600, %v4760
  %v4762 = vpop.f32.mrb[0].mxu0
  %4763 = vmatprep.mubr.bf16.mxu0 %v2181
  %4764 = vmatmul.mubr.bf16.gmra.mrb[0].mxu0 %v2180
  %v4765 = vpop.f32.mrb[0].mxu0
  %v4766 = vadd.f32 %v4605, %v4765
  %v4767 = vpop.f32.mrb[0].mxu0
  %v4768 = vpop.f32.mrb[0].mxu0
  %v4769 = vadd.f32 %v4608, %v4768
  %v4770 = vpop.f32.mrb[0].mxu0
  %4771 = vmatprep.mubr.bf16.mxu0 %v2206
  %4772 = vmatmul.mubr.bf16.gmra.mrb[0].mxu0 %v2205
  %v4773 = vpop.f32.mrb[0].mxu0
  %v4774 = vadd.f32 %v4613, %v4773
  %v4775 = vpop.f32.mrb[0].mxu0
  %v4776 = vpop.f32.mrb[0].mxu0
  %v4777 = vadd.f32 %v4616, %v4776
  %v4778 = vpop.f32.mrb[0].mxu0
  %4779 = vmatprep.mubr.bf16.mxu0 %v2231
  %4780 = vmatmul.mubr.bf16.gmra.mrb[0].mxu0 %v2230
  %v4781 = vpop.f32.mrb[0].mxu0
  %v4782 = vadd.f32 %v4621, %v4781
  %v4783 = vpop.f32.mrb[0].mxu0
  %v4784 = vpop.f32.mrb[0].mxu0
  %v4785 = vadd.f32 %v4624, %v4784
  %v4786 = vpop.f32.mrb[0].mxu0
  %4787 = vmatprep.mubr.bf16.mxu0 %v2256
  %4788 = vmatmul.mubr.bf16.gmra.mrb[0].mxu0 %v2255
  %v4789 = vpop.f32.mrb[0].mxu0
  %v4790 = vadd.f32 %v4629, %v4789
  %v4791 = vpop.f32.mrb[0].mxu0
  %v4792 = vpop.f32.mrb[0].mxu0
  %v4793 = vadd.f32 %v4632, %v4792
  %v4794 = vpop.f32.mrb[0].mxu0
  %4795 = vmatprep.mubr.bf16.mxu0 %v2281
  %4796 = vmatmul.mubr.bf16.gmra.mrb[0].mxu0 %v2280
  %v4797 = vpop.f32.mrb[0].mxu0
  %v4798 = vadd.f32 %v4637, %v4797
  %v4799 = vpop.f32.mrb[0].mxu0
  %v4800 = vpop.f32.mrb[0].mxu0
  %v4801 = vadd.f32 %v4640, %v4800
  %v4802 = vpop.f32.mrb[0].mxu0
  %4803 = vmatprep.mubr.bf16.mxu0 %v2306
  %4804 = vmatmul.mubr.bf16.gmra.mrb[0].mxu0 %v2305
  %v4805 = vpop.f32.mrb[0].mxu0
  %v4806 = vadd.f32 %v4645, %v4805
  %v4807 = vpop.f32.mrb[0].mxu0
  %v4808 = vpop.f32.mrb[0].mxu0
  %v4809 = vadd.f32 %v4648, %v4808
  %v4810 = vpop.f32.mrb[0].mxu0
  %4811 = vmatprep.mubr.bf16.mxu0 %v2331
  %4812 = vmatmul.mubr.bf16.gmra.mrb[0].mxu0 %v2330
  %v4813 = vpop.f32.mrb[0].mxu0
  %v4814 = vadd.f32 %v4653, %v4813
  %v4815 = vpop.f32.mrb[0].mxu0
  %v4816 = vpop.f32.mrb[0].mxu0
  %v4817 = vadd.f32 %v4656, %v4816
  %v4818 = vpop.f32.mrb[0].mxu0
  %4819 = vmatprep.mubr.bf16.mxu0 %v2356
  %4820 = vmatmul.mubr.bf16.gmra.mrb[0].mxu0 %v2355
  %v4821 = vpop.f32.mrb[0].mxu0
  %v4822 = vadd.f32 %v4661, %v4821
  %v4823 = vpop.f32.mrb[0].mxu0
  %v4824 = vpop.f32.mrb[0].mxu0
  %v4825 = vadd.f32 %v4664, %v4824
  %v4826 = vpop.f32.mrb[0].mxu0
  %4827 = vmatprep.mubr.bf16.mxu0 %v2381
  %4828 = vmatmul.mubr.bf16.gmra.mrb[0].mxu0 %v2380
  %v4829 = vpop.f32.mrb[0].mxu0
  %v4830 = vadd.f32 %v4669, %v4829
  %v4831 = vpop.f32.mrb[0].mxu0
  %v4832 = vpop.f32.mrb[0].mxu0
  %v4833 = vadd.f32 %v4672, %v4832
  %v4834 = vpop.f32.mrb[0].mxu0
  %4835 = vmatprep.mubr.bf16.mxu0 %v2406
  %4836 = vmatmul.mubr.bf16.gmra.mrb[0].mxu0 %v2405
  %v4837 = vpop.f32.mrb[0].mxu0
  %v4838 = vadd.f32 %v4677, %v4837
  %v4839 = vpop.f32.mrb[0].mxu0
  %v4840 = vpop.f32.mrb[0].mxu0
  %v4841 = vadd.f32 %v4680, %v4840
  %v4842 = vpop.f32.mrb[0].mxu0
  %4843 = vmatprep.mubr.bf16.mxu0 %v2431
  %4844 = vmatmul.mubr.bf16.gmra.mrb[0].mxu0 %v2430
  %v4845 = vpop.f32.mrb[0].mxu0
  %v4846 = vadd.f32 %v4685, %v4845
  %v4847 = vpop.f32.mrb[0].mxu0
  %v4848 = vpop.f32.mrb[0].mxu0
  %v4849 = vadd.f32 %v4688, %v4848
  %v4850 = vpop.f32.mrb[0].mxu0
  %4851 = vdwg.mxu0
  %4852 = vmatprep.subr.bf16.mxu0 0
  %4853 = vmatpush1.bf16.msra.mxu0 %v3727
  %4854 = vmatprep.subr.bf16.mxu0 0
  %4855 = vmatpush1.bf16.msra.mxu0 %v3728
  %4856 = vmatprep.subr.bf16.mxu0 0
  %4857 = vmatpush1.bf16.msra.mxu0 %v3729
  %4858 = vmatprep.subr.bf16.mxu0 0
  %4859 = vmatpush1.bf16.msra.mxu0 %v3730
  %4860 = vmatprep.subr.bf16.mxu0 0
  %4861 = vmatpush1.bf16.msra.mxu0 %v3731
  %4862 = vmatprep.subr.bf16.mxu0 0
  %4863 = vmatpush1.bf16.msra.mxu0 %v3732
  %4864 = vmatprep.subr.bf16.mxu0 0
  %4865 = vmatpush1.bf16.msra.mxu0 %v3733
  %4866 = vmatprep.subr.bf16.mxu0 0
  %4867 = vmatpush1.bf16.msra.mxu0 %v3734
  %4868 = vmatprep.subr.bf16.mxu0 0
  %4869 = vmatpush1.bf16.msra.mxu0 %v3735
  %4870 = vmatprep.subr.bf16.mxu0 0
  %4871 = vmatpush1.bf16.msra.mxu0 %v3736
  %4872 = vmatprep.subr.bf16.mxu0 0
  %4873 = vmatpush1.bf16.msra.mxu0 %v3737
  %4874 = vmatprep.subr.bf16.mxu0 0
  %4875 = vmatpush1.bf16.msra.mxu0 %v3738
  %4876 = vmatprep.subr.bf16.mxu0 0
  %4877 = vmatpush1.bf16.msra.mxu0 %v3739
  %4878 = vmatprep.subr.bf16.mxu0 0
  %4879 = vmatpush1.bf16.msra.mxu0 %v3740
  %4880 = vmatprep.subr.bf16.mxu0 0
  %4881 = vmatpush1.bf16.msra.mxu0 %v3741
  %4882 = vmatprep.subr.bf16.mxu0 0
  %4883 = vmatpush1.bf16.msra.mxu0 %v3742
  %4884 = vmatprep.mubr.bf16.mxu0 %v2058
  %4885 = vmatmul.mubr.bf16.gmra.mrb[0].mxu0 %v2057
  %v4886 = vpop.f32.mrb[0].mxu0
  %v4887 = vadd.f32 %v4726, %v4886
  %v4888 = vpop.f32.mrb[0].mxu0
  %v4889 = vpop.f32.mrb[0].mxu0
  %v4890 = vadd.f32 %v4729, %v4889
  %v4891 = vpop.f32.mrb[0].mxu0
  %4892 = vmatprep.mubr.bf16.mxu0 %v2083
  %4893 = vmatmul.mubr.bf16.gmra.mrb[0].mxu0 %v2082
  %v4894 = vpop.f32.mrb[0].mxu0
  %v4895 = vadd.f32 %v4734, %v4894
  %v4896 = vpop.f32.mrb[0].mxu0
  %v4897 = vpop.f32.mrb[0].mxu0
  %v4898 = vadd.f32 %v4737, %v4897
  %v4899 = vpop.f32.mrb[0].mxu0
  %4900 = vmatprep.mubr.bf16.mxu0 %v2108
  %4901 = vmatmul.mubr.bf16.gmra.mrb[0].mxu0 %v2107
  %v4902 = vpop.f32.mrb[0].mxu0
  %v4903 = vadd.f32 %v4742, %v4902
  %v4904 = vpop.f32.mrb[0].mxu0
  %v4905 = vpop.f32.mrb[0].mxu0
  %v4906 = vadd.f32 %v4745, %v4905
  %v4907 = vpop.f32.mrb[0].mxu0
  %4908 = vmatprep.mubr.bf16.mxu0 %v2133
  %4909 = vmatmul.mubr.bf16.gmra.mrb[0].mxu0 %v2132
  %v4910 = vpop.f32.mrb[0].mxu0
  %v4911 = vadd.f32 %v4750, %v4910
  %v4912 = vpop.f32.mrb[0].mxu0
  %v4913 = vpop.f32.mrb[0].mxu0
  %v4914 = vadd.f32 %v4753, %v4913
  %v4915 = vpop.f32.mrb[0].mxu0
  %4916 = vmatprep.mubr.bf16.mxu0 %v2158
  %4917 = vmatmul.mubr.bf16.gmra.mrb[0].mxu0 %v2157
  %v4918 = vpop.f32.mrb[0].mxu0
  %v4919 = vadd.f32 %v4758, %v4918
  %v4920 = vpop.f32.mrb[0].mxu0
  %v4921 = vpop.f32.mrb[0].mxu0
  %v4922 = vadd.f32 %v4761, %v4921
  %v4923 = vpop.f32.mrb[0].mxu0
  %4924 = vmatprep.mubr.bf16.mxu0 %v2183
  %4925 = vmatmul.mubr.bf16.gmra.mrb[0].mxu0 %v2182
  %v4926 = vpop.f32.mrb[0].mxu0
  %v4927 = vadd.f32 %v4766, %v4926
  %v4928 = vpop.f32.mrb[0].mxu0
  %v4929 = vpop.f32.mrb[0].mxu0
  %v4930 = vadd.f32 %v4769, %v4929
  %v4931 = vpop.f32.mrb[0].mxu0
  %4932 = vmatprep.mubr.bf16.mxu0 %v2208
  %4933 = vmatmul.mubr.bf16.gmra.mrb[0].mxu0 %v2207
  %v4934 = vpop.f32.mrb[0].mxu0
  %v4935 = vadd.f32 %v4774, %v4934
  %v4936 = vpop.f32.mrb[0].mxu0
  %v4937 = vpop.f32.mrb[0].mxu0
  %v4938 = vadd.f32 %v4777, %v4937
  %v4939 = vpop.f32.mrb[0].mxu0
  %4940 = vmatprep.mubr.bf16.mxu0 %v2233
  %4941 = vmatmul.mubr.bf16.gmra.mrb[0].mxu0 %v2232
  %v4942 = vpop.f32.mrb[0].mxu0
  %v4943 = vadd.f32 %v4782, %v4942
  %v4944 = vpop.f32.mrb[0].mxu0
  %v4945 = vpop.f32.mrb[0].mxu0
  %v4946 = vadd.f32 %v4785, %v4945
  %v4947 = vpop.f32.mrb[0].mxu0
  %4948 = vmatprep.mubr.bf16.mxu0 %v2258
  %4949 = vmatmul.mubr.bf16.gmra.mrb[0].mxu0 %v2257
  %v4950 = vpop.f32.mrb[0].mxu0
  %v4951 = vadd.f32 %v4790, %v4950
  %v4952 = vpop.f32.mrb[0].mxu0
  %v4953 = vpop.f32.mrb[0].mxu0
  %v4954 = vadd.f32 %v4793, %v4953
  %v4955 = vpop.f32.mrb[0].mxu0
  %4956 = vmatprep.mubr.bf16.mxu0 %v2283
  %4957 = vmatmul.mubr.bf16.gmra.mrb[0].mxu0 %v2282
  %v4958 = vpop.f32.mrb[0].mxu0
  %v4959 = vadd.f32 %v4798, %v4958
  %v4960 = vpop.f32.mrb[0].mxu0
  %v4961 = vpop.f32.mrb[0].mxu0
  %v4962 = vadd.f32 %v4801, %v4961
  %v4963 = vpop.f32.mrb[0].mxu0
  %4964 = vmatprep.mubr.bf16.mxu0 %v2308
  %4965 = vmatmul.mubr.bf16.gmra.mrb[0].mxu0 %v2307
  %v4966 = vpop.f32.mrb[0].mxu0
  %v4967 = vadd.f32 %v4806, %v4966
  %v4968 = vpop.f32.mrb[0].mxu0
  %v4969 = vpop.f32.mrb[0].mxu0
  %v4970 = vadd.f32 %v4809, %v4969
  %v4971 = vpop.f32.mrb[0].mxu0
  %4972 = vmatprep.mubr.bf16.mxu0 %v2333
  %4973 = vmatmul.mubr.bf16.gmra.mrb[0].mxu0 %v2332
  %v4974 = vpop.f32.mrb[0].mxu0
  %v4975 = vadd.f32 %v4814, %v4974
  %v4976 = vpop.f32.mrb[0].mxu0
  %v4977 = vpop.f32.mrb[0].mxu0
  %v4978 = vadd.f32 %v4817, %v4977
  %v4979 = vpop.f32.mrb[0].mxu0
  %4980 = vmatprep.mubr.bf16.mxu0 %v2358
  %4981 = vmatmul.mubr.bf16.gmra.mrb[0].mxu0 %v2357
  %v4982 = vpop.f32.mrb[0].mxu0
  %v4983 = vadd.f32 %v4822, %v4982
  %v4984 = vpop.f32.mrb[0].mxu0
  %v4985 = vpop.f32.mrb[0].mxu0
  %v4986 = vadd.f32 %v4825, %v4985
  %v4987 = vpop.f32.mrb[0].mxu0
  %4988 = vmatprep.mubr.bf16.mxu0 %v2383
  %4989 = vmatmul.mubr.bf16.gmra.mrb[0].mxu0 %v2382
  %v4990 = vpop.f32.mrb[0].mxu0
  %v4991 = vadd.f32 %v4830, %v4990
  %v4992 = vpop.f32.mrb[0].mxu0
  %v4993 = vpop.f32.mrb[0].mxu0
  %v4994 = vadd.f32 %v4833, %v4993
  %v4995 = vpop.f32.mrb[0].mxu0
  %4996 = vmatprep.mubr.bf16.mxu0 %v2408
  %4997 = vmatmul.mubr.bf16.gmra.mrb[0].mxu0 %v2407
  %v4998 = vpop.f32.mrb[0].mxu0
  %v4999 = vadd.f32 %v4838, %v4998
  %v5000 = vpop.f32.mrb[0].mxu0
  %v5001 = vpop.f32.mrb[0].mxu0
  %v5002 = vadd.f32 %v4841, %v5001
  %v5003 = vpop.f32.mrb[0].mxu0
  %5004 = vmatprep.mubr.bf16.mxu0 %v2433
  %5005 = vmatmul.mubr.bf16.gmra.mrb[0].mxu0 %v2432
  %v5006 = vpop.f32.mrb[0].mxu0
  %v5007 = vadd.f32 %v4846, %v5006
  %v5008 = vpop.f32.mrb[0].mxu0
  %v5009 = vpop.f32.mrb[0].mxu0
  %v5010 = vadd.f32 %v4849, %v5009
  %v5011 = vpop.f32.mrb[0].mxu0
  %5012 = vdwg.mxu0
  %5013 = vmatprep.subr.bf16.mxu0 0
  %5014 = vmatpush1.bf16.msra.mxu0 %v3743
  %5015 = vmatprep.subr.bf16.mxu0 0
  %5016 = vmatpush1.bf16.msra.mxu0 %v3744
  %5017 = vmatprep.subr.bf16.mxu0 0
  %5018 = vmatpush1.bf16.msra.mxu0 %v3745
  %5019 = vmatprep.subr.bf16.mxu0 0
  %5020 = vmatpush1.bf16.msra.mxu0 %v3746
  %5021 = vmatprep.subr.bf16.mxu0 0
  %5022 = vmatpush1.bf16.msra.mxu0 %v3747
  %5023 = vmatprep.subr.bf16.mxu0 0
  %5024 = vmatpush1.bf16.msra.mxu0 %v3748
  %5025 = vmatprep.subr.bf16.mxu0 0
  %5026 = vmatpush1.bf16.msra.mxu0 %v3749
  %5027 = vmatprep.subr.bf16.mxu0 0
  %5028 = vmatpush1.bf16.msra.mxu0 %v3750
  %5029 = vmatprep.subr.bf16.mxu0 0
  %5030 = vmatpush1.bf16.msra.mxu0 %v3751
  %5031 = vmatprep.subr.bf16.mxu0 0
  %5032 = vmatpush1.bf16.msra.mxu0 %v3752
  %5033 = vmatprep.subr.bf16.mxu0 0
  %5034 = vmatpush1.bf16.msra.mxu0 %v3753
  %5035 = vmatprep.subr.bf16.mxu0 0
  %5036 = vmatpush1.bf16.msra.mxu0 %v3754
  %5037 = vmatprep.subr.bf16.mxu0 0
  %5038 = vmatpush1.bf16.msra.mxu0 %v3755
  %5039 = vmatprep.subr.bf16.mxu0 0
  %5040 = vmatpush1.bf16.msra.mxu0 %v3756
  %5041 = vmatprep.subr.bf16.mxu0 0
  %5042 = vmatpush1.bf16.msra.mxu0 %v3757
  %5043 = vmatprep.subr.bf16.mxu0 0
  %5044 = vmatpush1.bf16.msra.mxu0 %v3758
  %5045 = vmatprep.mubr.bf16.mxu0 %v2060
  %5046 = vmatmul.mubr.bf16.gmra.mrb[0].mxu0 %v2059
  %v5047 = vpop.f32.mrb[0].mxu0
  %v5048 = vadd.f32 %v4887, %v5047
  %v5049 = vpop.f32.mrb[0].mxu0
  %v5050 = vpop.f32.mrb[0].mxu0
  %v5051 = vadd.f32 %v4890, %v5050
  %v5052 = vpop.f32.mrb[0].mxu0
  %5053 = vmatprep.mubr.bf16.mxu0 %v2085
  %5054 = vmatmul.mubr.bf16.gmra.mrb[0].mxu0 %v2084
  %v5055 = vpop.f32.mrb[0].mxu0
  %v5056 = vadd.f32 %v4895, %v5055
  %v5057 = vpop.f32.mrb[0].mxu0
  %v5058 = vpop.f32.mrb[0].mxu0
  %v5059 = vadd.f32 %v4898, %v5058
  %v5060 = vpop.f32.mrb[0].mxu0
  %5061 = vmatprep.mubr.bf16.mxu0 %v2110
  %5062 = vmatmul.mubr.bf16.gmra.mrb[0].mxu0 %v2109
  %v5063 = vpop.f32.mrb[0].mxu0
  %v5064 = vadd.f32 %v4903, %v5063
  %v5065 = vpop.f32.mrb[0].mxu0
  %v5066 = vpop.f32.mrb[0].mxu0
  %v5067 = vadd.f32 %v4906, %v5066
  %v5068 = vpop.f32.mrb[0].mxu0
  %5069 = vmatprep.mubr.bf16.mxu0 %v2135
  %5070 = vmatmul.mubr.bf16.gmra.mrb[0].mxu0 %v2134
  %v5071 = vpop.f32.mrb[0].mxu0
  %v5072 = vadd.f32 %v4911, %v5071
  %v5073 = vpop.f32.mrb[0].mxu0
  %v5074 = vpop.f32.mrb[0].mxu0
  %v5075 = vadd.f32 %v4914, %v5074
  %v5076 = vpop.f32.mrb[0].mxu0
  %5077 = vmatprep.mubr.bf16.mxu0 %v2160
  %5078 = vmatmul.mubr.bf16.gmra.mrb[0].mxu0 %v2159
  %v5079 = vpop.f32.mrb[0].mxu0
  %v5080 = vadd.f32 %v4919, %v5079
  %v5081 = vpop.f32.mrb[0].mxu0
  %v5082 = vpop.f32.mrb[0].mxu0
  %v5083 = vadd.f32 %v4922, %v5082
  %v5084 = vpop.f32.mrb[0].mxu0
  %5085 = vmatprep.mubr.bf16.mxu0 %v2185
  %5086 = vmatmul.mubr.bf16.gmra.mrb[0].mxu0 %v2184
  %v5087 = vpop.f32.mrb[0].mxu0
  %v5088 = vadd.f32 %v4927, %v5087
  %v5089 = vpop.f32.mrb[0].mxu0
  %v5090 = vpop.f32.mrb[0].mxu0
  %v5091 = vadd.f32 %v4930, %v5090
  %v5092 = vpop.f32.mrb[0].mxu0
  %5093 = vmatprep.mubr.bf16.mxu0 %v2210
  %5094 = vmatmul.mubr.bf16.gmra.mrb[0].mxu0 %v2209
  %v5095 = vpop.f32.mrb[0].mxu0
  %v5096 = vadd.f32 %v4935, %v5095
  %v5097 = vpop.f32.mrb[0].mxu0
  %v5098 = vpop.f32.mrb[0].mxu0
  %v5099 = vadd.f32 %v4938, %v5098
  %v5100 = vpop.f32.mrb[0].mxu0
  %5101 = vmatprep.mubr.bf16.mxu0 %v2235
  %5102 = vmatmul.mubr.bf16.gmra.mrb[0].mxu0 %v2234
  %v5103 = vpop.f32.mrb[0].mxu0
  %v5104 = vadd.f32 %v4943, %v5103
  %v5105 = vpop.f32.mrb[0].mxu0
  %v5106 = vpop.f32.mrb[0].mxu0
  %v5107 = vadd.f32 %v4946, %v5106
  %v5108 = vpop.f32.mrb[0].mxu0
  %5109 = vmatprep.mubr.bf16.mxu0 %v2260
  %5110 = vmatmul.mubr.bf16.gmra.mrb[0].mxu0 %v2259
  %v5111 = vpop.f32.mrb[0].mxu0
  %v5112 = vadd.f32 %v4951, %v5111
  %v5113 = vpop.f32.mrb[0].mxu0
  %v5114 = vpop.f32.mrb[0].mxu0
  %v5115 = vadd.f32 %v4954, %v5114
  %v5116 = vpop.f32.mrb[0].mxu0
  %5117 = vmatprep.mubr.bf16.mxu0 %v2285
  %5118 = vmatmul.mubr.bf16.gmra.mrb[0].mxu0 %v2284
  %v5119 = vpop.f32.mrb[0].mxu0
  %v5120 = vadd.f32 %v4959, %v5119
  %v5121 = vpop.f32.mrb[0].mxu0
  %v5122 = vpop.f32.mrb[0].mxu0
  %v5123 = vadd.f32 %v4962, %v5122
  %v5124 = vpop.f32.mrb[0].mxu0
  %5125 = vmatprep.mubr.bf16.mxu0 %v2310
  %5126 = vmatmul.mubr.bf16.gmra.mrb[0].mxu0 %v2309
  %v5127 = vpop.f32.mrb[0].mxu0
  %v5128 = vadd.f32 %v4967, %v5127
  %v5129 = vpop.f32.mrb[0].mxu0
  %v5130 = vpop.f32.mrb[0].mxu0
  %v5131 = vadd.f32 %v4970, %v5130
  %v5132 = vpop.f32.mrb[0].mxu0
  %5133 = vmatprep.mubr.bf16.mxu0 %v2335
  %5134 = vmatmul.mubr.bf16.gmra.mrb[0].mxu0 %v2334
  %v5135 = vpop.f32.mrb[0].mxu0
  %v5136 = vadd.f32 %v4975, %v5135
  %v5137 = vpop.f32.mrb[0].mxu0
  %v5138 = vpop.f32.mrb[0].mxu0
  %v5139 = vadd.f32 %v4978, %v5138
  %v5140 = vpop.f32.mrb[0].mxu0
  %5141 = vmatprep.mubr.bf16.mxu0 %v2360
  %5142 = vmatmul.mubr.bf16.gmra.mrb[0].mxu0 %v2359
  %v5143 = vpop.f32.mrb[0].mxu0
  %v5144 = vadd.f32 %v4983, %v5143
  %v5145 = vpop.f32.mrb[0].mxu0
  %v5146 = vpop.f32.mrb[0].mxu0
  %v5147 = vadd.f32 %v4986, %v5146
  %v5148 = vpop.f32.mrb[0].mxu0
  %5149 = vmatprep.mubr.bf16.mxu0 %v2385
  %5150 = vmatmul.mubr.bf16.gmra.mrb[0].mxu0 %v2384
  %v5151 = vpop.f32.mrb[0].mxu0
  %v5152 = vadd.f32 %v4991, %v5151
  %v5153 = vpop.f32.mrb[0].mxu0
  %v5154 = vpop.f32.mrb[0].mxu0
  %v5155 = vadd.f32 %v4994, %v5154
  %v5156 = vpop.f32.mrb[0].mxu0
  %5157 = vmatprep.mubr.bf16.mxu0 %v2410
  %5158 = vmatmul.mubr.bf16.gmra.mrb[0].mxu0 %v2409
  %v5159 = vpop.f32.mrb[0].mxu0
  %v5160 = vadd.f32 %v4999, %v5159
  %v5161 = vpop.f32.mrb[0].mxu0
  %v5162 = vpop.f32.mrb[0].mxu0
  %v5163 = vadd.f32 %v5002, %v5162
  %v5164 = vpop.f32.mrb[0].mxu0
  %5165 = vmatprep.mubr.bf16.mxu0 %v2435
  %5166 = vmatmul.mubr.bf16.gmra.mrb[0].mxu0 %v2434
  %v5167 = vpop.f32.mrb[0].mxu0
  %v5168 = vadd.f32 %v5007, %v5167
  %v5169 = vpop.f32.mrb[0].mxu0
  %v5170 = vpop.f32.mrb[0].mxu0
  %v5171 = vadd.f32 %v5010, %v5170
  %v5172 = vpop.f32.mrb[0].mxu0
  %5173 = vdwg.mxu0
  %5174 = vmatprep.subr.bf16.mxu0 0
  %5175 = vmatpush1.bf16.msra.mxu0 %v3759
  %5176 = vmatprep.subr.bf16.mxu0 0
  %5177 = vmatpush1.bf16.msra.mxu0 %v3760
  %5178 = vmatprep.subr.bf16.mxu0 0
  %5179 = vmatpush1.bf16.msra.mxu0 %v3761
  %5180 = vmatprep.subr.bf16.mxu0 0
  %5181 = vmatpush1.bf16.msra.mxu0 %v3762
  %5182 = vmatprep.subr.bf16.mxu0 0
  %5183 = vmatpush1.bf16.msra.mxu0 %v3763
  %5184 = vmatprep.subr.bf16.mxu0 0
  %5185 = vmatpush1.bf16.msra.mxu0 %v3764
  %5186 = vmatprep.subr.bf16.mxu0 0
  %5187 = vmatpush1.bf16.msra.mxu0 %v3765
  %5188 = vmatprep.subr.bf16.mxu0 0
  %5189 = vmatpush1.bf16.msra.mxu0 %v3766
  %5190 = vmatprep.subr.bf16.mxu0 0
  %5191 = vmatpush1.bf16.msra.mxu0 %v3767
  %5192 = vmatprep.subr.bf16.mxu0 0
  %5193 = vmatpush1.bf16.msra.mxu0 %v3768
  %5194 = vmatprep.subr.bf16.mxu0 0
  %5195 = vmatpush1.bf16.msra.mxu0 %v3769
  %5196 = vmatprep.subr.bf16.mxu0 0
  %5197 = vmatpush1.bf16.msra.mxu0 %v3770
  %5198 = vmatprep.subr.bf16.mxu0 0
  %5199 = vmatpush1.bf16.msra.mxu0 %v3771
  %5200 = vmatprep.subr.bf16.mxu0 0
  %5201 = vmatpush1.bf16.msra.mxu0 %v3772
  %5202 = vmatprep.subr.bf16.mxu0 0
  %5203 = vmatpush1.bf16.msra.mxu0 %v3773
  %5204 = vmatprep.subr.bf16.mxu0 0
  %5205 = vmatpush1.bf16.msra.mxu0 %v3774
  %5206 = vmatprep.mubr.bf16.mxu0 %v2062
  %5207 = vmatmul.mubr.bf16.gmra.mrb[0].mxu0 %v2061
  %v5208 = vpop.f32.mrb[0].mxu0
  %v5209 = vadd.f32 %v5048, %v5208
  %v5210 = vpop.f32.mrb[0].mxu0
  %v5211 = vpop.f32.mrb[0].mxu0
  %v5212 = vadd.f32 %v5051, %v5211
  %v5213 = vpop.f32.mrb[0].mxu0
  %5214 = vmatprep.mubr.bf16.mxu0 %v2087
  %5215 = vmatmul.mubr.bf16.gmra.mrb[0].mxu0 %v2086
  %v5216 = vpop.f32.mrb[0].mxu0
  %v5217 = vadd.f32 %v5056, %v5216
  %v5218 = vpop.f32.mrb[0].mxu0
  %v5219 = vpop.f32.mrb[0].mxu0
  %v5220 = vadd.f32 %v5059, %v5219
  %v5221 = vpop.f32.mrb[0].mxu0
  %5222 = vmatprep.mubr.bf16.mxu0 %v2112
  %5223 = vmatmul.mubr.bf16.gmra.mrb[0].mxu0 %v2111
  %v5224 = vpop.f32.mrb[0].mxu0
  %v5225 = vadd.f32 %v5064, %v5224
  %v5226 = vpop.f32.mrb[0].mxu0
  %v5227 = vpop.f32.mrb[0].mxu0
  %v5228 = vadd.f32 %v5067, %v5227
  %v5229 = vpop.f32.mrb[0].mxu0
  %5230 = vmatprep.mubr.bf16.mxu0 %v2137
  %5231 = vmatmul.mubr.bf16.gmra.mrb[0].mxu0 %v2136
  %v5232 = vpop.f32.mrb[0].mxu0
  %v5233 = vadd.f32 %v5072, %v5232
  %v5234 = vpop.f32.mrb[0].mxu0
  %v5235 = vpop.f32.mrb[0].mxu0
  %v5236 = vadd.f32 %v5075, %v5235
  %v5237 = vpop.f32.mrb[0].mxu0
  %5238 = vmatprep.mubr.bf16.mxu0 %v2162
  %5239 = vmatmul.mubr.bf16.gmra.mrb[0].mxu0 %v2161
  %v5240 = vpop.f32.mrb[0].mxu0
  %v5241 = vadd.f32 %v5080, %v5240
  %v5242 = vpop.f32.mrb[0].mxu0
  %v5243 = vpop.f32.mrb[0].mxu0
  %v5244 = vadd.f32 %v5083, %v5243
  %v5245 = vpop.f32.mrb[0].mxu0
  %5246 = vmatprep.mubr.bf16.mxu0 %v2187
  %5247 = vmatmul.mubr.bf16.gmra.mrb[0].mxu0 %v2186
  %v5248 = vpop.f32.mrb[0].mxu0
  %v5249 = vadd.f32 %v5088, %v5248
  %v5250 = vpop.f32.mrb[0].mxu0
  %v5251 = vpop.f32.mrb[0].mxu0
  %v5252 = vadd.f32 %v5091, %v5251
  %v5253 = vpop.f32.mrb[0].mxu0
  %5254 = vmatprep.mubr.bf16.mxu0 %v2212
  %5255 = vmatmul.mubr.bf16.gmra.mrb[0].mxu0 %v2211
  %v5256 = vpop.f32.mrb[0].mxu0
  %v5257 = vadd.f32 %v5096, %v5256
  %v5258 = vpop.f32.mrb[0].mxu0
  %v5259 = vpop.f32.mrb[0].mxu0
  %v5260 = vadd.f32 %v5099, %v5259
  %v5261 = vpop.f32.mrb[0].mxu0
  %5262 = vmatprep.mubr.bf16.mxu0 %v2237
  %5263 = vmatmul.mubr.bf16.gmra.mrb[0].mxu0 %v2236
  %v5264 = vpop.f32.mrb[0].mxu0
  %v5265 = vadd.f32 %v5104, %v5264
  %v5266 = vpop.f32.mrb[0].mxu0
  %v5267 = vpop.f32.mrb[0].mxu0
  %v5268 = vadd.f32 %v5107, %v5267
  %v5269 = vpop.f32.mrb[0].mxu0
  %5270 = vmatprep.mubr.bf16.mxu0 %v2262
  %5271 = vmatmul.mubr.bf16.gmra.mrb[0].mxu0 %v2261
  %v5272 = vpop.f32.mrb[0].mxu0
  %v5273 = vadd.f32 %v5112, %v5272
  %v5274 = vpop.f32.mrb[0].mxu0
  %v5275 = vpop.f32.mrb[0].mxu0
  %v5276 = vadd.f32 %v5115, %v5275
  %v5277 = vpop.f32.mrb[0].mxu0
  %5278 = vmatprep.mubr.bf16.mxu0 %v2287
  %5279 = vmatmul.mubr.bf16.gmra.mrb[0].mxu0 %v2286
  %v5280 = vpop.f32.mrb[0].mxu0
  %v5281 = vadd.f32 %v5120, %v5280
  %v5282 = vpop.f32.mrb[0].mxu0
  %v5283 = vpop.f32.mrb[0].mxu0
  %v5284 = vadd.f32 %v5123, %v5283
  %v5285 = vpop.f32.mrb[0].mxu0
  %5286 = vmatprep.mubr.bf16.mxu0 %v2312
  %5287 = vmatmul.mubr.bf16.gmra.mrb[0].mxu0 %v2311
  %v5288 = vpop.f32.mrb[0].mxu0
  %v5289 = vadd.f32 %v5128, %v5288
  %v5290 = vpop.f32.mrb[0].mxu0
  %v5291 = vpop.f32.mrb[0].mxu0
  %v5292 = vadd.f32 %v5131, %v5291
  %v5293 = vpop.f32.mrb[0].mxu0
  %5294 = vmatprep.mubr.bf16.mxu0 %v2337
  %5295 = vmatmul.mubr.bf16.gmra.mrb[0].mxu0 %v2336
  %v5296 = vpop.f32.mrb[0].mxu0
  %v5297 = vadd.f32 %v5136, %v5296
  %v5298 = vpop.f32.mrb[0].mxu0
  %v5299 = vpop.f32.mrb[0].mxu0
  %v5300 = vadd.f32 %v5139, %v5299
  %v5301 = vpop.f32.mrb[0].mxu0
  %5302 = vmatprep.mubr.bf16.mxu0 %v2362
  %5303 = vmatmul.mubr.bf16.gmra.mrb[0].mxu0 %v2361
  %v5304 = vpop.f32.mrb[0].mxu0
  %v5305 = vadd.f32 %v5144, %v5304
  %v5306 = vpop.f32.mrb[0].mxu0
  %v5307 = vpop.f32.mrb[0].mxu0
  %v5308 = vadd.f32 %v5147, %v5307
  %v5309 = vpop.f32.mrb[0].mxu0
  %5310 = vmatprep.mubr.bf16.mxu0 %v2387
  %5311 = vmatmul.mubr.bf16.gmra.mrb[0].mxu0 %v2386
  %v5312 = vpop.f32.mrb[0].mxu0
  %v5313 = vadd.f32 %v5152, %v5312
  %v5314 = vpop.f32.mrb[0].mxu0
  %v5315 = vpop.f32.mrb[0].mxu0
  %v5316 = vadd.f32 %v5155, %v5315
  %v5317 = vpop.f32.mrb[0].mxu0
  %5318 = vmatprep.mubr.bf16.mxu0 %v2412
  %5319 = vmatmul.mubr.bf16.gmra.mrb[0].mxu0 %v2411
  %v5320 = vpop.f32.mrb[0].mxu0
  %v5321 = vadd.f32 %v5160, %v5320
  %v5322 = vpop.f32.mrb[0].mxu0
  %v5323 = vpop.f32.mrb[0].mxu0
  %v5324 = vadd.f32 %v5163, %v5323
  %v5325 = vpop.f32.mrb[0].mxu0
  %5326 = vmatprep.mubr.bf16.mxu0 %v2437
  %5327 = vmatmul.mubr.bf16.gmra.mrb[0].mxu0 %v2436
  %v5328 = vpop.f32.mrb[0].mxu0
  %v5329 = vadd.f32 %v5168, %v5328
  %v5330 = vpop.f32.mrb[0].mxu0
  %v5331 = vpop.f32.mrb[0].mxu0
  %v5332 = vadd.f32 %v5171, %v5331
  %v5333 = vpop.f32.mrb[0].mxu0
  %5334 = vdwg.mxu0
  %5335 = vmatprep.subr.bf16.mxu0 0
  %5336 = vmatpush1.bf16.msra.mxu0 %v3775
  %5337 = vmatprep.subr.bf16.mxu0 0
  %5338 = vmatpush1.bf16.msra.mxu0 %v3776
  %5339 = vmatprep.subr.bf16.mxu0 0
  %5340 = vmatpush1.bf16.msra.mxu0 %v3777
  %5341 = vmatprep.subr.bf16.mxu0 0
  %5342 = vmatpush1.bf16.msra.mxu0 %v3778
  %5343 = vmatprep.subr.bf16.mxu0 0
  %5344 = vmatpush1.bf16.msra.mxu0 %v3779
  %5345 = vmatprep.subr.bf16.mxu0 0
  %5346 = vmatpush1.bf16.msra.mxu0 %v3780
  %5347 = vmatprep.subr.bf16.mxu0 0
  %5348 = vmatpush1.bf16.msra.mxu0 %v3781
  %5349 = vmatprep.subr.bf16.mxu0 0
  %5350 = vmatpush1.bf16.msra.mxu0 %v3782
  %5351 = vmatprep.subr.bf16.mxu0 0
  %5352 = vmatpush1.bf16.msra.mxu0 %v3783
  %5353 = vmatprep.subr.bf16.mxu0 0
  %5354 = vmatpush1.bf16.msra.mxu0 %v3784
  %5355 = vmatprep.subr.bf16.mxu0 0
  %5356 = vmatpush1.bf16.msra.mxu0 %v3785
  %5357 = vmatprep.subr.bf16.mxu0 0
  %5358 = vmatpush1.bf16.msra.mxu0 %v3786
  %5359 = vmatprep.subr.bf16.mxu0 0
  %5360 = vmatpush1.bf16.msra.mxu0 %v3787
  %5361 = vmatprep.subr.bf16.mxu0 0
  %5362 = vmatpush1.bf16.msra.mxu0 %v3788
  %5363 = vmatprep.subr.bf16.mxu0 0
  %5364 = vmatpush1.bf16.msra.mxu0 %v3789
  %5365 = vmatprep.subr.bf16.mxu0 0
  %5366 = vmatpush1.bf16.msra.mxu0 %v3790
  %5367 = vmatprep.mubr.bf16.mxu0 %v2064
  %5368 = vmatmul.mubr.bf16.gmra.mrb[0].mxu0 %v2063
  %v5369 = vpop.f32.mrb[0].mxu0
  %v5370 = vadd.f32 %v5209, %v5369
  %v5371 = vpop.f32.mrb[0].mxu0
  %v5372 = vpop.f32.mrb[0].mxu0
  %v5373 = vadd.f32 %v5212, %v5372
  %v5374 = vpop.f32.mrb[0].mxu0
  %5375 = vmatprep.mubr.bf16.mxu0 %v2089
  %5376 = vmatmul.mubr.bf16.gmra.mrb[0].mxu0 %v2088
  %v5377 = vpop.f32.mrb[0].mxu0
  %v5378 = vadd.f32 %v5217, %v5377
  %v5379 = vpop.f32.mrb[0].mxu0
  %v5380 = vpop.f32.mrb[0].mxu0
  %v5381 = vadd.f32 %v5220, %v5380
  %v5382 = vpop.f32.mrb[0].mxu0
  %5383 = vmatprep.mubr.bf16.mxu0 %v2114
  %5384 = vmatmul.mubr.bf16.gmra.mrb[0].mxu0 %v2113
  %v5385 = vpop.f32.mrb[0].mxu0
  %v5386 = vadd.f32 %v5225, %v5385
  %v5387 = vpop.f32.mrb[0].mxu0
  %v5388 = vpop.f32.mrb[0].mxu0
  %v5389 = vadd.f32 %v5228, %v5388
  %v5390 = vpop.f32.mrb[0].mxu0
  %5391 = vmatprep.mubr.bf16.mxu0 %v2139
  %5392 = vmatmul.mubr.bf16.gmra.mrb[0].mxu0 %v2138
  %v5393 = vpop.f32.mrb[0].mxu0
  %v5394 = vadd.f32 %v5233, %v5393
  %v5395 = vpop.f32.mrb[0].mxu0
  %v5396 = vpop.f32.mrb[0].mxu0
  %v5397 = vadd.f32 %v5236, %v5396
  %v5398 = vpop.f32.mrb[0].mxu0
  %5399 = vmatprep.mubr.bf16.mxu0 %v2164
  %5400 = vmatmul.mubr.bf16.gmra.mrb[0].mxu0 %v2163
  %v5401 = vpop.f32.mrb[0].mxu0
  %v5402 = vadd.f32 %v5241, %v5401
  %v5403 = vpop.f32.mrb[0].mxu0
  %v5404 = vpop.f32.mrb[0].mxu0
  %v5405 = vadd.f32 %v5244, %v5404
  %v5406 = vpop.f32.mrb[0].mxu0
  %5407 = vmatprep.mubr.bf16.mxu0 %v2189
  %5408 = vmatmul.mubr.bf16.gmra.mrb[0].mxu0 %v2188
  %v5409 = vpop.f32.mrb[0].mxu0
  %v5410 = vadd.f32 %v5249, %v5409
  %v5411 = vpop.f32.mrb[0].mxu0
  %v5412 = vpop.f32.mrb[0].mxu0
  %v5413 = vadd.f32 %v5252, %v5412
  %v5414 = vpop.f32.mrb[0].mxu0
  %5415 = vmatprep.mubr.bf16.mxu0 %v2214
  %5416 = vmatmul.mubr.bf16.gmra.mrb[0].mxu0 %v2213
  %v5417 = vpop.f32.mrb[0].mxu0
  %v5418 = vadd.f32 %v5257, %v5417
  %v5419 = vpop.f32.mrb[0].mxu0
  %v5420 = vpop.f32.mrb[0].mxu0
  %v5421 = vadd.f32 %v5260, %v5420
  %v5422 = vpop.f32.mrb[0].mxu0
  %5423 = vmatprep.mubr.bf16.mxu0 %v2239
  %5424 = vmatmul.mubr.bf16.gmra.mrb[0].mxu0 %v2238
  %v5425 = vpop.f32.mrb[0].mxu0
  %v5426 = vadd.f32 %v5265, %v5425
  %v5427 = vpop.f32.mrb[0].mxu0
  %v5428 = vpop.f32.mrb[0].mxu0
  %v5429 = vadd.f32 %v5268, %v5428
  %v5430 = vpop.f32.mrb[0].mxu0
  %5431 = vmatprep.mubr.bf16.mxu0 %v2264
  %5432 = vmatmul.mubr.bf16.gmra.mrb[0].mxu0 %v2263
  %v5433 = vpop.f32.mrb[0].mxu0
  %v5434 = vadd.f32 %v5273, %v5433
  %v5435 = vpop.f32.mrb[0].mxu0
  %v5436 = vpop.f32.mrb[0].mxu0
  %v5437 = vadd.f32 %v5276, %v5436
  %v5438 = vpop.f32.mrb[0].mxu0
  %5439 = vmatprep.mubr.bf16.mxu0 %v2289
  %5440 = vmatmul.mubr.bf16.gmra.mrb[0].mxu0 %v2288
  %v5441 = vpop.f32.mrb[0].mxu0
  %v5442 = vadd.f32 %v5281, %v5441
  %v5443 = vpop.f32.mrb[0].mxu0
  %v5444 = vpop.f32.mrb[0].mxu0
  %v5445 = vadd.f32 %v5284, %v5444
  %v5446 = vpop.f32.mrb[0].mxu0
  %5447 = vmatprep.mubr.bf16.mxu0 %v2314
  %5448 = vmatmul.mubr.bf16.gmra.mrb[0].mxu0 %v2313
  %v5449 = vpop.f32.mrb[0].mxu0
  %v5450 = vadd.f32 %v5289, %v5449
  %v5451 = vpop.f32.mrb[0].mxu0
  %v5452 = vpop.f32.mrb[0].mxu0
  %v5453 = vadd.f32 %v5292, %v5452
  %v5454 = vpop.f32.mrb[0].mxu0
  %5455 = vmatprep.mubr.bf16.mxu0 %v2339
  %5456 = vmatmul.mubr.bf16.gmra.mrb[0].mxu0 %v2338
  %v5457 = vpop.f32.mrb[0].mxu0
  %v5458 = vadd.f32 %v5297, %v5457
  %v5459 = vpop.f32.mrb[0].mxu0
  %v5460 = vpop.f32.mrb[0].mxu0
  %v5461 = vadd.f32 %v5300, %v5460
  %v5462 = vpop.f32.mrb[0].mxu0
  %5463 = vmatprep.mubr.bf16.mxu0 %v2364
  %5464 = vmatmul.mubr.bf16.gmra.mrb[0].mxu0 %v2363
  %v5465 = vpop.f32.mrb[0].mxu0
  %v5466 = vadd.f32 %v5305, %v5465
  %v5467 = vpop.f32.mrb[0].mxu0
  %v5468 = vpop.f32.mrb[0].mxu0
  %v5469 = vadd.f32 %v5308, %v5468
  %v5470 = vpop.f32.mrb[0].mxu0
  %5471 = vmatprep.mubr.bf16.mxu0 %v2389
  %5472 = vmatmul.mubr.bf16.gmra.mrb[0].mxu0 %v2388
  %v5473 = vpop.f32.mrb[0].mxu0
  %v5474 = vadd.f32 %v5313, %v5473
  %v5475 = vpop.f32.mrb[0].mxu0
  %v5476 = vpop.f32.mrb[0].mxu0
  %v5477 = vadd.f32 %v5316, %v5476
  %v5478 = vpop.f32.mrb[0].mxu0
  %5479 = vmatprep.mubr.bf16.mxu0 %v2414
  %5480 = vmatmul.mubr.bf16.gmra.mrb[0].mxu0 %v2413
  %v5481 = vpop.f32.mrb[0].mxu0
  %v5482 = vadd.f32 %v5321, %v5481
  %v5483 = vpop.f32.mrb[0].mxu0
  %v5484 = vpop.f32.mrb[0].mxu0
  %v5485 = vadd.f32 %v5324, %v5484
  %v5486 = vpop.f32.mrb[0].mxu0
  %5487 = vmatprep.mubr.bf16.mxu0 %v2439
  %5488 = vmatmul.mubr.bf16.gmra.mrb[0].mxu0 %v2438
  %v5489 = vpop.f32.mrb[0].mxu0
  %v5490 = vadd.f32 %v5329, %v5489
  %v5491 = vpop.f32.mrb[0].mxu0
  %v5492 = vpop.f32.mrb[0].mxu0
  %v5493 = vadd.f32 %v5332, %v5492
  %v5494 = vpop.f32.mrb[0].mxu0
  %5495 = vdwg.mxu0
  %5496 = vmatprep.subr.bf16.mxu0 0
  %5497 = vmatpush1.bf16.msra.mxu0 %v3791
  %5498 = vmatprep.subr.bf16.mxu0 0
  %5499 = vmatpush1.bf16.msra.mxu0 %v3792
  %5500 = vmatprep.subr.bf16.mxu0 0
  %5501 = vmatpush1.bf16.msra.mxu0 %v3793
  %5502 = vmatprep.subr.bf16.mxu0 0
  %5503 = vmatpush1.bf16.msra.mxu0 %v3794
  %5504 = vmatprep.subr.bf16.mxu0 0
  %5505 = vmatpush1.bf16.msra.mxu0 %v3795
  %5506 = vmatprep.subr.bf16.mxu0 0
  %5507 = vmatpush1.bf16.msra.mxu0 %v3796
  %5508 = vmatprep.subr.bf16.mxu0 0
  %5509 = vmatpush1.bf16.msra.mxu0 %v3797
  %5510 = vmatprep.subr.bf16.mxu0 0
  %5511 = vmatpush1.bf16.msra.mxu0 %v3798
  %5512 = vmatprep.subr.bf16.mxu0 0
  %5513 = vmatpush1.bf16.msra.mxu0 %v3799
  %5514 = vmatprep.subr.bf16.mxu0 0
  %5515 = vmatpush1.bf16.msra.mxu0 %v3800
  %5516 = vmatprep.subr.bf16.mxu0 0
  %5517 = vmatpush1.bf16.msra.mxu0 %v3801
  %5518 = vmatprep.subr.bf16.mxu0 0
  %5519 = vmatpush1.bf16.msra.mxu0 %v3802
  %5520 = vmatprep.subr.bf16.mxu0 0
  %5521 = vmatpush1.bf16.msra.mxu0 %v3803
  %5522 = vmatprep.subr.bf16.mxu0 0
  %5523 = vmatpush1.bf16.msra.mxu0 %v3804
  %5524 = vmatprep.subr.bf16.mxu0 0
  %5525 = vmatpush1.bf16.msra.mxu0 %v3805
  %5526 = vmatprep.subr.bf16.mxu0 0
  %5527 = vmatpush1.bf16.msra.mxu0 %v3806
  %5528 = vmatprep.mubr.bf16.mxu0 %v2066
  %5529 = vmatmul.mubr.bf16.gmra.mrb[0].mxu0 %v2065
  %v5530 = vpop.f32.mrb[0].mxu0
  %v5531 = vadd.f32 %v5370, %v5530
  %v5532 = vpop.f32.mrb[0].mxu0
  %v5533 = vpop.f32.mrb[0].mxu0
  %v5534 = vadd.f32 %v5373, %v5533
  %v5535 = vpop.f32.mrb[0].mxu0
  %5536 = vmatprep.mubr.bf16.mxu0 %v2091
  %5537 = vmatmul.mubr.bf16.gmra.mrb[0].mxu0 %v2090
  %v5538 = vpop.f32.mrb[0].mxu0
  %v5539 = vadd.f32 %v5378, %v5538
  %v5540 = vpop.f32.mrb[0].mxu0
  %v5541 = vpop.f32.mrb[0].mxu0
  %v5542 = vadd.f32 %v5381, %v5541
  %v5543 = vpop.f32.mrb[0].mxu0
  %5544 = vmatprep.mubr.bf16.mxu0 %v2116
  %5545 = vmatmul.mubr.bf16.gmra.mrb[0].mxu0 %v2115
  %v5546 = vpop.f32.mrb[0].mxu0
  %v5547 = vadd.f32 %v5386, %v5546
  %v5548 = vpop.f32.mrb[0].mxu0
  %v5549 = vpop.f32.mrb[0].mxu0
  %v5550 = vadd.f32 %v5389, %v5549
  %v5551 = vpop.f32.mrb[0].mxu0
  %5552 = vmatprep.mubr.bf16.mxu0 %v2141
  %5553 = vmatmul.mubr.bf16.gmra.mrb[0].mxu0 %v2140
  %v5554 = vpop.f32.mrb[0].mxu0
  %v5555 = vadd.f32 %v5394, %v5554
  %v5556 = vpop.f32.mrb[0].mxu0
  %v5557 = vpop.f32.mrb[0].mxu0
  %v5558 = vadd.f32 %v5397, %v5557
  %v5559 = vpop.f32.mrb[0].mxu0
  %5560 = vmatprep.mubr.bf16.mxu0 %v2166
  %5561 = vmatmul.mubr.bf16.gmra.mrb[0].mxu0 %v2165
  %v5562 = vpop.f32.mrb[0].mxu0
  %v5563 = vadd.f32 %v5402, %v5562
  %v5564 = vpop.f32.mrb[0].mxu0
  %v5565 = vpop.f32.mrb[0].mxu0
  %v5566 = vadd.f32 %v5405, %v5565
  %v5567 = vpop.f32.mrb[0].mxu0
  %5568 = vmatprep.mubr.bf16.mxu0 %v2191
  %5569 = vmatmul.mubr.bf16.gmra.mrb[0].mxu0 %v2190
  %v5570 = vpop.f32.mrb[0].mxu0
  %v5571 = vadd.f32 %v5410, %v5570
  %v5572 = vpop.f32.mrb[0].mxu0
  %v5573 = vpop.f32.mrb[0].mxu0
  %v5574 = vadd.f32 %v5413, %v5573
  %v5575 = vpop.f32.mrb[0].mxu0
  %5576 = vmatprep.mubr.bf16.mxu0 %v2216
  %5577 = vmatmul.mubr.bf16.gmra.mrb[0].mxu0 %v2215
  %v5578 = vpop.f32.mrb[0].mxu0
  %v5579 = vadd.f32 %v5418, %v5578
  %v5580 = vpop.f32.mrb[0].mxu0
  %v5581 = vpop.f32.mrb[0].mxu0
  %v5582 = vadd.f32 %v5421, %v5581
  %v5583 = vpop.f32.mrb[0].mxu0
  %5584 = vmatprep.mubr.bf16.mxu0 %v2241
  %5585 = vmatmul.mubr.bf16.gmra.mrb[0].mxu0 %v2240
  %v5586 = vpop.f32.mrb[0].mxu0
  %v5587 = vadd.f32 %v5426, %v5586
  %v5588 = vpop.f32.mrb[0].mxu0
  %v5589 = vpop.f32.mrb[0].mxu0
  %v5590 = vadd.f32 %v5429, %v5589
  %v5591 = vpop.f32.mrb[0].mxu0
  %5592 = vmatprep.mubr.bf16.mxu0 %v2266
  %5593 = vmatmul.mubr.bf16.gmra.mrb[0].mxu0 %v2265
  %v5594 = vpop.f32.mrb[0].mxu0
  %v5595 = vadd.f32 %v5434, %v5594
  %v5596 = vpop.f32.mrb[0].mxu0
  %v5597 = vpop.f32.mrb[0].mxu0
  %v5598 = vadd.f32 %v5437, %v5597
  %v5599 = vpop.f32.mrb[0].mxu0
  %5600 = vmatprep.mubr.bf16.mxu0 %v2291
  %5601 = vmatmul.mubr.bf16.gmra.mrb[0].mxu0 %v2290
  %v5602 = vpop.f32.mrb[0].mxu0
  %v5603 = vadd.f32 %v5442, %v5602
  %v5604 = vpop.f32.mrb[0].mxu0
  %v5605 = vpop.f32.mrb[0].mxu0
  %v5606 = vadd.f32 %v5445, %v5605
  %v5607 = vpop.f32.mrb[0].mxu0
  %5608 = vmatprep.mubr.bf16.mxu0 %v2316
  %5609 = vmatmul.mubr.bf16.gmra.mrb[0].mxu0 %v2315
  %v5610 = vpop.f32.mrb[0].mxu0
  %v5611 = vadd.f32 %v5450, %v5610
  %v5612 = vpop.f32.mrb[0].mxu0
  %v5613 = vpop.f32.mrb[0].mxu0
  %v5614 = vadd.f32 %v5453, %v5613
  %v5615 = vpop.f32.mrb[0].mxu0
  %5616 = vmatprep.mubr.bf16.mxu0 %v2341
  %5617 = vmatmul.mubr.bf16.gmra.mrb[0].mxu0 %v2340
  %v5618 = vpop.f32.mrb[0].mxu0
  %v5619 = vadd.f32 %v5458, %v5618
  %v5620 = vpop.f32.mrb[0].mxu0
  %v5621 = vpop.f32.mrb[0].mxu0
  %v5622 = vadd.f32 %v5461, %v5621
  %v5623 = vpop.f32.mrb[0].mxu0
  %5624 = vmatprep.mubr.bf16.mxu0 %v2366
  %5625 = vmatmul.mubr.bf16.gmra.mrb[0].mxu0 %v2365
  %v5626 = vpop.f32.mrb[0].mxu0
  %v5627 = vadd.f32 %v5466, %v5626
  %v5628 = vpop.f32.mrb[0].mxu0
  %v5629 = vpop.f32.mrb[0].mxu0
  %v5630 = vadd.f32 %v5469, %v5629
  %v5631 = vpop.f32.mrb[0].mxu0
  %5632 = vmatprep.mubr.bf16.mxu0 %v2391
  %5633 = vmatmul.mubr.bf16.gmra.mrb[0].mxu0 %v2390
  %v5634 = vpop.f32.mrb[0].mxu0
  %v5635 = vadd.f32 %v5474, %v5634
  %v5636 = vpop.f32.mrb[0].mxu0
  %v5637 = vpop.f32.mrb[0].mxu0
  %v5638 = vadd.f32 %v5477, %v5637
  %v5639 = vpop.f32.mrb[0].mxu0
  %5640 = vmatprep.mubr.bf16.mxu0 %v2416
  %5641 = vmatmul.mubr.bf16.gmra.mrb[0].mxu0 %v2415
  %v5642 = vpop.f32.mrb[0].mxu0
  %v5643 = vadd.f32 %v5482, %v5642
  %v5644 = vpop.f32.mrb[0].mxu0
  %v5645 = vpop.f32.mrb[0].mxu0
  %v5646 = vadd.f32 %v5485, %v5645
  %v5647 = vpop.f32.mrb[0].mxu0
  %5648 = vmatprep.mubr.bf16.mxu0 %v2441
  %5649 = vmatmul.mubr.bf16.gmra.mrb[0].mxu0 %v2440
  %v5650 = vpop.f32.mrb[0].mxu0
  %v5651 = vadd.f32 %v5490, %v5650
  %v5652 = vpop.f32.mrb[0].mxu0
  %v5653 = vpop.f32.mrb[0].mxu0
  %v5654 = vadd.f32 %v5493, %v5653
  %v5655 = vpop.f32.mrb[0].mxu0
  %5656 = vdwg.mxu0
  %5657 = vmatprep.subr.bf16.mxu0 0
  %5658 = vmatpush1.bf16.msra.mxu0 %v3807
  %5659 = vmatprep.subr.bf16.mxu0 0
  %5660 = vmatpush1.bf16.msra.mxu0 %v3808
  %5661 = vmatprep.subr.bf16.mxu0 0
  %5662 = vmatpush1.bf16.msra.mxu0 %v3809
  %5663 = vmatprep.subr.bf16.mxu0 0
  %5664 = vmatpush1.bf16.msra.mxu0 %v3810
  %5665 = vmatprep.subr.bf16.mxu0 0
  %5666 = vmatpush1.bf16.msra.mxu0 %v3811
  %5667 = vmatprep.subr.bf16.mxu0 0
  %5668 = vmatpush1.bf16.msra.mxu0 %v3812
  %5669 = vmatprep.subr.bf16.mxu0 0
  %5670 = vmatpush1.bf16.msra.mxu0 %v3813
  %5671 = vmatprep.subr.bf16.mxu0 0
  %5672 = vmatpush1.bf16.msra.mxu0 %v3814
  %5673 = vmatprep.subr.bf16.mxu0 0
  %5674 = vmatpush1.bf16.msra.mxu0 %v3815
  %5675 = vmatprep.subr.bf16.mxu0 0
  %5676 = vmatpush1.bf16.msra.mxu0 %v3816
  %5677 = vmatprep.subr.bf16.mxu0 0
  %5678 = vmatpush1.bf16.msra.mxu0 %v3817
  %5679 = vmatprep.subr.bf16.mxu0 0
  %5680 = vmatpush1.bf16.msra.mxu0 %v3818
  %5681 = vmatprep.subr.bf16.mxu0 0
  %5682 = vmatpush1.bf16.msra.mxu0 %v3819
  %5683 = vmatprep.subr.bf16.mxu0 0
  %5684 = vmatpush1.bf16.msra.mxu0 %v3820
  %5685 = vmatprep.subr.bf16.mxu0 0
  %5686 = vmatpush1.bf16.msra.mxu0 %v3821
  %5687 = vmatprep.subr.bf16.mxu0 0
  %5688 = vmatpush1.bf16.msra.mxu0 %v3822
  %5689 = vmatprep.mubr.bf16.mxu0 %v2068
  %5690 = vmatmul.mubr.bf16.gmra.mrb[0].mxu0 %v2067
  %v5691 = vpop.f32.mrb[0].mxu0
  %v5692 = vadd.f32 %v5531, %v5691
  %v5693 = vpop.f32.mrb[0].mxu0
  %v5694 = vpop.f32.mrb[0].mxu0
  %v5695 = vadd.f32 %v5534, %v5694
  %v5696 = vpop.f32.mrb[0].mxu0
  %5697 = vmatprep.mubr.bf16.mxu0 %v2093
  %5698 = vmatmul.mubr.bf16.gmra.mrb[0].mxu0 %v2092
  %v5699 = vpop.f32.mrb[0].mxu0
  %v5700 = vadd.f32 %v5539, %v5699
  %v5701 = vpop.f32.mrb[0].mxu0
  %v5702 = vpop.f32.mrb[0].mxu0
  %v5703 = vadd.f32 %v5542, %v5702
  %v5704 = vpop.f32.mrb[0].mxu0
  %5705 = vmatprep.mubr.bf16.mxu0 %v2118
  %5706 = vmatmul.mubr.bf16.gmra.mrb[0].mxu0 %v2117
  %v5707 = vpop.f32.mrb[0].mxu0
  %v5708 = vadd.f32 %v5547, %v5707
  %v5709 = vpop.f32.mrb[0].mxu0
  %v5710 = vpop.f32.mrb[0].mxu0
  %v5711 = vadd.f32 %v5550, %v5710
  %v5712 = vpop.f32.mrb[0].mxu0
  %5713 = vmatprep.mubr.bf16.mxu0 %v2143
  %5714 = vmatmul.mubr.bf16.gmra.mrb[0].mxu0 %v2142
  %v5715 = vpop.f32.mrb[0].mxu0
  %v5716 = vadd.f32 %v5555, %v5715
  %v5717 = vpop.f32.mrb[0].mxu0
  %v5718 = vpop.f32.mrb[0].mxu0
  %v5719 = vadd.f32 %v5558, %v5718
  %v5720 = vpop.f32.mrb[0].mxu0
  %5721 = vmatprep.mubr.bf16.mxu0 %v2168
  %5722 = vmatmul.mubr.bf16.gmra.mrb[0].mxu0 %v2167
  %v5723 = vpop.f32.mrb[0].mxu0
  %v5724 = vadd.f32 %v5563, %v5723
  %v5725 = vpop.f32.mrb[0].mxu0
  %v5726 = vpop.f32.mrb[0].mxu0
  %v5727 = vadd.f32 %v5566, %v5726
  %v5728 = vpop.f32.mrb[0].mxu0
  %5729 = vmatprep.mubr.bf16.mxu0 %v2193
  %5730 = vmatmul.mubr.bf16.gmra.mrb[0].mxu0 %v2192
  %v5731 = vpop.f32.mrb[0].mxu0
  %v5732 = vadd.f32 %v5571, %v5731
  %v5733 = vpop.f32.mrb[0].mxu0
  %v5734 = vpop.f32.mrb[0].mxu0
  %v5735 = vadd.f32 %v5574, %v5734
  %v5736 = vpop.f32.mrb[0].mxu0
  %5737 = vmatprep.mubr.bf16.mxu0 %v2218
  %5738 = vmatmul.mubr.bf16.gmra.mrb[0].mxu0 %v2217
  %v5739 = vpop.f32.mrb[0].mxu0
  %v5740 = vadd.f32 %v5579, %v5739
  %v5741 = vpop.f32.mrb[0].mxu0
  %v5742 = vpop.f32.mrb[0].mxu0
  %v5743 = vadd.f32 %v5582, %v5742
  %v5744 = vpop.f32.mrb[0].mxu0
  %5745 = vmatprep.mubr.bf16.mxu0 %v2243
  %5746 = vmatmul.mubr.bf16.gmra.mrb[0].mxu0 %v2242
  %v5747 = vpop.f32.mrb[0].mxu0
  %v5748 = vadd.f32 %v5587, %v5747
  %v5749 = vpop.f32.mrb[0].mxu0
  %v5750 = vpop.f32.mrb[0].mxu0
  %v5751 = vadd.f32 %v5590, %v5750
  %v5752 = vpop.f32.mrb[0].mxu0
  %5753 = vmatprep.mubr.bf16.mxu0 %v2268
  %5754 = vmatmul.mubr.bf16.gmra.mrb[0].mxu0 %v2267
  %v5755 = vpop.f32.mrb[0].mxu0
  %v5756 = vadd.f32 %v5595, %v5755
  %v5757 = vpop.f32.mrb[0].mxu0
  %v5758 = vpop.f32.mrb[0].mxu0
  %v5759 = vadd.f32 %v5598, %v5758
  %v5760 = vpop.f32.mrb[0].mxu0
  %5761 = vmatprep.mubr.bf16.mxu0 %v2293
  %5762 = vmatmul.mubr.bf16.gmra.mrb[0].mxu0 %v2292
  %v5763 = vpop.f32.mrb[0].mxu0
  %v5764 = vadd.f32 %v5603, %v5763
  %v5765 = vpop.f32.mrb[0].mxu0
  %v5766 = vpop.f32.mrb[0].mxu0
  %v5767 = vadd.f32 %v5606, %v5766
  %v5768 = vpop.f32.mrb[0].mxu0
  %5769 = vmatprep.mubr.bf16.mxu0 %v2318
  %5770 = vmatmul.mubr.bf16.gmra.mrb[0].mxu0 %v2317
  %v5771 = vpop.f32.mrb[0].mxu0
  %v5772 = vadd.f32 %v5611, %v5771
  %v5773 = vpop.f32.mrb[0].mxu0
  %v5774 = vpop.f32.mrb[0].mxu0
  %v5775 = vadd.f32 %v5614, %v5774
  %v5776 = vpop.f32.mrb[0].mxu0
  %5777 = vmatprep.mubr.bf16.mxu0 %v2343
  %5778 = vmatmul.mubr.bf16.gmra.mrb[0].mxu0 %v2342
  %v5779 = vpop.f32.mrb[0].mxu0
  %v5780 = vadd.f32 %v5619, %v5779
  %v5781 = vpop.f32.mrb[0].mxu0
  %v5782 = vpop.f32.mrb[0].mxu0
  %v5783 = vadd.f32 %v5622, %v5782
  %v5784 = vpop.f32.mrb[0].mxu0
  %5785 = vmatprep.mubr.bf16.mxu0 %v2368
  %5786 = vmatmul.mubr.bf16.gmra.mrb[0].mxu0 %v2367
  %v5787 = vpop.f32.mrb[0].mxu0
  %v5788 = vadd.f32 %v5627, %v5787
  %v5789 = vpop.f32.mrb[0].mxu0
  %v5790 = vpop.f32.mrb[0].mxu0
  %v5791 = vadd.f32 %v5630, %v5790
  %v5792 = vpop.f32.mrb[0].mxu0
  %5793 = vmatprep.mubr.bf16.mxu0 %v2393
  %5794 = vmatmul.mubr.bf16.gmra.mrb[0].mxu0 %v2392
  %v5795 = vpop.f32.mrb[0].mxu0
  %v5796 = vadd.f32 %v5635, %v5795
  %v5797 = vpop.f32.mrb[0].mxu0
  %v5798 = vpop.f32.mrb[0].mxu0
  %v5799 = vadd.f32 %v5638, %v5798
  %v5800 = vpop.f32.mrb[0].mxu0
  %5801 = vmatprep.mubr.bf16.mxu0 %v2418
  %5802 = vmatmul.mubr.bf16.gmra.mrb[0].mxu0 %v2417
  %v5803 = vpop.f32.mrb[0].mxu0
  %v5804 = vadd.f32 %v5643, %v5803
  %v5805 = vpop.f32.mrb[0].mxu0
  %v5806 = vpop.f32.mrb[0].mxu0
  %v5807 = vadd.f32 %v5646, %v5806
  %v5808 = vpop.f32.mrb[0].mxu0
  %5809 = vmatprep.mubr.bf16.mxu0 %v2443
  %5810 = vmatmul.mubr.bf16.gmra.mrb[0].mxu0 %v2442
  %v5811 = vpop.f32.mrb[0].mxu0
  %v5812 = vadd.f32 %v5651, %v5811
  %v5813 = vpop.f32.mrb[0].mxu0
  %v5814 = vpop.f32.mrb[0].mxu0
  %v5815 = vadd.f32 %v5654, %v5814
  %v5816 = vpop.f32.mrb[0].mxu0
  %5817 = vdwg.mxu0
  %5818 = vmatprep.subr.bf16.mxu0 0
  %5819 = vmatpush1.bf16.msra.mxu0 %v3823
  %5820 = vmatprep.subr.bf16.mxu0 0
  %5821 = vmatpush1.bf16.msra.mxu0 %v3824
  %5822 = vmatprep.subr.bf16.mxu0 0
  %5823 = vmatpush1.bf16.msra.mxu0 %v3825
  %5824 = vmatprep.subr.bf16.mxu0 0
  %5825 = vmatpush1.bf16.msra.mxu0 %v3826
  %5826 = vmatprep.subr.bf16.mxu0 0
  %5827 = vmatpush1.bf16.msra.mxu0 %v3827
  %5828 = vmatprep.subr.bf16.mxu0 0
  %5829 = vmatpush1.bf16.msra.mxu0 %v3828
  %5830 = vmatprep.subr.bf16.mxu0 0
  %5831 = vmatpush1.bf16.msra.mxu0 %v3829
  %5832 = vmatprep.subr.bf16.mxu0 0
  %5833 = vmatpush1.bf16.msra.mxu0 %v3830
  %5834 = vmatprep.subr.bf16.mxu0 0
  %5835 = vmatpush1.bf16.msra.mxu0 %v3831
  %5836 = vmatprep.subr.bf16.mxu0 0
  %5837 = vmatpush1.bf16.msra.mxu0 %v3832
  %5838 = vmatprep.subr.bf16.mxu0 0
  %5839 = vmatpush1.bf16.msra.mxu0 %v3833
  %5840 = vmatprep.subr.bf16.mxu0 0
  %5841 = vmatpush1.bf16.msra.mxu0 %v3834
  %5842 = vmatprep.subr.bf16.mxu0 0
  %5843 = vmatpush1.bf16.msra.mxu0 %v3835
  %5844 = vmatprep.subr.bf16.mxu0 0
  %5845 = vmatpush1.bf16.msra.mxu0 %v3836
  %5846 = vmatprep.subr.bf16.mxu0 0
  %5847 = vmatpush1.bf16.msra.mxu0 %v3837
  %5848 = vmatprep.subr.bf16.mxu0 0
  %5849 = vmatpush1.bf16.msra.mxu0 %v3838
  %5850 = vmatprep.mubr.bf16.mxu0 %v2070
  %5851 = vmatmul.mubr.bf16.gmra.mrb[0].mxu0 %v2069
  %v5852 = vpop.f32.mrb[0].mxu0
  %v5853 = vadd.f32 %v5692, %v5852
  %v5854 = vpop.f32.mrb[0].mxu0
  %v5855 = vpop.f32.mrb[0].mxu0
  %v5856 = vadd.f32 %v5695, %v5855
  %v5857 = vpop.f32.mrb[0].mxu0
  %5858 = vmatprep.mubr.bf16.mxu0 %v2095
  %5859 = vmatmul.mubr.bf16.gmra.mrb[0].mxu0 %v2094
  %v5860 = vpop.f32.mrb[0].mxu0
  %v5861 = vadd.f32 %v5700, %v5860
  %v5862 = vpop.f32.mrb[0].mxu0
  %v5863 = vpop.f32.mrb[0].mxu0
  %v5864 = vadd.f32 %v5703, %v5863
  %v5865 = vpop.f32.mrb[0].mxu0
  %5866 = vmatprep.mubr.bf16.mxu0 %v2120
  %5867 = vmatmul.mubr.bf16.gmra.mrb[0].mxu0 %v2119
  %v5868 = vpop.f32.mrb[0].mxu0
  %v5869 = vadd.f32 %v5708, %v5868
  %v5870 = vpop.f32.mrb[0].mxu0
  %v5871 = vpop.f32.mrb[0].mxu0
  %v5872 = vadd.f32 %v5711, %v5871
  %v5873 = vpop.f32.mrb[0].mxu0
  %5874 = vmatprep.mubr.bf16.mxu0 %v2145
  %5875 = vmatmul.mubr.bf16.gmra.mrb[0].mxu0 %v2144
  %v5876 = vpop.f32.mrb[0].mxu0
  %v5877 = vadd.f32 %v5716, %v5876
  %v5878 = vpop.f32.mrb[0].mxu0
  %v5879 = vpop.f32.mrb[0].mxu0
  %v5880 = vadd.f32 %v5719, %v5879
  %v5881 = vpop.f32.mrb[0].mxu0
  %5882 = vmatprep.mubr.bf16.mxu0 %v2170
  %5883 = vmatmul.mubr.bf16.gmra.mrb[0].mxu0 %v2169
  %v5884 = vpop.f32.mrb[0].mxu0
  %v5885 = vadd.f32 %v5724, %v5884
  %v5886 = vpop.f32.mrb[0].mxu0
  %v5887 = vpop.f32.mrb[0].mxu0
  %v5888 = vadd.f32 %v5727, %v5887
  %v5889 = vpop.f32.mrb[0].mxu0
  %5890 = vmatprep.mubr.bf16.mxu0 %v2195
  %5891 = vmatmul.mubr.bf16.gmra.mrb[0].mxu0 %v2194
  %v5892 = vpop.f32.mrb[0].mxu0
  %v5893 = vadd.f32 %v5732, %v5892
  %v5894 = vpop.f32.mrb[0].mxu0
  %v5895 = vpop.f32.mrb[0].mxu0
  %v5896 = vadd.f32 %v5735, %v5895
  %v5897 = vpop.f32.mrb[0].mxu0
  %5898 = vmatprep.mubr.bf16.mxu0 %v2220
  %5899 = vmatmul.mubr.bf16.gmra.mrb[0].mxu0 %v2219
  %v5900 = vpop.f32.mrb[0].mxu0
  %v5901 = vadd.f32 %v5740, %v5900
  %v5902 = vpop.f32.mrb[0].mxu0
  %v5903 = vpop.f32.mrb[0].mxu0
  %v5904 = vadd.f32 %v5743, %v5903
  %v5905 = vpop.f32.mrb[0].mxu0
  %5906 = vmatprep.mubr.bf16.mxu0 %v2245
  %5907 = vmatmul.mubr.bf16.gmra.mrb[0].mxu0 %v2244
  %v5908 = vpop.f32.mrb[0].mxu0
  %v5909 = vadd.f32 %v5748, %v5908
  %v5910 = vpop.f32.mrb[0].mxu0
  %v5911 = vpop.f32.mrb[0].mxu0
  %v5912 = vadd.f32 %v5751, %v5911
  %v5913 = vpop.f32.mrb[0].mxu0
  %5914 = vmatprep.mubr.bf16.mxu0 %v2270
  %5915 = vmatmul.mubr.bf16.gmra.mrb[0].mxu0 %v2269
  %v5916 = vpop.f32.mrb[0].mxu0
  %v5917 = vadd.f32 %v5756, %v5916
  %v5918 = vpop.f32.mrb[0].mxu0
  %v5919 = vpop.f32.mrb[0].mxu0
  %v5920 = vadd.f32 %v5759, %v5919
  %v5921 = vpop.f32.mrb[0].mxu0
  %5922 = vmatprep.mubr.bf16.mxu0 %v2295
  %5923 = vmatmul.mubr.bf16.gmra.mrb[0].mxu0 %v2294
  %v5924 = vpop.f32.mrb[0].mxu0
  %v5925 = vadd.f32 %v5764, %v5924
  %v5926 = vpop.f32.mrb[0].mxu0
  %v5927 = vpop.f32.mrb[0].mxu0
  %v5928 = vadd.f32 %v5767, %v5927
  %v5929 = vpop.f32.mrb[0].mxu0
  %5930 = vmatprep.mubr.bf16.mxu0 %v2320
  %5931 = vmatmul.mubr.bf16.gmra.mrb[0].mxu0 %v2319
  %v5932 = vpop.f32.mrb[0].mxu0
  %v5933 = vadd.f32 %v5772, %v5932
  %v5934 = vpop.f32.mrb[0].mxu0
  %v5935 = vpop.f32.mrb[0].mxu0
  %v5936 = vadd.f32 %v5775, %v5935
  %v5937 = vpop.f32.mrb[0].mxu0
  %5938 = vmatprep.mubr.bf16.mxu0 %v2345
  %5939 = vmatmul.mubr.bf16.gmra.mrb[0].mxu0 %v2344
  %v5940 = vpop.f32.mrb[0].mxu0
  %v5941 = vadd.f32 %v5780, %v5940
  %v5942 = vpop.f32.mrb[0].mxu0
  %v5943 = vpop.f32.mrb[0].mxu0
  %v5944 = vadd.f32 %v5783, %v5943
  %v5945 = vpop.f32.mrb[0].mxu0
  %5946 = vmatprep.mubr.bf16.mxu0 %v2370
  %5947 = vmatmul.mubr.bf16.gmra.mrb[0].mxu0 %v2369
  %v5948 = vpop.f32.mrb[0].mxu0
  %v5949 = vadd.f32 %v5788, %v5948
  %v5950 = vpop.f32.mrb[0].mxu0
  %v5951 = vpop.f32.mrb[0].mxu0
  %v5952 = vadd.f32 %v5791, %v5951
  %v5953 = vpop.f32.mrb[0].mxu0
  %5954 = vmatprep.mubr.bf16.mxu0 %v2395
  %5955 = vmatmul.mubr.bf16.gmra.mrb[0].mxu0 %v2394
  %v5956 = vpop.f32.mrb[0].mxu0
  %v5957 = vadd.f32 %v5796, %v5956
  %v5958 = vpop.f32.mrb[0].mxu0
  %v5959 = vpop.f32.mrb[0].mxu0
  %v5960 = vadd.f32 %v5799, %v5959
  %v5961 = vpop.f32.mrb[0].mxu0
  %5962 = vmatprep.mubr.bf16.mxu0 %v2420
  %5963 = vmatmul.mubr.bf16.gmra.mrb[0].mxu0 %v2419
  %v5964 = vpop.f32.mrb[0].mxu0
  %v5965 = vadd.f32 %v5804, %v5964
  %v5966 = vpop.f32.mrb[0].mxu0
  %v5967 = vpop.f32.mrb[0].mxu0
  %v5968 = vadd.f32 %v5807, %v5967
  %v5969 = vpop.f32.mrb[0].mxu0
  %5970 = vmatprep.mubr.bf16.mxu0 %v2445
  %5971 = vmatmul.mubr.bf16.gmra.mrb[0].mxu0 %v2444
  %v5972 = vpop.f32.mrb[0].mxu0
  %v5973 = vadd.f32 %v5812, %v5972
  %v5974 = vpop.f32.mrb[0].mxu0
  %v5975 = vpop.f32.mrb[0].mxu0
  %v5976 = vadd.f32 %v5815, %v5975
  %v5977 = vpop.f32.mrb[0].mxu0
  %5978 = vdwg.mxu0
  %5979 = vmatprep.subr.bf16.mxu0 0
  %5980 = vmatpush1.bf16.msra.mxu0 %v3839
  %5981 = vmatprep.subr.bf16.mxu0 0
  %5982 = vmatpush1.bf16.msra.mxu0 %v3840
  %5983 = vmatprep.subr.bf16.mxu0 0
  %5984 = vmatpush1.bf16.msra.mxu0 %v3841
  %5985 = vmatprep.subr.bf16.mxu0 0
  %5986 = vmatpush1.bf16.msra.mxu0 %v3842
  %5987 = vmatprep.subr.bf16.mxu0 0
  %5988 = vmatpush1.bf16.msra.mxu0 %v3843
  %5989 = vmatprep.subr.bf16.mxu0 0
  %5990 = vmatpush1.bf16.msra.mxu0 %v3844
  %5991 = vmatprep.subr.bf16.mxu0 0
  %5992 = vmatpush1.bf16.msra.mxu0 %v3845
  %5993 = vmatprep.subr.bf16.mxu0 0
  %5994 = vmatpush1.bf16.msra.mxu0 %v3846
  %5995 = vmatprep.subr.bf16.mxu0 0
  %5996 = vmatpush1.bf16.msra.mxu0 0
  %5997 = vmatprep.subr.bf16.mxu0 0
  %5998 = vmatpush1.bf16.msra.mxu0 0
  %5999 = vmatprep.subr.bf16.mxu0 0
  %6000 = vmatpush1.bf16.msra.mxu0 0
  %6001 = vmatprep.subr.bf16.mxu0 0
  %6002 = vmatpush1.bf16.msra.mxu0 0
  %6003 = vmatprep.subr.bf16.mxu0 0
  %6004 = vmatpush1.bf16.msra.mxu0 0
  %6005 = vmatprep.subr.bf16.mxu0 0
  %6006 = vmatpush1.bf16.msra.mxu0 0
  %6007 = vmatprep.subr.bf16.mxu0 0
  %6008 = vmatpush1.bf16.msra.mxu0 0
  %6009 = vmatprep.subr.bf16.mxu0 0
  %6010 = vmatpush1.bf16.msra.mxu0 0
  %6011 = vmatprep.mubr.bf16.mxu0 0
  %6012 = vmatmul.mubr.bf16.gmra.mrb[0].mxu0 %v2071
  %v6013 = vpop.f32.mrb[0].mxu0
  %v6014 = vadd.f32 %v5853, %v6013
  %v6015 = vpop.f32.mrb[0].mxu0
  %v6016 = vpop.f32.mrb[0].mxu0
  %v6017 = vadd.f32 %v5856, %v6016
  %v6018 = vpop.f32.mrb[0].mxu0
  %6019 = vmatprep.mubr.bf16.mxu0 0
  %6020 = vmatmul.mubr.bf16.gmra.mrb[0].mxu0 %v2096
  %v6021 = vpop.f32.mrb[0].mxu0
  %v6022 = vadd.f32 %v5861, %v6021
  %v6023 = vpop.f32.mrb[0].mxu0
  %v6024 = vpop.f32.mrb[0].mxu0
  %v6025 = vadd.f32 %v5864, %v6024
  %v6026 = vpop.f32.mrb[0].mxu0
  %6027 = vmatprep.mubr.bf16.mxu0 0
  %6028 = vmatmul.mubr.bf16.gmra.mrb[0].mxu0 %v2121
  %v6029 = vpop.f32.mrb[0].mxu0
  %v6030 = vadd.f32 %v5869, %v6029
  %v6031 = vpop.f32.mrb[0].mxu0
  %v6032 = vpop.f32.mrb[0].mxu0
  %v6033 = vadd.f32 %v5872, %v6032
  %v6034 = vpop.f32.mrb[0].mxu0
  %6035 = vmatprep.mubr.bf16.mxu0 0
  %6036 = vmatmul.mubr.bf16.gmra.mrb[0].mxu0 %v2146
  %v6037 = vpop.f32.mrb[0].mxu0
  %v6038 = vadd.f32 %v5877, %v6037
  %v6039 = vpop.f32.mrb[0].mxu0
  %v6040 = vpop.f32.mrb[0].mxu0
  %v6041 = vadd.f32 %v5880, %v6040
  %v6042 = vpop.f32.mrb[0].mxu0
  %6043 = vmatprep.mubr.bf16.mxu0 0
  %6044 = vmatmul.mubr.bf16.gmra.mrb[0].mxu0 %v2171
  %v6045 = vpop.f32.mrb[0].mxu0
  %v6046 = vadd.f32 %v5885, %v6045
  %v6047 = vpop.f32.mrb[0].mxu0
  %v6048 = vpop.f32.mrb[0].mxu0
  %v6049 = vadd.f32 %v5888, %v6048
  %v6050 = vpop.f32.mrb[0].mxu0
  %6051 = vmatprep.mubr.bf16.mxu0 0
  %6052 = vmatmul.mubr.bf16.gmra.mrb[0].mxu0 %v2196
  %v6053 = vpop.f32.mrb[0].mxu0
  %v6054 = vadd.f32 %v5893, %v6053
  %v6055 = vpop.f32.mrb[0].mxu0
  %v6056 = vpop.f32.mrb[0].mxu0
  %v6057 = vadd.f32 %v5896, %v6056
  %v6058 = vpop.f32.mrb[0].mxu0
  %6059 = vmatprep.mubr.bf16.mxu0 0
  %6060 = vmatmul.mubr.bf16.gmra.mrb[0].mxu0 %v2221
  %v6061 = vpop.f32.mrb[0].mxu0
  %v6062 = vadd.f32 %v5901, %v6061
  %v6063 = vpop.f32.mrb[0].mxu0
  %v6064 = vpop.f32.mrb[0].mxu0
  %v6065 = vadd.f32 %v5904, %v6064
  %v6066 = vpop.f32.mrb[0].mxu0
  %6067 = vmatprep.mubr.bf16.mxu0 0
  %6068 = vmatmul.mubr.bf16.gmra.mrb[0].mxu0 %v2246
  %v6069 = vpop.f32.mrb[0].mxu0
  %v6070 = vadd.f32 %v5909, %v6069
  %v6071 = vpop.f32.mrb[0].mxu0
  %v6072 = vpop.f32.mrb[0].mxu0
  %v6073 = vadd.f32 %v5912, %v6072
  %v6074 = vpop.f32.mrb[0].mxu0
  %6075 = vmatprep.mubr.bf16.mxu0 0
  %6076 = vmatmul.mubr.bf16.gmra.mrb[0].mxu0 %v2271
  %v6077 = vpop.f32.mrb[0].mxu0
  %v6078 = vadd.f32 %v5917, %v6077
  %v6079 = vpop.f32.mrb[0].mxu0
  %v6080 = vpop.f32.mrb[0].mxu0
  %v6081 = vadd.f32 %v5920, %v6080
  %v6082 = vpop.f32.mrb[0].mxu0
  %6083 = vmatprep.mubr.bf16.mxu0 0
  %6084 = vmatmul.mubr.bf16.gmra.mrb[0].mxu0 %v2296
  %v6085 = vpop.f32.mrb[0].mxu0
  %v6086 = vadd.f32 %v5925, %v6085
  %v6087 = vpop.f32.mrb[0].mxu0
  %v6088 = vpop.f32.mrb[0].mxu0
  %v6089 = vadd.f32 %v5928, %v6088
  %v6090 = vpop.f32.mrb[0].mxu0
  %6091 = vmatprep.mubr.bf16.mxu0 0
  %6092 = vmatmul.mubr.bf16.gmra.mrb[0].mxu0 %v2321
  %v6093 = vpop.f32.mrb[0].mxu0
  %v6094 = vadd.f32 %v5933, %v6093
  %v6095 = vpop.f32.mrb[0].mxu0
  %v6096 = vpop.f32.mrb[0].mxu0
  %v6097 = vadd.f32 %v5936, %v6096
  %v6098 = vpop.f32.mrb[0].mxu0
  %6099 = vmatprep.mubr.bf16.mxu0 0
  %6100 = vmatmul.mubr.bf16.gmra.mrb[0].mxu0 %v2346
  %v6101 = vpop.f32.mrb[0].mxu0
  %v6102 = vadd.f32 %v5941, %v6101
  %v6103 = vpop.f32.mrb[0].mxu0
  %v6104 = vpop.f32.mrb[0].mxu0
  %v6105 = vadd.f32 %v5944, %v6104
  %v6106 = vpop.f32.mrb[0].mxu0
  %6107 = vmatprep.mubr.bf16.mxu0 0
  %6108 = vmatmul.mubr.bf16.gmra.mrb[0].mxu0 %v2371
  %v6109 = vpop.f32.mrb[0].mxu0
  %v6110 = vadd.f32 %v5949, %v6109
  %v6111 = vpop.f32.mrb[0].mxu0
  %v6112 = vpop.f32.mrb[0].mxu0
  %v6113 = vadd.f32 %v5952, %v6112
  %v6114 = vpop.f32.mrb[0].mxu0
  %6115 = vmatprep.mubr.bf16.mxu0 0
  %6116 = vmatmul.mubr.bf16.gmra.mrb[0].mxu0 %v2396
  %v6117 = vpop.f32.mrb[0].mxu0
  %v6118 = vadd.f32 %v5957, %v6117
  %v6119 = vpop.f32.mrb[0].mxu0
  %v6120 = vpop.f32.mrb[0].mxu0
  %v6121 = vadd.f32 %v5960, %v6120
  %v6122 = vpop.f32.mrb[0].mxu0
  %6123 = vmatprep.mubr.bf16.mxu0 0
  %6124 = vmatmul.mubr.bf16.gmra.mrb[0].mxu0 %v2421
  %v6125 = vpop.f32.mrb[0].mxu0
  %v6126 = vadd.f32 %v5965, %v6125
  %v6127 = vpop.f32.mrb[0].mxu0
  %v6128 = vpop.f32.mrb[0].mxu0
  %v6129 = vadd.f32 %v5968, %v6128
  %v6130 = vpop.f32.mrb[0].mxu0
  %6131 = vmatprep.mubr.bf16.mxu0 0
  %6132 = vmatmul.mubr.bf16.gmra.mrb[0].mxu0 %v2446
  %v6133 = vpop.f32.mrb[0].mxu0
  %v6134 = vadd.f32 %v5973, %v6133
  %v6135 = vpop.f32.mrb[0].mxu0
  %v6136 = vpop.f32.mrb[0].mxu0
  %v6137 = vadd.f32 %v5976, %v6136
  %v6138 = vpop.f32.mrb[0].mxu0
  %6139 = vdwg.mxu0
  %v6140 = vmax.f32 %v6014, %v6046
  %v6141 = vmax.f32 %v6017, %v6049
  %v6142 = vmax.f32 %v6022, %v6054
  %v6143 = vmax.f32 %v6025, %v6057
  %v6144 = vmax.f32 %v6030, %v6062
  %v6145 = vmax.f32 %v6033, %v6065
  %v6146 = vmax.f32 %v6038, %v6070
  %v6147 = vmax.f32 %v6041, %v6073
  %v6148 = vmax.f32 %v6078, %v6110
  %v6149 = vmax.f32 %v6081, %v6113
  %v6150 = vmax.f32 %v6086, %v6118
  %v6151 = vmax.f32 %v6089, %v6121
  %v6152 = vmax.f32 %v6094, %v6126
  %v6153 = vmax.f32 %v6097, %v6129
  %v6154 = vmax.f32 %v6102, %v6134
  %v6155 = vmax.f32 %v6105, %v6137
  %v6156 = vmax.f32 %v6140, %v6148
  %v6157 = vmax.f32 %v6141, %v6149
  %v6158 = vmax.f32 %v6142, %v6150
  %v6159 = vmax.f32 %v6143, %v6151
  %v6160 = vmax.f32 %v6144, %v6152
  %v6161 = vmax.f32 %v6145, %v6153
  %v6162 = vmax.f32 %v6146, %v6154
  %v6163 = vmax.f32 %v6147, %v6155
  %v6164 = vld [vmem:[%s2] sm:$0x1]
  %v6166 = vlaneseq
  %v6167 = vshrl.u32 %v6166, 7
  %v6168 = vsub.s32 0, %v6167
  %v6169 = vrot.slane %v6164, %v6168
  %v6171 = vadd.f32 %v6156, %v6169
  %v6172 = vadd.f32 %v6157, %v6169
  %v6173 = vadd.f32 %v6158, %v6169
  %v6174 = vadd.f32 %v6159, %v6169
  %v6175 = vadd.f32 %v6160, %v6169
  %v6176 = vadd.f32 %v6161, %v6169
  %v6177 = vadd.f32 %v6162, %v6169
  %v6178 = vadd.f32 %v6163, %v6169
  %v6179 = vmax.f32 %v6171, 0.0
  %v6180 = vmax.f32 %v6172, 0.0
  %v6181 = vmax.f32 %v6173, 0.0
  %v6182 = vmax.f32 %v6174, 0.0
  %v6183 = vmax.f32 %v6175, 0.0
  %v6184 = vmax.f32 %v6176, 0.0
  %v6185 = vmax.f32 %v6177, 0.0
  %v6186 = vmax.f32 %v6178, 0.0
  %v6187 = vpack.c.bf16 %v6180, %v6179
  %v6188 = vpack.c.bf16 %v6182, %v6181
  %v6189 = vpack.c.bf16 %v6184, %v6183
  %v6190 = vpack.c.bf16 %v6186, %v6185
  %v6195 = vunpack.c.l.b16 %v6187
  %v6196 = vunpack.c.h.b16 %v6187
  %v6197 = vunpack.c.l.b16 %v6188
  %v6198 = vunpack.c.h.b16 %v6188
  %v6199 = vunpack.c.l.b16 %v6189
  %v6200 = vunpack.c.h.b16 %v6189
  %v6201 = vunpack.c.l.b16 %v6190
  %v6202 = vunpack.c.h.b16 %v6190
  %v6203 = vpack.c.b16 %v6195, %v6195
  %v6204 = vpack.c.b16 %v6196, %v6196
  %v6205 = vpack.c.b16 %v6197, %v6197
  %v6206 = vpack.c.b16 %v6198, %v6198
  %v6207 = vpack.c.b16 %v6199, %v6199
  %v6208 = vpack.c.b16 %v6200, %v6200
  %v6209 = vpack.c.b16 %v6201, %v6201
  %v6210 = vpack.c.b16 %v6202, %v6202
  %6219 = vst [vmem:[%s3] sm:$0xf] %v6203
  %6220 = vst [vmem:[%s3 + $0x4] sm:$0xf] %v6204
  %6221 = vst [vmem:[%s3 + $0x8] sm:$0xf] %v6205
  %6222 = vst [vmem:[%s3 + $0xc] sm:$0xf] %v6206
  %6223 = vst [vmem:[%s3 + $0x10] sm:$0xf] %v6207
  %6224 = vst [vmem:[%s3 + $0x14] sm:$0xf] %v6208
  %6225 = vst [vmem:[%s3 + $0x18] sm:$0xf] %v6209
  %6226 = vst [vmem:[%s3 + $0x1c] sm:$0xf] %v6210
  // Predicated region
  $region14: #{_lambda_.4} parent=0 // pred_check
    _
  $region15: #{_lambda_.4} parent=0 // pred_check_branch
    %6228 = sbr.rel (0) target = $region17
  $region16: #{_lambda_.4} parent=0 // pred_region
    _
  $region17: #{_lambda_.4} parent=0 // pred_fallthru
    _
  // Predicated region
  $region18: #{_lambda_.4} parent=0 // pred_check
    _
  $region19: #{_lambda_.4} parent=0 // pred_check_branch
    %6230 = sbr.rel (0) target = $region21
  $region20: #{_lambda_.4} parent=0 // pred_region
    _
  $region21: #{_lambda_.4} parent=0 // pred_fallthru
    _

// kernel: _lambda_.5
$region0: #{_lambda_.5}
  #allocation0 [shape = 'u32[]', space=smem, size = 0x4, offset = 0x4, fixed_abs, tag = 'smem constant byte address 0x4 - core index']
  #allocation1 [shape = 'u32[144,128]{1,0:T(1,128)}', space=vmem, size = 0x12000, scoped, tag = 'internal scratch']
  %s0 = inlined_call_operand.vmem [shape: bf16[4,2048], index: 0, kind: input, shape index: {}]
  %s1 = inlined_call_operand.vmem [shape: bf16[2048,512], index: 1, kind: input, shape index: {}]
  %s2 = inlined_call_operand.vmem [shape: f32[1,512], index: 2, kind: input, shape index: {}]
  %s3 = inlined_call_operand.vmem [shape: bf16[512,128], index: 3, kind: input, shape index: {}]
  %s4 = inlined_call_operand.vmem [shape: f32[1,128], index: 4, kind: input, shape index: {}]
  %s5 = inlined_call_operand.vmem [shape: f32[4,128], index: 5, kind: output, shape index: {}]
  %s6 = sld [smem:[#allocation0]]
  $region30: #{_lambda_.5} parent=0
    _
  %s8 = ssub.s32 1, %s6
  %s9 = scalar_select 0, %s8, %s6
  // Predicated region
  $region2: #{_lambda_.5} parent=0 // pred_check
    _
  $region3: #{_lambda_.5} parent=0 // pred_check_branch
    %11 = sbr.rel (0) target = $region5
  $region4: #{_lambda_.5} parent=0 // pred_region
    _
  $region5: #{_lambda_.5} parent=0 // pred_fallthru
    _
  // Predicated region
  $region6: #{_lambda_.5} parent=0 // pred_check
    _
  $region7: #{_lambda_.5} parent=0 // pred_check_branch
    %13 = sbr.rel (0) target = $region9
  $region8: #{_lambda_.5} parent=0 // pred_region
    _
  $region9: #{_lambda_.5} parent=0 // pred_fallthru
    _
  // Predicated region
  $region10: #{_lambda_.5} parent=0 // pred_check
    _
  $region11: #{_lambda_.5} parent=0 // pred_check_branch
    %15 = sbr.rel (0) target = $region13
  $region12: #{_lambda_.5} parent=0 // pred_region
    _
  $region13: #{_lambda_.5} parent=0 // pred_fallthru
    _
  // Predicated region
  $region14: #{_lambda_.5} parent=0 // pred_check
    _
  $region15: #{_lambda_.5} parent=0 // pred_check_branch
    %17 = sbr.rel (0) target = $region17
  $region16: #{_lambda_.5} parent=0 // pred_region
    _
  $region17: #{_lambda_.5} parent=0 // pred_fallthru
    _
  // Predicated region
  $region18: #{_lambda_.5} parent=0 // pred_check
    _
  $region19: #{_lambda_.5} parent=0 // pred_check_branch
    %19 = sbr.rel (0) target = $region21
  $region20: #{_lambda_.5} parent=0 // pred_region
    _
  $region21: #{_lambda_.5} parent=0 // pred_fallthru
    _
  %v21 = vld [vmem:[%s0] sm:$0xff]
  %v22 = vld [vmem:[%s0 + $0x8] sm:$0xff]
  %v23 = vld [vmem:[%s0 + $0x10] sm:$0xff]
  %v24 = vld [vmem:[%s0 + $0x18] sm:$0xff]
  %v25 = vld [vmem:[%s1] sm:$0xff]
  %v26 = vld [vmem:[%s1 + $0x8] sm:$0xff]
  %v27 = vld [vmem:[%s1 + $0x10] sm:$0xff]
  %v28 = vld [vmem:[%s1 + $0x18] sm:$0xff]
  %v29 = vld [vmem:[%s1 + $0x20] sm:$0xff]
  %v30 = vld [vmem:[%s1 + $0x28] sm:$0xff]
  %v31 = vld [vmem:[%s1 + $0x30] sm:$0xff]
  %v32 = vld [vmem:[%s1 + $0x38] sm:$0xff]
  %v33 = vld [vmem:[%s1 + $0x40] sm:$0xff]
  %v34 = vld [vmem:[%s1 + $0x48] sm:$0xff]
  %v35 = vld [vmem:[%s1 + $0x50] sm:$0xff]
  %v36 = vld [vmem:[%s1 + $0x58] sm:$0xff]
  %v37 = vld [vmem:[%s1 + $0x60] sm:$0xff]
  %v38 = vld [vmem:[%s1 + $0x68] sm:$0xff]
  %v39 = vld [vmem:[%s1 + $0x70] sm:$0xff]
  %v40 = vld [vmem:[%s1 + $0x78] sm:$0xff]
  %v41 = vld [vmem:[%s1 + $0x80] sm:$0xff]
  %v42 = vld [vmem:[%s1 + $0x88] sm:$0xff]
  %v43 = vld [vmem:[%s1 + $0x90] sm:$0xff]
  %v44 = vld [vmem:[%s1 + $0x98] sm:$0xff]
  %v45 = vld [vmem:[%s1 + $0xa0] sm:$0xff]
  %v46 = vld [vmem:[%s1 + $0xa8] sm:$0xff]
  %v47 = vld [vmem:[%s1 + $0xb0] sm:$0xff]
  %v48 = vld [vmem:[%s1 + $0xb8] sm:$0xff]
  %v49 = vld [vmem:[%s1 + $0xc0] sm:$0xff]
  %v50 = vld [vmem:[%s1 + $0xc8] sm:$0xff]
  %v51 = vld [vmem:[%s1 + $0xd0] sm:$0xff]
  %v52 = vld [vmem:[%s1 + $0xd8] sm:$0xff]
  %v53 = vld [vmem:[%s1 + $0xe0] sm:$0xff]
  %v54 = vld [vmem:[%s1 + $0xe8] sm:$0xff]
  %v55 = vld [vmem:[%s1 + $0xf0] sm:$0xff]
  %v56 = vld [vmem:[%s1 + $0xf8] sm:$0xff]
  %v57 = vld [vmem:[%s1 + $0x100] sm:$0xff]
  %v58 = vld [vmem:[%s1 + $0x108] sm:$0xff]
  %v59 = vld [vmem:[%s1 + $0x110] sm:$0xff]
  %v60 = vld [vmem:[%s1 + $0x118] sm:$0xff]
  %v61 = vld [vmem:[%s1 + $0x120] sm:$0xff]
  %v62 = vld [vmem:[%s1 + $0x128] sm:$0xff]
  %v63 = vld [vmem:[%s1 + $0x130] sm:$0xff]
  %v64 = vld [vmem:[%s1 + $0x138] sm:$0xff]
  %v65 = vld [vmem:[%s1 + $0x140] sm:$0xff]
  %v66 = vld [vmem:[%s1 + $0x148] sm:$0xff]
  %v67 = vld [vmem:[%s1 + $0x150] sm:$0xff]
  %v68 = vld [vmem:[%s1 + $0x158] sm:$0xff]
  %v69 = vld [vmem:[%s1 + $0x160] sm:$0xff]
  %v70 = vld [vmem:[%s1 + $0x168] sm:$0xff]
  %v71 = vld [vmem:[%s1 + $0x170] sm:$0xff]
  %v72 = vld [vmem:[%s1 + $0x178] sm:$0xff]
  %v73 = vld [vmem:[%s1 + $0x180] sm:$0xff]
  %v74 = vld [vmem:[%s1 + $0x188] sm:$0xff]
  %v75 = vld [vmem:[%s1 + $0x190] sm:$0xff]
  %v76 = vld [vmem:[%s1 + $0x198] sm:$0xff]
  %v77 = vld [vmem:[%s1 + $0x1a0] sm:$0xff]
  %v78 = vld [vmem:[%s1 + $0x1a8] sm:$0xff]
  %v79 = vld [vmem:[%s1 + $0x1b0] sm:$0xff]
  %v80 = vld [vmem:[%s1 + $0x1b8] sm:$0xff]
  %v81 = vld [vmem:[%s1 + $0x1c0] sm:$0xff]
  %v82 = vld [vmem:[%s1 + $0x1c8] sm:$0xff]
  %v83 = vld [vmem:[%s1 + $0x1d0] sm:$0xff]
  %v84 = vld [vmem:[%s1 + $0x1d8] sm:$0xff]
  %v85 = vld [vmem:[%s1 + $0x1e0] sm:$0xff]
  %v86 = vld [vmem:[%s1 + $0x1e8] sm:$0xff]
  %v87 = vld [vmem:[%s1 + $0x1f0] sm:$0xff]
  %v88 = vld [vmem:[%s1 + $0x1f8] sm:$0xff]
  %v89 = vld [vmem:[%s1 + $0x200] sm:$0xff]
  %v90 = vld [vmem:[%s1 + $0x208] sm:$0xff]
  %v91 = vld [vmem:[%s1 + $0x210] sm:$0xff]
  %v92 = vld [vmem:[%s1 + $0x218] sm:$0xff]
  %v93 = vld [vmem:[%s1 + $0x220] sm:$0xff]
  %v94 = vld [vmem:[%s1 + $0x228] sm:$0xff]
  %v95 = vld [vmem:[%s1 + $0x230] sm:$0xff]
  %v96 = vld [vmem:[%s1 + $0x238] sm:$0xff]
  %v97 = vld [vmem:[%s1 + $0x240] sm:$0xff]
  %v98 = vld [vmem:[%s1 + $0x248] sm:$0xff]
  %v99 = vld [vmem:[%s1 + $0x250] sm:$0xff]
  %v100 = vld [vmem:[%s1 + $0x258] sm:$0xff]
  %v101 = vld [vmem:[%s1 + $0x260] sm:$0xff]
  %v102 = vld [vmem:[%s1 + $0x268] sm:$0xff]
  %v103 = vld [vmem:[%s1 + $0x270] sm:$0xff]
  %v104 = vld [vmem:[%s1 + $0x278] sm:$0xff]
  %v105 = vld [vmem:[%s1 + $0x280] sm:$0xff]
  %v106 = vld [vmem:[%s1 + $0x288] sm:$0xff]
  %v107 = vld [vmem:[%s1 + $0x290] sm:$0xff]
  %v108 = vld [vmem:[%s1 + $0x298] sm:$0xff]
  %v109 = vld [vmem:[%s1 + $0x2a0] sm:$0xff]
  %v110 = vld [vmem:[%s1 + $0x2a8] sm:$0xff]
  %v111 = vld [vmem:[%s1 + $0x2b0] sm:$0xff]
  %v112 = vld [vmem:[%s1 + $0x2b8] sm:$0xff]
  %v113 = vld [vmem:[%s1 + $0x2c0] sm:$0xff]
  %v114 = vld [vmem:[%s1 + $0x2c8] sm:$0xff]
  %v115 = vld [vmem:[%s1 + $0x2d0] sm:$0xff]
  %v116 = vld [vmem:[%s1 + $0x2d8] sm:$0xff]
  %v117 = vld [vmem:[%s1 + $0x2e0] sm:$0xff]
  %v118 = vld [vmem:[%s1 + $0x2e8] sm:$0xff]
  %v119 = vld [vmem:[%s1 + $0x2f0] sm:$0xff]
  %v120 = vld [vmem:[%s1 + $0x2f8] sm:$0xff]
  %v121 = vld [vmem:[%s1 + $0x300] sm:$0xff]
  %v122 = vld [vmem:[%s1 + $0x308] sm:$0xff]
  %v123 = vld [vmem:[%s1 + $0x310] sm:$0xff]
  %v124 = vld [vmem:[%s1 + $0x318] sm:$0xff]
  %v125 = vld [vmem:[%s1 + $0x320] sm:$0xff]
  %v126 = vld [vmem:[%s1 + $0x328] sm:$0xff]
  %v127 = vld [vmem:[%s1 + $0x330] sm:$0xff]
  %v128 = vld [vmem:[%s1 + $0x338] sm:$0xff]
  %v129 = vld [vmem:[%s1 + $0x340] sm:$0xff]
  %v130 = vld [vmem:[%s1 + $0x348] sm:$0xff]
  %v131 = vld [vmem:[%s1 + $0x350] sm:$0xff]
  %v132 = vld [vmem:[%s1 + $0x358] sm:$0xff]
  %v133 = vld [vmem:[%s1 + $0x360] sm:$0xff]
  %v134 = vld [vmem:[%s1 + $0x368] sm:$0xff]
  %v135 = vld [vmem:[%s1 + $0x370] sm:$0xff]
  %v136 = vld [vmem:[%s1 + $0x378] sm:$0xff]
  %v137 = vld [vmem:[%s1 + $0x380] sm:$0xff]
  %v138 = vld [vmem:[%s1 + $0x388] sm:$0xff]
  %v139 = vld [vmem:[%s1 + $0x390] sm:$0xff]
  %v140 = vld [vmem:[%s1 + $0x398] sm:$0xff]
  %v141 = vld [vmem:[%s1 + $0x3a0] sm:$0xff]
  %v142 = vld [vmem:[%s1 + $0x3a8] sm:$0xff]
  %v143 = vld [vmem:[%s1 + $0x3b0] sm:$0xff]
  %v144 = vld [vmem:[%s1 + $0x3b8] sm:$0xff]
  %v145 = vld [vmem:[%s1 + $0x3c0] sm:$0xff]
  %v146 = vld [vmem:[%s1 + $0x3c8] sm:$0xff]
  %v147 = vld [vmem:[%s1 + $0x3d0] sm:$0xff]
  %v148 = vld [vmem:[%s1 + $0x3d8] sm:$0xff]
  %v149 = vld [vmem:[%s1 + $0x3e0] sm:$0xff]
  %v150 = vld [vmem:[%s1 + $0x3e8] sm:$0xff]
  %v151 = vld [vmem:[%s1 + $0x3f0] sm:$0xff]
  %v152 = vld [vmem:[%s1 + $0x3f8] sm:$0xff]
  %v153 = vld [vmem:[%s1 + $0x400] sm:$0xff]
  %v154 = vld [vmem:[%s1 + $0x408] sm:$0xff]
  %v155 = vld [vmem:[%s1 + $0x410] sm:$0xff]
  %v156 = vld [vmem:[%s1 + $0x418] sm:$0xff]
  %v157 = vld [vmem:[%s1 + $0x420] sm:$0xff]
  %v158 = vld [vmem:[%s1 + $0x428] sm:$0xff]
  %v159 = vld [vmem:[%s1 + $0x430] sm:$0xff]
  %v160 = vld [vmem:[%s1 + $0x438] sm:$0xff]
  %v161 = vld [vmem:[%s1 + $0x440] sm:$0xff]
  %v162 = vld [vmem:[%s1 + $0x448] sm:$0xff]
  %v163 = vld [vmem:[%s1 + $0x450] sm:$0xff]
  %v164 = vld [vmem:[%s1 + $0x458] sm:$0xff]
  %v165 = vld [vmem:[%s1 + $0x460] sm:$0xff]
  %v166 = vld [vmem:[%s1 + $0x468] sm:$0xff]
  %v167 = vld [vmem:[%s1 + $0x470] sm:$0xff]
  %v168 = vld [vmem:[%s1 + $0x478] sm:$0xff]
  %v169 = vld [vmem:[%s1 + $0x480] sm:$0xff]
  %v170 = vld [vmem:[%s1 + $0x488] sm:$0xff]
  %v171 = vld [vmem:[%s1 + $0x490] sm:$0xff]
  %v172 = vld [vmem:[%s1 + $0x498] sm:$0xff]
  %v173 = vld [vmem:[%s1 + $0x4a0] sm:$0xff]
  %v174 = vld [vmem:[%s1 + $0x4a8] sm:$0xff]
  %v175 = vld [vmem:[%s1 + $0x4b0] sm:$0xff]
  %v176 = vld [vmem:[%s1 + $0x4b8] sm:$0xff]
  %v177 = vld [vmem:[%s1 + $0x4c0] sm:$0xff]
  %v178 = vld [vmem:[%s1 + $0x4c8] sm:$0xff]
  %v179 = vld [vmem:[%s1 + $0x4d0] sm:$0xff]
  %v180 = vld [vmem:[%s1 + $0x4d8] sm:$0xff]
  %v181 = vld [vmem:[%s1 + $0x4e0] sm:$0xff]
  %v182 = vld [vmem:[%s1 + $0x4e8] sm:$0xff]
  %v183 = vld [vmem:[%s1 + $0x4f0] sm:$0xff]
  %v184 = vld [vmem:[%s1 + $0x4f8] sm:$0xff]
  %v185 = vld [vmem:[%s1 + $0x500] sm:$0xff]
  %v186 = vld [vmem:[%s1 + $0x508] sm:$0xff]
  %v187 = vld [vmem:[%s1 + $0x510] sm:$0xff]
  %v188 = vld [vmem:[%s1 + $0x518] sm:$0xff]
  %v189 = vld [vmem:[%s1 + $0x520] sm:$0xff]
  %v190 = vld [vmem:[%s1 + $0x528] sm:$0xff]
  %v191 = vld [vmem:[%s1 + $0x530] sm:$0xff]
  %v192 = vld [vmem:[%s1 + $0x538] sm:$0xff]
  %v193 = vld [vmem:[%s1 + $0x540] sm:$0xff]
  %v194 = vld [vmem:[%s1 + $0x548] sm:$0xff]
  %v195 = vld [vmem:[%s1 + $0x550] sm:$0xff]
  %v196 = vld [vmem:[%s1 + $0x558] sm:$0xff]
  %v197 = vld [vmem:[%s1 + $0x560] sm:$0xff]
  %v198 = vld [vmem:[%s1 + $0x568] sm:$0xff]
  %v199 = vld [vmem:[%s1 + $0x570] sm:$0xff]
  %v200 = vld [vmem:[%s1 + $0x578] sm:$0xff]
  %v201 = vld [vmem:[%s1 + $0x580] sm:$0xff]
  %v202 = vld [vmem:[%s1 + $0x588] sm:$0xff]
  %v203 = vld [vmem:[%s1 + $0x590] sm:$0xff]
  %v204 = vld [vmem:[%s1 + $0x598] sm:$0xff]
  %v205 = vld [vmem:[%s1 + $0x5a0] sm:$0xff]
  %v206 = vld [vmem:[%s1 + $0x5a8] sm:$0xff]
  %v207 = vld [vmem:[%s1 + $0x5b0] sm:$0xff]
  %v208 = vld [vmem:[%s1 + $0x5b8] sm:$0xff]
  %v209 = vld [vmem:[%s1 + $0x5c0] sm:$0xff]
  %v210 = vld [vmem:[%s1 + $0x5c8] sm:$0xff]
  %v211 = vld [vmem:[%s1 + $0x5d0] sm:$0xff]
  %v212 = vld [vmem:[%s1 + $0x5d8] sm:$0xff]
  %v213 = vld [vmem:[%s1 + $0x5e0] sm:$0xff]
  %v214 = vld [vmem:[%s1 + $0x5e8] sm:$0xff]
  %v215 = vld [vmem:[%s1 + $0x5f0] sm:$0xff]
  %v216 = vld [vmem:[%s1 + $0x5f8] sm:$0xff]
  %v217 = vld [vmem:[%s1 + $0x600] sm:$0xff]
  %v218 = vld [vmem:[%s1 + $0x608] sm:$0xff]
  %v219 = vld [vmem:[%s1 + $0x610] sm:$0xff]
  %v220 = vld [vmem:[%s1 + $0x618] sm:$0xff]
  %v221 = vld [vmem:[%s1 + $0x620] sm:$0xff]
  %v222 = vld [vmem:[%s1 + $0x628] sm:$0xff]
  %v223 = vld [vmem:[%s1 + $0x630] sm:$0xff]
  %v224 = vld [vmem:[%s1 + $0x638] sm:$0xff]
  %v225 = vld [vmem:[%s1 + $0x640] sm:$0xff]
  %v226 = vld [vmem:[%s1 + $0x648] sm:$0xff]
  %v227 = vld [vmem:[%s1 + $0x650] sm:$0xff]
  %v228 = vld [vmem:[%s1 + $0x658] sm:$0xff]
  %v229 = vld [vmem:[%s1 + $0x660] sm:$0xff]
  %v230 = vld [vmem:[%s1 + $0x668] sm:$0xff]
  %v231 = vld [vmem:[%s1 + $0x670] sm:$0xff]
  %v232 = vld [vmem:[%s1 + $0x678] sm:$0xff]
  %v233 = vld [vmem:[%s1 + $0x680] sm:$0xff]
  %v234 = vld [vmem:[%s1 + $0x688] sm:$0xff]
  %v235 = vld [vmem:[%s1 + $0x690] sm:$0xff]
  %v236 = vld [vmem:[%s1 + $0x698] sm:$0xff]
  %v237 = vld [vmem:[%s1 + $0x6a0] sm:$0xff]
  %v238 = vld [vmem:[%s1 + $0x6a8] sm:$0xff]
  %v239 = vld [vmem:[%s1 + $0x6b0] sm:$0xff]
  %v240 = vld [vmem:[%s1 + $0x6b8] sm:$0xff]
  %v241 = vld [vmem:[%s1 + $0x6c0] sm:$0xff]
  %v242 = vld [vmem:[%s1 + $0x6c8] sm:$0xff]
  %v243 = vld [vmem:[%s1 + $0x6d0] sm:$0xff]
  %v244 = vld [vmem:[%s1 + $0x6d8] sm:$0xff]
  %v245 = vld [vmem:[%s1 + $0x6e0] sm:$0xff]
  %v246 = vld [vmem:[%s1 + $0x6e8] sm:$0xff]
  %v247 = vld [vmem:[%s1 + $0x6f0] sm:$0xff]
  %v248 = vld [vmem:[%s1 + $0x6f8] sm:$0xff]
  %v249 = vld [vmem:[%s1 + $0x700] sm:$0xff]
  %v250 = vld [vmem:[%s1 + $0x708] sm:$0xff]
  %v251 = vld [vmem:[%s1 + $0x710] sm:$0xff]
  %v252 = vld [vmem:[%s1 + $0x718] sm:$0xff]
  %v253 = vld [vmem:[%s1 + $0x720] sm:$0xff]
  %v254 = vld [vmem:[%s1 + $0x728] sm:$0xff]
  %v255 = vld [vmem:[%s1 + $0x730] sm:$0xff]
  %v256 = vld [vmem:[%s1 + $0x738] sm:$0xff]
  %v257 = vld [vmem:[%s1 + $0x740] sm:$0xff]
  %v258 = vld [vmem:[%s1 + $0x748] sm:$0xff]
  %v259 = vld [vmem:[%s1 + $0x750] sm:$0xff]
  %v260 = vld [vmem:[%s1 + $0x758] sm:$0xff]
  %v261 = vld [vmem:[%s1 + $0x760] sm:$0xff]
  %v262 = vld [vmem:[%s1 + $0x768] sm:$0xff]
  %v263 = vld [vmem:[%s1 + $0x770] sm:$0xff]
  %v264 = vld [vmem:[%s1 + $0x778] sm:$0xff]
  %v265 = vld [vmem:[%s1 + $0x780] sm:$0xff]
  %v266 = vld [vmem:[%s1 + $0x788] sm:$0xff]
  %v267 = vld [vmem:[%s1 + $0x790] sm:$0xff]
  %v268 = vld [vmem:[%s1 + $0x798] sm:$0xff]
  %v269 = vld [vmem:[%s1 + $0x7a0] sm:$0xff]
  %v270 = vld [vmem:[%s1 + $0x7a8] sm:$0xff]
  %v271 = vld [vmem:[%s1 + $0x7b0] sm:$0xff]
  %v272 = vld [vmem:[%s1 + $0x7b8] sm:$0xff]
  %v273 = vld [vmem:[%s1 + $0x7c0] sm:$0xff]
  %v274 = vld [vmem:[%s1 + $0x7c8] sm:$0xff]
  %v275 = vld [vmem:[%s1 + $0x7d0] sm:$0xff]
  %v276 = vld [vmem:[%s1 + $0x7d8] sm:$0xff]
  %v277 = vld [vmem:[%s1 + $0x7e0] sm:$0xff]
  %v278 = vld [vmem:[%s1 + $0x7e8] sm:$0xff]
  %v279 = vld [vmem:[%s1 + $0x7f0] sm:$0xff]
  %v280 = vld [vmem:[%s1 + $0x7f8] sm:$0xff]
  %v281 = vld [vmem:[%s1 + $0x800] sm:$0xff]
  %v282 = vld [vmem:[%s1 + $0x808] sm:$0xff]
  %v283 = vld [vmem:[%s1 + $0x810] sm:$0xff]
  %v284 = vld [vmem:[%s1 + $0x818] sm:$0xff]
  %v285 = vld [vmem:[%s1 + $0x820] sm:$0xff]
  %v286 = vld [vmem:[%s1 + $0x828] sm:$0xff]
  %v287 = vld [vmem:[%s1 + $0x830] sm:$0xff]
  %v288 = vld [vmem:[%s1 + $0x838] sm:$0xff]
  %v289 = vld [vmem:[%s1 + $0x840] sm:$0xff]
  %v290 = vld [vmem:[%s1 + $0x848] sm:$0xff]
  %v291 = vld [vmem:[%s1 + $0x850] sm:$0xff]
  %v292 = vld [vmem:[%s1 + $0x858] sm:$0xff]
  %v293 = vld [vmem:[%s1 + $0x860] sm:$0xff]
  %v294 = vld [vmem:[%s1 + $0x868] sm:$0xff]
  %v295 = vld [vmem:[%s1 + $0x870] sm:$0xff]
  %v296 = vld [vmem:[%s1 + $0x878] sm:$0xff]
  %v297 = vld [vmem:[%s1 + $0x880] sm:$0xff]
  %v298 = vld [vmem:[%s1 + $0x888] sm:$0xff]
  %v299 = vld [vmem:[%s1 + $0x890] sm:$0xff]
  %v300 = vld [vmem:[%s1 + $0x898] sm:$0xff]
  %v301 = vld [vmem:[%s1 + $0x8a0] sm:$0xff]
  %v302 = vld [vmem:[%s1 + $0x8a8] sm:$0xff]
  %v303 = vld [vmem:[%s1 + $0x8b0] sm:$0xff]
  %v304 = vld [vmem:[%s1 + $0x8b8] sm:$0xff]
  %v305 = vld [vmem:[%s1 + $0x8c0] sm:$0xff]
  %v306 = vld [vmem:[%s1 + $0x8c8] sm:$0xff]
  %v307 = vld [vmem:[%s1 + $0x8d0] sm:$0xff]
  %v308 = vld [vmem:[%s1 + $0x8d8] sm:$0xff]
  %v309 = vld [vmem:[%s1 + $0x8e0] sm:$0xff]
  %v310 = vld [vmem:[%s1 + $0x8e8] sm:$0xff]
  %v311 = vld [vmem:[%s1 + $0x8f0] sm:$0xff]
  %v312 = vld [vmem:[%s1 + $0x8f8] sm:$0xff]
  %v313 = vld [vmem:[%s1 + $0x900] sm:$0xff]
  %v314 = vld [vmem:[%s1 + $0x908] sm:$0xff]
  %v315 = vld [vmem:[%s1 + $0x910] sm:$0xff]
  %v316 = vld [vmem:[%s1 + $0x918] sm:$0xff]
  %v317 = vld [vmem:[%s1 + $0x920] sm:$0xff]
  %v318 = vld [vmem:[%s1 + $0x928] sm:$0xff]
  %v319 = vld [vmem:[%s1 + $0x930] sm:$0xff]
  %v320 = vld [vmem:[%s1 + $0x938] sm:$0xff]
  %v321 = vld [vmem:[%s1 + $0x940] sm:$0xff]
  %v322 = vld [vmem:[%s1 + $0x948] sm:$0xff]
  %v323 = vld [vmem:[%s1 + $0x950] sm:$0xff]
  %v324 = vld [vmem:[%s1 + $0x958] sm:$0xff]
  %v325 = vld [vmem:[%s1 + $0x960] sm:$0xff]
  %v326 = vld [vmem:[%s1 + $0x968] sm:$0xff]
  %v327 = vld [vmem:[%s1 + $0x970] sm:$0xff]
  %v328 = vld [vmem:[%s1 + $0x978] sm:$0xff]
  %v329 = vld [vmem:[%s1 + $0x980] sm:$0xff]
  %v330 = vld [vmem:[%s1 + $0x988] sm:$0xff]
  %v331 = vld [vmem:[%s1 + $0x990] sm:$0xff]
  %v332 = vld [vmem:[%s1 + $0x998] sm:$0xff]
  %v333 = vld [vmem:[%s1 + $0x9a0] sm:$0xff]
  %v334 = vld [vmem:[%s1 + $0x9a8] sm:$0xff]
  %v335 = vld [vmem:[%s1 + $0x9b0] sm:$0xff]
  %v336 = vld [vmem:[%s1 + $0x9b8] sm:$0xff]
  %v337 = vld [vmem:[%s1 + $0x9c0] sm:$0xff]
  %v338 = vld [vmem:[%s1 + $0x9c8] sm:$0xff]
  %v339 = vld [vmem:[%s1 + $0x9d0] sm:$0xff]
  %v340 = vld [vmem:[%s1 + $0x9d8] sm:$0xff]
  %v341 = vld [vmem:[%s1 + $0x9e0] sm:$0xff]
  %v342 = vld [vmem:[%s1 + $0x9e8] sm:$0xff]
  %v343 = vld [vmem:[%s1 + $0x9f0] sm:$0xff]
  %v344 = vld [vmem:[%s1 + $0x9f8] sm:$0xff]
  %v345 = vld [vmem:[%s1 + $0xa00] sm:$0xff]
  %v346 = vld [vmem:[%s1 + $0xa08] sm:$0xff]
  %v347 = vld [vmem:[%s1 + $0xa10] sm:$0xff]
  %v348 = vld [vmem:[%s1 + $0xa18] sm:$0xff]
  %v349 = vld [vmem:[%s1 + $0xa20] sm:$0xff]
  %v350 = vld [vmem:[%s1 + $0xa28] sm:$0xff]
  %v351 = vld [vmem:[%s1 + $0xa30] sm:$0xff]
  %v352 = vld [vmem:[%s1 + $0xa38] sm:$0xff]
  %v353 = vld [vmem:[%s1 + $0xa40] sm:$0xff]
  %v354 = vld [vmem:[%s1 + $0xa48] sm:$0xff]
  %v355 = vld [vmem:[%s1 + $0xa50] sm:$0xff]
  %v356 = vld [vmem:[%s1 + $0xa58] sm:$0xff]
  %v357 = vld [vmem:[%s1 + $0xa60] sm:$0xff]
  %v358 = vld [vmem:[%s1 + $0xa68] sm:$0xff]
  %v359 = vld [vmem:[%s1 + $0xa70] sm:$0xff]
  %v360 = vld [vmem:[%s1 + $0xa78] sm:$0xff]
  %v361 = vld [vmem:[%s1 + $0xa80] sm:$0xff]
  %v362 = vld [vmem:[%s1 + $0xa88] sm:$0xff]
  %v363 = vld [vmem:[%s1 + $0xa90] sm:$0xff]
  %v364 = vld [vmem:[%s1 + $0xa98] sm:$0xff]
  %v365 = vld [vmem:[%s1 + $0xaa0] sm:$0xff]
  %v366 = vld [vmem:[%s1 + $0xaa8] sm:$0xff]
  %v367 = vld [vmem:[%s1 + $0xab0] sm:$0xff]
  %v368 = vld [vmem:[%s1 + $0xab8] sm:$0xff]
  %v369 = vld [vmem:[%s1 + $0xac0] sm:$0xff]
  %v370 = vld [vmem:[%s1 + $0xac8] sm:$0xff]
  %v371 = vld [vmem:[%s1 + $0xad0] sm:$0xff]
  %v372 = vld [vmem:[%s1 + $0xad8] sm:$0xff]
  %v373 = vld [vmem:[%s1 + $0xae0] sm:$0xff]
  %v374 = vld [vmem:[%s1 + $0xae8] sm:$0xff]
  %v375 = vld [vmem:[%s1 + $0xaf0] sm:$0xff]
  %v376 = vld [vmem:[%s1 + $0xaf8] sm:$0xff]
  %v377 = vld [vmem:[%s1 + $0xb00] sm:$0xff]
  %v378 = vld [vmem:[%s1 + $0xb08] sm:$0xff]
  %v379 = vld [vmem:[%s1 + $0xb10] sm:$0xff]
  %v380 = vld [vmem:[%s1 + $0xb18] sm:$0xff]
  %v381 = vld [vmem:[%s1 + $0xb20] sm:$0xff]
  %v382 = vld [vmem:[%s1 + $0xb28] sm:$0xff]
  %v383 = vld [vmem:[%s1 + $0xb30] sm:$0xff]
  %v384 = vld [vmem:[%s1 + $0xb38] sm:$0xff]
  %v385 = vld [vmem:[%s1 + $0xb40] sm:$0xff]
  %v386 = vld [vmem:[%s1 + $0xb48] sm:$0xff]
  %v387 = vld [vmem:[%s1 + $0xb50] sm:$0xff]
  %v388 = vld [vmem:[%s1 + $0xb58] sm:$0xff]
  %v389 = vld [vmem:[%s1 + $0xb60] sm:$0xff]
  %v390 = vld [vmem:[%s1 + $0xb68] sm:$0xff]
  %v391 = vld [vmem:[%s1 + $0xb70] sm:$0xff]
  %v392 = vld [vmem:[%s1 + $0xb78] sm:$0xff]
  %v393 = vld [vmem:[%s1 + $0xb80] sm:$0xff]
  %v394 = vld [vmem:[%s1 + $0xb88] sm:$0xff]
  %v395 = vld [vmem:[%s1 + $0xb90] sm:$0xff]
  %v396 = vld [vmem:[%s1 + $0xb98] sm:$0xff]
  %v397 = vld [vmem:[%s1 + $0xba0] sm:$0xff]
  %v398 = vld [vmem:[%s1 + $0xba8] sm:$0xff]
  %v399 = vld [vmem:[%s1 + $0xbb0] sm:$0xff]
  %v400 = vld [vmem:[%s1 + $0xbb8] sm:$0xff]
  %v401 = vld [vmem:[%s1 + $0xbc0] sm:$0xff]
  %v402 = vld [vmem:[%s1 + $0xbc8] sm:$0xff]
  %v403 = vld [vmem:[%s1 + $0xbd0] sm:$0xff]
  %v404 = vld [vmem:[%s1 + $0xbd8] sm:$0xff]
  %v405 = vld [vmem:[%s1 + $0xbe0] sm:$0xff]
  %v406 = vld [vmem:[%s1 + $0xbe8] sm:$0xff]
  %v407 = vld [vmem:[%s1 + $0xbf0] sm:$0xff]
  %v408 = vld [vmem:[%s1 + $0xbf8] sm:$0xff]
  %v409 = vld [vmem:[%s1 + $0xc00] sm:$0xff]
  %v410 = vld [vmem:[%s1 + $0xc08] sm:$0xff]
  %v411 = vld [vmem:[%s1 + $0xc10] sm:$0xff]
  %v412 = vld [vmem:[%s1 + $0xc18] sm:$0xff]
  %v413 = vld [vmem:[%s1 + $0xc20] sm:$0xff]
  %v414 = vld [vmem:[%s1 + $0xc28] sm:$0xff]
  %v415 = vld [vmem:[%s1 + $0xc30] sm:$0xff]
  %v416 = vld [vmem:[%s1 + $0xc38] sm:$0xff]
  %v417 = vld [vmem:[%s1 + $0xc40] sm:$0xff]
  %v418 = vld [vmem:[%s1 + $0xc48] sm:$0xff]
  %v419 = vld [vmem:[%s1 + $0xc50] sm:$0xff]
  %v420 = vld [vmem:[%s1 + $0xc58] sm:$0xff]
  %v421 = vld [vmem:[%s1 + $0xc60] sm:$0xff]
  %v422 = vld [vmem:[%s1 + $0xc68] sm:$0xff]
  %v423 = vld [vmem:[%s1 + $0xc70] sm:$0xff]
  %v424 = vld [vmem:[%s1 + $0xc78] sm:$0xff]
  %v425 = vld [vmem:[%s1 + $0xc80] sm:$0xff]
  %v426 = vld [vmem:[%s1 + $0xc88] sm:$0xff]
  %v427 = vld [vmem:[%s1 + $0xc90] sm:$0xff]
  %v428 = vld [vmem:[%s1 + $0xc98] sm:$0xff]
  %v429 = vld [vmem:[%s1 + $0xca0] sm:$0xff]
  %v430 = vld [vmem:[%s1 + $0xca8] sm:$0xff]
  %v431 = vld [vmem:[%s1 + $0xcb0] sm:$0xff]
  %v432 = vld [vmem:[%s1 + $0xcb8] sm:$0xff]
  %v433 = vld [vmem:[%s1 + $0xcc0] sm:$0xff]
  %v434 = vld [vmem:[%s1 + $0xcc8] sm:$0xff]
  %v435 = vld [vmem:[%s1 + $0xcd0] sm:$0xff]
  %v436 = vld [vmem:[%s1 + $0xcd8] sm:$0xff]
  %v437 = vld [vmem:[%s1 + $0xce0] sm:$0xff]
  %v438 = vld [vmem:[%s1 + $0xce8] sm:$0xff]
  %v439 = vld [vmem:[%s1 + $0xcf0] sm:$0xff]
  %v440 = vld [vmem:[%s1 + $0xcf8] sm:$0xff]
  %v441 = vld [vmem:[%s1 + $0xd00] sm:$0xff]
  %v442 = vld [vmem:[%s1 + $0xd08] sm:$0xff]
  %v443 = vld [vmem:[%s1 + $0xd10] sm:$0xff]
  %v444 = vld [vmem:[%s1 + $0xd18] sm:$0xff]
  %v445 = vld [vmem:[%s1 + $0xd20] sm:$0xff]
  %v446 = vld [vmem:[%s1 + $0xd28] sm:$0xff]
  %v447 = vld [vmem:[%s1 + $0xd30] sm:$0xff]
  %v448 = vld [vmem:[%s1 + $0xd38] sm:$0xff]
  %v449 = vld [vmem:[%s1 + $0xd40] sm:$0xff]
  %v450 = vld [vmem:[%s1 + $0xd48] sm:$0xff]
  %v451 = vld [vmem:[%s1 + $0xd50] sm:$0xff]
  %v452 = vld [vmem:[%s1 + $0xd58] sm:$0xff]
  %v453 = vld [vmem:[%s1 + $0xd60] sm:$0xff]
  %v454 = vld [vmem:[%s1 + $0xd68] sm:$0xff]
  %v455 = vld [vmem:[%s1 + $0xd70] sm:$0xff]
  %v456 = vld [vmem:[%s1 + $0xd78] sm:$0xff]
  %v457 = vld [vmem:[%s1 + $0xd80] sm:$0xff]
  %v458 = vld [vmem:[%s1 + $0xd88] sm:$0xff]
  %v459 = vld [vmem:[%s1 + $0xd90] sm:$0xff]
  %v460 = vld [vmem:[%s1 + $0xd98] sm:$0xff]
  %v461 = vld [vmem:[%s1 + $0xda0] sm:$0xff]
  %v462 = vld [vmem:[%s1 + $0xda8] sm:$0xff]
  %v463 = vld [vmem:[%s1 + $0xdb0] sm:$0xff]
  %v464 = vld [vmem:[%s1 + $0xdb8] sm:$0xff]
  %v465 = vld [vmem:[%s1 + $0xdc0] sm:$0xff]
  %v466 = vld [vmem:[%s1 + $0xdc8] sm:$0xff]
  %v467 = vld [vmem:[%s1 + $0xdd0] sm:$0xff]
  %v468 = vld [vmem:[%s1 + $0xdd8] sm:$0xff]
  %v469 = vld [vmem:[%s1 + $0xde0] sm:$0xff]
  %v470 = vld [vmem:[%s1 + $0xde8] sm:$0xff]
  %v471 = vld [vmem:[%s1 + $0xdf0] sm:$0xff]
  %v472 = vld [vmem:[%s1 + $0xdf8] sm:$0xff]
  %v473 = vld [vmem:[%s1 + $0xe00] sm:$0xff]
  %v474 = vld [vmem:[%s1 + $0xe08] sm:$0xff]
  %v475 = vld [vmem:[%s1 + $0xe10] sm:$0xff]
  %v476 = vld [vmem:[%s1 + $0xe18] sm:$0xff]
  %v477 = vld [vmem:[%s1 + $0xe20] sm:$0xff]
  %v478 = vld [vmem:[%s1 + $0xe28] sm:$0xff]
  %v479 = vld [vmem:[%s1 + $0xe30] sm:$0xff]
  %v480 = vld [vmem:[%s1 + $0xe38] sm:$0xff]
  %v481 = vld [vmem:[%s1 + $0xe40] sm:$0xff]
  %v482 = vld [vmem:[%s1 + $0xe48] sm:$0xff]
  %v483 = vld [vmem:[%s1 + $0xe50] sm:$0xff]
  %v484 = vld [vmem:[%s1 + $0xe58] sm:$0xff]
  %v485 = vld [vmem:[%s1 + $0xe60] sm:$0xff]
  %v486 = vld [vmem:[%s1 + $0xe68] sm:$0xff]
  %v487 = vld [vmem:[%s1 + $0xe70] sm:$0xff]
  %v488 = vld [vmem:[%s1 + $0xe78] sm:$0xff]
  %v489 = vld [vmem:[%s1 + $0xe80] sm:$0xff]
  %v490 = vld [vmem:[%s1 + $0xe88] sm:$0xff]
  %v491 = vld [vmem:[%s1 + $0xe90] sm:$0xff]
  %v492 = vld [vmem:[%s1 + $0xe98] sm:$0xff]
  %v493 = vld [vmem:[%s1 + $0xea0] sm:$0xff]
  %v494 = vld [vmem:[%s1 + $0xea8] sm:$0xff]
  %v495 = vld [vmem:[%s1 + $0xeb0] sm:$0xff]
  %v496 = vld [vmem:[%s1 + $0xeb8] sm:$0xff]
  %v497 = vld [vmem:[%s1 + $0xec0] sm:$0xff]
  %v498 = vld [vmem:[%s1 + $0xec8] sm:$0xff]
  %v499 = vld [vmem:[%s1 + $0xed0] sm:$0xff]
  %v500 = vld [vmem:[%s1 + $0xed8] sm:$0xff]
  %v501 = vld [vmem:[%s1 + $0xee0] sm:$0xff]
  %v502 = vld [vmem:[%s1 + $0xee8] sm:$0xff]
  %v503 = vld [vmem:[%s1 + $0xef0] sm:$0xff]
  %v504 = vld [vmem:[%s1 + $0xef8] sm:$0xff]
  %v505 = vld [vmem:[%s1 + $0xf00] sm:$0xff]
  %v506 = vld [vmem:[%s1 + $0xf08] sm:$0xff]
  %v507 = vld [vmem:[%s1 + $0xf10] sm:$0xff]
  %v508 = vld [vmem:[%s1 + $0xf18] sm:$0xff]
  %v509 = vld [vmem:[%s1 + $0xf20] sm:$0xff]
  %v510 = vld [vmem:[%s1 + $0xf28] sm:$0xff]
  %v511 = vld [vmem:[%s1 + $0xf30] sm:$0xff]
  %v512 = vld [vmem:[%s1 + $0xf38] sm:$0xff]
  %v513 = vld [vmem:[%s1 + $0xf40] sm:$0xff]
  %v514 = vld [vmem:[%s1 + $0xf48] sm:$0xff]
  %v515 = vld [vmem:[%s1 + $0xf50] sm:$0xff]
  %v516 = vld [vmem:[%s1 + $0xf58] sm:$0xff]
  %v517 = vld [vmem:[%s1 + $0xf60] sm:$0xff]
  %v518 = vld [vmem:[%s1 + $0xf68] sm:$0xff]
  %v519 = vld [vmem:[%s1 + $0xf70] sm:$0xff]
  %v520 = vld [vmem:[%s1 + $0xf78] sm:$0xff]
  %v521 = vld [vmem:[%s1 + $0xf80] sm:$0xff]
  %v522 = vld [vmem:[%s1 + $0xf88] sm:$0xff]
  %v523 = vld [vmem:[%s1 + $0xf90] sm:$0xff]
  %v524 = vld [vmem:[%s1 + $0xf98] sm:$0xff]
  %v525 = vld [vmem:[%s1 + $0xfa0] sm:$0xff]
  %v526 = vld [vmem:[%s1 + $0xfa8] sm:$0xff]
  %v527 = vld [vmem:[%s1 + $0xfb0] sm:$0xff]
  %v528 = vld [vmem:[%s1 + $0xfb8] sm:$0xff]
  %v529 = vld [vmem:[%s1 + $0xfc0] sm:$0xff]
  %v530 = vld [vmem:[%s1 + $0xfc8] sm:$0xff]
  %v531 = vld [vmem:[%s1 + $0xfd0] sm:$0xff]
  %v532 = vld [vmem:[%s1 + $0xfd8] sm:$0xff]
  %v533 = vld [vmem:[%s1 + $0xfe0] sm:$0xff]
  %v534 = vld [vmem:[%s1 + $0xfe8] sm:$0xff]
  %v535 = vld [vmem:[%s1 + $0xff0] sm:$0xff]
  %v536 = vld [vmem:[%s1 + $0xff8] sm:$0xff]
  %v537 = vld [vmem:[%s2] sm:$0xf]
  %v539 = vlaneseq
  %v540 = vshrl.u32 %v539, 7
  %v541 = vsub.s32 0, %v540
  %v542 = vrot.slane %v537, %v541
  %v543 = vlaneseq
  %v544 = vshrl.u32 %v543, 7
  %v545 = vsub.s32 1, %v544
  %v546 = vrot.slane %v537, %v545
  %v547 = vlaneseq
  %v548 = vshrl.u32 %v547, 7
  %v549 = vsub.s32 2, %v548
  %v550 = vrot.slane %v537, %v549
  %v551 = vlaneseq
  %v552 = vshrl.u32 %v551, 7
  %v553 = vsub.s32 3, %v552
  %v554 = vrot.slane %v537, %v553
  %v563 = vcombine.high %v21, %v21
  %v565 = vunpack.c.l.s4 1983009808
  %v566 = vunpack.c.0.s8 %v565
  %v567 = vlaneseq
  %v568 = vshrl.u32 %v567, 7
  %v569 = vsub.s32 %v566, %v568
  %v570 = vrot.slane %v21, %v569
  %v572 = vunpack.c.l.s4 1983009808
  %v573 = vunpack.c.0.s8 %v572
  %v574 = vlaneseq
  %v575 = vshrl.u32 %v574, 7
  %v576 = vsub.s32 %v573, %v575
  %v577 = vrot.slane %v563, %v576
  %v578 = vcombine.high %v570, %v570
  %v579 = vcombine.high %v577, %v577
  %v580 = vcombine.high %v22, %v22
  %v582 = vunpack.c.l.s4 1983009808
  %v583 = vunpack.c.0.s8 %v582
  %v584 = vlaneseq
  %v585 = vshrl.u32 %v584, 7
  %v586 = vsub.s32 %v583, %v585
  %v587 = vrot.slane %v22, %v586
  %v589 = vunpack.c.l.s4 1983009808
  %v590 = vunpack.c.0.s8 %v589
  %v591 = vlaneseq
  %v592 = vshrl.u32 %v591, 7
  %v593 = vsub.s32 %v590, %v592
  %v594 = vrot.slane %v580, %v593
  %v595 = vcombine.high %v587, %v587
  %v596 = vcombine.high %v594, %v594
  %v597 = vcombine.high %v23, %v23
  %v599 = vunpack.c.l.s4 1983009808
  %v600 = vunpack.c.0.s8 %v599
  %v601 = vlaneseq
  %v602 = vshrl.u32 %v601, 7
  %v603 = vsub.s32 %v600, %v602
  %v604 = vrot.slane %v23, %v603
  %v606 = vunpack.c.l.s4 1983009808
  %v607 = vunpack.c.0.s8 %v606
  %v608 = vlaneseq
  %v609 = vshrl.u32 %v608, 7
  %v610 = vsub.s32 %v607, %v609
  %v611 = vrot.slane %v597, %v610
  %v612 = vcombine.high %v604, %v604
  %v613 = vcombine.high %v611, %v611
  %v614 = vcombine.high %v24, %v24
  %v616 = vunpack.c.l.s4 1983009808
  %v617 = vunpack.c.0.s8 %v616
  %v618 = vlaneseq
  %v619 = vshrl.u32 %v618, 7
  %v620 = vsub.s32 %v617, %v619
  %v621 = vrot.slane %v24, %v620
  %v623 = vunpack.c.l.s4 1983009808
  %v624 = vunpack.c.0.s8 %v623
  %v625 = vlaneseq
  %v626 = vshrl.u32 %v625, 7
  %v627 = vsub.s32 %v624, %v626
  %v628 = vrot.slane %v614, %v627
  %v629 = vcombine.high %v621, %v621
  %v630 = vcombine.high %v628, %v628
  %v1159 = vunpack.c.l.b16 %v25
  %v1160 = vunpack.c.h.b16 %v25
  %v1161 = vunpack.c.l.b16 %v26
  %v1162 = vunpack.c.h.b16 %v26
  %v1163 = vunpack.c.l.b16 %v27
  %v1164 = vunpack.c.h.b16 %v27
  %v1165 = vunpack.c.l.b16 %v28
  %v1166 = vunpack.c.h.b16 %v28
  %v1167 = vunpack.c.l.b16 %v29
  %v1168 = vunpack.c.h.b16 %v29
  %v1169 = vunpack.c.l.b16 %v30
  %v1170 = vunpack.c.h.b16 %v30
  %v1171 = vunpack.c.l.b16 %v31
  %v1172 = vunpack.c.h.b16 %v31
  %v1173 = vunpack.c.l.b16 %v32
  %v1174 = vunpack.c.h.b16 %v32
  %v1175 = vunpack.c.l.b16 %v33
  %v1176 = vunpack.c.h.b16 %v33
  %v1177 = vunpack.c.l.b16 %v34
  %v1178 = vunpack.c.h.b16 %v34
  %v1179 = vunpack.c.l.b16 %v35
  %v1180 = vunpack.c.h.b16 %v35
  %v1181 = vunpack.c.l.b16 %v36
  %v1182 = vunpack.c.h.b16 %v36
  %v1183 = vunpack.c.l.b16 %v37
  %v1184 = vunpack.c.h.b16 %v37
  %v1185 = vunpack.c.l.b16 %v38
  %v1186 = vunpack.c.h.b16 %v38
  %v1187 = vunpack.c.l.b16 %v39
  %v1188 = vunpack.c.h.b16 %v39
  %v1189 = vunpack.c.l.b16 %v40
  %v1190 = vunpack.c.h.b16 %v40
  %v1191 = vunpack.c.l.b16 %v41
  %v1192 = vunpack.c.h.b16 %v41
  %v1193 = vunpack.c.l.b16 %v42
  %v1194 = vunpack.c.h.b16 %v42
  %v1195 = vunpack.c.l.b16 %v43
  %v1196 = vunpack.c.h.b16 %v43
  %v1197 = vunpack.c.l.b16 %v44
  %v1198 = vunpack.c.h.b16 %v44
  %v1199 = vunpack.c.l.b16 %v45
  %v1200 = vunpack.c.h.b16 %v45
  %v1201 = vunpack.c.l.b16 %v46
  %v1202 = vunpack.c.h.b16 %v46
  %v1203 = vunpack.c.l.b16 %v47
  %v1204 = vunpack.c.h.b16 %v47
  %v1205 = vunpack.c.l.b16 %v48
  %v1206 = vunpack.c.h.b16 %v48
  %v1207 = vunpack.c.l.b16 %v49
  %v1208 = vunpack.c.h.b16 %v49
  %v1209 = vunpack.c.l.b16 %v50
  %v1210 = vunpack.c.h.b16 %v50
  %v1211 = vunpack.c.l.b16 %v51
  %v1212 = vunpack.c.h.b16 %v51
  %v1213 = vunpack.c.l.b16 %v52
  %v1214 = vunpack.c.h.b16 %v52
  %v1215 = vunpack.c.l.b16 %v53
  %v1216 = vunpack.c.h.b16 %v53
  %v1217 = vunpack.c.l.b16 %v54
  %v1218 = vunpack.c.h.b16 %v54
  %v1219 = vunpack.c.l.b16 %v55
  %v1220 = vunpack.c.h.b16 %v55
  %v1221 = vunpack.c.l.b16 %v56
  %v1222 = vunpack.c.h.b16 %v56
  %v1223 = vunpack.c.l.b16 %v57
  %v1224 = vunpack.c.h.b16 %v57
  %v1225 = vunpack.c.l.b16 %v58
  %v1226 = vunpack.c.h.b16 %v58
  %v1227 = vunpack.c.l.b16 %v59
  %v1228 = vunpack.c.h.b16 %v59
  %v1229 = vunpack.c.l.b16 %v60
  %v1230 = vunpack.c.h.b16 %v60
  %v1231 = vunpack.c.l.b16 %v61
  %v1232 = vunpack.c.h.b16 %v61
  %v1233 = vunpack.c.l.b16 %v62
  %v1234 = vunpack.c.h.b16 %v62
  %v1235 = vunpack.c.l.b16 %v63
  %v1236 = vunpack.c.h.b16 %v63
  %v1237 = vunpack.c.l.b16 %v64
  %v1238 = vunpack.c.h.b16 %v64
  %v1239 = vunpack.c.l.b16 %v65
  %v1240 = vunpack.c.h.b16 %v65
  %v1241 = vunpack.c.l.b16 %v66
  %v1242 = vunpack.c.h.b16 %v66
  %v1243 = vunpack.c.l.b16 %v67
  %v1244 = vunpack.c.h.b16 %v67
  %v1245 = vunpack.c.l.b16 %v68
  %v1246 = vunpack.c.h.b16 %v68
  %v1247 = vunpack.c.l.b16 %v69
  %v1248 = vunpack.c.h.b16 %v69
  %v1249 = vunpack.c.l.b16 %v70
  %v1250 = vunpack.c.h.b16 %v70
  %v1251 = vunpack.c.l.b16 %v71
  %v1252 = vunpack.c.h.b16 %v71
  %v1253 = vunpack.c.l.b16 %v72
  %v1254 = vunpack.c.h.b16 %v72
  %v1255 = vunpack.c.l.b16 %v73
  %v1256 = vunpack.c.h.b16 %v73
  %v1257 = vunpack.c.l.b16 %v74
  %v1258 = vunpack.c.h.b16 %v74
  %v1259 = vunpack.c.l.b16 %v75
  %v1260 = vunpack.c.h.b16 %v75
  %v1261 = vunpack.c.l.b16 %v76
  %v1262 = vunpack.c.h.b16 %v76
  %v1263 = vunpack.c.l.b16 %v77
  %v1264 = vunpack.c.h.b16 %v77
  %v1265 = vunpack.c.l.b16 %v78
  %v1266 = vunpack.c.h.b16 %v78
  %v1267 = vunpack.c.l.b16 %v79
  %v1268 = vunpack.c.h.b16 %v79
  %v1269 = vunpack.c.l.b16 %v80
  %v1270 = vunpack.c.h.b16 %v80
  %v1271 = vunpack.c.l.b16 %v81
  %v1272 = vunpack.c.h.b16 %v81
  %v1273 = vunpack.c.l.b16 %v82
  %v1274 = vunpack.c.h.b16 %v82
  %v1275 = vunpack.c.l.b16 %v83
  %v1276 = vunpack.c.h.b16 %v83
  %v1277 = vunpack.c.l.b16 %v84
  %v1278 = vunpack.c.h.b16 %v84
  %v1279 = vunpack.c.l.b16 %v85
  %v1280 = vunpack.c.h.b16 %v85
  %v1281 = vunpack.c.l.b16 %v86
  %v1282 = vunpack.c.h.b16 %v86
  %v1283 = vunpack.c.l.b16 %v87
  %v1284 = vunpack.c.h.b16 %v87
  %v1285 = vunpack.c.l.b16 %v88
  %v1286 = vunpack.c.h.b16 %v88
  %v1287 = vunpack.c.l.b16 %v89
  %v1288 = vunpack.c.h.b16 %v89
  %v1289 = vunpack.c.l.b16 %v90
  %v1290 = vunpack.c.h.b16 %v90
  %v1291 = vunpack.c.l.b16 %v91
  %v1292 = vunpack.c.h.b16 %v91
  %v1293 = vunpack.c.l.b16 %v92
  %v1294 = vunpack.c.h.b16 %v92
  %v1295 = vunpack.c.l.b16 %v93
  %v1296 = vunpack.c.h.b16 %v93
  %v1297 = vunpack.c.l.b16 %v94
  %v1298 = vunpack.c.h.b16 %v94
  %v1299 = vunpack.c.l.b16 %v95
  %v1300 = vunpack.c.h.b16 %v95
  %v1301 = vunpack.c.l.b16 %v96
  %v1302 = vunpack.c.h.b16 %v96
  %v1303 = vunpack.c.l.b16 %v97
  %v1304 = vunpack.c.h.b16 %v97
  %v1305 = vunpack.c.l.b16 %v98
  %v1306 = vunpack.c.h.b16 %v98
  %v1307 = vunpack.c.l.b16 %v99
  %v1308 = vunpack.c.h.b16 %v99
  %v1309 = vunpack.c.l.b16 %v100
  %v1310 = vunpack.c.h.b16 %v100
  %v1311 = vunpack.c.l.b16 %v101
  %v1312 = vunpack.c.h.b16 %v101
  %v1313 = vunpack.c.l.b16 %v102
  %v1314 = vunpack.c.h.b16 %v102
  %v1315 = vunpack.c.l.b16 %v103
  %v1316 = vunpack.c.h.b16 %v103
  %v1317 = vunpack.c.l.b16 %v104
  %v1318 = vunpack.c.h.b16 %v104
  %v1319 = vunpack.c.l.b16 %v105
  %v1320 = vunpack.c.h.b16 %v105
  %v1321 = vunpack.c.l.b16 %v106
  %v1322 = vunpack.c.h.b16 %v106
  %v1323 = vunpack.c.l.b16 %v107
  %v1324 = vunpack.c.h.b16 %v107
  %v1325 = vunpack.c.l.b16 %v108
  %v1326 = vunpack.c.h.b16 %v108
  %v1327 = vunpack.c.l.b16 %v109
  %v1328 = vunpack.c.h.b16 %v109
  %v1329 = vunpack.c.l.b16 %v110
  %v1330 = vunpack.c.h.b16 %v110
  %v1331 = vunpack.c.l.b16 %v111
  %v1332 = vunpack.c.h.b16 %v111
  %v1333 = vunpack.c.l.b16 %v112
  %v1334 = vunpack.c.h.b16 %v112
  %v1335 = vunpack.c.l.b16 %v113
  %v1336 = vunpack.c.h.b16 %v113
  %v1337 = vunpack.c.l.b16 %v114
  %v1338 = vunpack.c.h.b16 %v114
  %v1339 = vunpack.c.l.b16 %v115
  %v1340 = vunpack.c.h.b16 %v115
  %v1341 = vunpack.c.l.b16 %v116
  %v1342 = vunpack.c.h.b16 %v116
  %v1343 = vunpack.c.l.b16 %v117
  %v1344 = vunpack.c.h.b16 %v117
  %v1345 = vunpack.c.l.b16 %v118
  %v1346 = vunpack.c.h.b16 %v118
  %v1347 = vunpack.c.l.b16 %v119
  %v1348 = vunpack.c.h.b16 %v119
  %v1349 = vunpack.c.l.b16 %v120
  %v1350 = vunpack.c.h.b16 %v120
  %v1351 = vunpack.c.l.b16 %v121
  %v1352 = vunpack.c.h.b16 %v121
  %v1353 = vunpack.c.l.b16 %v122
  %v1354 = vunpack.c.h.b16 %v122
  %v1355 = vunpack.c.l.b16 %v123
  %v1356 = vunpack.c.h.b16 %v123
  %v1357 = vunpack.c.l.b16 %v124
  %v1358 = vunpack.c.h.b16 %v124
  %v1359 = vunpack.c.l.b16 %v125
  %v1360 = vunpack.c.h.b16 %v125
  %v1361 = vunpack.c.l.b16 %v126
  %v1362 = vunpack.c.h.b16 %v126
  %v1363 = vunpack.c.l.b16 %v127
  %v1364 = vunpack.c.h.b16 %v127
  %v1365 = vunpack.c.l.b16 %v128
  %v1366 = vunpack.c.h.b16 %v128
  %v1367 = vunpack.c.l.b16 %v129
  %v1368 = vunpack.c.h.b16 %v129
  %v1369 = vunpack.c.l.b16 %v130
  %v1370 = vunpack.c.h.b16 %v130
  %v1371 = vunpack.c.l.b16 %v131
  %v1372 = vunpack.c.h.b16 %v131
  %v1373 = vunpack.c.l.b16 %v132
  %v1374 = vunpack.c.h.b16 %v132
  %v1375 = vunpack.c.l.b16 %v133
  %v1376 = vunpack.c.h.b16 %v133
  %v1377 = vunpack.c.l.b16 %v134
  %v1378 = vunpack.c.h.b16 %v134
  %v1379 = vunpack.c.l.b16 %v135
  %v1380 = vunpack.c.h.b16 %v135
  %v1381 = vunpack.c.l.b16 %v136
  %v1382 = vunpack.c.h.b16 %v136
  %v1383 = vunpack.c.l.b16 %v137
  %v1384 = vunpack.c.h.b16 %v137
  %v1385 = vunpack.c.l.b16 %v138
  %v1386 = vunpack.c.h.b16 %v138
  %v1387 = vunpack.c.l.b16 %v139
  %v1388 = vunpack.c.h.b16 %v139
  %v1389 = vunpack.c.l.b16 %v140
  %v1390 = vunpack.c.h.b16 %v140
  %v1391 = vunpack.c.l.b16 %v141
  %v1392 = vunpack.c.h.b16 %v141
  %v1393 = vunpack.c.l.b16 %v142
  %v1394 = vunpack.c.h.b16 %v142
  %v1395 = vunpack.c.l.b16 %v143
  %v1396 = vunpack.c.h.b16 %v143
  %v1397 = vunpack.c.l.b16 %v144
  %v1398 = vunpack.c.h.b16 %v144
  %v1399 = vunpack.c.l.b16 %v145
  %v1400 = vunpack.c.h.b16 %v145
  %v1401 = vunpack.c.l.b16 %v146
  %v1402 = vunpack.c.h.b16 %v146
  %v1403 = vunpack.c.l.b16 %v147
  %v1404 = vunpack.c.h.b16 %v147
  %v1405 = vunpack.c.l.b16 %v148
  %v1406 = vunpack.c.h.b16 %v148
  %v1407 = vunpack.c.l.b16 %v149
  %v1408 = vunpack.c.h.b16 %v149
  %v1409 = vunpack.c.l.b16 %v150
  %v1410 = vunpack.c.h.b16 %v150
  %v1411 = vunpack.c.l.b16 %v151
  %v1412 = vunpack.c.h.b16 %v151
  %v1413 = vunpack.c.l.b16 %v152
  %v1414 = vunpack.c.h.b16 %v152
  %v1415 = vunpack.c.l.b16 %v153
  %v1416 = vunpack.c.h.b16 %v153
  %v1417 = vunpack.c.l.b16 %v154
  %v1418 = vunpack.c.h.b16 %v154
  %v1419 = vunpack.c.l.b16 %v155
  %v1420 = vunpack.c.h.b16 %v155
  %v1421 = vunpack.c.l.b16 %v156
  %v1422 = vunpack.c.h.b16 %v156
  %v1423 = vunpack.c.l.b16 %v157
  %v1424 = vunpack.c.h.b16 %v157
  %v1425 = vunpack.c.l.b16 %v158
  %v1426 = vunpack.c.h.b16 %v158
  %v1427 = vunpack.c.l.b16 %v159
  %v1428 = vunpack.c.h.b16 %v159
  %v1429 = vunpack.c.l.b16 %v160
  %v1430 = vunpack.c.h.b16 %v160
  %v1431 = vunpack.c.l.b16 %v161
  %v1432 = vunpack.c.h.b16 %v161
  %v1433 = vunpack.c.l.b16 %v162
  %v1434 = vunpack.c.h.b16 %v162
  %v1435 = vunpack.c.l.b16 %v163
  %v1436 = vunpack.c.h.b16 %v163
  %v1437 = vunpack.c.l.b16 %v164
  %v1438 = vunpack.c.h.b16 %v164
  %v1439 = vunpack.c.l.b16 %v165
  %v1440 = vunpack.c.h.b16 %v165
  %v1441 = vunpack.c.l.b16 %v166
  %v1442 = vunpack.c.h.b16 %v166
  %v1443 = vunpack.c.l.b16 %v167
  %v1444 = vunpack.c.h.b16 %v167
  %v1445 = vunpack.c.l.b16 %v168
  %v1446 = vunpack.c.h.b16 %v168
  %v1447 = vunpack.c.l.b16 %v169
  %v1448 = vunpack.c.h.b16 %v169
  %v1449 = vunpack.c.l.b16 %v170
  %v1450 = vunpack.c.h.b16 %v170
  %v1451 = vunpack.c.l.b16 %v171
  %v1452 = vunpack.c.h.b16 %v171
  %v1453 = vunpack.c.l.b16 %v172
  %v1454 = vunpack.c.h.b16 %v172
  %v1455 = vunpack.c.l.b16 %v173
  %v1456 = vunpack.c.h.b16 %v173
  %v1457 = vunpack.c.l.b16 %v174
  %v1458 = vunpack.c.h.b16 %v174
  %v1459 = vunpack.c.l.b16 %v175
  %v1460 = vunpack.c.h.b16 %v175
  %v1461 = vunpack.c.l.b16 %v176
  %v1462 = vunpack.c.h.b16 %v176
  %v1463 = vunpack.c.l.b16 %v177
  %v1464 = vunpack.c.h.b16 %v177
  %v1465 = vunpack.c.l.b16 %v178
  %v1466 = vunpack.c.h.b16 %v178
  %v1467 = vunpack.c.l.b16 %v179
  %v1468 = vunpack.c.h.b16 %v179
  %v1469 = vunpack.c.l.b16 %v180
  %v1470 = vunpack.c.h.b16 %v180
  %v1471 = vunpack.c.l.b16 %v181
  %v1472 = vunpack.c.h.b16 %v181
  %v1473 = vunpack.c.l.b16 %v182
  %v1474 = vunpack.c.h.b16 %v182
  %v1475 = vunpack.c.l.b16 %v183
  %v1476 = vunpack.c.h.b16 %v183
  %v1477 = vunpack.c.l.b16 %v184
  %v1478 = vunpack.c.h.b16 %v184
  %v1479 = vunpack.c.l.b16 %v185
  %v1480 = vunpack.c.h.b16 %v185
  %v1481 = vunpack.c.l.b16 %v186
  %v1482 = vunpack.c.h.b16 %v186
  %v1483 = vunpack.c.l.b16 %v187
  %v1484 = vunpack.c.h.b16 %v187
  %v1485 = vunpack.c.l.b16 %v188
  %v1486 = vunpack.c.h.b16 %v188
  %v1487 = vunpack.c.l.b16 %v189
  %v1488 = vunpack.c.h.b16 %v189
  %v1489 = vunpack.c.l.b16 %v190
  %v1490 = vunpack.c.h.b16 %v190
  %v1491 = vunpack.c.l.b16 %v191
  %v1492 = vunpack.c.h.b16 %v191
  %v1493 = vunpack.c.l.b16 %v192
  %v1494 = vunpack.c.h.b16 %v192
  %v1495 = vunpack.c.l.b16 %v193
  %v1496 = vunpack.c.h.b16 %v193
  %v1497 = vunpack.c.l.b16 %v194
  %v1498 = vunpack.c.h.b16 %v194
  %v1499 = vunpack.c.l.b16 %v195
  %v1500 = vunpack.c.h.b16 %v195
  %v1501 = vunpack.c.l.b16 %v196
  %v1502 = vunpack.c.h.b16 %v196
  %v1503 = vunpack.c.l.b16 %v197
  %v1504 = vunpack.c.h.b16 %v197
  %v1505 = vunpack.c.l.b16 %v198
  %v1506 = vunpack.c.h.b16 %v198
  %v1507 = vunpack.c.l.b16 %v199
  %v1508 = vunpack.c.h.b16 %v199
  %v1509 = vunpack.c.l.b16 %v200
  %v1510 = vunpack.c.h.b16 %v200
  %v1511 = vunpack.c.l.b16 %v201
  %v1512 = vunpack.c.h.b16 %v201
  %v1513 = vunpack.c.l.b16 %v202
  %v1514 = vunpack.c.h.b16 %v202
  %v1515 = vunpack.c.l.b16 %v203
  %v1516 = vunpack.c.h.b16 %v203
  %v1517 = vunpack.c.l.b16 %v204
  %v1518 = vunpack.c.h.b16 %v204
  %v1519 = vunpack.c.l.b16 %v205
  %v1520 = vunpack.c.h.b16 %v205
  %v1521 = vunpack.c.l.b16 %v206
  %v1522 = vunpack.c.h.b16 %v206
  %v1523 = vunpack.c.l.b16 %v207
  %v1524 = vunpack.c.h.b16 %v207
  %v1525 = vunpack.c.l.b16 %v208
  %v1526 = vunpack.c.h.b16 %v208
  %v1527 = vunpack.c.l.b16 %v209
  %v1528 = vunpack.c.h.b16 %v209
  %v1529 = vunpack.c.l.b16 %v210
  %v1530 = vunpack.c.h.b16 %v210
  %v1531 = vunpack.c.l.b16 %v211
  %v1532 = vunpack.c.h.b16 %v211
  %v1533 = vunpack.c.l.b16 %v212
  %v1534 = vunpack.c.h.b16 %v212
  %v1535 = vunpack.c.l.b16 %v213
  %v1536 = vunpack.c.h.b16 %v213
  %v1537 = vunpack.c.l.b16 %v214
  %v1538 = vunpack.c.h.b16 %v214
  %v1539 = vunpack.c.l.b16 %v215
  %v1540 = vunpack.c.h.b16 %v215
  %v1541 = vunpack.c.l.b16 %v216
  %v1542 = vunpack.c.h.b16 %v216
  %v1543 = vunpack.c.l.b16 %v217
  %v1544 = vunpack.c.h.b16 %v217
  %v1545 = vunpack.c.l.b16 %v218
  %v1546 = vunpack.c.h.b16 %v218
  %v1547 = vunpack.c.l.b16 %v219
  %v1548 = vunpack.c.h.b16 %v219
  %v1549 = vunpack.c.l.b16 %v220
  %v1550 = vunpack.c.h.b16 %v220
  %v1551 = vunpack.c.l.b16 %v221
  %v1552 = vunpack.c.h.b16 %v221
  %v1553 = vunpack.c.l.b16 %v222
  %v1554 = vunpack.c.h.b16 %v222
  %v1555 = vunpack.c.l.b16 %v223
  %v1556 = vunpack.c.h.b16 %v223
  %v1557 = vunpack.c.l.b16 %v224
  %v1558 = vunpack.c.h.b16 %v224
  %v1559 = vunpack.c.l.b16 %v225
  %v1560 = vunpack.c.h.b16 %v225
  %v1561 = vunpack.c.l.b16 %v226
  %v1562 = vunpack.c.h.b16 %v226
  %v1563 = vunpack.c.l.b16 %v227
  %v1564 = vunpack.c.h.b16 %v227
  %v1565 = vunpack.c.l.b16 %v228
  %v1566 = vunpack.c.h.b16 %v228
  %v1567 = vunpack.c.l.b16 %v229
  %v1568 = vunpack.c.h.b16 %v229
  %v1569 = vunpack.c.l.b16 %v230
  %v1570 = vunpack.c.h.b16 %v230
  %v1571 = vunpack.c.l.b16 %v231
  %v1572 = vunpack.c.h.b16 %v231
  %v1573 = vunpack.c.l.b16 %v232
  %v1574 = vunpack.c.h.b16 %v232
  %v1575 = vunpack.c.l.b16 %v233
  %v1576 = vunpack.c.h.b16 %v233
  %v1577 = vunpack.c.l.b16 %v234
  %v1578 = vunpack.c.h.b16 %v234
  %v1579 = vunpack.c.l.b16 %v235
  %v1580 = vunpack.c.h.b16 %v235
  %v1581 = vunpack.c.l.b16 %v236
  %v1582 = vunpack.c.h.b16 %v236
  %v1583 = vunpack.c.l.b16 %v237
  %v1584 = vunpack.c.h.b16 %v237
  %v1585 = vunpack.c.l.b16 %v238
  %v1586 = vunpack.c.h.b16 %v238
  %v1587 = vunpack.c.l.b16 %v239
  %v1588 = vunpack.c.h.b16 %v239
  %v1589 = vunpack.c.l.b16 %v240
  %v1590 = vunpack.c.h.b16 %v240
  %v1591 = vunpack.c.l.b16 %v241
  %v1592 = vunpack.c.h.b16 %v241
  %v1593 = vunpack.c.l.b16 %v242
  %v1594 = vunpack.c.h.b16 %v242
  %v1595 = vunpack.c.l.b16 %v243
  %v1596 = vunpack.c.h.b16 %v243
  %v1597 = vunpack.c.l.b16 %v244
  %v1598 = vunpack.c.h.b16 %v244
  %v1599 = vunpack.c.l.b16 %v245
  %v1600 = vunpack.c.h.b16 %v245
  %v1601 = vunpack.c.l.b16 %v246
  %v1602 = vunpack.c.h.b16 %v246
  %v1603 = vunpack.c.l.b16 %v247
  %v1604 = vunpack.c.h.b16 %v247
  %v1605 = vunpack.c.l.b16 %v248
  %v1606 = vunpack.c.h.b16 %v248
  %v1607 = vunpack.c.l.b16 %v249
  %v1608 = vunpack.c.h.b16 %v249
  %v1609 = vunpack.c.l.b16 %v250
  %v1610 = vunpack.c.h.b16 %v250
  %v1611 = vunpack.c.l.b16 %v251
  %v1612 = vunpack.c.h.b16 %v251
  %v1613 = vunpack.c.l.b16 %v252
  %v1614 = vunpack.c.h.b16 %v252
  %v1615 = vunpack.c.l.b16 %v253
  %v1616 = vunpack.c.h.b16 %v253
  %v1617 = vunpack.c.l.b16 %v254
  %v1618 = vunpack.c.h.b16 %v254
  %v1619 = vunpack.c.l.b16 %v255
  %v1620 = vunpack.c.h.b16 %v255
  %v1621 = vunpack.c.l.b16 %v256
  %v1622 = vunpack.c.h.b16 %v256
  %v1623 = vunpack.c.l.b16 %v257
  %v1624 = vunpack.c.h.b16 %v257
  %v1625 = vunpack.c.l.b16 %v258
  %v1626 = vunpack.c.h.b16 %v258
  %v1627 = vunpack.c.l.b16 %v259
  %v1628 = vunpack.c.h.b16 %v259
  %v1629 = vunpack.c.l.b16 %v260
  %v1630 = vunpack.c.h.b16 %v260
  %v1631 = vunpack.c.l.b16 %v261
  %v1632 = vunpack.c.h.b16 %v261
  %v1633 = vunpack.c.l.b16 %v262
  %v1634 = vunpack.c.h.b16 %v262
  %v1635 = vunpack.c.l.b16 %v263
  %v1636 = vunpack.c.h.b16 %v263
  %v1637 = vunpack.c.l.b16 %v264
  %v1638 = vunpack.c.h.b16 %v264
  %v1639 = vunpack.c.l.b16 %v265
  %v1640 = vunpack.c.h.b16 %v265
  %v1641 = vunpack.c.l.b16 %v266
  %v1642 = vunpack.c.h.b16 %v266
  %v1643 = vunpack.c.l.b16 %v267
  %v1644 = vunpack.c.h.b16 %v267
  %v1645 = vunpack.c.l.b16 %v268
  %v1646 = vunpack.c.h.b16 %v268
  %v1647 = vunpack.c.l.b16 %v269
  %v1648 = vunpack.c.h.b16 %v269
  %v1649 = vunpack.c.l.b16 %v270
  %v1650 = vunpack.c.h.b16 %v270
  %v1651 = vunpack.c.l.b16 %v271
  %v1652 = vunpack.c.h.b16 %v271
  %v1653 = vunpack.c.l.b16 %v272
  %v1654 = vunpack.c.h.b16 %v272
  %v1655 = vunpack.c.l.b16 %v273
  %v1656 = vunpack.c.h.b16 %v273
  %v1657 = vunpack.c.l.b16 %v274
  %v1658 = vunpack.c.h.b16 %v274
  %v1659 = vunpack.c.l.b16 %v275
  %v1660 = vunpack.c.h.b16 %v275
  %v1661 = vunpack.c.l.b16 %v276
  %v1662 = vunpack.c.h.b16 %v276
  %v1663 = vunpack.c.l.b16 %v277
  %v1664 = vunpack.c.h.b16 %v277
  %v1665 = vunpack.c.l.b16 %v278
  %v1666 = vunpack.c.h.b16 %v278
  %v1667 = vunpack.c.l.b16 %v279
  %v1668 = vunpack.c.h.b16 %v279
  %v1669 = vunpack.c.l.b16 %v280
  %v1670 = vunpack.c.h.b16 %v280
  %v1671 = vunpack.c.l.b16 %v281
  %v1672 = vunpack.c.h.b16 %v281
  %v1673 = vunpack.c.l.b16 %v282
  %v1674 = vunpack.c.h.b16 %v282
  %v1675 = vunpack.c.l.b16 %v283
  %v1676 = vunpack.c.h.b16 %v283
  %v1677 = vunpack.c.l.b16 %v284
  %v1678 = vunpack.c.h.b16 %v284
  %v1679 = vunpack.c.l.b16 %v285
  %v1680 = vunpack.c.h.b16 %v285
  %v1681 = vunpack.c.l.b16 %v286
  %v1682 = vunpack.c.h.b16 %v286
  %v1683 = vunpack.c.l.b16 %v287
  %v1684 = vunpack.c.h.b16 %v287
  %v1685 = vunpack.c.l.b16 %v288
  %v1686 = vunpack.c.h.b16 %v288
  %v1687 = vunpack.c.l.b16 %v289
  %v1688 = vunpack.c.h.b16 %v289
  %v1689 = vunpack.c.l.b16 %v290
  %v1690 = vunpack.c.h.b16 %v290
  %v1691 = vunpack.c.l.b16 %v291
  %v1692 = vunpack.c.h.b16 %v291
  %v1693 = vunpack.c.l.b16 %v292
  %v1694 = vunpack.c.h.b16 %v292
  %v1695 = vunpack.c.l.b16 %v293
  %v1696 = vunpack.c.h.b16 %v293
  %v1697 = vunpack.c.l.b16 %v294
  %v1698 = vunpack.c.h.b16 %v294
  %v1699 = vunpack.c.l.b16 %v295
  %v1700 = vunpack.c.h.b16 %v295
  %v1701 = vunpack.c.l.b16 %v296
  %v1702 = vunpack.c.h.b16 %v296
  %v1703 = vunpack.c.l.b16 %v297
  %v1704 = vunpack.c.h.b16 %v297
  %v1705 = vunpack.c.l.b16 %v298
  %v1706 = vunpack.c.h.b16 %v298
  %v1707 = vunpack.c.l.b16 %v299
  %v1708 = vunpack.c.h.b16 %v299
  %v1709 = vunpack.c.l.b16 %v300
  %v1710 = vunpack.c.h.b16 %v300
  %v1711 = vunpack.c.l.b16 %v301
  %v1712 = vunpack.c.h.b16 %v301
  %v1713 = vunpack.c.l.b16 %v302
  %v1714 = vunpack.c.h.b16 %v302
  %v1715 = vunpack.c.l.b16 %v303
  %v1716 = vunpack.c.h.b16 %v303
  %v1717 = vunpack.c.l.b16 %v304
  %v1718 = vunpack.c.h.b16 %v304
  %v1719 = vunpack.c.l.b16 %v305
  %v1720 = vunpack.c.h.b16 %v305
  %v1721 = vunpack.c.l.b16 %v306
  %v1722 = vunpack.c.h.b16 %v306
  %v1723 = vunpack.c.l.b16 %v307
  %v1724 = vunpack.c.h.b16 %v307
  %v1725 = vunpack.c.l.b16 %v308
  %v1726 = vunpack.c.h.b16 %v308
  %v1727 = vunpack.c.l.b16 %v309
  %v1728 = vunpack.c.h.b16 %v309
  %v1729 = vunpack.c.l.b16 %v310
  %v1730 = vunpack.c.h.b16 %v310
  %v1731 = vunpack.c.l.b16 %v311
  %v1732 = vunpack.c.h.b16 %v311
  %v1733 = vunpack.c.l.b16 %v312
  %v1734 = vunpack.c.h.b16 %v312
  %v1735 = vunpack.c.l.b16 %v313
  %v1736 = vunpack.c.h.b16 %v313
  %v1737 = vunpack.c.l.b16 %v314
  %v1738 = vunpack.c.h.b16 %v314
  %v1739 = vunpack.c.l.b16 %v315
  %v1740 = vunpack.c.h.b16 %v315
  %v1741 = vunpack.c.l.b16 %v316
  %v1742 = vunpack.c.h.b16 %v316
  %v1743 = vunpack.c.l.b16 %v317
  %v1744 = vunpack.c.h.b16 %v317
  %v1745 = vunpack.c.l.b16 %v318
  %v1746 = vunpack.c.h.b16 %v318
  %v1747 = vunpack.c.l.b16 %v319
  %v1748 = vunpack.c.h.b16 %v319
  %v1749 = vunpack.c.l.b16 %v320
  %v1750 = vunpack.c.h.b16 %v320
  %v1751 = vunpack.c.l.b16 %v321
  %v1752 = vunpack.c.h.b16 %v321
  %v1753 = vunpack.c.l.b16 %v322
  %v1754 = vunpack.c.h.b16 %v322
  %v1755 = vunpack.c.l.b16 %v323
  %v1756 = vunpack.c.h.b16 %v323
  %v1757 = vunpack.c.l.b16 %v324
  %v1758 = vunpack.c.h.b16 %v324
  %v1759 = vunpack.c.l.b16 %v325
  %v1760 = vunpack.c.h.b16 %v325
  %v1761 = vunpack.c.l.b16 %v326
  %v1762 = vunpack.c.h.b16 %v326
  %v1763 = vunpack.c.l.b16 %v327
  %v1764 = vunpack.c.h.b16 %v327
  %v1765 = vunpack.c.l.b16 %v328
  %v1766 = vunpack.c.h.b16 %v328
  %v1767 = vunpack.c.l.b16 %v329
  %v1768 = vunpack.c.h.b16 %v329
  %v1769 = vunpack.c.l.b16 %v330
  %v1770 = vunpack.c.h.b16 %v330
  %v1771 = vunpack.c.l.b16 %v331
  %v1772 = vunpack.c.h.b16 %v331
  %v1773 = vunpack.c.l.b16 %v332
  %v1774 = vunpack.c.h.b16 %v332
  %v1775 = vunpack.c.l.b16 %v333
  %v1776 = vunpack.c.h.b16 %v333
  %v1777 = vunpack.c.l.b16 %v334
  %v1778 = vunpack.c.h.b16 %v334
  %v1779 = vunpack.c.l.b16 %v335
  %v1780 = vunpack.c.h.b16 %v335
  %v1781 = vunpack.c.l.b16 %v336
  %v1782 = vunpack.c.h.b16 %v336
  %v1783 = vunpack.c.l.b16 %v337
  %v1784 = vunpack.c.h.b16 %v337
  %v1785 = vunpack.c.l.b16 %v338
  %v1786 = vunpack.c.h.b16 %v338
  %v1787 = vunpack.c.l.b16 %v339
  %v1788 = vunpack.c.h.b16 %v339
  %v1789 = vunpack.c.l.b16 %v340
  %v1790 = vunpack.c.h.b16 %v340
  %v1791 = vunpack.c.l.b16 %v341
  %v1792 = vunpack.c.h.b16 %v341
  %v1793 = vunpack.c.l.b16 %v342
  %v1794 = vunpack.c.h.b16 %v342
  %v1795 = vunpack.c.l.b16 %v343
  %v1796 = vunpack.c.h.b16 %v343
  %v1797 = vunpack.c.l.b16 %v344
  %v1798 = vunpack.c.h.b16 %v344
  %v1799 = vunpack.c.l.b16 %v345
  %v1800 = vunpack.c.h.b16 %v345
  %v1801 = vunpack.c.l.b16 %v346
  %v1802 = vunpack.c.h.b16 %v346
  %v1803 = vunpack.c.l.b16 %v347
  %v1804 = vunpack.c.h.b16 %v347
  %v1805 = vunpack.c.l.b16 %v348
  %v1806 = vunpack.c.h.b16 %v348
  %v1807 = vunpack.c.l.b16 %v349
  %v1808 = vunpack.c.h.b16 %v349
  %v1809 = vunpack.c.l.b16 %v350
  %v1810 = vunpack.c.h.b16 %v350
  %v1811 = vunpack.c.l.b16 %v351
  %v1812 = vunpack.c.h.b16 %v351
  %v1813 = vunpack.c.l.b16 %v352
  %v1814 = vunpack.c.h.b16 %v352
  %v1815 = vunpack.c.l.b16 %v353
  %v1816 = vunpack.c.h.b16 %v353
  %v1817 = vunpack.c.l.b16 %v354
  %v1818 = vunpack.c.h.b16 %v354
  %v1819 = vunpack.c.l.b16 %v355
  %v1820 = vunpack.c.h.b16 %v355
  %v1821 = vunpack.c.l.b16 %v356
  %v1822 = vunpack.c.h.b16 %v356
  %v1823 = vunpack.c.l.b16 %v357
  %v1824 = vunpack.c.h.b16 %v357
  %v1825 = vunpack.c.l.b16 %v358
  %v1826 = vunpack.c.h.b16 %v358
  %v1827 = vunpack.c.l.b16 %v359
  %v1828 = vunpack.c.h.b16 %v359
  %v1829 = vunpack.c.l.b16 %v360
  %v1830 = vunpack.c.h.b16 %v360
  %v1831 = vunpack.c.l.b16 %v361
  %v1832 = vunpack.c.h.b16 %v361
  %v1833 = vunpack.c.l.b16 %v362
  %v1834 = vunpack.c.h.b16 %v362
  %v1835 = vunpack.c.l.b16 %v363
  %v1836 = vunpack.c.h.b16 %v363
  %v1837 = vunpack.c.l.b16 %v364
  %v1838 = vunpack.c.h.b16 %v364
  %v1839 = vunpack.c.l.b16 %v365
  %v1840 = vunpack.c.h.b16 %v365
  %v1841 = vunpack.c.l.b16 %v366
  %v1842 = vunpack.c.h.b16 %v366
  %v1843 = vunpack.c.l.b16 %v367
  %v1844 = vunpack.c.h.b16 %v367
  %v1845 = vunpack.c.l.b16 %v368
  %v1846 = vunpack.c.h.b16 %v368
  %v1847 = vunpack.c.l.b16 %v369
  %v1848 = vunpack.c.h.b16 %v369
  %v1849 = vunpack.c.l.b16 %v370
  %v1850 = vunpack.c.h.b16 %v370
  %v1851 = vunpack.c.l.b16 %v371
  %v1852 = vunpack.c.h.b16 %v371
  %v1853 = vunpack.c.l.b16 %v372
  %v1854 = vunpack.c.h.b16 %v372
  %v1855 = vunpack.c.l.b16 %v373
  %v1856 = vunpack.c.h.b16 %v373
  %v1857 = vunpack.c.l.b16 %v374
  %v1858 = vunpack.c.h.b16 %v374
  %v1859 = vunpack.c.l.b16 %v375
  %v1860 = vunpack.c.h.b16 %v375
  %v1861 = vunpack.c.l.b16 %v376
  %v1862 = vunpack.c.h.b16 %v376
  %v1863 = vunpack.c.l.b16 %v377
  %v1864 = vunpack.c.h.b16 %v377
  %v1865 = vunpack.c.l.b16 %v378
  %v1866 = vunpack.c.h.b16 %v378
  %v1867 = vunpack.c.l.b16 %v379
  %v1868 = vunpack.c.h.b16 %v379
  %v1869 = vunpack.c.l.b16 %v380
  %v1870 = vunpack.c.h.b16 %v380
  %v1871 = vunpack.c.l.b16 %v381
  %v1872 = vunpack.c.h.b16 %v381
  %v1873 = vunpack.c.l.b16 %v382
  %v1874 = vunpack.c.h.b16 %v382
  %v1875 = vunpack.c.l.b16 %v383
  %v1876 = vunpack.c.h.b16 %v383
  %v1877 = vunpack.c.l.b16 %v384
  %v1878 = vunpack.c.h.b16 %v384
  %v1879 = vunpack.c.l.b16 %v385
  %v1880 = vunpack.c.h.b16 %v385
  %v1881 = vunpack.c.l.b16 %v386
  %v1882 = vunpack.c.h.b16 %v386
  %v1883 = vunpack.c.l.b16 %v387
  %v1884 = vunpack.c.h.b16 %v387
  %v1885 = vunpack.c.l.b16 %v388
  %v1886 = vunpack.c.h.b16 %v388
  %v1887 = vunpack.c.l.b16 %v389
  %v1888 = vunpack.c.h.b16 %v389
  %v1889 = vunpack.c.l.b16 %v390
  %v1890 = vunpack.c.h.b16 %v390
  %v1891 = vunpack.c.l.b16 %v391
  %v1892 = vunpack.c.h.b16 %v391
  %v1893 = vunpack.c.l.b16 %v392
  %v1894 = vunpack.c.h.b16 %v392
  %v1895 = vunpack.c.l.b16 %v393
  %v1896 = vunpack.c.h.b16 %v393
  %v1897 = vunpack.c.l.b16 %v394
  %v1898 = vunpack.c.h.b16 %v394
  %v1899 = vunpack.c.l.b16 %v395
  %v1900 = vunpack.c.h.b16 %v395
  %v1901 = vunpack.c.l.b16 %v396
  %v1902 = vunpack.c.h.b16 %v396
  %v1903 = vunpack.c.l.b16 %v397
  %v1904 = vunpack.c.h.b16 %v397
  %v1905 = vunpack.c.l.b16 %v398
  %v1906 = vunpack.c.h.b16 %v398
  %v1907 = vunpack.c.l.b16 %v399
  %v1908 = vunpack.c.h.b16 %v399
  %v1909 = vunpack.c.l.b16 %v400
  %v1910 = vunpack.c.h.b16 %v400
  %v1911 = vunpack.c.l.b16 %v401
  %v1912 = vunpack.c.h.b16 %v401
  %v1913 = vunpack.c.l.b16 %v402
  %v1914 = vunpack.c.h.b16 %v402
  %v1915 = vunpack.c.l.b16 %v403
  %v1916 = vunpack.c.h.b16 %v403
  %v1917 = vunpack.c.l.b16 %v404
  %v1918 = vunpack.c.h.b16 %v404
  %v1919 = vunpack.c.l.b16 %v405
  %v1920 = vunpack.c.h.b16 %v405
  %v1921 = vunpack.c.l.b16 %v406
  %v1922 = vunpack.c.h.b16 %v406
  %v1923 = vunpack.c.l.b16 %v407
  %v1924 = vunpack.c.h.b16 %v407
  %v1925 = vunpack.c.l.b16 %v408
  %v1926 = vunpack.c.h.b16 %v408
  %v1927 = vunpack.c.l.b16 %v409
  %v1928 = vunpack.c.h.b16 %v409
  %v1929 = vunpack.c.l.b16 %v410
  %v1930 = vunpack.c.h.b16 %v410
  %v1931 = vunpack.c.l.b16 %v411
  %v1932 = vunpack.c.h.b16 %v411
  %v1933 = vunpack.c.l.b16 %v412
  %v1934 = vunpack.c.h.b16 %v412
  %v1935 = vunpack.c.l.b16 %v413
  %v1936 = vunpack.c.h.b16 %v413
  %v1937 = vunpack.c.l.b16 %v414
  %v1938 = vunpack.c.h.b16 %v414
  %v1939 = vunpack.c.l.b16 %v415
  %v1940 = vunpack.c.h.b16 %v415
  %v1941 = vunpack.c.l.b16 %v416
  %v1942 = vunpack.c.h.b16 %v416
  %v1943 = vunpack.c.l.b16 %v417
  %v1944 = vunpack.c.h.b16 %v417
  %v1945 = vunpack.c.l.b16 %v418
  %v1946 = vunpack.c.h.b16 %v418
  %v1947 = vunpack.c.l.b16 %v419
  %v1948 = vunpack.c.h.b16 %v419
  %v1949 = vunpack.c.l.b16 %v420
  %v1950 = vunpack.c.h.b16 %v420
  %v1951 = vunpack.c.l.b16 %v421
  %v1952 = vunpack.c.h.b16 %v421
  %v1953 = vunpack.c.l.b16 %v422
  %v1954 = vunpack.c.h.b16 %v422
  %v1955 = vunpack.c.l.b16 %v423
  %v1956 = vunpack.c.h.b16 %v423
  %v1957 = vunpack.c.l.b16 %v424
  %v1958 = vunpack.c.h.b16 %v424
  %v1959 = vunpack.c.l.b16 %v425
  %v1960 = vunpack.c.h.b16 %v425
  %v1961 = vunpack.c.l.b16 %v426
  %v1962 = vunpack.c.h.b16 %v426
  %v1963 = vunpack.c.l.b16 %v427
  %v1964 = vunpack.c.h.b16 %v427
  %v1965 = vunpack.c.l.b16 %v428
  %v1966 = vunpack.c.h.b16 %v428
  %v1967 = vunpack.c.l.b16 %v429
  %v1968 = vunpack.c.h.b16 %v429
  %v1969 = vunpack.c.l.b16 %v430
  %v1970 = vunpack.c.h.b16 %v430
  %v1971 = vunpack.c.l.b16 %v431
  %v1972 = vunpack.c.h.b16 %v431
  %v1973 = vunpack.c.l.b16 %v432
  %v1974 = vunpack.c.h.b16 %v432
  %v1975 = vunpack.c.l.b16 %v433
  %v1976 = vunpack.c.h.b16 %v433
  %v1977 = vunpack.c.l.b16 %v434
  %v1978 = vunpack.c.h.b16 %v434
  %v1979 = vunpack.c.l.b16 %v435
  %v1980 = vunpack.c.h.b16 %v435
  %v1981 = vunpack.c.l.b16 %v436
  %v1982 = vunpack.c.h.b16 %v436
  %v1983 = vunpack.c.l.b16 %v437
  %v1984 = vunpack.c.h.b16 %v437
  %v1985 = vunpack.c.l.b16 %v438
  %v1986 = vunpack.c.h.b16 %v438
  %v1987 = vunpack.c.l.b16 %v439
  %v1988 = vunpack.c.h.b16 %v439
  %v1989 = vunpack.c.l.b16 %v440
  %v1990 = vunpack.c.h.b16 %v440
  %v1991 = vunpack.c.l.b16 %v441
  %v1992 = vunpack.c.h.b16 %v441
  %v1993 = vunpack.c.l.b16 %v442
  %v1994 = vunpack.c.h.b16 %v442
  %v1995 = vunpack.c.l.b16 %v443
  %v1996 = vunpack.c.h.b16 %v443
  %v1997 = vunpack.c.l.b16 %v444
  %v1998 = vunpack.c.h.b16 %v444
  %v1999 = vunpack.c.l.b16 %v445
  %v2000 = vunpack.c.h.b16 %v445
  %v2001 = vunpack.c.l.b16 %v446
  %v2002 = vunpack.c.h.b16 %v446
  %v2003 = vunpack.c.l.b16 %v447
  %v2004 = vunpack.c.h.b16 %v447
  %v2005 = vunpack.c.l.b16 %v448
  %v2006 = vunpack.c.h.b16 %v448
  %v2007 = vunpack.c.l.b16 %v449
  %v2008 = vunpack.c.h.b16 %v449
  %v2009 = vunpack.c.l.b16 %v450
  %v2010 = vunpack.c.h.b16 %v450
  %v2011 = vunpack.c.l.b16 %v451
  %v2012 = vunpack.c.h.b16 %v451
  %v2013 = vunpack.c.l.b16 %v452
  %v2014 = vunpack.c.h.b16 %v452
  %v2015 = vunpack.c.l.b16 %v453
  %v2016 = vunpack.c.h.b16 %v453
  %v2017 = vunpack.c.l.b16 %v454
  %v2018 = vunpack.c.h.b16 %v454
  %v2019 = vunpack.c.l.b16 %v455
  %v2020 = vunpack.c.h.b16 %v455
  %v2021 = vunpack.c.l.b16 %v456
  %v2022 = vunpack.c.h.b16 %v456
  %v2023 = vunpack.c.l.b16 %v457
  %v2024 = vunpack.c.h.b16 %v457
  %v2025 = vunpack.c.l.b16 %v458
  %v2026 = vunpack.c.h.b16 %v458
  %v2027 = vunpack.c.l.b16 %v459
  %v2028 = vunpack.c.h.b16 %v459
  %v2029 = vunpack.c.l.b16 %v460
  %v2030 = vunpack.c.h.b16 %v460
  %v2031 = vunpack.c.l.b16 %v461
  %v2032 = vunpack.c.h.b16 %v461
  %v2033 = vunpack.c.l.b16 %v462
  %v2034 = vunpack.c.h.b16 %v462
  %v2035 = vunpack.c.l.b16 %v463
  %v2036 = vunpack.c.h.b16 %v463
  %v2037 = vunpack.c.l.b16 %v464
  %v2038 = vunpack.c.h.b16 %v464
  %v2039 = vunpack.c.l.b16 %v465
  %v2040 = vunpack.c.h.b16 %v465
  %v2041 = vunpack.c.l.b16 %v466
  %v2042 = vunpack.c.h.b16 %v466
  %v2043 = vunpack.c.l.b16 %v467
  %v2044 = vunpack.c.h.b16 %v467
  %v2045 = vunpack.c.l.b16 %v468
  %v2046 = vunpack.c.h.b16 %v468
  %v2047 = vunpack.c.l.b16 %v469
  %v2048 = vunpack.c.h.b16 %v469
  %v2049 = vunpack.c.l.b16 %v470
  %v2050 = vunpack.c.h.b16 %v470
  %v2051 = vunpack.c.l.b16 %v471
  %v2052 = vunpack.c.h.b16 %v471
  %v2053 = vunpack.c.l.b16 %v472
  %v2054 = vunpack.c.h.b16 %v472
  %v2055 = vunpack.c.l.b16 %v473
  %v2056 = vunpack.c.h.b16 %v473
  %v2057 = vunpack.c.l.b16 %v474
  %v2058 = vunpack.c.h.b16 %v474
  %v2059 = vunpack.c.l.b16 %v475
  %v2060 = vunpack.c.h.b16 %v475
  %v2061 = vunpack.c.l.b16 %v476
  %v2062 = vunpack.c.h.b16 %v476
  %v2063 = vunpack.c.l.b16 %v477
  %v2064 = vunpack.c.h.b16 %v477
  %v2065 = vunpack.c.l.b16 %v478
  %v2066 = vunpack.c.h.b16 %v478
  %v2067 = vunpack.c.l.b16 %v479
  %v2068 = vunpack.c.h.b16 %v479
  %v2069 = vunpack.c.l.b16 %v480
  %v2070 = vunpack.c.h.b16 %v480
  %v2071 = vunpack.c.l.b16 %v481
  %v2072 = vunpack.c.h.b16 %v481
  %v2073 = vunpack.c.l.b16 %v482
  %v2074 = vunpack.c.h.b16 %v482
  %v2075 = vunpack.c.l.b16 %v483
  %v2076 = vunpack.c.h.b16 %v483
  %v2077 = vunpack.c.l.b16 %v484
  %v2078 = vunpack.c.h.b16 %v484
  %v2079 = vunpack.c.l.b16 %v485
  %v2080 = vunpack.c.h.b16 %v485
  %v2081 = vunpack.c.l.b16 %v486
  %v2082 = vunpack.c.h.b16 %v486
  %v2083 = vunpack.c.l.b16 %v487
  %v2084 = vunpack.c.h.b16 %v487
  %v2085 = vunpack.c.l.b16 %v488
  %v2086 = vunpack.c.h.b16 %v488
  %v2087 = vunpack.c.l.b16 %v489
  %v2088 = vunpack.c.h.b16 %v489
  %v2089 = vunpack.c.l.b16 %v490
  %v2090 = vunpack.c.h.b16 %v490
  %v2091 = vunpack.c.l.b16 %v491
  %v2092 = vunpack.c.h.b16 %v491
  %v2093 = vunpack.c.l.b16 %v492
  %v2094 = vunpack.c.h.b16 %v492
  %v2095 = vunpack.c.l.b16 %v493
  %v2096 = vunpack.c.h.b16 %v493
  %v2097 = vunpack.c.l.b16 %v494
  %v2098 = vunpack.c.h.b16 %v494
  %v2099 = vunpack.c.l.b16 %v495
  %v2100 = vunpack.c.h.b16 %v495
  %v2101 = vunpack.c.l.b16 %v496
  %v2102 = vunpack.c.h.b16 %v496
  %v2103 = vunpack.c.l.b16 %v497
  %v2104 = vunpack.c.h.b16 %v497
  %v2105 = vunpack.c.l.b16 %v498
  %v2106 = vunpack.c.h.b16 %v498
  %v2107 = vunpack.c.l.b16 %v499
  %v2108 = vunpack.c.h.b16 %v499
  %v2109 = vunpack.c.l.b16 %v500
  %v2110 = vunpack.c.h.b16 %v500
  %v2111 = vunpack.c.l.b16 %v501
  %v2112 = vunpack.c.h.b16 %v501
  %v2113 = vunpack.c.l.b16 %v502
  %v2114 = vunpack.c.h.b16 %v502
  %v2115 = vunpack.c.l.b16 %v503
  %v2116 = vunpack.c.h.b16 %v503
  %v2117 = vunpack.c.l.b16 %v504
  %v2118 = vunpack.c.h.b16 %v504
  %v2119 = vunpack.c.l.b16 %v505
  %v2120 = vunpack.c.h.b16 %v505
  %v2121 = vunpack.c.l.b16 %v506
  %v2122 = vunpack.c.h.b16 %v506
  %v2123 = vunpack.c.l.b16 %v507
  %v2124 = vunpack.c.h.b16 %v507
  %v2125 = vunpack.c.l.b16 %v508
  %v2126 = vunpack.c.h.b16 %v508
  %v2127 = vunpack.c.l.b16 %v509
  %v2128 = vunpack.c.h.b16 %v509
  %v2129 = vunpack.c.l.b16 %v510
  %v2130 = vunpack.c.h.b16 %v510
  %v2131 = vunpack.c.l.b16 %v511
  %v2132 = vunpack.c.h.b16 %v511
  %v2133 = vunpack.c.l.b16 %v512
  %v2134 = vunpack.c.h.b16 %v512
  %v2135 = vunpack.c.l.b16 %v513
  %v2136 = vunpack.c.h.b16 %v513
  %v2137 = vunpack.c.l.b16 %v514
  %v2138 = vunpack.c.h.b16 %v514
  %v2139 = vunpack.c.l.b16 %v515
  %v2140 = vunpack.c.h.b16 %v515
  %v2141 = vunpack.c.l.b16 %v516
  %v2142 = vunpack.c.h.b16 %v516
  %v2143 = vunpack.c.l.b16 %v517
  %v2144 = vunpack.c.h.b16 %v517
  %v2145 = vunpack.c.l.b16 %v518
  %v2146 = vunpack.c.h.b16 %v518
  %v2147 = vunpack.c.l.b16 %v519
  %v2148 = vunpack.c.h.b16 %v519
  %v2149 = vunpack.c.l.b16 %v520
  %v2150 = vunpack.c.h.b16 %v520
  %v2151 = vunpack.c.l.b16 %v521
  %v2152 = vunpack.c.h.b16 %v521
  %v2153 = vunpack.c.l.b16 %v522
  %v2154 = vunpack.c.h.b16 %v522
  %v2155 = vunpack.c.l.b16 %v523
  %v2156 = vunpack.c.h.b16 %v523
  %v2157 = vunpack.c.l.b16 %v524
  %v2158 = vunpack.c.h.b16 %v524
  %v2159 = vunpack.c.l.b16 %v525
  %v2160 = vunpack.c.h.b16 %v525
  %v2161 = vunpack.c.l.b16 %v526
  %v2162 = vunpack.c.h.b16 %v526
  %v2163 = vunpack.c.l.b16 %v527
  %v2164 = vunpack.c.h.b16 %v527
  %v2165 = vunpack.c.l.b16 %v528
  %v2166 = vunpack.c.h.b16 %v528
  %v2167 = vunpack.c.l.b16 %v529
  %v2168 = vunpack.c.h.b16 %v529
  %v2169 = vunpack.c.l.b16 %v530
  %v2170 = vunpack.c.h.b16 %v530
  %v2171 = vunpack.c.l.b16 %v531
  %v2172 = vunpack.c.h.b16 %v531
  %v2173 = vunpack.c.l.b16 %v532
  %v2174 = vunpack.c.h.b16 %v532
  %v2175 = vunpack.c.l.b16 %v533
  %v2176 = vunpack.c.h.b16 %v533
  %v2177 = vunpack.c.l.b16 %v534
  %v2178 = vunpack.c.h.b16 %v534
  %v2179 = vunpack.c.l.b16 %v535
  %v2180 = vunpack.c.h.b16 %v535
  %v2181 = vunpack.c.l.b16 %v536
  %v2182 = vunpack.c.h.b16 %v536
  %v2183 = vpack.c.b16 %v1163, %v1159
  %v2184 = vpack.c.b16 %v1164, %v1160
  %v2185 = vpack.c.b16 %v1165, %v1161
  %v2186 = vpack.c.b16 %v1166, %v1162
  %v2187 = vpack.c.b16 %v1171, %v1167
  %v2188 = vpack.c.b16 %v1172, %v1168
  %v2189 = vpack.c.b16 %v1173, %v1169
  %v2190 = vpack.c.b16 %v1174, %v1170
  %v2191 = vpack.c.b16 %v1179, %v1175
  %v2192 = vpack.c.b16 %v1180, %v1176
  %v2193 = vpack.c.b16 %v1181, %v1177
  %v2194 = vpack.c.b16 %v1182, %v1178
  %v2195 = vpack.c.b16 %v1187, %v1183
  %v2196 = vpack.c.b16 %v1188, %v1184
  %v2197 = vpack.c.b16 %v1189, %v1185
  %v2198 = vpack.c.b16 %v1190, %v1186
  %v2199 = vpack.c.b16 %v1195, %v1191
  %v2200 = vpack.c.b16 %v1196, %v1192
  %v2201 = vpack.c.b16 %v1197, %v1193
  %v2202 = vpack.c.b16 %v1198, %v1194
  %v2203 = vpack.c.b16 %v1203, %v1199
  %v2204 = vpack.c.b16 %v1204, %v1200
  %v2205 = vpack.c.b16 %v1205, %v1201
  %v2206 = vpack.c.b16 %v1206, %v1202
  %v2207 = vpack.c.b16 %v1211, %v1207
  %v2208 = vpack.c.b16 %v1212, %v1208
  %v2209 = vpack.c.b16 %v1213, %v1209
  %v2210 = vpack.c.b16 %v1214, %v1210
  %v2211 = vpack.c.b16 %v1219, %v1215
  %v2212 = vpack.c.b16 %v1220, %v1216
  %v2213 = vpack.c.b16 %v1221, %v1217
  %v2214 = vpack.c.b16 %v1222, %v1218
  %v2215 = vpack.c.b16 %v1227, %v1223
  %v2216 = vpack.c.b16 %v1228, %v1224
  %v2217 = vpack.c.b16 %v1229, %v1225
  %v2218 = vpack.c.b16 %v1230, %v1226
  %v2219 = vpack.c.b16 %v1235, %v1231
  %v2220 = vpack.c.b16 %v1236, %v1232
  %v2221 = vpack.c.b16 %v1237, %v1233
  %v2222 = vpack.c.b16 %v1238, %v1234
  %v2223 = vpack.c.b16 %v1243, %v1239
  %v2224 = vpack.c.b16 %v1244, %v1240
  %v2225 = vpack.c.b16 %v1245, %v1241
  %v2226 = vpack.c.b16 %v1246, %v1242
  %v2227 = vpack.c.b16 %v1251, %v1247
  %v2228 = vpack.c.b16 %v1252, %v1248
  %v2229 = vpack.c.b16 %v1253, %v1249
  %v2230 = vpack.c.b16 %v1254, %v1250
  %v2231 = vpack.c.b16 %v1259, %v1255
  %v2232 = vpack.c.b16 %v1260, %v1256
  %v2233 = vpack.c.b16 %v1261, %v1257
  %v2234 = vpack.c.b16 %v1262, %v1258
  %v2235 = vpack.c.b16 %v1267, %v1263
  %v2236 = vpack.c.b16 %v1268, %v1264
  %v2237 = vpack.c.b16 %v1269, %v1265
  %v2238 = vpack.c.b16 %v1270, %v1266
  %v2239 = vpack.c.b16 %v1275, %v1271
  %v2240 = vpack.c.b16 %v1276, %v1272
  %v2241 = vpack.c.b16 %v1277, %v1273
  %v2242 = vpack.c.b16 %v1278, %v1274
  %v2243 = vpack.c.b16 %v1283, %v1279
  %v2244 = vpack.c.b16 %v1284, %v1280
  %v2245 = vpack.c.b16 %v1285, %v1281
  %v2246 = vpack.c.b16 %v1286, %v1282
  %v2247 = vpack.c.b16 %v1291, %v1287
  %v2248 = vpack.c.b16 %v1292, %v1288
  %v2249 = vpack.c.b16 %v1293, %v1289
  %v2250 = vpack.c.b16 %v1294, %v1290
  %v2251 = vpack.c.b16 %v1299, %v1295
  %v2252 = vpack.c.b16 %v1300, %v1296
  %v2253 = vpack.c.b16 %v1301, %v1297
  %v2254 = vpack.c.b16 %v1302, %v1298
  %v2255 = vpack.c.b16 %v1307, %v1303
  %v2256 = vpack.c.b16 %v1308, %v1304
  %v2257 = vpack.c.b16 %v1309, %v1305
  %v2258 = vpack.c.b16 %v1310, %v1306
  %v2259 = vpack.c.b16 %v1315, %v1311
  %v2260 = vpack.c.b16 %v1316, %v1312
  %v2261 = vpack.c.b16 %v1317, %v1313
  %v2262 = vpack.c.b16 %v1318, %v1314
  %v2263 = vpack.c.b16 %v1323, %v1319
  %v2264 = vpack.c.b16 %v1324, %v1320
  %v2265 = vpack.c.b16 %v1325, %v1321
  %v2266 = vpack.c.b16 %v1326, %v1322
  %v2267 = vpack.c.b16 %v1331, %v1327
  %v2268 = vpack.c.b16 %v1332, %v1328
  %v2269 = vpack.c.b16 %v1333, %v1329
  %v2270 = vpack.c.b16 %v1334, %v1330
  %v2271 = vpack.c.b16 %v1339, %v1335
  %v2272 = vpack.c.b16 %v1340, %v1336
  %v2273 = vpack.c.b16 %v1341, %v1337
  %v2274 = vpack.c.b16 %v1342, %v1338
  %v2275 = vpack.c.b16 %v1347, %v1343
  %v2276 = vpack.c.b16 %v1348, %v1344
  %v2277 = vpack.c.b16 %v1349, %v1345
  %v2278 = vpack.c.b16 %v1350, %v1346
  %v2279 = vpack.c.b16 %v1355, %v1351
  %v2280 = vpack.c.b16 %v1356, %v1352
  %v2281 = vpack.c.b16 %v1357, %v1353
  %v2282 = vpack.c.b16 %v1358, %v1354
  %v2283 = vpack.c.b16 %v1363, %v1359
  %v2284 = vpack.c.b16 %v1364, %v1360
  %v2285 = vpack.c.b16 %v1365, %v1361
  %v2286 = vpack.c.b16 %v1366, %v1362
  %v2287 = vpack.c.b16 %v1371, %v1367
  %v2288 = vpack.c.b16 %v1372, %v1368
  %v2289 = vpack.c.b16 %v1373, %v1369
  %v2290 = vpack.c.b16 %v1374, %v1370
  %v2291 = vpack.c.b16 %v1379, %v1375
  %v2292 = vpack.c.b16 %v1380, %v1376
  %v2293 = vpack.c.b16 %v1381, %v1377
  %v2294 = vpack.c.b16 %v1382, %v1378
  %v2295 = vpack.c.b16 %v1387, %v1383
  %v2296 = vpack.c.b16 %v1388, %v1384
  %v2297 = vpack.c.b16 %v1389, %v1385
  %v2298 = vpack.c.b16 %v1390, %v1386
  %v2299 = vpack.c.b16 %v1395, %v1391
  %v2300 = vpack.c.b16 %v1396, %v1392
  %v2301 = vpack.c.b16 %v1397, %v1393
  %v2302 = vpack.c.b16 %v1398, %v1394
  %v2303 = vpack.c.b16 %v1403, %v1399
  %v2304 = vpack.c.b16 %v1404, %v1400
  %v2305 = vpack.c.b16 %v1405, %v1401
  %v2306 = vpack.c.b16 %v1406, %v1402
  %v2307 = vpack.c.b16 %v1411, %v1407
  %v2308 = vpack.c.b16 %v1412, %v1408
  %v2309 = vpack.c.b16 %v1413, %v1409
  %v2310 = vpack.c.b16 %v1414, %v1410
  %v2311 = vpack.c.b16 %v1419, %v1415
  %v2312 = vpack.c.b16 %v1420, %v1416
  %v2313 = vpack.c.b16 %v1421, %v1417
  %v2314 = vpack.c.b16 %v1422, %v1418
  %v2315 = vpack.c.b16 %v1427, %v1423
  %v2316 = vpack.c.b16 %v1428, %v1424
  %v2317 = vpack.c.b16 %v1429, %v1425
  %v2318 = vpack.c.b16 %v1430, %v1426
  %v2319 = vpack.c.b16 %v1435, %v1431
  %v2320 = vpack.c.b16 %v1436, %v1432
  %v2321 = vpack.c.b16 %v1437, %v1433
  %v2322 = vpack.c.b16 %v1438, %v1434
  %v2323 = vpack.c.b16 %v1443, %v1439
  %v2324 = vpack.c.b16 %v1444, %v1440
  %v2325 = vpack.c.b16 %v1445, %v1441
  %v2326 = vpack.c.b16 %v1446, %v1442
  %v2327 = vpack.c.b16 %v1451, %v1447
  %v2328 = vpack.c.b16 %v1452, %v1448
  %v2329 = vpack.c.b16 %v1453, %v1449
  %v2330 = vpack.c.b16 %v1454, %v1450
  %v2331 = vpack.c.b16 %v1459, %v1455
  %v2332 = vpack.c.b16 %v1460, %v1456
  %v2333 = vpack.c.b16 %v1461, %v1457
  %v2334 = vpack.c.b16 %v1462, %v1458
  %v2335 = vpack.c.b16 %v1467, %v1463
  %v2336 = vpack.c.b16 %v1468, %v1464
  %v2337 = vpack.c.b16 %v1469, %v1465
  %v2338 = vpack.c.b16 %v1470, %v1466
  %v2339 = vpack.c.b16 %v1475, %v1471
  %v2340 = vpack.c.b16 %v1476, %v1472
  %v2341 = vpack.c.b16 %v1477, %v1473
  %v2342 = vpack.c.b16 %v1478, %v1474
  %v2343 = vpack.c.b16 %v1483, %v1479
  %v2344 = vpack.c.b16 %v1484, %v1480
  %v2345 = vpack.c.b16 %v1485, %v1481
  %v2346 = vpack.c.b16 %v1486, %v1482
  %v2347 = vpack.c.b16 %v1491, %v1487
  %v2348 = vpack.c.b16 %v1492, %v1488
  %v2349 = vpack.c.b16 %v1493, %v1489
  %v2350 = vpack.c.b16 %v1494, %v1490
  %v2351 = vpack.c.b16 %v1499, %v1495
  %v2352 = vpack.c.b16 %v1500, %v1496
  %v2353 = vpack.c.b16 %v1501, %v1497
  %v2354 = vpack.c.b16 %v1502, %v1498
  %v2355 = vpack.c.b16 %v1507, %v1503
  %v2356 = vpack.c.b16 %v1508, %v1504
  %v2357 = vpack.c.b16 %v1509, %v1505
  %v2358 = vpack.c.b16 %v1510, %v1506
  %v2359 = vpack.c.b16 %v1515, %v1511
  %v2360 = vpack.c.b16 %v1516, %v1512
  %v2361 = vpack.c.b16 %v1517, %v1513
  %v2362 = vpack.c.b16 %v1518, %v1514
  %v2363 = vpack.c.b16 %v1523, %v1519
  %v2364 = vpack.c.b16 %v1524, %v1520
  %v2365 = vpack.c.b16 %v1525, %v1521
  %v2366 = vpack.c.b16 %v1526, %v1522
  %v2367 = vpack.c.b16 %v1531, %v1527
  %v2368 = vpack.c.b16 %v1532, %v1528
  %v2369 = vpack.c.b16 %v1533, %v1529
  %v2370 = vpack.c.b16 %v1534, %v1530
  %v2371 = vpack.c.b16 %v1539, %v1535
  %v2372 = vpack.c.b16 %v1540, %v1536
  %v2373 = vpack.c.b16 %v1541, %v1537
  %v2374 = vpack.c.b16 %v1542, %v1538
  %v2375 = vpack.c.b16 %v1547, %v1543
  %v2376 = vpack.c.b16 %v1548, %v1544
  %v2377 = vpack.c.b16 %v1549, %v1545
  %v2378 = vpack.c.b16 %v1550, %v1546
  %v2379 = vpack.c.b16 %v1555, %v1551
  %v2380 = vpack.c.b16 %v1556, %v1552
  %v2381 = vpack.c.b16 %v1557, %v1553
  %v2382 = vpack.c.b16 %v1558, %v1554
  %v2383 = vpack.c.b16 %v1563, %v1559
  %v2384 = vpack.c.b16 %v1564, %v1560
  %v2385 = vpack.c.b16 %v1565, %v1561
  %v2386 = vpack.c.b16 %v1566, %v1562
  %v2387 = vpack.c.b16 %v1571, %v1567
  %v2388 = vpack.c.b16 %v1572, %v1568
  %v2389 = vpack.c.b16 %v1573, %v1569
  %v2390 = vpack.c.b16 %v1574, %v1570
  %v2391 = vpack.c.b16 %v1579, %v1575
  %v2392 = vpack.c.b16 %v1580, %v1576
  %v2393 = vpack.c.b16 %v1581, %v1577
  %v2394 = vpack.c.b16 %v1582, %v1578
  %v2395 = vpack.c.b16 %v1587, %v1583
  %v2396 = vpack.c.b16 %v1588, %v1584
  %v2397 = vpack.c.b16 %v1589, %v1585
  %v2398 = vpack.c.b16 %v1590, %v1586
  %v2399 = vpack.c.b16 %v1595, %v1591
  %v2400 = vpack.c.b16 %v1596, %v1592
  %v2401 = vpack.c.b16 %v1597, %v1593
  %v2402 = vpack.c.b16 %v1598, %v1594
  %v2403 = vpack.c.b16 %v1603, %v1599
  %v2404 = vpack.c.b16 %v1604, %v1600
  %v2405 = vpack.c.b16 %v1605, %v1601
  %v2406 = vpack.c.b16 %v1606, %v1602
  %v2407 = vpack.c.b16 %v1611, %v1607
  %v2408 = vpack.c.b16 %v1612, %v1608
  %v2409 = vpack.c.b16 %v1613, %v1609
  %v2410 = vpack.c.b16 %v1614, %v1610
  %v2411 = vpack.c.b16 %v1619, %v1615
  %v2412 = vpack.c.b16 %v1620, %v1616
  %v2413 = vpack.c.b16 %v1621, %v1617
  %v2414 = vpack.c.b16 %v1622, %v1618
  %v2415 = vpack.c.b16 %v1627, %v1623
  %v2416 = vpack.c.b16 %v1628, %v1624
  %v2417 = vpack.c.b16 %v1629, %v1625
  %v2418 = vpack.c.b16 %v1630, %v1626
  %v2419 = vpack.c.b16 %v1635, %v1631
  %v2420 = vpack.c.b16 %v1636, %v1632
  %v2421 = vpack.c.b16 %v1637, %v1633
  %v2422 = vpack.c.b16 %v1638, %v1634
  %v2423 = vpack.c.b16 %v1643, %v1639
  %v2424 = vpack.c.b16 %v1644, %v1640
  %v2425 = vpack.c.b16 %v1645, %v1641
  %v2426 = vpack.c.b16 %v1646, %v1642
  %v2427 = vpack.c.b16 %v1651, %v1647
  %v2428 = vpack.c.b16 %v1652, %v1648
  %v2429 = vpack.c.b16 %v1653, %v1649
  %v2430 = vpack.c.b16 %v1654, %v1650
  %v2431 = vpack.c.b16 %v1659, %v1655
  %v2432 = vpack.c.b16 %v1660, %v1656
  %v2433 = vpack.c.b16 %v1661, %v1657
  %v2434 = vpack.c.b16 %v1662, %v1658
  %v2435 = vpack.c.b16 %v1667, %v1663
  %v2436 = vpack.c.b16 %v1668, %v1664
  %v2437 = vpack.c.b16 %v1669, %v1665
  %v2438 = vpack.c.b16 %v1670, %v1666
  %v2439 = vpack.c.b16 %v1675, %v1671
  %v2440 = vpack.c.b16 %v1676, %v1672
  %v2441 = vpack.c.b16 %v1677, %v1673
  %v2442 = vpack.c.b16 %v1678, %v1674
  %v2443 = vpack.c.b16 %v1683, %v1679
  %v2444 = vpack.c.b16 %v1684, %v1680
  %v2445 = vpack.c.b16 %v1685, %v1681
  %v2446 = vpack.c.b16 %v1686, %v1682
  %v2447 = vpack.c.b16 %v1691, %v1687
  %v2448 = vpack.c.b16 %v1692, %v1688
  %v2449 = vpack.c.b16 %v1693, %v1689
  %v2450 = vpack.c.b16 %v1694, %v1690
  %v2451 = vpack.c.b16 %v1699, %v1695
  %v2452 = vpack.c.b16 %v1700, %v1696
  %v2453 = vpack.c.b16 %v1701, %v1697
  %v2454 = vpack.c.b16 %v1702, %v1698
  %v2455 = vpack.c.b16 %v1707, %v1703
  %v2456 = vpack.c.b16 %v1708, %v1704
  %v2457 = vpack.c.b16 %v1709, %v1705
  %v2458 = vpack.c.b16 %v1710, %v1706
  %v2459 = vpack.c.b16 %v1715, %v1711
  %v2460 = vpack.c.b16 %v1716, %v1712
  %v2461 = vpack.c.b16 %v1717, %v1713
  %v2462 = vpack.c.b16 %v1718, %v1714
  %v2463 = vpack.c.b16 %v1723, %v1719
  %v2464 = vpack.c.b16 %v1724, %v1720
  %v2465 = vpack.c.b16 %v1725, %v1721
  %v2466 = vpack.c.b16 %v1726, %v1722
  %v2467 = vpack.c.b16 %v1731, %v1727
  %v2468 = vpack.c.b16 %v1732, %v1728
  %v2469 = vpack.c.b16 %v1733, %v1729
  %v2470 = vpack.c.b16 %v1734, %v1730
  %v2471 = vpack.c.b16 %v1739, %v1735
  %v2472 = vpack.c.b16 %v1740, %v1736
  %v2473 = vpack.c.b16 %v1741, %v1737
  %v2474 = vpack.c.b16 %v1742, %v1738
  %v2475 = vpack.c.b16 %v1747, %v1743
  %v2476 = vpack.c.b16 %v1748, %v1744
  %v2477 = vpack.c.b16 %v1749, %v1745
  %v2478 = vpack.c.b16 %v1750, %v1746
  %v2479 = vpack.c.b16 %v1755, %v1751
  %v2480 = vpack.c.b16 %v1756, %v1752
  %v2481 = vpack.c.b16 %v1757, %v1753
  %v2482 = vpack.c.b16 %v1758, %v1754
  %v2483 = vpack.c.b16 %v1763, %v1759
  %v2484 = vpack.c.b16 %v1764, %v1760
  %v2485 = vpack.c.b16 %v1765, %v1761
  %v2486 = vpack.c.b16 %v1766, %v1762
  %v2487 = vpack.c.b16 %v1771, %v1767
  %v2488 = vpack.c.b16 %v1772, %v1768
  %v2489 = vpack.c.b16 %v1773, %v1769
  %v2490 = vpack.c.b16 %v1774, %v1770
  %v2491 = vpack.c.b16 %v1779, %v1775
  %v2492 = vpack.c.b16 %v1780, %v1776
  %v2493 = vpack.c.b16 %v1781, %v1777
  %v2494 = vpack.c.b16 %v1782, %v1778
  %v2495 = vpack.c.b16 %v1787, %v1783
  %v2496 = vpack.c.b16 %v1788, %v1784
  %v2497 = vpack.c.b16 %v1789, %v1785
  %v2498 = vpack.c.b16 %v1790, %v1786
  %v2499 = vpack.c.b16 %v1795, %v1791
  %v2500 = vpack.c.b16 %v1796, %v1792
  %v2501 = vpack.c.b16 %v1797, %v1793
  %v2502 = vpack.c.b16 %v1798, %v1794
  %v2503 = vpack.c.b16 %v1803, %v1799
  %v2504 = vpack.c.b16 %v1804, %v1800
  %v2505 = vpack.c.b16 %v1805, %v1801
  %v2506 = vpack.c.b16 %v1806, %v1802
  %v2507 = vpack.c.b16 %v1811, %v1807
  %v2508 = vpack.c.b16 %v1812, %v1808
  %v2509 = vpack.c.b16 %v1813, %v1809
  %v2510 = vpack.c.b16 %v1814, %v1810
  %v2511 = vpack.c.b16 %v1819, %v1815
  %v2512 = vpack.c.b16 %v1820, %v1816
  %v2513 = vpack.c.b16 %v1821, %v1817
  %v2514 = vpack.c.b16 %v1822, %v1818
  %v2515 = vpack.c.b16 %v1827, %v1823
  %v2516 = vpack.c.b16 %v1828, %v1824
  %v2517 = vpack.c.b16 %v1829, %v1825
  %v2518 = vpack.c.b16 %v1830, %v1826
  %v2519 = vpack.c.b16 %v1835, %v1831
  %v2520 = vpack.c.b16 %v1836, %v1832
  %v2521 = vpack.c.b16 %v1837, %v1833
  %v2522 = vpack.c.b16 %v1838, %v1834
  %v2523 = vpack.c.b16 %v1843, %v1839
  %v2524 = vpack.c.b16 %v1844, %v1840
  %v2525 = vpack.c.b16 %v1845, %v1841
  %v2526 = vpack.c.b16 %v1846, %v1842
  %v2527 = vpack.c.b16 %v1851, %v1847
  %v2528 = vpack.c.b16 %v1852, %v1848
  %v2529 = vpack.c.b16 %v1853, %v1849
  %v2530 = vpack.c.b16 %v1854, %v1850
  %v2531 = vpack.c.b16 %v1859, %v1855
  %v2532 = vpack.c.b16 %v1860, %v1856
  %v2533 = vpack.c.b16 %v1861, %v1857
  %v2534 = vpack.c.b16 %v1862, %v1858
  %v2535 = vpack.c.b16 %v1867, %v1863
  %v2536 = vpack.c.b16 %v1868, %v1864
  %v2537 = vpack.c.b16 %v1869, %v1865
  %v2538 = vpack.c.b16 %v1870, %v1866
  %v2539 = vpack.c.b16 %v1875, %v1871
  %v2540 = vpack.c.b16 %v1876, %v1872
  %v2541 = vpack.c.b16 %v1877, %v1873
  %v2542 = vpack.c.b16 %v1878, %v1874
  %v2543 = vpack.c.b16 %v1883, %v1879
  %v2544 = vpack.c.b16 %v1884, %v1880
  %v2545 = vpack.c.b16 %v1885, %v1881
  %v2546 = vpack.c.b16 %v1886, %v1882
  %v2547 = vpack.c.b16 %v1891, %v1887
  %v2548 = vpack.c.b16 %v1892, %v1888
  %v2549 = vpack.c.b16 %v1893, %v1889
  %v2550 = vpack.c.b16 %v1894, %v1890
  %v2551 = vpack.c.b16 %v1899, %v1895
  %v2552 = vpack.c.b16 %v1900, %v1896
  %v2553 = vpack.c.b16 %v1901, %v1897
  %v2554 = vpack.c.b16 %v1902, %v1898
  %v2555 = vpack.c.b16 %v1907, %v1903
  %v2556 = vpack.c.b16 %v1908, %v1904
  %v2557 = vpack.c.b16 %v1909, %v1905
  %v2558 = vpack.c.b16 %v1910, %v1906
  %v2559 = vpack.c.b16 %v1915, %v1911
  %v2560 = vpack.c.b16 %v1916, %v1912
  %v2561 = vpack.c.b16 %v1917, %v1913
  %v2562 = vpack.c.b16 %v1918, %v1914
  %v2563 = vpack.c.b16 %v1923, %v1919
  %v2564 = vpack.c.b16 %v1924, %v1920
  %v2565 = vpack.c.b16 %v1925, %v1921
  %v2566 = vpack.c.b16 %v1926, %v1922
  %v2567 = vpack.c.b16 %v1931, %v1927
  %v2568 = vpack.c.b16 %v1932, %v1928
  %v2569 = vpack.c.b16 %v1933, %v1929
  %v2570 = vpack.c.b16 %v1934, %v1930
  %v2571 = vpack.c.b16 %v1939, %v1935
  %v2572 = vpack.c.b16 %v1940, %v1936
  %v2573 = vpack.c.b16 %v1941, %v1937
  %v2574 = vpack.c.b16 %v1942, %v1938
  %v2575 = vpack.c.b16 %v1947, %v1943
  %v2576 = vpack.c.b16 %v1948, %v1944
  %v2577 = vpack.c.b16 %v1949, %v1945
  %v2578 = vpack.c.b16 %v1950, %v1946
  %v2579 = vpack.c.b16 %v1955, %v1951
  %v2580 = vpack.c.b16 %v1956, %v1952
  %v2581 = vpack.c.b16 %v1957, %v1953
  %v2582 = vpack.c.b16 %v1958, %v1954
  %v2583 = vpack.c.b16 %v1963, %v1959
  %v2584 = vpack.c.b16 %v1964, %v1960
  %v2585 = vpack.c.b16 %v1965, %v1961
  %v2586 = vpack.c.b16 %v1966, %v1962
  %v2587 = vpack.c.b16 %v1971, %v1967
  %v2588 = vpack.c.b16 %v1972, %v1968
  %v2589 = vpack.c.b16 %v1973, %v1969
  %v2590 = vpack.c.b16 %v1974, %v1970
  %v2591 = vpack.c.b16 %v1979, %v1975
  %v2592 = vpack.c.b16 %v1980, %v1976
  %v2593 = vpack.c.b16 %v1981, %v1977
  %v2594 = vpack.c.b16 %v1982, %v1978
  %v2595 = vpack.c.b16 %v1987, %v1983
  %v2596 = vpack.c.b16 %v1988, %v1984
  %v2597 = vpack.c.b16 %v1989, %v1985
  %v2598 = vpack.c.b16 %v1990, %v1986
  %v2599 = vpack.c.b16 %v1995, %v1991
  %v2600 = vpack.c.b16 %v1996, %v1992
  %v2601 = vpack.c.b16 %v1997, %v1993
  %v2602 = vpack.c.b16 %v1998, %v1994
  %v2603 = vpack.c.b16 %v2003, %v1999
  %v2604 = vpack.c.b16 %v2004, %v2000
  %v2605 = vpack.c.b16 %v2005, %v2001
  %v2606 = vpack.c.b16 %v2006, %v2002
  %v2607 = vpack.c.b16 %v2011, %v2007
  %v2608 = vpack.c.b16 %v2012, %v2008
  %v2609 = vpack.c.b16 %v2013, %v2009
  %v2610 = vpack.c.b16 %v2014, %v2010
  %v2611 = vpack.c.b16 %v2019, %v2015
  %v2612 = vpack.c.b16 %v2020, %v2016
  %v2613 = vpack.c.b16 %v2021, %v2017
  %v2614 = vpack.c.b16 %v2022, %v2018
  %v2615 = vpack.c.b16 %v2027, %v2023
  %v2616 = vpack.c.b16 %v2028, %v2024
  %v2617 = vpack.c.b16 %v2029, %v2025
  %v2618 = vpack.c.b16 %v2030, %v2026
  %v2619 = vpack.c.b16 %v2035, %v2031
  %v2620 = vpack.c.b16 %v2036, %v2032
  %v2621 = vpack.c.b16 %v2037, %v2033
  %v2622 = vpack.c.b16 %v2038, %v2034
  %v2623 = vpack.c.b16 %v2043, %v2039
  %v2624 = vpack.c.b16 %v2044, %v2040
  %v2625 = vpack.c.b16 %v2045, %v2041
  %v2626 = vpack.c.b16 %v2046, %v2042
  %v2627 = vpack.c.b16 %v2051, %v2047
  %v2628 = vpack.c.b16 %v2052, %v2048
  %v2629 = vpack.c.b16 %v2053, %v2049
  %v2630 = vpack.c.b16 %v2054, %v2050
  %v2631 = vpack.c.b16 %v2059, %v2055
  %v2632 = vpack.c.b16 %v2060, %v2056
  %v2633 = vpack.c.b16 %v2061, %v2057
  %v2634 = vpack.c.b16 %v2062, %v2058
  %v2635 = vpack.c.b16 %v2067, %v2063
  %v2636 = vpack.c.b16 %v2068, %v2064
  %v2637 = vpack.c.b16 %v2069, %v2065
  %v2638 = vpack.c.b16 %v2070, %v2066
  %v2639 = vpack.c.b16 %v2075, %v2071
  %v2640 = vpack.c.b16 %v2076, %v2072
  %v2641 = vpack.c.b16 %v2077, %v2073
  %v2642 = vpack.c.b16 %v2078, %v2074
  %v2643 = vpack.c.b16 %v2083, %v2079
  %v2644 = vpack.c.b16 %v2084, %v2080
  %v2645 = vpack.c.b16 %v2085, %v2081
  %v2646 = vpack.c.b16 %v2086, %v2082
  %v2647 = vpack.c.b16 %v2091, %v2087
  %v2648 = vpack.c.b16 %v2092, %v2088
  %v2649 = vpack.c.b16 %v2093, %v2089
  %v2650 = vpack.c.b16 %v2094, %v2090
  %v2651 = vpack.c.b16 %v2099, %v2095
  %v2652 = vpack.c.b16 %v2100, %v2096
  %v2653 = vpack.c.b16 %v2101, %v2097
  %v2654 = vpack.c.b16 %v2102, %v2098
  %v2655 = vpack.c.b16 %v2107, %v2103
  %v2656 = vpack.c.b16 %v2108, %v2104
  %v2657 = vpack.c.b16 %v2109, %v2105
  %v2658 = vpack.c.b16 %v2110, %v2106
  %v2659 = vpack.c.b16 %v2115, %v2111
  %v2660 = vpack.c.b16 %v2116, %v2112
  %v2661 = vpack.c.b16 %v2117, %v2113
  %v2662 = vpack.c.b16 %v2118, %v2114
  %v2663 = vpack.c.b16 %v2123, %v2119
  %v2664 = vpack.c.b16 %v2124, %v2120
  %v2665 = vpack.c.b16 %v2125, %v2121
  %v2666 = vpack.c.b16 %v2126, %v2122
  %v2667 = vpack.c.b16 %v2131, %v2127
  %v2668 = vpack.c.b16 %v2132, %v2128
  %v2669 = vpack.c.b16 %v2133, %v2129
  %v2670 = vpack.c.b16 %v2134, %v2130
  %v2671 = vpack.c.b16 %v2139, %v2135
  %v2672 = vpack.c.b16 %v2140, %v2136
  %v2673 = vpack.c.b16 %v2141, %v2137
  %v2674 = vpack.c.b16 %v2142, %v2138
  %v2675 = vpack.c.b16 %v2147, %v2143
  %v2676 = vpack.c.b16 %v2148, %v2144
  %v2677 = vpack.c.b16 %v2149, %v2145
  %v2678 = vpack.c.b16 %v2150, %v2146
  %v2679 = vpack.c.b16 %v2155, %v2151
  %v2680 = vpack.c.b16 %v2156, %v2152
  %v2681 = vpack.c.b16 %v2157, %v2153
  %v2682 = vpack.c.b16 %v2158, %v2154
  %v2683 = vpack.c.b16 %v2163, %v2159
  %v2684 = vpack.c.b16 %v2164, %v2160
  %v2685 = vpack.c.b16 %v2165, %v2161
  %v2686 = vpack.c.b16 %v2166, %v2162
  %v2687 = vpack.c.b16 %v2171, %v2167
  %v2688 = vpack.c.b16 %v2172, %v2168
  %v2689 = vpack.c.b16 %v2173, %v2169
  %v2690 = vpack.c.b16 %v2174, %v2170
  %v2691 = vpack.c.b16 %v2179, %v2175
  %v2692 = vpack.c.b16 %v2180, %v2176
  %v2693 = vpack.c.b16 %v2181, %v2177
  %v2694 = vpack.c.b16 %v2182, %v2178
  %3207 = vmatprep.subr.bf16.mxu0 %v2184
  %3208 = vmatpush1.bf16.msra.mxu0 %v2183
  %3209 = vmatprep.subr.bf16.mxu0 %v2188
  %3210 = vmatpush1.bf16.msra.mxu0 %v2187
  %3211 = vmatprep.subr.bf16.mxu0 %v2192
  %3212 = vmatpush1.bf16.msra.mxu0 %v2191
  %3213 = vmatprep.subr.bf16.mxu0 %v2196
  %3214 = vmatpush1.bf16.msra.mxu0 %v2195
  %3215 = vmatprep.subr.bf16.mxu0 %v2200
  %3216 = vmatpush1.bf16.msra.mxu0 %v2199
  %3217 = vmatprep.subr.bf16.mxu0 %v2204
  %3218 = vmatpush1.bf16.msra.mxu0 %v2203
  %3219 = vmatprep.subr.bf16.mxu0 %v2208
  %3220 = vmatpush1.bf16.msra.mxu0 %v2207
  %3221 = vmatprep.subr.bf16.mxu0 %v2212
  %3222 = vmatpush1.bf16.msra.mxu0 %v2211
  %3223 = vmatprep.subr.bf16.mxu0 %v2216
  %3224 = vmatpush1.bf16.msra.mxu0 %v2215
  %3225 = vmatprep.subr.bf16.mxu0 %v2220
  %3226 = vmatpush1.bf16.msra.mxu0 %v2219
  %3227 = vmatprep.subr.bf16.mxu0 %v2224
  %3228 = vmatpush1.bf16.msra.mxu0 %v2223
  %3229 = vmatprep.subr.bf16.mxu0 %v2228
  %3230 = vmatpush1.bf16.msra.mxu0 %v2227
  %3231 = vmatprep.subr.bf16.mxu0 %v2232
  %3232 = vmatpush1.bf16.msra.mxu0 %v2231
  %3233 = vmatprep.subr.bf16.mxu0 %v2236
  %3234 = vmatpush1.bf16.msra.mxu0 %v2235
  %3235 = vmatprep.subr.bf16.mxu0 %v2240
  %3236 = vmatpush1.bf16.msra.mxu0 %v2239
  %3237 = vmatprep.subr.bf16.mxu0 %v2244
  %3238 = vmatpush1.bf16.msra.mxu0 %v2243
  %3239 = vmatprep.mubr.bf16.mxu0 %v578
  %3240 = vmatmul.mubr.bf16.gmra.mrb[0].mxu0 %v570
  %v3241 = vpop.f32.mrb[0].mxu0
  %v3242 = vadd.f32 %v542, %v3241
  %v3243 = vpop.f32.mrb[0].mxu0
  %v3244 = vadd.f32 %v546, %v3243
  %v3245 = vpop.f32.mrb[0].mxu0
  %v3246 = vpop.f32.mrb[0].mxu0
  %3247 = vdwg.mxu0
  %3248 = vmatprep.subr.bf16.mxu0 %v2248
  %3249 = vmatpush1.bf16.msra.mxu0 %v2247
  %3250 = vmatprep.subr.bf16.mxu0 %v2252
  %3251 = vmatpush1.bf16.msra.mxu0 %v2251
  %3252 = vmatprep.subr.bf16.mxu0 %v2256
  %3253 = vmatpush1.bf16.msra.mxu0 %v2255
  %3254 = vmatprep.subr.bf16.mxu0 %v2260
  %3255 = vmatpush1.bf16.msra.mxu0 %v2259
  %3256 = vmatprep.subr.bf16.mxu0 %v2264
  %3257 = vmatpush1.bf16.msra.mxu0 %v2263
  %3258 = vmatprep.subr.bf16.mxu0 %v2268
  %3259 = vmatpush1.bf16.msra.mxu0 %v2267
  %3260 = vmatprep.subr.bf16.mxu0 %v2272
  %3261 = vmatpush1.bf16.msra.mxu0 %v2271
  %3262 = vmatprep.subr.bf16.mxu0 %v2276
  %3263 = vmatpush1.bf16.msra.mxu0 %v2275
  %3264 = vmatprep.subr.bf16.mxu0 %v2280
  %3265 = vmatpush1.bf16.msra.mxu0 %v2279
  %3266 = vmatprep.subr.bf16.mxu0 %v2284
  %3267 = vmatpush1.bf16.msra.mxu0 %v2283
  %3268 = vmatprep.subr.bf16.mxu0 %v2288
  %3269 = vmatpush1.bf16.msra.mxu0 %v2287
  %3270 = vmatprep.subr.bf16.mxu0 %v2292
  %3271 = vmatpush1.bf16.msra.mxu0 %v2291
  %3272 = vmatprep.subr.bf16.mxu0 %v2296
  %3273 = vmatpush1.bf16.msra.mxu0 %v2295
  %3274 = vmatprep.subr.bf16.mxu0 %v2300
  %3275 = vmatpush1.bf16.msra.mxu0 %v2299
  %3276 = vmatprep.subr.bf16.mxu0 %v2304
  %3277 = vmatpush1.bf16.msra.mxu0 %v2303
  %3278 = vmatprep.subr.bf16.mxu0 %v2308
  %3279 = vmatpush1.bf16.msra.mxu0 %v2307
  %3280 = vmatprep.mubr.bf16.mxu0 %v579
  %3281 = vmatmul.mubr.bf16.gmra.mrb[0].mxu0 %v577
  %v3282 = vpop.f32.mrb[0].mxu0
  %v3283 = vadd.f32 %v3242, %v3282
  %v3284 = vpop.f32.mrb[0].mxu0
  %v3285 = vadd.f32 %v3244, %v3284
  %v3286 = vpop.f32.mrb[0].mxu0
  %v3287 = vpop.f32.mrb[0].mxu0
  %3288 = vdwg.mxu0
  %3289 = vmatprep.subr.bf16.mxu0 %v2312
  %3290 = vmatpush1.bf16.msra.mxu0 %v2311
  %3291 = vmatprep.subr.bf16.mxu0 %v2316
  %3292 = vmatpush1.bf16.msra.mxu0 %v2315
  %3293 = vmatprep.subr.bf16.mxu0 %v2320
  %3294 = vmatpush1.bf16.msra.mxu0 %v2319
  %3295 = vmatprep.subr.bf16.mxu0 %v2324
  %3296 = vmatpush1.bf16.msra.mxu0 %v2323
  %3297 = vmatprep.subr.bf16.mxu0 %v2328
  %3298 = vmatpush1.bf16.msra.mxu0 %v2327
  %3299 = vmatprep.subr.bf16.mxu0 %v2332
  %3300 = vmatpush1.bf16.msra.mxu0 %v2331
  %3301 = vmatprep.subr.bf16.mxu0 %v2336
  %3302 = vmatpush1.bf16.msra.mxu0 %v2335
  %3303 = vmatprep.subr.bf16.mxu0 %v2340
  %3304 = vmatpush1.bf16.msra.mxu0 %v2339
  %3305 = vmatprep.subr.bf16.mxu0 %v2344
  %3306 = vmatpush1.bf16.msra.mxu0 %v2343
  %3307 = vmatprep.subr.bf16.mxu0 %v2348
  %3308 = vmatpush1.bf16.msra.mxu0 %v2347
  %3309 = vmatprep.subr.bf16.mxu0 %v2352
  %3310 = vmatpush1.bf16.msra.mxu0 %v2351
  %3311 = vmatprep.subr.bf16.mxu0 %v2356
  %3312 = vmatpush1.bf16.msra.mxu0 %v2355
  %3313 = vmatprep.subr.bf16.mxu0 %v2360
  %3314 = vmatpush1.bf16.msra.mxu0 %v2359
  %3315 = vmatprep.subr.bf16.mxu0 %v2364
  %3316 = vmatpush1.bf16.msra.mxu0 %v2363
  %3317 = vmatprep.subr.bf16.mxu0 %v2368
  %3318 = vmatpush1.bf16.msra.mxu0 %v2367
  %3319 = vmatprep.subr.bf16.mxu0 %v2372
  %3320 = vmatpush1.bf16.msra.mxu0 %v2371
  %3321 = vmatprep.mubr.bf16.mxu0 %v595
  %3322 = vmatmul.mubr.bf16.gmra.mrb[0].mxu0 %v587
  %v3323 = vpop.f32.mrb[0].mxu0
  %v3324 = vadd.f32 %v3283, %v3323
  %v3325 = vpop.f32.mrb[0].mxu0
  %v3326 = vadd.f32 %v3285, %v3325
  %v3327 = vpop.f32.mrb[0].mxu0
  %v3328 = vpop.f32.mrb[0].mxu0
  %3329 = vdwg.mxu0
  %3330 = vmatprep.subr.bf16.mxu0 %v2376
  %3331 = vmatpush1.bf16.msra.mxu0 %v2375
  %3332 = vmatprep.subr.bf16.mxu0 %v2380
  %3333 = vmatpush1.bf16.msra.mxu0 %v2379
  %3334 = vmatprep.subr.bf16.mxu0 %v2384
  %3335 = vmatpush1.bf16.msra.mxu0 %v2383
  %3336 = vmatprep.subr.bf16.mxu0 %v2388
  %3337 = vmatpush1.bf16.msra.mxu0 %v2387
  %3338 = vmatprep.subr.bf16.mxu0 %v2392
  %3339 = vmatpush1.bf16.msra.mxu0 %v2391
  %3340 = vmatprep.subr.bf16.mxu0 %v2396
  %3341 = vmatpush1.bf16.msra.mxu0 %v2395
  %3342 = vmatprep.subr.bf16.mxu0 %v2400
  %3343 = vmatpush1.bf16.msra.mxu0 %v2399
  %3344 = vmatprep.subr.bf16.mxu0 %v2404
  %3345 = vmatpush1.bf16.msra.mxu0 %v2403
  %3346 = vmatprep.subr.bf16.mxu0 %v2408
  %3347 = vmatpush1.bf16.msra.mxu0 %v2407
  %3348 = vmatprep.subr.bf16.mxu0 %v2412
  %3349 = vmatpush1.bf16.msra.mxu0 %v2411
  %3350 = vmatprep.subr.bf16.mxu0 %v2416
  %3351 = vmatpush1.bf16.msra.mxu0 %v2415
  %3352 = vmatprep.subr.bf16.mxu0 %v2420
  %3353 = vmatpush1.bf16.msra.mxu0 %v2419
  %3354 = vmatprep.subr.bf16.mxu0 %v2424
  %3355 = vmatpush1.bf16.msra.mxu0 %v2423
  %3356 = vmatprep.subr.bf16.mxu0 %v2428
  %3357 = vmatpush1.bf16.msra.mxu0 %v2427
  %3358 = vmatprep.subr.bf16.mxu0 %v2432
  %3359 = vmatpush1.bf16.msra.mxu0 %v2431
  %3360 = vmatprep.subr.bf16.mxu0 %v2436
  %3361 = vmatpush1.bf16.msra.mxu0 %v2435
  %3362 = vmatprep.mubr.bf16.mxu0 %v596
  %3363 = vmatmul.mubr.bf16.gmra.mrb[0].mxu0 %v594
  %v3364 = vpop.f32.mrb[0].mxu0
  %v3365 = vadd.f32 %v3324, %v3364
  %v3366 = vpop.f32.mrb[0].mxu0
  %v3367 = vadd.f32 %v3326, %v3366
  %v3368 = vpop.f32.mrb[0].mxu0
  %v3369 = vpop.f32.mrb[0].mxu0
  %3370 = vdwg.mxu0
  %3371 = vmatprep.subr.bf16.mxu0 %v2440
  %3372 = vmatpush1.bf16.msra.mxu0 %v2439
  %3373 = vmatprep.subr.bf16.mxu0 %v2444
  %3374 = vmatpush1.bf16.msra.mxu0 %v2443
  %3375 = vmatprep.subr.bf16.mxu0 %v2448
  %3376 = vmatpush1.bf16.msra.mxu0 %v2447
  %3377 = vmatprep.subr.bf16.mxu0 %v2452
  %3378 = vmatpush1.bf16.msra.mxu0 %v2451
  %3379 = vmatprep.subr.bf16.mxu0 %v2456
  %3380 = vmatpush1.bf16.msra.mxu0 %v2455
  %3381 = vmatprep.subr.bf16.mxu0 %v2460
  %3382 = vmatpush1.bf16.msra.mxu0 %v2459
  %3383 = vmatprep.subr.bf16.mxu0 %v2464
  %3384 = vmatpush1.bf16.msra.mxu0 %v2463
  %3385 = vmatprep.subr.bf16.mxu0 %v2468
  %3386 = vmatpush1.bf16.msra.mxu0 %v2467
  %3387 = vmatprep.subr.bf16.mxu0 %v2472
  %3388 = vmatpush1.bf16.msra.mxu0 %v2471
  %3389 = vmatprep.subr.bf16.mxu0 %v2476
  %3390 = vmatpush1.bf16.msra.mxu0 %v2475
  %3391 = vmatprep.subr.bf16.mxu0 %v2480
  %3392 = vmatpush1.bf16.msra.mxu0 %v2479
  %3393 = vmatprep.subr.bf16.mxu0 %v2484
  %3394 = vmatpush1.bf16.msra.mxu0 %v2483
  %3395 = vmatprep.subr.bf16.mxu0 %v2488
  %3396 = vmatpush1.bf16.msra.mxu0 %v2487
  %3397 = vmatprep.subr.bf16.mxu0 %v2492
  %3398 = vmatpush1.bf16.msra.mxu0 %v2491
  %3399 = vmatprep.subr.bf16.mxu0 %v2496
  %3400 = vmatpush1.bf16.msra.mxu0 %v2495
  %3401 = vmatprep.subr.bf16.mxu0 %v2500
  %3402 = vmatpush1.bf16.msra.mxu0 %v2499
  %3403 = vmatprep.mubr.bf16.mxu0 %v612
  %3404 = vmatmul.mubr.bf16.gmra.mrb[0].mxu0 %v604
  %v3405 = vpop.f32.mrb[0].mxu0
  %v3406 = vadd.f32 %v3365, %v3405
  %v3407 = vpop.f32.mrb[0].mxu0
  %v3408 = vadd.f32 %v3367, %v3407
  %v3409 = vpop.f32.mrb[0].mxu0
  %v3410 = vpop.f32.mrb[0].mxu0
  %3411 = vdwg.mxu0
  %3412 = vmatprep.subr.bf16.mxu0 %v2504
  %3413 = vmatpush1.bf16.msra.mxu0 %v2503
  %3414 = vmatprep.subr.bf16.mxu0 %v2508
  %3415 = vmatpush1.bf16.msra.mxu0 %v2507
  %3416 = vmatprep.subr.bf16.mxu0 %v2512
  %3417 = vmatpush1.bf16.msra.mxu0 %v2511
  %3418 = vmatprep.subr.bf16.mxu0 %v2516
  %3419 = vmatpush1.bf16.msra.mxu0 %v2515
  %3420 = vmatprep.subr.bf16.mxu0 %v2520
  %3421 = vmatpush1.bf16.msra.mxu0 %v2519
  %3422 = vmatprep.subr.bf16.mxu0 %v2524
  %3423 = vmatpush1.bf16.msra.mxu0 %v2523
  %3424 = vmatprep.subr.bf16.mxu0 %v2528
  %3425 = vmatpush1.bf16.msra.mxu0 %v2527
  %3426 = vmatprep.subr.bf16.mxu0 %v2532
  %3427 = vmatpush1.bf16.msra.mxu0 %v2531
  %3428 = vmatprep.subr.bf16.mxu0 %v2536
  %3429 = vmatpush1.bf16.msra.mxu0 %v2535
  %3430 = vmatprep.subr.bf16.mxu0 %v2540
  %3431 = vmatpush1.bf16.msra.mxu0 %v2539
  %3432 = vmatprep.subr.bf16.mxu0 %v2544
  %3433 = vmatpush1.bf16.msra.mxu0 %v2543
  %3434 = vmatprep.subr.bf16.mxu0 %v2548
  %3435 = vmatpush1.bf16.msra.mxu0 %v2547
  %3436 = vmatprep.subr.bf16.mxu0 %v2552
  %3437 = vmatpush1.bf16.msra.mxu0 %v2551
  %3438 = vmatprep.subr.bf16.mxu0 %v2556
  %3439 = vmatpush1.bf16.msra.mxu0 %v2555
  %3440 = vmatprep.subr.bf16.mxu0 %v2560
  %3441 = vmatpush1.bf16.msra.mxu0 %v2559
  %3442 = vmatprep.subr.bf16.mxu0 %v2564
  %3443 = vmatpush1.bf16.msra.mxu0 %v2563
  %3444 = vmatprep.mubr.bf16.mxu0 %v613
  %3445 = vmatmul.mubr.bf16.gmra.mrb[0].mxu0 %v611
  %v3446 = vpop.f32.mrb[0].mxu0
  %v3447 = vadd.f32 %v3406, %v3446
  %v3448 = vpop.f32.mrb[0].mxu0
  %v3449 = vadd.f32 %v3408, %v3448
  %v3450 = vpop.f32.mrb[0].mxu0
  %v3451 = vpop.f32.mrb[0].mxu0
  %3452 = vdwg.mxu0
  %3453 = vmatprep.subr.bf16.mxu0 %v2568
  %3454 = vmatpush1.bf16.msra.mxu0 %v2567
  %3455 = vmatprep.subr.bf16.mxu0 %v2572
  %3456 = vmatpush1.bf16.msra.mxu0 %v2571
  %3457 = vmatprep.subr.bf16.mxu0 %v2576
  %3458 = vmatpush1.bf16.msra.mxu0 %v2575
  %3459 = vmatprep.subr.bf16.mxu0 %v2580
  %3460 = vmatpush1.bf16.msra.mxu0 %v2579
  %3461 = vmatprep.subr.bf16.mxu0 %v2584
  %3462 = vmatpush1.bf16.msra.mxu0 %v2583
  %3463 = vmatprep.subr.bf16.mxu0 %v2588
  %3464 = vmatpush1.bf16.msra.mxu0 %v2587
  %3465 = vmatprep.subr.bf16.mxu0 %v2592
  %3466 = vmatpush1.bf16.msra.mxu0 %v2591
  %3467 = vmatprep.subr.bf16.mxu0 %v2596
  %3468 = vmatpush1.bf16.msra.mxu0 %v2595
  %3469 = vmatprep.subr.bf16.mxu0 %v2600
  %3470 = vmatpush1.bf16.msra.mxu0 %v2599
  %3471 = vmatprep.subr.bf16.mxu0 %v2604
  %3472 = vmatpush1.bf16.msra.mxu0 %v2603
  %3473 = vmatprep.subr.bf16.mxu0 %v2608
  %3474 = vmatpush1.bf16.msra.mxu0 %v2607
  %3475 = vmatprep.subr.bf16.mxu0 %v2612
  %3476 = vmatpush1.bf16.msra.mxu0 %v2611
  %3477 = vmatprep.subr.bf16.mxu0 %v2616
  %3478 = vmatpush1.bf16.msra.mxu0 %v2615
  %3479 = vmatprep.subr.bf16.mxu0 %v2620
  %3480 = vmatpush1.bf16.msra.mxu0 %v2619
  %3481 = vmatprep.subr.bf16.mxu0 %v2624
  %3482 = vmatpush1.bf16.msra.mxu0 %v2623
  %3483 = vmatprep.subr.bf16.mxu0 %v2628
  %3484 = vmatpush1.bf16.msra.mxu0 %v2627
  %3485 = vmatprep.mubr.bf16.mxu0 %v629
  %3486 = vmatmul.mubr.bf16.gmra.mrb[0].mxu0 %v621
  %v3487 = vpop.f32.mrb[0].mxu0
  %v3488 = vadd.f32 %v3447, %v3487
  %v3489 = vpop.f32.mrb[0].mxu0
  %v3490 = vadd.f32 %v3449, %v3489
  %v3491 = vpop.f32.mrb[0].mxu0
  %v3492 = vpop.f32.mrb[0].mxu0
  %3493 = vdwg.mxu0
  %3494 = vmatprep.subr.bf16.mxu0 %v2632
  %3495 = vmatpush1.bf16.msra.mxu0 %v2631
  %3496 = vmatprep.subr.bf16.mxu0 %v2636
  %3497 = vmatpush1.bf16.msra.mxu0 %v2635
  %3498 = vmatprep.subr.bf16.mxu0 %v2640
  %3499 = vmatpush1.bf16.msra.mxu0 %v2639
  %3500 = vmatprep.subr.bf16.mxu0 %v2644
  %3501 = vmatpush1.bf16.msra.mxu0 %v2643
  %3502 = vmatprep.subr.bf16.mxu0 %v2648
  %3503 = vmatpush1.bf16.msra.mxu0 %v2647
  %3504 = vmatprep.subr.bf16.mxu0 %v2652
  %3505 = vmatpush1.bf16.msra.mxu0 %v2651
  %3506 = vmatprep.subr.bf16.mxu0 %v2656
  %3507 = vmatpush1.bf16.msra.mxu0 %v2655
  %3508 = vmatprep.subr.bf16.mxu0 %v2660
  %3509 = vmatpush1.bf16.msra.mxu0 %v2659
  %3510 = vmatprep.subr.bf16.mxu0 %v2664
  %3511 = vmatpush1.bf16.msra.mxu0 %v2663
  %3512 = vmatprep.subr.bf16.mxu0 %v2668
  %3513 = vmatpush1.bf16.msra.mxu0 %v2667
  %3514 = vmatprep.subr.bf16.mxu0 %v2672
  %3515 = vmatpush1.bf16.msra.mxu0 %v2671
  %3516 = vmatprep.subr.bf16.mxu0 %v2676
  %3517 = vmatpush1.bf16.msra.mxu0 %v2675
  %3518 = vmatprep.subr.bf16.mxu0 %v2680
  %3519 = vmatpush1.bf16.msra.mxu0 %v2679
  %3520 = vmatprep.subr.bf16.mxu0 %v2684
  %3521 = vmatpush1.bf16.msra.mxu0 %v2683
  %3522 = vmatprep.subr.bf16.mxu0 %v2688
  %3523 = vmatpush1.bf16.msra.mxu0 %v2687
  %3524 = vmatprep.subr.bf16.mxu0 %v2692
  %3525 = vmatpush1.bf16.msra.mxu0 %v2691
  %3526 = vmatprep.mubr.bf16.mxu0 %v630
  %3527 = vmatmul.mubr.bf16.gmra.mrb[0].mxu0 %v628
  %v3528 = vpop.f32.mrb[0].mxu0
  %v3529 = vadd.f32 %v3488, %v3528
  %v3530 = vpop.f32.mrb[0].mxu0
  %v3531 = vadd.f32 %v3490, %v3530
  %v3532 = vpop.f32.mrb[0].mxu0
  %v3533 = vpop.f32.mrb[0].mxu0
  %3534 = vdwg.mxu0
  %3535 = vmatprep.subr.bf16.mxu0 %v2186
  %3536 = vmatpush1.bf16.msra.mxu0 %v2185
  %3537 = vmatprep.subr.bf16.mxu0 %v2190
  %3538 = vmatpush1.bf16.msra.mxu0 %v2189
  %3539 = vmatprep.subr.bf16.mxu0 %v2194
  %3540 = vmatpush1.bf16.msra.mxu0 %v2193
  %3541 = vmatprep.subr.bf16.mxu0 %v2198
  %3542 = vmatpush1.bf16.msra.mxu0 %v2197
  %3543 = vmatprep.subr.bf16.mxu0 %v2202
  %3544 = vmatpush1.bf16.msra.mxu0 %v2201
  %3545 = vmatprep.subr.bf16.mxu0 %v2206
  %3546 = vmatpush1.bf16.msra.mxu0 %v2205
  %3547 = vmatprep.subr.bf16.mxu0 %v2210
  %3548 = vmatpush1.bf16.msra.mxu0 %v2209
  %3549 = vmatprep.subr.bf16.mxu0 %v2214
  %3550 = vmatpush1.bf16.msra.mxu0 %v2213
  %3551 = vmatprep.subr.bf16.mxu0 %v2218
  %3552 = vmatpush1.bf16.msra.mxu0 %v2217
  %3553 = vmatprep.subr.bf16.mxu0 %v2222
  %3554 = vmatpush1.bf16.msra.mxu0 %v2221
  %3555 = vmatprep.subr.bf16.mxu0 %v2226
  %3556 = vmatpush1.bf16.msra.mxu0 %v2225
  %3557 = vmatprep.subr.bf16.mxu0 %v2230
  %3558 = vmatpush1.bf16.msra.mxu0 %v2229
  %3559 = vmatprep.subr.bf16.mxu0 %v2234
  %3560 = vmatpush1.bf16.msra.mxu0 %v2233
  %3561 = vmatprep.subr.bf16.mxu0 %v2238
  %3562 = vmatpush1.bf16.msra.mxu0 %v2237
  %3563 = vmatprep.subr.bf16.mxu0 %v2242
  %3564 = vmatpush1.bf16.msra.mxu0 %v2241
  %3565 = vmatprep.subr.bf16.mxu0 %v2246
  %3566 = vmatpush1.bf16.msra.mxu0 %v2245
  %3567 = vmatprep.mubr.bf16.mxu0 %v578
  %3568 = vmatmul.mubr.bf16.gmra.mrb[0].mxu0 %v570
  %v3569 = vpop.f32.mrb[0].mxu0
  %v3570 = vadd.f32 %v550, %v3569
  %v3571 = vpop.f32.mrb[0].mxu0
  %v3572 = vadd.f32 %v554, %v3571
  %v3573 = vpop.f32.mrb[0].mxu0
  %v3574 = vpop.f32.mrb[0].mxu0
  %3575 = vdwg.mxu0
  %3576 = vmatprep.subr.bf16.mxu0 %v2250
  %3577 = vmatpush1.bf16.msra.mxu0 %v2249
  %3578 = vmatprep.subr.bf16.mxu0 %v2254
  %3579 = vmatpush1.bf16.msra.mxu0 %v2253
  %3580 = vmatprep.subr.bf16.mxu0 %v2258
  %3581 = vmatpush1.bf16.msra.mxu0 %v2257
  %3582 = vmatprep.subr.bf16.mxu0 %v2262
  %3583 = vmatpush1.bf16.msra.mxu0 %v2261
  %3584 = vmatprep.subr.bf16.mxu0 %v2266
  %3585 = vmatpush1.bf16.msra.mxu0 %v2265
  %3586 = vmatprep.subr.bf16.mxu0 %v2270
  %3587 = vmatpush1.bf16.msra.mxu0 %v2269
  %3588 = vmatprep.subr.bf16.mxu0 %v2274
  %3589 = vmatpush1.bf16.msra.mxu0 %v2273
  %3590 = vmatprep.subr.bf16.mxu0 %v2278
  %3591 = vmatpush1.bf16.msra.mxu0 %v2277
  %3592 = vmatprep.subr.bf16.mxu0 %v2282
  %3593 = vmatpush1.bf16.msra.mxu0 %v2281
  %3594 = vmatprep.subr.bf16.mxu0 %v2286
  %3595 = vmatpush1.bf16.msra.mxu0 %v2285
  %3596 = vmatprep.subr.bf16.mxu0 %v2290
  %3597 = vmatpush1.bf16.msra.mxu0 %v2289
  %3598 = vmatprep.subr.bf16.mxu0 %v2294
  %3599 = vmatpush1.bf16.msra.mxu0 %v2293
  %3600 = vmatprep.subr.bf16.mxu0 %v2298
  %3601 = vmatpush1.bf16.msra.mxu0 %v2297
  %3602 = vmatprep.subr.bf16.mxu0 %v2302
  %3603 = vmatpush1.bf16.msra.mxu0 %v2301
  %3604 = vmatprep.subr.bf16.mxu0 %v2306
  %3605 = vmatpush1.bf16.msra.mxu0 %v2305
  %3606 = vmatprep.subr.bf16.mxu0 %v2310
  %3607 = vmatpush1.bf16.msra.mxu0 %v2309
  %3608 = vmatprep.mubr.bf16.mxu0 %v579
  %3609 = vmatmul.mubr.bf16.gmra.mrb[0].mxu0 %v577
  %v3610 = vpop.f32.mrb[0].mxu0
  %v3611 = vadd.f32 %v3570, %v3610
  %v3612 = vpop.f32.mrb[0].mxu0
  %v3613 = vadd.f32 %v3572, %v3612
  %v3614 = vpop.f32.mrb[0].mxu0
  %v3615 = vpop.f32.mrb[0].mxu0
  %3616 = vdwg.mxu0
  %3617 = vmatprep.subr.bf16.mxu0 %v2314
  %3618 = vmatpush1.bf16.msra.mxu0 %v2313
  %3619 = vmatprep.subr.bf16.mxu0 %v2318
  %3620 = vmatpush1.bf16.msra.mxu0 %v2317
  %3621 = vmatprep.subr.bf16.mxu0 %v2322
  %3622 = vmatpush1.bf16.msra.mxu0 %v2321
  %3623 = vmatprep.subr.bf16.mxu0 %v2326
  %3624 = vmatpush1.bf16.msra.mxu0 %v2325
  %3625 = vmatprep.subr.bf16.mxu0 %v2330
  %3626 = vmatpush1.bf16.msra.mxu0 %v2329
  %3627 = vmatprep.subr.bf16.mxu0 %v2334
  %3628 = vmatpush1.bf16.msra.mxu0 %v2333
  %3629 = vmatprep.subr.bf16.mxu0 %v2338
  %3630 = vmatpush1.bf16.msra.mxu0 %v2337
  %3631 = vmatprep.subr.bf16.mxu0 %v2342
  %3632 = vmatpush1.bf16.msra.mxu0 %v2341
  %3633 = vmatprep.subr.bf16.mxu0 %v2346
  %3634 = vmatpush1.bf16.msra.mxu0 %v2345
  %3635 = vmatprep.subr.bf16.mxu0 %v2350
  %3636 = vmatpush1.bf16.msra.mxu0 %v2349
  %3637 = vmatprep.subr.bf16.mxu0 %v2354
  %3638 = vmatpush1.bf16.msra.mxu0 %v2353
  %3639 = vmatprep.subr.bf16.mxu0 %v2358
  %3640 = vmatpush1.bf16.msra.mxu0 %v2357
  %3641 = vmatprep.subr.bf16.mxu0 %v2362
  %3642 = vmatpush1.bf16.msra.mxu0 %v2361
  %3643 = vmatprep.subr.bf16.mxu0 %v2366
  %3644 = vmatpush1.bf16.msra.mxu0 %v2365
  %3645 = vmatprep.subr.bf16.mxu0 %v2370
  %3646 = vmatpush1.bf16.msra.mxu0 %v2369
  %3647 = vmatprep.subr.bf16.mxu0 %v2374
  %3648 = vmatpush1.bf16.msra.mxu0 %v2373
  %3649 = vmatprep.mubr.bf16.mxu0 %v595
  %3650 = vmatmul.mubr.bf16.gmra.mrb[0].mxu0 %v587
  %v3651 = vpop.f32.mrb[0].mxu0
  %v3652 = vadd.f32 %v3611, %v3651
  %v3653 = vpop.f32.mrb[0].mxu0
  %v3654 = vadd.f32 %v3613, %v3653
  %v3655 = vpop.f32.mrb[0].mxu0
  %v3656 = vpop.f32.mrb[0].mxu0
  %3657 = vdwg.mxu0
  %3658 = vmatprep.subr.bf16.mxu0 %v2378
  %3659 = vmatpush1.bf16.msra.mxu0 %v2377
  %3660 = vmatprep.subr.bf16.mxu0 %v2382
  %3661 = vmatpush1.bf16.msra.mxu0 %v2381
  %3662 = vmatprep.subr.bf16.mxu0 %v2386
  %3663 = vmatpush1.bf16.msra.mxu0 %v2385
  %3664 = vmatprep.subr.bf16.mxu0 %v2390
  %3665 = vmatpush1.bf16.msra.mxu0 %v2389
  %3666 = vmatprep.subr.bf16.mxu0 %v2394
  %3667 = vmatpush1.bf16.msra.mxu0 %v2393
  %3668 = vmatprep.subr.bf16.mxu0 %v2398
  %3669 = vmatpush1.bf16.msra.mxu0 %v2397
  %3670 = vmatprep.subr.bf16.mxu0 %v2402
  %3671 = vmatpush1.bf16.msra.mxu0 %v2401
  %3672 = vmatprep.subr.bf16.mxu0 %v2406
  %3673 = vmatpush1.bf16.msra.mxu0 %v2405
  %3674 = vmatprep.subr.bf16.mxu0 %v2410
  %3675 = vmatpush1.bf16.msra.mxu0 %v2409
  %3676 = vmatprep.subr.bf16.mxu0 %v2414
  %3677 = vmatpush1.bf16.msra.mxu0 %v2413
  %3678 = vmatprep.subr.bf16.mxu0 %v2418
  %3679 = vmatpush1.bf16.msra.mxu0 %v2417
  %3680 = vmatprep.subr.bf16.mxu0 %v2422
  %3681 = vmatpush1.bf16.msra.mxu0 %v2421
  %3682 = vmatprep.subr.bf16.mxu0 %v2426
  %3683 = vmatpush1.bf16.msra.mxu0 %v2425
  %3684 = vmatprep.subr.bf16.mxu0 %v2430
  %3685 = vmatpush1.bf16.msra.mxu0 %v2429
  %3686 = vmatprep.subr.bf16.mxu0 %v2434
  %3687 = vmatpush1.bf16.msra.mxu0 %v2433
  %3688 = vmatprep.subr.bf16.mxu0 %v2438
  %3689 = vmatpush1.bf16.msra.mxu0 %v2437
  %3690 = vmatprep.mubr.bf16.mxu0 %v596
  %3691 = vmatmul.mubr.bf16.gmra.mrb[0].mxu0 %v594
  %v3692 = vpop.f32.mrb[0].mxu0
  %v3693 = vadd.f32 %v3652, %v3692
  %v3694 = vpop.f32.mrb[0].mxu0
  %v3695 = vadd.f32 %v3654, %v3694
  %v3696 = vpop.f32.mrb[0].mxu0
  %v3697 = vpop.f32.mrb[0].mxu0
  %3698 = vdwg.mxu0
  %3699 = vmatprep.subr.bf16.mxu0 %v2442
  %3700 = vmatpush1.bf16.msra.mxu0 %v2441
  %3701 = vmatprep.subr.bf16.mxu0 %v2446
  %3702 = vmatpush1.bf16.msra.mxu0 %v2445
  %3703 = vmatprep.subr.bf16.mxu0 %v2450
  %3704 = vmatpush1.bf16.msra.mxu0 %v2449
  %3705 = vmatprep.subr.bf16.mxu0 %v2454
  %3706 = vmatpush1.bf16.msra.mxu0 %v2453
  %3707 = vmatprep.subr.bf16.mxu0 %v2458
  %3708 = vmatpush1.bf16.msra.mxu0 %v2457
  %3709 = vmatprep.subr.bf16.mxu0 %v2462
  %3710 = vmatpush1.bf16.msra.mxu0 %v2461
  %3711 = vmatprep.subr.bf16.mxu0 %v2466
  %3712 = vmatpush1.bf16.msra.mxu0 %v2465
  %3713 = vmatprep.subr.bf16.mxu0 %v2470
  %3714 = vmatpush1.bf16.msra.mxu0 %v2469
  %3715 = vmatprep.subr.bf16.mxu0 %v2474
  %3716 = vmatpush1.bf16.msra.mxu0 %v2473
  %3717 = vmatprep.subr.bf16.mxu0 %v2478
  %3718 = vmatpush1.bf16.msra.mxu0 %v2477
  %3719 = vmatprep.subr.bf16.mxu0 %v2482
  %3720 = vmatpush1.bf16.msra.mxu0 %v2481
  %3721 = vmatprep.subr.bf16.mxu0 %v2486
  %3722 = vmatpush1.bf16.msra.mxu0 %v2485
  %3723 = vmatprep.subr.bf16.mxu0 %v2490
  %3724 = vmatpush1.bf16.msra.mxu0 %v2489
  %3725 = vmatprep.subr.bf16.mxu0 %v2494
  %3726 = vmatpush1.bf16.msra.mxu0 %v2493
  %3727 = vmatprep.subr.bf16.mxu0 %v2498
  %3728 = vmatpush1.bf16.msra.mxu0 %v2497
  %3729 = vmatprep.subr.bf16.mxu0 %v2502
  %3730 = vmatpush1.bf16.msra.mxu0 %v2501
  %3731 = vmatprep.mubr.bf16.mxu0 %v612
  %3732 = vmatmul.mubr.bf16.gmra.mrb[0].mxu0 %v604
  %v3733 = vpop.f32.mrb[0].mxu0
  %v3734 = vadd.f32 %v3693, %v3733
  %v3735 = vpop.f32.mrb[0].mxu0
  %v3736 = vadd.f32 %v3695, %v3735
  %v3737 = vpop.f32.mrb[0].mxu0
  %v3738 = vpop.f32.mrb[0].mxu0
  %3739 = vdwg.mxu0
  %3740 = vmatprep.subr.bf16.mxu0 %v2506
  %3741 = vmatpush1.bf16.msra.mxu0 %v2505
  %3742 = vmatprep.subr.bf16.mxu0 %v2510
  %3743 = vmatpush1.bf16.msra.mxu0 %v2509
  %3744 = vmatprep.subr.bf16.mxu0 %v2514
  %3745 = vmatpush1.bf16.msra.mxu0 %v2513
  %3746 = vmatprep.subr.bf16.mxu0 %v2518
  %3747 = vmatpush1.bf16.msra.mxu0 %v2517
  %3748 = vmatprep.subr.bf16.mxu0 %v2522
  %3749 = vmatpush1.bf16.msra.mxu0 %v2521
  %3750 = vmatprep.subr.bf16.mxu0 %v2526
  %3751 = vmatpush1.bf16.msra.mxu0 %v2525
  %3752 = vmatprep.subr.bf16.mxu0 %v2530
  %3753 = vmatpush1.bf16.msra.mxu0 %v2529
  %3754 = vmatprep.subr.bf16.mxu0 %v2534
  %3755 = vmatpush1.bf16.msra.mxu0 %v2533
  %3756 = vmatprep.subr.bf16.mxu0 %v2538
  %3757 = vmatpush1.bf16.msra.mxu0 %v2537
  %3758 = vmatprep.subr.bf16.mxu0 %v2542
  %3759 = vmatpush1.bf16.msra.mxu0 %v2541
  %3760 = vmatprep.subr.bf16.mxu0 %v2546
  %3761 = vmatpush1.bf16.msra.mxu0 %v2545
  %3762 = vmatprep.subr.bf16.mxu0 %v2550
  %3763 = vmatpush1.bf16.msra.mxu0 %v2549
  %3764 = vmatprep.subr.bf16.mxu0 %v2554
  %3765 = vmatpush1.bf16.msra.mxu0 %v2553
  %3766 = vmatprep.subr.bf16.mxu0 %v2558
  %3767 = vmatpush1.bf16.msra.mxu0 %v2557
  %3768 = vmatprep.subr.bf16.mxu0 %v2562
  %3769 = vmatpush1.bf16.msra.mxu0 %v2561
  %3770 = vmatprep.subr.bf16.mxu0 %v2566
  %3771 = vmatpush1.bf16.msra.mxu0 %v2565
  %3772 = vmatprep.mubr.bf16.mxu0 %v613
  %3773 = vmatmul.mubr.bf16.gmra.mrb[0].mxu0 %v611
  %v3774 = vpop.f32.mrb[0].mxu0
  %v3775 = vadd.f32 %v3734, %v3774
  %v3776 = vpop.f32.mrb[0].mxu0
  %v3777 = vadd.f32 %v3736, %v3776
  %v3778 = vpop.f32.mrb[0].mxu0
  %v3779 = vpop.f32.mrb[0].mxu0
  %3780 = vdwg.mxu0
  %3781 = vmatprep.subr.bf16.mxu0 %v2570
  %3782 = vmatpush1.bf16.msra.mxu0 %v2569
  %3783 = vmatprep.subr.bf16.mxu0 %v2574
  %3784 = vmatpush1.bf16.msra.mxu0 %v2573
  %3785 = vmatprep.subr.bf16.mxu0 %v2578
  %3786 = vmatpush1.bf16.msra.mxu0 %v2577
  %3787 = vmatprep.subr.bf16.mxu0 %v2582
  %3788 = vmatpush1.bf16.msra.mxu0 %v2581
  %3789 = vmatprep.subr.bf16.mxu0 %v2586
  %3790 = vmatpush1.bf16.msra.mxu0 %v2585
  %3791 = vmatprep.subr.bf16.mxu0 %v2590
  %3792 = vmatpush1.bf16.msra.mxu0 %v2589
  %3793 = vmatprep.subr.bf16.mxu0 %v2594
  %3794 = vmatpush1.bf16.msra.mxu0 %v2593
  %3795 = vmatprep.subr.bf16.mxu0 %v2598
  %3796 = vmatpush1.bf16.msra.mxu0 %v2597
  %3797 = vmatprep.subr.bf16.mxu0 %v2602
  %3798 = vmatpush1.bf16.msra.mxu0 %v2601
  %3799 = vmatprep.subr.bf16.mxu0 %v2606
  %3800 = vmatpush1.bf16.msra.mxu0 %v2605
  %3801 = vmatprep.subr.bf16.mxu0 %v2610
  %3802 = vmatpush1.bf16.msra.mxu0 %v2609
  %3803 = vmatprep.subr.bf16.mxu0 %v2614
  %3804 = vmatpush1.bf16.msra.mxu0 %v2613
  %3805 = vmatprep.subr.bf16.mxu0 %v2618
  %3806 = vmatpush1.bf16.msra.mxu0 %v2617
  %3807 = vmatprep.subr.bf16.mxu0 %v2622
  %3808 = vmatpush1.bf16.msra.mxu0 %v2621
  %3809 = vmatprep.subr.bf16.mxu0 %v2626
  %3810 = vmatpush1.bf16.msra.mxu0 %v2625
  %3811 = vmatprep.subr.bf16.mxu0 %v2630
  %3812 = vmatpush1.bf16.msra.mxu0 %v2629
  %3813 = vmatprep.mubr.bf16.mxu0 %v629
  %3814 = vmatmul.mubr.bf16.gmra.mrb[0].mxu0 %v621
  %v3815 = vpop.f32.mrb[0].mxu0
  %v3816 = vadd.f32 %v3775, %v3815
  %v3817 = vpop.f32.mrb[0].mxu0
  %v3818 = vadd.f32 %v3777, %v3817
  %v3819 = vpop.f32.mrb[0].mxu0
  %v3820 = vpop.f32.mrb[0].mxu0
  %3821 = vdwg.mxu0
  %3822 = vmatprep.subr.bf16.mxu0 %v2634
  %3823 = vmatpush1.bf16.msra.mxu0 %v2633
  %3824 = vmatprep.subr.bf16.mxu0 %v2638
  %3825 = vmatpush1.bf16.msra.mxu0 %v2637
  %3826 = vmatprep.subr.bf16.mxu0 %v2642
  %3827 = vmatpush1.bf16.msra.mxu0 %v2641
  %3828 = vmatprep.subr.bf16.mxu0 %v2646
  %3829 = vmatpush1.bf16.msra.mxu0 %v2645
  %3830 = vmatprep.subr.bf16.mxu0 %v2650
  %3831 = vmatpush1.bf16.msra.mxu0 %v2649
  %3832 = vmatprep.subr.bf16.mxu0 %v2654
  %3833 = vmatpush1.bf16.msra.mxu0 %v2653
  %3834 = vmatprep.subr.bf16.mxu0 %v2658
  %3835 = vmatpush1.bf16.msra.mxu0 %v2657
  %3836 = vmatprep.subr.bf16.mxu0 %v2662
  %3837 = vmatpush1.bf16.msra.mxu0 %v2661
  %3838 = vmatprep.subr.bf16.mxu0 %v2666
  %3839 = vmatpush1.bf16.msra.mxu0 %v2665
  %3840 = vmatprep.subr.bf16.mxu0 %v2670
  %3841 = vmatpush1.bf16.msra.mxu0 %v2669
  %3842 = vmatprep.subr.bf16.mxu0 %v2674
  %3843 = vmatpush1.bf16.msra.mxu0 %v2673
  %3844 = vmatprep.subr.bf16.mxu0 %v2678
  %3845 = vmatpush1.bf16.msra.mxu0 %v2677
  %3846 = vmatprep.subr.bf16.mxu0 %v2682
  %3847 = vmatpush1.bf16.msra.mxu0 %v2681
  %3848 = vmatprep.subr.bf16.mxu0 %v2686
  %3849 = vmatpush1.bf16.msra.mxu0 %v2685
  %3850 = vmatprep.subr.bf16.mxu0 %v2690
  %3851 = vmatpush1.bf16.msra.mxu0 %v2689
  %3852 = vmatprep.subr.bf16.mxu0 %v2694
  %3853 = vmatpush1.bf16.msra.mxu0 %v2693
  %3854 = vmatprep.mubr.bf16.mxu0 %v630
  %3855 = vmatmul.mubr.bf16.gmra.mrb[0].mxu0 %v628
  %v3856 = vpop.f32.mrb[0].mxu0
  %v3857 = vadd.f32 %v3816, %v3856
  %v3858 = vpop.f32.mrb[0].mxu0
  %v3859 = vadd.f32 %v3818, %v3858
  %v3860 = vpop.f32.mrb[0].mxu0
  %v3861 = vpop.f32.mrb[0].mxu0
  %3862 = vdwg.mxu0
  %v3863 = vmax.f32 %v3529, 0.0
  %v3864 = vmax.f32 %v3531, 0.0
  %v3865 = vmax.f32 %v3857, 0.0
  %v3866 = vmax.f32 %v3859, 0.0
  %v3867 = vpack.c.bf16 %v3863, %v3863
  %v3868 = vpack.c.bf16 %v3864, %v3864
  %v3869 = vpack.c.bf16 %v3865, %v3865
  %v3870 = vpack.c.bf16 %v3866, %v3866
  %v3871 = vld [vmem:[%s3] sm:$0xf]
  %v3872 = vld [vmem:[%s3 + $0x4] sm:$0xf]
  %v3873 = vld [vmem:[%s3 + $0x8] sm:$0xf]
  %v3874 = vld [vmem:[%s3 + $0xc] sm:$0xf]
  %v3875 = vld [vmem:[%s3 + $0x10] sm:$0xf]
  %v3876 = vld [vmem:[%s3 + $0x14] sm:$0xf]
  %v3877 = vld [vmem:[%s3 + $0x18] sm:$0xf]
  %v3878 = vld [vmem:[%s3 + $0x1c] sm:$0xf]
  %v3879 = vld [vmem:[%s3 + $0x20] sm:$0xf]
  %v3880 = vld [vmem:[%s3 + $0x24] sm:$0xf]
  %v3881 = vld [vmem:[%s3 + $0x28] sm:$0xf]
  %v3882 = vld [vmem:[%s3 + $0x2c] sm:$0xf]
  %v3883 = vld [vmem:[%s3 + $0x30] sm:$0xf]
  %v3884 = vld [vmem:[%s3 + $0x34] sm:$0xf]
  %v3885 = vld [vmem:[%s3 + $0x38] sm:$0xf]
  %v3886 = vld [vmem:[%s3 + $0x3c] sm:$0xf]
  %v3887 = vld [vmem:[%s3 + $0x40] sm:$0xf]
  %v3888 = vld [vmem:[%s3 + $0x44] sm:$0xf]
  %v3889 = vld [vmem:[%s3 + $0x48] sm:$0xf]
  %v3890 = vld [vmem:[%s3 + $0x4c] sm:$0xf]
  %v3891 = vld [vmem:[%s3 + $0x50] sm:$0xf]
  %v3892 = vld [vmem:[%s3 + $0x54] sm:$0xf]
  %v3893 = vld [vmem:[%s3 + $0x58] sm:$0xf]
  %v3894 = vld [vmem:[%s3 + $0x5c] sm:$0xf]
  %v3895 = vld [vmem:[%s3 + $0x60] sm:$0xf]
  %v3896 = vld [vmem:[%s3 + $0x64] sm:$0xf]
  %v3897 = vld [vmem:[%s3 + $0x68] sm:$0xf]
  %v3898 = vld [vmem:[%s3 + $0x6c] sm:$0xf]
  %v3899 = vld [vmem:[%s3 + $0x70] sm:$0xf]
  %v3900 = vld [vmem:[%s3 + $0x74] sm:$0xf]
  %v3901 = vld [vmem:[%s3 + $0x78] sm:$0xf]
  %v3902 = vld [vmem:[%s3 + $0x7c] sm:$0xf]
  %v3903 = vld [vmem:[%s3 + $0x80] sm:$0xf]
  %v3904 = vld [vmem:[%s3 + $0x84] sm:$0xf]
  %v3905 = vld [vmem:[%s3 + $0x88] sm:$0xf]
  %v3906 = vld [vmem:[%s3 + $0x8c] sm:$0xf]
  %v3907 = vld [vmem:[%s3 + $0x90] sm:$0xf]
  %v3908 = vld [vmem:[%s3 + $0x94] sm:$0xf]
  %v3909 = vld [vmem:[%s3 + $0x98] sm:$0xf]
  %v3910 = vld [vmem:[%s3 + $0x9c] sm:$0xf]
  %v3911 = vld [vmem:[%s3 + $0xa0] sm:$0xf]
  %v3912 = vld [vmem:[%s3 + $0xa4] sm:$0xf]
  %v3913 = vld [vmem:[%s3 + $0xa8] sm:$0xf]
  %v3914 = vld [vmem:[%s3 + $0xac] sm:$0xf]
  %v3915 = vld [vmem:[%s3 + $0xb0] sm:$0xf]
  %v3916 = vld [vmem:[%s3 + $0xb4] sm:$0xf]
  %v3917 = vld [vmem:[%s3 + $0xb8] sm:$0xf]
  %v3918 = vld [vmem:[%s3 + $0xbc] sm:$0xf]
  %v3919 = vld [vmem:[%s3 + $0xc0] sm:$0xf]
  %v3920 = vld [vmem:[%s3 + $0xc4] sm:$0xf]
  %v3921 = vld [vmem:[%s3 + $0xc8] sm:$0xf]
  %v3922 = vld [vmem:[%s3 + $0xcc] sm:$0xf]
  %v3923 = vld [vmem:[%s3 + $0xd0] sm:$0xf]
  %v3924 = vld [vmem:[%s3 + $0xd4] sm:$0xf]
  %v3925 = vld [vmem:[%s3 + $0xd8] sm:$0xf]
  %v3926 = vld [vmem:[%s3 + $0xdc] sm:$0xf]
  %v3927 = vld [vmem:[%s3 + $0xe0] sm:$0xf]
  %v3928 = vld [vmem:[%s3 + $0xe4] sm:$0xf]
  %v3929 = vld [vmem:[%s3 + $0xe8] sm:$0xf]
  %v3930 = vld [vmem:[%s3 + $0xec] sm:$0xf]
  %v3931 = vld [vmem:[%s3 + $0xf0] sm:$0xf]
  %v3932 = vld [vmem:[%s3 + $0xf4] sm:$0xf]
  %v3933 = vld [vmem:[%s3 + $0xf8] sm:$0xf]
  %v3934 = vld [vmem:[%s3 + $0xfc] sm:$0xf]
  %v3935 = vld [vmem:[%s4] sm:$0x1]
  %v3937 = vlaneseq
  %v3938 = vshrl.u32 %v3937, 7
  %v3939 = vsub.s32 0, %v3938
  %v3940 = vrot.slane %v3935, %v3939
  %v4006 = vunpack.c.l.b16 %v3871
  %v4007 = vunpack.c.l.b16 %v3872
  %v4008 = vunpack.c.l.b16 %v3873
  %v4009 = vunpack.c.l.b16 %v3874
  %v4010 = vunpack.c.l.b16 %v3875
  %v4011 = vunpack.c.l.b16 %v3876
  %v4012 = vunpack.c.l.b16 %v3877
  %v4013 = vunpack.c.l.b16 %v3878
  %v4014 = vunpack.c.l.b16 %v3879
  %v4015 = vunpack.c.l.b16 %v3880
  %v4016 = vunpack.c.l.b16 %v3881
  %v4017 = vunpack.c.l.b16 %v3882
  %v4018 = vunpack.c.l.b16 %v3883
  %v4019 = vunpack.c.l.b16 %v3884
  %v4020 = vunpack.c.l.b16 %v3885
  %v4021 = vunpack.c.l.b16 %v3886
  %v4022 = vunpack.c.l.b16 %v3887
  %v4023 = vunpack.c.l.b16 %v3888
  %v4024 = vunpack.c.l.b16 %v3889
  %v4025 = vunpack.c.l.b16 %v3890
  %v4026 = vunpack.c.l.b16 %v3891
  %v4027 = vunpack.c.l.b16 %v3892
  %v4028 = vunpack.c.l.b16 %v3893
  %v4029 = vunpack.c.l.b16 %v3894
  %v4030 = vunpack.c.l.b16 %v3895
  %v4031 = vunpack.c.l.b16 %v3896
  %v4032 = vunpack.c.l.b16 %v3897
  %v4033 = vunpack.c.l.b16 %v3898
  %v4034 = vunpack.c.l.b16 %v3899
  %v4035 = vunpack.c.l.b16 %v3900
  %v4036 = vunpack.c.l.b16 %v3901
  %v4037 = vunpack.c.l.b16 %v3902
  %v4038 = vunpack.c.l.b16 %v3903
  %v4039 = vunpack.c.l.b16 %v3904
  %v4040 = vunpack.c.l.b16 %v3905
  %v4041 = vunpack.c.l.b16 %v3906
  %v4042 = vunpack.c.l.b16 %v3907
  %v4043 = vunpack.c.l.b16 %v3908
  %v4044 = vunpack.c.l.b16 %v3909
  %v4045 = vunpack.c.l.b16 %v3910
  %v4046 = vunpack.c.l.b16 %v3911
  %v4047 = vunpack.c.l.b16 %v3912
  %v4048 = vunpack.c.l.b16 %v3913
  %v4049 = vunpack.c.l.b16 %v3914
  %v4050 = vunpack.c.l.b16 %v3915
  %v4051 = vunpack.c.l.b16 %v3916
  %v4052 = vunpack.c.l.b16 %v3917
  %v4053 = vunpack.c.l.b16 %v3918
  %v4054 = vunpack.c.l.b16 %v3919
  %v4055 = vunpack.c.l.b16 %v3920
  %v4056 = vunpack.c.l.b16 %v3921
  %v4057 = vunpack.c.l.b16 %v3922
  %v4058 = vunpack.c.l.b16 %v3923
  %v4059 = vunpack.c.l.b16 %v3924
  %v4060 = vunpack.c.l.b16 %v3925
  %v4061 = vunpack.c.l.b16 %v3926
  %v4062 = vunpack.c.l.b16 %v3927
  %v4063 = vunpack.c.l.b16 %v3928
  %v4064 = vunpack.c.l.b16 %v3929
  %v4065 = vunpack.c.l.b16 %v3930
  %v4066 = vunpack.c.l.b16 %v3931
  %v4067 = vunpack.c.l.b16 %v3932
  %v4068 = vunpack.c.l.b16 %v3933
  %v4069 = vunpack.c.l.b16 %v3934
  %v4070 = vpack.c.b16 %v4007, %v4006
  %v4071 = vpack.c.b16 %v4009, %v4008
  %v4072 = vpack.c.b16 %v4011, %v4010
  %v4073 = vpack.c.b16 %v4013, %v4012
  %v4074 = vpack.c.b16 %v4015, %v4014
  %v4075 = vpack.c.b16 %v4017, %v4016
  %v4076 = vpack.c.b16 %v4019, %v4018
  %v4077 = vpack.c.b16 %v4021, %v4020
  %v4078 = vpack.c.b16 %v4023, %v4022
  %v4079 = vpack.c.b16 %v4025, %v4024
  %v4080 = vpack.c.b16 %v4027, %v4026
  %v4081 = vpack.c.b16 %v4029, %v4028
  %v4082 = vpack.c.b16 %v4031, %v4030
  %v4083 = vpack.c.b16 %v4033, %v4032
  %v4084 = vpack.c.b16 %v4035, %v4034
  %v4085 = vpack.c.b16 %v4037, %v4036
  %v4086 = vpack.c.b16 %v4039, %v4038
  %v4087 = vpack.c.b16 %v4041, %v4040
  %v4088 = vpack.c.b16 %v4043, %v4042
  %v4089 = vpack.c.b16 %v4045, %v4044
  %v4090 = vpack.c.b16 %v4047, %v4046
  %v4091 = vpack.c.b16 %v4049, %v4048
  %v4092 = vpack.c.b16 %v4051, %v4050
  %v4093 = vpack.c.b16 %v4053, %v4052
  %v4094 = vpack.c.b16 %v4055, %v4054
  %v4095 = vpack.c.b16 %v4057, %v4056
  %v4096 = vpack.c.b16 %v4059, %v4058
  %v4097 = vpack.c.b16 %v4061, %v4060
  %v4098 = vpack.c.b16 %v4063, %v4062
  %v4099 = vpack.c.b16 %v4065, %v4064
  %v4100 = vpack.c.b16 %v4067, %v4066
  %v4101 = vpack.c.b16 %v4069, %v4068
  %4134 = vmatprep.subr.bf16.mxu0 0
  %4135 = vmatpush1.bf16.msra.mxu0 %v4070
  %4136 = vmatprep.subr.bf16.mxu0 0
  %4137 = vmatpush1.bf16.msra.mxu0 %v4071
  %4138 = vmatprep.subr.bf16.mxu0 0
  %4139 = vmatpush1.bf16.msra.mxu0 %v4072
  %4140 = vmatprep.subr.bf16.mxu0 0
  %4141 = vmatpush1.bf16.msra.mxu0 %v4073
  %4142 = vmatprep.subr.bf16.mxu0 0
  %4143 = vmatpush1.bf16.msra.mxu0 %v4074
  %4144 = vmatprep.subr.bf16.mxu0 0
  %4145 = vmatpush1.bf16.msra.mxu0 %v4075
  %4146 = vmatprep.subr.bf16.mxu0 0
  %4147 = vmatpush1.bf16.msra.mxu0 %v4076
  %4148 = vmatprep.subr.bf16.mxu0 0
  %4149 = vmatpush1.bf16.msra.mxu0 %v4077
  %4150 = vmatprep.subr.bf16.mxu0 0
  %4151 = vmatpush1.bf16.msra.mxu0 %v4078
  %4152 = vmatprep.subr.bf16.mxu0 0
  %4153 = vmatpush1.bf16.msra.mxu0 %v4079
  %4154 = vmatprep.subr.bf16.mxu0 0
  %4155 = vmatpush1.bf16.msra.mxu0 %v4080
  %4156 = vmatprep.subr.bf16.mxu0 0
  %4157 = vmatpush1.bf16.msra.mxu0 %v4081
  %4158 = vmatprep.subr.bf16.mxu0 0
  %4159 = vmatpush1.bf16.msra.mxu0 %v4082
  %4160 = vmatprep.subr.bf16.mxu0 0
  %4161 = vmatpush1.bf16.msra.mxu0 %v4083
  %4162 = vmatprep.subr.bf16.mxu0 0
  %4163 = vmatpush1.bf16.msra.mxu0 %v4084
  %4164 = vmatprep.subr.bf16.mxu0 0
  %4165 = vmatpush1.bf16.msra.mxu0 %v4085
  %4166 = vmatprep.mubr.bf16.mxu0 %v3868
  %4167 = vmatmul.mubr.bf16.gmra.mrb[0].mxu0 %v3867
  %v4168 = vpop.f32.mrb[0].mxu0
  %v4169 = vadd.f32 %v3940, %v4168
  %v4170 = vpop.f32.mrb[0].mxu0
  %v4171 = vpop.f32.mrb[0].mxu0
  %v4172 = vpop.f32.mrb[0].mxu0
  %4173 = vdwg.mxu0
  %4174 = vmatprep.subr.bf16.mxu0 0
  %4175 = vmatpush1.bf16.msra.mxu0 %v4086
  %4176 = vmatprep.subr.bf16.mxu0 0
  %4177 = vmatpush1.bf16.msra.mxu0 %v4087
  %4178 = vmatprep.subr.bf16.mxu0 0
  %4179 = vmatpush1.bf16.msra.mxu0 %v4088
  %4180 = vmatprep.subr.bf16.mxu0 0
  %4181 = vmatpush1.bf16.msra.mxu0 %v4089
  %4182 = vmatprep.subr.bf16.mxu0 0
  %4183 = vmatpush1.bf16.msra.mxu0 %v4090
  %4184 = vmatprep.subr.bf16.mxu0 0
  %4185 = vmatpush1.bf16.msra.mxu0 %v4091
  %4186 = vmatprep.subr.bf16.mxu0 0
  %4187 = vmatpush1.bf16.msra.mxu0 %v4092
  %4188 = vmatprep.subr.bf16.mxu0 0
  %4189 = vmatpush1.bf16.msra.mxu0 %v4093
  %4190 = vmatprep.subr.bf16.mxu0 0
  %4191 = vmatpush1.bf16.msra.mxu0 %v4094
  %4192 = vmatprep.subr.bf16.mxu0 0
  %4193 = vmatpush1.bf16.msra.mxu0 %v4095
  %4194 = vmatprep.subr.bf16.mxu0 0
  %4195 = vmatpush1.bf16.msra.mxu0 %v4096
  %4196 = vmatprep.subr.bf16.mxu0 0
  %4197 = vmatpush1.bf16.msra.mxu0 %v4097
  %4198 = vmatprep.subr.bf16.mxu0 0
  %4199 = vmatpush1.bf16.msra.mxu0 %v4098
  %4200 = vmatprep.subr.bf16.mxu0 0
  %4201 = vmatpush1.bf16.msra.mxu0 %v4099
  %4202 = vmatprep.subr.bf16.mxu0 0
  %4203 = vmatpush1.bf16.msra.mxu0 %v4100
  %4204 = vmatprep.subr.bf16.mxu0 0
  %4205 = vmatpush1.bf16.msra.mxu0 %v4101
  %4206 = vmatprep.mubr.bf16.mxu0 %v3870
  %4207 = vmatmul.mubr.bf16.gmra.mrb[0].mxu0 %v3869
  %v4208 = vpop.f32.mrb[0].mxu0
  %v4209 = vadd.f32 %v4169, %v4208
  %v4210 = vpop.f32.mrb[0].mxu0
  %v4211 = vpop.f32.mrb[0].mxu0
  %v4212 = vpop.f32.mrb[0].mxu0
  %4213 = vdwg.mxu0
  %4214 = vst [vmem:[%s5] sm:$0xf] %v4209
  // Predicated region
  $region22: #{_lambda_.5} parent=0 // pred_check
    _
  $region23: #{_lambda_.5} parent=0 // pred_check_branch
    %4216 = sbr.rel (0) target = $region25
  $region24: #{_lambda_.5} parent=0 // pred_region
    _
  $region25: #{_lambda_.5} parent=0 // pred_fallthru
    _
  // Predicated region
  $region26: #{_lambda_.5} parent=0 // pred_check
    _
  $region27: #{_lambda_.5} parent=0 // pred_check_branch
    %4218 = sbr.rel (0) target = $region29
  $region28: #{_lambda_.5} parent=0 // pred_region
    _
  $region29: #{_lambda_.5} parent=0 // pred_fallthru
    _

</llo_original>
